<compile_context>
chip_gen: v5e
topology: v5e:2x2
jax: 0.10.0
libtpu: 0.0.40
codegen_flags: <defaults>
</compile_context>

<pallas_src>
import functools
import numpy as np
import jax
import jax.numpy as jnp
from jax import lax
from jax.experimental import pallas as pl
from jax.experimental.pallas import tpu as pltpu

LEAKY_RELU_GAIN = float(np.sqrt(2.0 / (1.0 + 0.2 ** 2)))
_MiB = 1024 * 1024


def _round_up(x, m):
    return -(-x // m) * m


@functools.lru_cache(maxsize=None)
def _tpu_vmem_and_cores():
    """Returns (per-core VMEM capacity bytes, #TensorCores sharing the grid)."""
    vmem = 128 * _MiB
    try:
        info = pltpu.get_tpu_info()
        v = int(getattr(info, "vmem_capacity_bytes", 0) or 0)
        if v > 0:
            vmem = v
    except Exception:
        pass
    kind = ""
    try:
        kind = jax.devices()[0].device_kind.lower()
    except Exception:
        pass
    # v7x: 64 MiB VMEM per TC and 2 TCs/chip; v5e/v6e: 128 MiB, single TC.
    cores = 2 if (vmem <= 64 * _MiB or "7" in kind or "v4" in kind) else 1
    return vmem, cores


@functools.lru_cache(maxsize=None)
def _single_buffer_supported():
    """Probe whether BlockSpec(pipeline_mode=pl.Buffered(1)) builds and lowers."""
    if not hasattr(pl, "Buffered"):
        return False
    try:
        def k(c_ref, x_ref, o_ref):
            o_ref[...] = x_ref[...] + c_ref[...]

        c = jnp.zeros((8, 128), jnp.float32)
        x = jnp.ones((16, 128), jnp.float32)
        out = pl.pallas_call(
            k,
            out_shape=jax.ShapeDtypeStruct((16, 128), jnp.float32),
            grid=(2,),
            in_specs=[pl.BlockSpec((8, 128), lambda n: (0, 0),
                                   pipeline_mode=pl.Buffered(1)),
                      pl.BlockSpec((8, 128), lambda n: (n, 0))],
            out_specs=pl.BlockSpec((8, 128), lambda n: (n, 0)),
        )(c, x)
        jax.block_until_ready(out)
        return True
    except Exception:
        return False


def _const_spec(shape, single_buffer):
    """Grid-invariant input spec; single-buffered (no re-DMA slot) if supported."""
    index_map = lambda n: (0,) * len(shape)
    if single_buffer:
        return pl.BlockSpec(shape, index_map, pipeline_mode=pl.Buffered(1))
    return pl.BlockSpec(shape, index_map)


def _make_disc_conv_kernel(B, H, W, Cin, Cout, scale, compute_dtype, fused):
    H2, W2 = H // 2, W // 2
    M = B * H * W          # matmul M dim (all pixels in the batch block)
    M2 = B * H2 * W2       # pooled pixel count
    taps = [(ky, kx) for ky in range(3) for kx in range(3)]

    def conv3x3(src_ref, w_ref):
        # src_ref: (B, H+2, W+2, Cin) zero-padded NHWC; w_ref: (9*Cin, C_out)
        # in tap-major / channel-minor im2col layout.
        if fused:
            # Single K = 9*Cin matmul (best for small Cin: amortizes MXU K dim).
            slabs = [src_ref[:, ky:ky + H, kx:kx + W, :] for ky, kx in taps]
            patches = jnp.concatenate(slabs, axis=-1).reshape(M, 9 * Cin)
            return jnp.dot(patches, w_ref[...], preferred_element_type=jnp.float32)
        # Cin >= 128: 9 accumulated per-tap matmuls -- no (M, 9*Cin) patch buffer.
        acc = None
        for t, (ky, kx) in enumerate(taps):
            slab = src_ref[:, ky:ky + H, kx:kx + W, :].reshape(M, Cin)
            part = jnp.dot(slab, w_ref[t * Cin:(t + 1) * Cin, :],
                           preferred_element_type=jnp.float32)
            acc = part if acc is None else acc + part
        return acc

    def kernel(xp_ref, w1_ref, b1_ref, w2_ref, b2_ref, o_ref, y1p_ref, vsum_ref):
        # xp_ref : (B, H+2, W+2, Cin)  zero-padded NHWC input block (compute_dtype)
        # w1_ref : (9*Cin, Cin)        conv1 weights, im2col layout (compute_dtype)
        # w2_ref : (9*Cin, Cout)       conv2 weights, im2col layout (compute_dtype)
        # b1_ref : (1, Cin) f32        b2_ref : (1, Cout) f32
        # o_ref  : (B, H2*W2, Cout) f32
        # y1p_ref: VMEM (B, H+2, W+2, Cin) compute_dtype  (padded intermediate)
        # vsum_ref: VMEM (B*H2*W, Cout) f32               (row-pooled partial)

        # ---- conv1 (MXU) + scale-by-linearity + bias + LeakyReLU(0.2) --------
        y1 = conv3x3(xp_ref, w1_ref)                                  # (M, Cin) f32
        y1 = scale * y1 + b1_ref[...]
        y1 = jnp.where(y1 >= 0.0, y1, 0.2 * y1)

        # ---- stage padded intermediate: W-axis padding in-register (XLU) so
        #      the big store writes full rows (unmasked, sublane-aligned) ------
        zcol = jnp.zeros((B, H, 1, Cin), compute_dtype)
        y1_rows = jnp.concatenate(
            [zcol, y1.astype(compute_dtype).reshape(B, H, W, Cin), zcol], axis=2)
        zrow = jnp.zeros((B, 1, W + 2, Cin), compute_dtype)
        y1p_ref[:, 0:1, :, :] = zrow            # top border row (per-step: megacore-safe)
        y1p_ref[:, H + 1:H + 2, :, :] = zrow    # bottom border row
        y1p_ref[:, 1:H + 1, :, :] = y1_rows     # full-width interior rows

        # ---- conv2 (MXU) + scale + bias + LeakyReLU --------------------------
        y2 = conv3x3(y1p_ref, w2_ref)                                 # (M, Cout) f32
        y2 = scale * y2 + b2_ref[...]
        y2 = jnp.where(y2 >= 0.0, y2, 0.2 * y2)

        # ---- AvgPool2d(2,2) on the VPU (no pooling matmul) -------------------
        # vertical pairs: rows (2*h2) and (2*h2+1) sit W apart after reshape
        y2v = y2.reshape(B * H2, 2 * W, Cout)
        vsum = y2v[:, :W, :] + y2v[:, W:, :]                          # (B*H2, W, Cout)
        vsum_ref[...] = vsum.reshape(B * H2 * W, Cout)
        # horizontal pairs: even/odd flat rows via sublane-strided ref loads
        hsum = (vsum_ref[pl.ds(0, M2, stride=2), :]
                + vsum_ref[pl.ds(1, M2, stride=2), :])                # (M2, Cout)
        o_ref[...] = (0.25 * hsum).reshape(B, H2 * W2, Cout).astype(o_ref.dtype)

    return kernel


def _pick_batch_block(N, H, W, Cin, Cout, compute_dtype, fused, budget_bytes,
                      min_steps):
    """Largest divisor-of-N batch block that fits the (weights-excluded) budget."""
    cbytes = jnp.dtype(compute_dtype).itemsize
    H2, W2 = H // 2, W // 2
    if fused:
        live = (2 * H * W * 9 * Cin * cbytes          # im2col patch slabs
                + H * W * max(Cin, Cout) * 4)         # f32 matmul result
    else:
        live = (H * W * Cin * cbytes                  # one shifted slab
                + 2 * H * W * max(Cin, Cout) * 4)     # f32 accumulator + partial
    per_item = (2 * (H + 2) * (W + 2) * Cin * cbytes  # input block (double-buffered)
                + (H + 2) * (W + 2) * Cin * cbytes    # y1p scratch
                + H * (W + 2) * Cin * cbytes          # row-padded staging value
                + H2 * W * Cout * 4                   # vsum scratch (f32)
                + 2 * H2 * W2 * Cout * 4              # output block (double-buffered)
                + live)
    best = 1
    for b in range(1, N + 1):
        if N % b:
            continue
        if N // b < min_steps:
            continue
        if b * per_item <= budget_bytes:
            best = b
    return best


def disc_conv_forward(x_nchw, w1_hwio, b1, w2_hwio, b2, *,
                      compute_dtype=jnp.bfloat16, batch_block=None,
                      im2col_fused=None):
    """x_nchw: (N, Cin, H, W); conv weights in HWIO (3,3,I,O). Returns NCHW f32."""
    N, Cin, H, W = x_nchw.shape
    Cout = w2_hwio.shape[-1]
    assert H % 2 == 0 and W % 2 == 0, "AvgPool2d(2,2) needs even spatial dims"
    H2, W2 = H // 2, W // 2
    scale = float(LEAKY_RELU_GAIN / np.sqrt(Cin * 3 * 3))
    cbytes = jnp.dtype(compute_dtype).itemsize

    # K = Cin already feeds the MXU fully at >= 128: skip the 9x patch concat.
    fused = (Cin < 128) if im2col_fused is None else bool(im2col_fused)

    # ---- generation-aware VMEM budgeting (v5e/v6e: 128 MiB, v7x: 64 MiB/TC) --
    vmem_cap, num_tc = _tpu_vmem_and_cores()
    vmem_limit = max(32 * _MiB, min(int(0.75 * vmem_cap), 100 * _MiB))

    single_buf = _single_buffer_supported()
    w_copies = 1 if single_buf else 2
    weight_bytes = w_copies * 9 * Cin * (Cin + Cout) * cbytes
    bias_bytes = w_copies * 8 * (_round_up(Cin, 128) + _round_up(Cout, 128)) * 4
    budget = int(0.9 * (vmem_limit - weight_bytes - bias_bytes - 2 * _MiB))
    budget = max(budget, 1)
    # Only keep >=2 grid steps where 2 TensorCores can split the grid (v7x).
    min_steps = 2 if (num_tc >= 2 and N >= 2) else 1

    B = batch_block if batch_block is not None else _pick_batch_block(
        N, H, W, Cin, Cout, compute_dtype, fused, budget, min_steps)
    assert N % B == 0, (N, B)

    # glue: layout change + spatial zero-pad + dtype casts (XLA)
    x_nhwc = jnp.transpose(x_nchw, (0, 2, 3, 1)).astype(jnp.float32)
    x_pad = jnp.pad(x_nhwc, ((0, 0), (1, 1), (1, 1), (0, 0))).astype(compute_dtype)

    w1_k = w1_hwio.astype(compute_dtype).reshape(9 * Cin, Cin)    # (tap, ci) rows
    w2_k = w2_hwio.astype(compute_dtype).reshape(9 * Cin, Cout)
    b1_2d = b1.reshape(1, Cin).astype(jnp.float32)
    b2_2d = b2.reshape(1, Cout).astype(jnp.float32)

    kernel = _make_disc_conv_kernel(B, H, W, Cin, Cout, scale, compute_dtype, fused)

    flops = 2.0 * N * H * W * 9 * Cin * (Cin + Cout)
    bytes_acc = (x_pad.size * cbytes + (w1_k.size + w2_k.size) * cbytes
                 + (b1_2d.size + b2_2d.size) * 4 + N * H2 * W2 * Cout * 4)
    try:
        cost = pl.CostEstimate(flops=int(flops), transcendentals=0,
                               bytes_accessed=int(bytes_acc))
    except Exception:
        cost = None

    out = pl.pallas_call(
        kernel,
        out_shape=jax.ShapeDtypeStruct((N, H2 * W2, Cout), jnp.float32),
        grid_spec=pltpu.PrefetchScalarGridSpec(
            num_scalar_prefetch=0,
            grid=(N // B,),
            in_specs=[
                pl.BlockSpec((B, H + 2, W + 2, Cin), lambda n: (n, 0, 0, 0)),
                _const_spec((9 * Cin, Cin), single_buf),
                _const_spec((1, Cin), single_buf),
                _const_spec((9 * Cin, Cout), single_buf),
                _const_spec((1, Cout), single_buf),
            ],
            out_specs=pl.BlockSpec((B, H2 * W2, Cout), lambda n: (n, 0, 0)),
            scratch_shapes=[
                pltpu.VMEM((B, H + 2, W + 2, Cin), compute_dtype),
                pltpu.VMEM((B * H2 * W, Cout), jnp.float32),
            ],
        ),
        compiler_params=pltpu.CompilerParams(
            dimension_semantics=("parallel",),
            vmem_limit_bytes=int(vmem_limit)),
        cost_estimate=cost,
    )(x_pad, w1_k, b1_2d, w2_k, b2_2d)

    out = out.reshape(N, H2, W2, Cout)
    return jnp.transpose(out, (0, 3, 1, 2))            # back to NCHW


def disc_conv_reference(x_nchw, w1_hwio, b1, w2_hwio, b2):
    """Pure-JAX reference (XLA convs), for correctness checking."""
    Cin = x_nchw.shape[1]
    s = LEAKY_RELU_GAIN / np.sqrt(Cin * 3 * 3)
    x = jnp.transpose(x_nchw, (0, 2, 3, 1)).astype(jnp.float32)
    dn1 = lax.conv_dimension_numbers(x.shape, w1_hwio.shape, ('NHWC', 'HWIO', 'NHWC'))
    y = lax.conv_general_dilated(s * x, w1_hwio, (1, 1), 'SAME',
                                 dimension_numbers=dn1) + b1
    y = jnp.where(y >= 0, y, 0.2 * y)
    dn2 = lax.conv_dimension_numbers(y.shape, w2_hwio.shape, ('NHWC', 'HWIO', 'NHWC'))
    y = lax.conv_general_dilated(s * y, w2_hwio, (1, 1), 'SAME',
                                 dimension_numbers=dn2) + b2
    y = jnp.where(y >= 0, y, 0.2 * y)
    N, H, W, C = y.shape
    y = y.reshape(N, H // 2, 2, W // 2, 2, C).mean(axis=(2, 4))
    return jnp.transpose(y, (0, 3, 1, 2))


if __name__ == "__main__":
    N, Cin, Cout, H, W = 2, 4, 8, 16, 16

    key = jax.random.PRNGKey(0)
    kx, kw1, kb1, kw2, kb2 = jax.random.split(key, 5)

    x = jax.random.normal(kx, (N, Cin, H, W), jnp.float32)
    # Deterministic synthetic parameters (HWIO layout for convs).
    w1 = 0.1 * jax.random.normal(kw1, (3, 3, Cin, Cin), jnp.float32)
    b1 = 0.1 * jax.random.normal(kb1, (Cin,), jnp.float32)
    w2 = 0.1 * jax.random.normal(kw2, (3, 3, Cin, Cout), jnp.float32)
    b2 = 0.1 * jax.random.normal(kb2, (Cout,), jnp.float32)

    ref = jax.block_until_ready(disc_conv_reference(x, w1, b1, w2, b2))

    # f32 matmul path, fused-im2col conv (auto for small Cin): tight tolerance.
    out_f32 = jax.block_until_ready(
        disc_conv_forward(x, w1, b1, w2, b2, compute_dtype=jnp.float32))
    assert out_f32.shape == (N, Cout, H // 2, W // 2), out_f32.shape
    assert jnp.allclose(out_f32, ref, atol=1e-4, rtol=1e-4), \
        float(jnp.max(jnp.abs(out_f32 - ref)))

    # f32, forced 9-accumulated-matmul path (the Cin>=128 code path) + 2-step grid.
    out_acc = jax.block_until_ready(
        disc_conv_forward(x, w1, b1, w2, b2, compute_dtype=jnp.float32,
                          im2col_fused=False, batch_block=1))
    assert out_acc.shape == (N, Cout, H // 2, W // 2), out_acc.shape
    assert jnp.allclose(out_acc, ref, atol=1e-4, rtol=1e-4), \
        float(jnp.max(jnp.abs(out_acc - ref)))

    # bf16 matmul path (MXU rate / DMA bytes win on v6e/v7x): loose tolerance.
    out_bf16 = jax.block_until_ready(
        disc_conv_forward(x, w1, b1, w2, b2, compute_dtype=jnp.bfloat16))
    assert out_bf16.shape == (N, Cout, H // 2, W // 2), out_bf16.shape
    assert jnp.allclose(out_bf16, ref, atol=2e-2, rtol=2e-2), \
        float(jnp.max(jnp.abs(out_bf16 - ref)))

    print("KERNEL_OK")
</pallas_src>

<mosaic_0001>
module attributes {stable_mosaic.version = 11 : i64} {
  func.func @k(%arg0: i32, %arg1: memref<8x128xf32, #tpu.memory_space<vmem>>, %arg2: memref<8x128xf32, #tpu.memory_space<vmem>>, %arg3: memref<8x128xf32, #tpu.memory_space<vmem>>) attributes {dimension_semantics = [#tpu.dimension_semantics<arbitrary>], iteration_bounds = array<i64: 2>, scalar_prefetch = 0 : i64, scratch_operands = 0 : i64, tpu.core_type = #tpu.core_type<tc>, window_params = [{pipeline_mode = #tpu.pipeline_mode<synchronous>, transform_indices = @transform_0, window_bounds = array<i64: 8, 128>}, {transform_indices = @transform_1, window_bounds = array<i64: 8, 128>}, {transform_indices = @transform_2, window_bounds = array<i64: 8, 128>}]} {
    %c0 = arith.constant 0 : index
    %c0_0 = arith.constant 0 : index
    %0 = vector.load %arg2[%c0, %c0_0] : memref<8x128xf32, #tpu.memory_space<vmem>>, vector<8x128xf32>
    %c0_1 = arith.constant 0 : index
    %c0_2 = arith.constant 0 : index
    %1 = vector.load %arg1[%c0_1, %c0_2] : memref<8x128xf32, #tpu.memory_space<vmem>>, vector<8x128xf32>
    %2 = arith.addf %0, %1 : vector<8x128xf32>
    %c0_3 = arith.constant 0 : index
    %c0_4 = arith.constant 0 : index
    %3 = vector.load %arg3[%c0_3, %c0_4] : memref<8x128xf32, #tpu.memory_space<vmem>>, vector<8x128xf32>
    tpu.vector_store %arg3[%c0_3, %c0_4], %2 {strides = array<i32>} : memref<8x128xf32, #tpu.memory_space<vmem>>, vector<8x128xf32>,
    return
  }
  func.func @transform_0(%arg0: i32) -> (i32, i32) {
    %c0_i32 = arith.constant 0 : i32
    %c0_i32_0 = arith.constant 0 : i32
    %c0_i32_1 = arith.constant 0 : i32
    return %c0_i32, %c0_i32_0 : i32, i32
  }
  func.func @transform_1(%arg0: i32) -> (i32, i32) {
    %c0_i32 = arith.constant 0 : i32
    %c0_i32_0 = arith.constant 0 : i32
    return %arg0, %c0_i32 : i32, i32
  }
  func.func @transform_2(%arg0: i32) -> (i32, i32) {
    %c0_i32 = arith.constant 0 : i32
    %c0_i32_0 = arith.constant 0 : i32
    return %arg0, %c0_i32 : i32, i32
  }
}

module attributes {stable_mosaic.version = 11 : i64} {
  func.func @kernel(%arg0: i32, %arg1: memref<2x18x18x4xf32, #tpu.memory_space<vmem>>, %arg2: memref<36x4xf32, #tpu.memory_space<vmem>>, %arg3: memref<1x4xf32, #tpu.memory_space<vmem>>, %arg4: memref<36x8xf32, #tpu.memory_space<vmem>>, %arg5: memref<1x8xf32, #tpu.memory_space<vmem>>, %arg6: memref<2x64x8xf32, #tpu.memory_space<vmem>>, %arg7: memref<2x18x18x4xf32, #tpu.memory_space<vmem>>, %arg8: memref<256x8xf32, #tpu.memory_space<vmem>>) attributes {dimension_semantics = [#tpu.dimension_semantics<parallel>], iteration_bounds = array<i64: 1>, scalar_prefetch = 0 : i64, scratch_operands = 2 : i64, tpu.core_type = #tpu.core_type<tc>, window_params = [{transform_indices = @transform_0, window_bounds = array<i64: 2, 18, 18, 4>}, {pipeline_mode = #tpu.pipeline_mode<synchronous>, transform_indices = @transform_1, window_bounds = array<i64: 36, 4>}, {pipeline_mode = #tpu.pipeline_mode<synchronous>, transform_indices = @transform_2, window_bounds = array<i64: 1, 4>}, {pipeline_mode = #tpu.pipeline_mode<synchronous>, transform_indices = @transform_3, window_bounds = array<i64: 36, 8>}, {pipeline_mode = #tpu.pipeline_mode<synchronous>, transform_indices = @transform_4, window_bounds = array<i64: 1, 8>}, {transform_indices = @transform_5, window_bounds = array<i64: 2, 64, 8>}]} {
    %c0 = arith.constant 0 : index
    %c0_0 = arith.constant 0 : index
    %c0_1 = arith.constant 0 : index
    %c0_2 = arith.constant 0 : index
    %0 = vector.load %arg1[%c0, %c0_0, %c0_1, %c0_2] : memref<2x18x18x4xf32, #tpu.memory_space<vmem>>, vector<2x16x16x4xf32>
    %c0_3 = arith.constant 0 : index
    %c0_4 = arith.constant 0 : index
    %c1 = arith.constant 1 : index
    %c0_5 = arith.constant 0 : index
    %1 = vector.load %arg1[%c0_3, %c0_4, %c1, %c0_5] : memref<2x18x18x4xf32, #tpu.memory_space<vmem>>, vector<2x16x16x4xf32>
    %c0_6 = arith.constant 0 : index
    %c0_7 = arith.constant 0 : index
    %c2 = arith.constant 2 : index
    %c0_8 = arith.constant 0 : index
    %2 = vector.load %arg1[%c0_6, %c0_7, %c2, %c0_8] : memref<2x18x18x4xf32, #tpu.memory_space<vmem>>, vector<2x16x16x4xf32>
    %c0_9 = arith.constant 0 : index
    %c1_10 = arith.constant 1 : index
    %c0_11 = arith.constant 0 : index
    %c0_12 = arith.constant 0 : index
    %3 = vector.load %arg1[%c0_9, %c1_10, %c0_11, %c0_12] : memref<2x18x18x4xf32, #tpu.memory_space<vmem>>, vector<2x16x16x4xf32>
    %c0_13 = arith.constant 0 : index
    %c1_14 = arith.constant 1 : index
    %c1_15 = arith.constant 1 : index
    %c0_16 = arith.constant 0 : index
    %4 = vector.load %arg1[%c0_13, %c1_14, %c1_15, %c0_16] : memref<2x18x18x4xf32, #tpu.memory_space<vmem>>, vector<2x16x16x4xf32>
    %c0_17 = arith.constant 0 : index
    %c1_18 = arith.constant 1 : index
    %c2_19 = arith.constant 2 : index
    %c0_20 = arith.constant 0 : index
    %5 = vector.load %arg1[%c0_17, %c1_18, %c2_19, %c0_20] : memref<2x18x18x4xf32, #tpu.memory_space<vmem>>, vector<2x16x16x4xf32>
    %c0_21 = arith.constant 0 : index
    %c2_22 = arith.constant 2 : index
    %c0_23 = arith.constant 0 : index
    %c0_24 = arith.constant 0 : index
    %6 = vector.load %arg1[%c0_21, %c2_22, %c0_23, %c0_24] : memref<2x18x18x4xf32, #tpu.memory_space<vmem>>, vector<2x16x16x4xf32>
    %c0_25 = arith.constant 0 : index
    %c2_26 = arith.constant 2 : index
    %c1_27 = arith.constant 1 : index
    %c0_28 = arith.constant 0 : index
    %7 = vector.load %arg1[%c0_25, %c2_26, %c1_27, %c0_28] : memref<2x18x18x4xf32, #tpu.memory_space<vmem>>, vector<2x16x16x4xf32>
    %c0_29 = arith.constant 0 : index
    %c2_30 = arith.constant 2 : index
    %c2_31 = arith.constant 2 : index
    %c0_32 = arith.constant 0 : index
    %8 = vector.load %arg1[%c0_29, %c2_30, %c2_31, %c0_32] : memref<2x18x18x4xf32, #tpu.memory_space<vmem>>, vector<2x16x16x4xf32>
    %9 = tpu.concatenate %0, %1, %2, %3, %4, %5, %6, %7, %8 in 3 : vector<2x16x16x4xf32>, vector<2x16x16x4xf32>, vector<2x16x16x4xf32>, vector<2x16x16x4xf32>, vector<2x16x16x4xf32>, vector<2x16x16x4xf32>, vector<2x16x16x4xf32>, vector<2x16x16x4xf32>, vector<2x16x16x4xf32> -> vector<2x16x16x36xf32>
    %10 = vector.shape_cast %9 : vector<2x16x16x36xf32> to vector<512x36xf32>
    %c0_33 = arith.constant 0 : index
    %c0_34 = arith.constant 0 : index
    %11 = vector.load %arg2[%c0_33, %c0_34] : memref<36x4xf32, #tpu.memory_space<vmem>>, vector<36x4xf32>
    %cst = arith.constant dense<0.000000e+00> : vector<512x4xf32>
    %12 = tpu.matmul %10, %11, %cst {dimension_numbers = #tpu.dot_dimension_numbers<[1], [0], [0], [1], [0, 0, 1, 1], [], []>} : vector<512x36xf32>, vector<36x4xf32>, vector<512x4xf32> -> vector<512x4xf32>
    %cst_35 = arith.constant 0.231125087 : f32
    %13 = vector.broadcast %cst_35 : f32 to vector<512x4xf32>
    %14 = arith.mulf %13, %12 : vector<512x4xf32>
    %c0_36 = arith.constant 0 : index
    %c0_37 = arith.constant 0 : index
    %15 = vector.load %arg3[%c0_36, %c0_37] : memref<1x4xf32, #tpu.memory_space<vmem>>, vector<1x4xf32>
    %16 = vector.broadcast %15 : vector<1x4xf32> to vector<512x4xf32>
    %17 = arith.addf %14, %16 : vector<512x4xf32>
    %cst_38 = arith.constant 0.000000e+00 : f32
    %18 = vector.broadcast %cst_38 : f32 to vector<512x4xf32>
    %19 = arith.cmpf oge, %17, %18 : vector<512x4xf32>
    %cst_39 = arith.constant 2.000000e-01 : f32
    %20 = vector.broadcast %cst_39 : f32 to vector<512x4xf32>
    %21 = arith.mulf %20, %17 : vector<512x4xf32>
    %22 = arith.select %19, %17, %21 : vector<512x4xi1>, vector<512x4xf32>
    %cst_40 = arith.constant 0.000000e+00 : f32
    %23 = vector.broadcast %cst_40 : f32 to vector<2x16x1x4xf32>
    %24 = vector.shape_cast %22 : vector<512x4xf32> to vector<2x16x16x4xf32>
    %25 = tpu.concatenate %23, %24, %23 in 2 : vector<2x16x1x4xf32>, vector<2x16x16x4xf32>, vector<2x16x1x4xf32> -> vector<2x16x18x4xf32>
    %cst_41 = arith.constant 0.000000e+00 : f32
    %26 = vector.broadcast %cst_41 : f32 to vector<2x1x18x4xf32>
    %c0_42 = arith.constant 0 : index
    %c0_43 = arith.constant 0 : index
    %c0_44 = arith.constant 0 : index
    %c0_45 = arith.constant 0 : index
    %27 = vector.load %arg7[%c0_42, %c0_43, %c0_44, %c0_45] : memref<2x18x18x4xf32, #tpu.memory_space<vmem>>, vector<2x1x18x4xf32>
    tpu.vector_store %arg7[%c0_42, %c0_43, %c0_44, %c0_45], %26 {strides = array<i32>} : memref<2x18x18x4xf32, #tpu.memory_space<vmem>>, vector<2x1x18x4xf32>,
    %c0_46 = arith.constant 0 : index
    %c17 = arith.constant 17 : index
    %c0_47 = arith.constant 0 : index
    %c0_48 = arith.constant 0 : index
    %28 = vector.load %arg7[%c0_46, %c17, %c0_47, %c0_48] : memref<2x18x18x4xf32, #tpu.memory_space<vmem>>, vector<2x1x18x4xf32>
    tpu.vector_store %arg7[%c0_46, %c17, %c0_47, %c0_48], %26 {strides = array<i32>} : memref<2x18x18x4xf32, #tpu.memory_space<vmem>>, vector<2x1x18x4xf32>,
    %c0_49 = arith.constant 0 : index
    %c1_50 = arith.constant 1 : index
    %c0_51 = arith.constant 0 : index
    %c0_52 = arith.constant 0 : index
    %29 = vector.load %arg7[%c0_49, %c1_50, %c0_51, %c0_52] : memref<2x18x18x4xf32, #tpu.memory_space<vmem>>, vector<2x16x18x4xf32>
    tpu.vector_store %arg7[%c0_49, %c1_50, %c0_51, %c0_52], %25 {strides = array<i32>} : memref<2x18x18x4xf32, #tpu.memory_space<vmem>>, vector<2x16x18x4xf32>,
    %c0_53 = arith.constant 0 : index
    %c0_54 = arith.constant 0 : index
    %c0_55 = arith.constant 0 : index
    %c0_56 = arith.constant 0 : index
    %30 = vector.load %arg7[%c0_53, %c0_54, %c0_55, %c0_56] : memref<2x18x18x4xf32, #tpu.memory_space<vmem>>, vector<2x16x16x4xf32>
    %c0_57 = arith.constant 0 : index
    %c0_58 = arith.constant 0 : index
    %c1_59 = arith.constant 1 : index
    %c0_60 = arith.constant 0 : index
    %31 = vector.load %arg7[%c0_57, %c0_58, %c1_59, %c0_60] : memref<2x18x18x4xf32, #tpu.memory_space<vmem>>, vector<2x16x16x4xf32>
    %c0_61 = arith.constant 0 : index
    %c0_62 = arith.constant 0 : index
    %c2_63 = arith.constant 2 : index
    %c0_64 = arith.constant 0 : index
    %32 = vector.load %arg7[%c0_61, %c0_62, %c2_63, %c0_64] : memref<2x18x18x4xf32, #tpu.memory_space<vmem>>, vector<2x16x16x4xf32>
    %c0_65 = arith.constant 0 : index
    %c1_66 = arith.constant 1 : index
    %c0_67 = arith.constant 0 : index
    %c0_68 = arith.constant 0 : index
    %33 = vector.load %arg7[%c0_65, %c1_66, %c0_67, %c0_68] : memref<2x18x18x4xf32, #tpu.memory_space<vmem>>, vector<2x16x16x4xf32>
    %c0_69 = arith.constant 0 : index
    %c1_70 = arith.constant 1 : index
    %c1_71 = arith.constant 1 : index
    %c0_72 = arith.constant 0 : index
    %34 = vector.load %arg7[%c0_69, %c1_70, %c1_71, %c0_72] : memref<2x18x18x4xf32, #tpu.memory_space<vmem>>, vector<2x16x16x4xf32>
    %c0_73 = arith.constant 0 : index
    %c1_74 = arith.constant 1 : index
    %c2_75 = arith.constant 2 : index
    %c0_76 = arith.constant 0 : index
    %35 = vector.load %arg7[%c0_73, %c1_74, %c2_75, %c0_76] : memref<2x18x18x4xf32, #tpu.memory_space<vmem>>, vector<2x16x16x4xf32>
    %c0_77 = arith.constant 0 : index
    %c2_78 = arith.constant 2 : index
    %c0_79 = arith.constant 0 : index
    %c0_80 = arith.constant 0 : index
    %36 = vector.load %arg7[%c0_77, %c2_78, %c0_79, %c0_80] : memref<2x18x18x4xf32, #tpu.memory_space<vmem>>, vector<2x16x16x4xf32>
    %c0_81 = arith.constant 0 : index
    %c2_82 = arith.constant 2 : index
    %c1_83 = arith.constant 1 : index
    %c0_84 = arith.constant 0 : index
    %37 = vector.load %arg7[%c0_81, %c2_82, %c1_83, %c0_84] : memref<2x18x18x4xf32, #tpu.memory_space<vmem>>, vector<2x16x16x4xf32>
    %c0_85 = arith.constant 0 : index
    %c2_86 = arith.constant 2 : index
    %c2_87 = arith.constant 2 : index
    %c0_88 = arith.constant 0 : index
    %38 = vector.load %arg7[%c0_85, %c2_86, %c2_87, %c0_88] : memref<2x18x18x4xf32, #tpu.memory_space<vmem>>, vector<2x16x16x4xf32>
    %39 = tpu.concatenate %30, %31, %32, %33, %34, %35, %36, %37, %38 in 3 : vector<2x16x16x4xf32>, vector<2x16x16x4xf32>, vector<2x16x16x4xf32>, vector<2x16x16x4xf32>, vector<2x16x16x4xf32>, vector<2x16x16x4xf32>, vector<2x16x16x4xf32>, vector<2x16x16x4xf32>, vector<2x16x16x4xf32> -> vector<2x16x16x36xf32>
    %40 = vector.shape_cast %39 : vector<2x16x16x36xf32> to vector<512x36xf32>
    %c0_89 = arith.constant 0 : index
    %c0_90 = arith.constant 0 : index
    %41 = vector.load %arg4[%c0_89, %c0_90] : memref<36x8xf32, #tpu.memory_space<vmem>>, vector<36x8xf32>
    %cst_91 = arith.constant dense<0.000000e+00> : vector<512x8xf32>
    %42 = tpu.matmul %40, %41, %cst_91 {dimension_numbers = #tpu.dot_dimension_numbers<[1], [0], [0], [1], [0, 0, 1, 1], [], []>} : vector<512x36xf32>, vector<36x8xf32>, vector<512x8xf32> -> vector<512x8xf32>
    %cst_92 = arith.constant 0.231125087 : f32
    %43 = vector.broadcast %cst_92 : f32 to vector<512x8xf32>
    %44 = arith.mulf %43, %42 : vector<512x8xf32>
    %c0_93 = arith.constant 0 : index
    %c0_94 = arith.constant 0 : index
    %45 = vector.load %arg5[%c0_93, %c0_94] : memref<1x8xf32, #tpu.memory_space<vmem>>, vector<1x8xf32>
    %46 = vector.broadcast %45 : vector<1x8xf32> to vector<512x8xf32>
    %47 = arith.addf %44, %46 : vector<512x8xf32>
    %cst_95 = arith.constant 0.000000e+00 : f32
    %48 = vector.broadcast %cst_95 : f32 to vector<512x8xf32>
    %49 = arith.cmpf oge, %47, %48 : vector<512x8xf32>
    %cst_96 = arith.constant 2.000000e-01 : f32
    %50 = vector.broadcast %cst_96 : f32 to vector<512x8xf32>
    %51 = arith.mulf %50, %47 : vector<512x8xf32>
    %52 = arith.select %49, %47, %51 : vector<512x8xi1>, vector<512x8xf32>
    %53 = vector.shape_cast %52 : vector<512x8xf32> to vector<16x32x8xf32>
    %54 = vector.extract_strided_slice %53 {offsets = [0, 0, 0], sizes = [16, 16, 8], strides = [1, 1, 1]} : vector<16x32x8xf32> to vector<16x16x8xf32>
    %55 = vector.extract_strided_slice %53 {offsets = [0, 16, 0], sizes = [16, 16, 8], strides = [1, 1, 1]} : vector<16x32x8xf32> to vector<16x16x8xf32>
    %56 = arith.addf %54, %55 : vector<16x16x8xf32>
    %57 = vector.shape_cast %56 : vector<16x16x8xf32> to vector<256x8xf32>
    %c0_97 = arith.constant 0 : index
    %c0_98 = arith.constant 0 : index
    %58 = vector.load %arg8[%c0_97, %c0_98] : memref<256x8xf32, #tpu.memory_space<vmem>>, vector<256x8xf32>
    tpu.vector_store %arg8[%c0_97, %c0_98], %57 {strides = array<i32>} : memref<256x8xf32, #tpu.memory_space<vmem>>, vector<256x8xf32>,
    %c0_99 = arith.constant 0 : index
    %c0_100 = arith.constant 0 : index
    %59 = tpu.strided_load %arg8[%c0_99, %c0_100] {strides = array<i32: 2, 1>} : memref<256x8xf32, #tpu.memory_space<vmem>>, vector<128x8xf32>
    %c1_101 = arith.constant 1 : index
    %c0_102 = arith.constant 0 : index
    %60 = tpu.strided_load %arg8[%c1_101, %c0_102] {strides = array<i32: 2, 1>} : memref<256x8xf32, #tpu.memory_space<vmem>>, vector<128x8xf32>
    %61 = arith.addf %59, %60 : vector<128x8xf32>
    %cst_103 = arith.constant 2.500000e-01 : f32
    %62 = vector.broadcast %cst_103 : f32 to vector<128x8xf32>
    %63 = arith.mulf %62, %61 : vector<128x8xf32>
    %64 = vector.shape_cast %63 : vector<128x8xf32> to vector<2x64x8xf32>
    %c0_104 = arith.constant 0 : index
    %c0_105 = arith.constant 0 : index
    %c0_106 = arith.constant 0 : index
    %65 = vector.load %arg6[%c0_104, %c0_105, %c0_106] : memref<2x64x8xf32, #tpu.memory_space<vmem>>, vector<2x64x8xf32>
    tpu.vector_store %arg6[%c0_104, %c0_105, %c0_106], %64 {strides = array<i32>} : memref<2x64x8xf32, #tpu.memory_space<vmem>>, vector<2x64x8xf32>,
    return
  }
  func.func @transform_0(%arg0: i32) -> (i32, i32, i32, i32) {
    %c0_i32 = arith.constant 0 : i32
    %c0_i32_0 = arith.constant 0 : i32
    %c0_i32_1 = arith.constant 0 : i32
    %c0_i32_2 = arith.constant 0 : i32
    return %arg0, %c0_i32, %c0_i32_0, %c0_i32_1 : i32, i32, i32, i32
  }
  func.func @transform_1(%arg0: i32) -> (i32, i32) {
    %c0_i32 = arith.constant 0 : i32
    %c0_i32_0 = arith.constant 0 : i32
    %c0_i32_1 = arith.constant 0 : i32
    return %c0_i32, %c0_i32_0 : i32, i32
  }
  func.func @transform_2(%arg0: i32) -> (i32, i32) {
    %c0_i32 = arith.constant 0 : i32
    %c0_i32_0 = arith.constant 0 : i32
    %c0_i32_1 = arith.constant 0 : i32
    return %c0_i32, %c0_i32_0 : i32, i32
  }
  func.func @transform_3(%arg0: i32) -> (i32, i32) {
    %c0_i32 = arith.constant 0 : i32
    %c0_i32_0 = arith.constant 0 : i32
    %c0_i32_1 = arith.constant 0 : i32
    return %c0_i32, %c0_i32_0 : i32, i32
  }
  func.func @transform_4(%arg0: i32) -> (i32, i32) {
    %c0_i32 = arith.constant 0 : i32
    %c0_i32_0 = arith.constant 0 : i32
    %c0_i32_1 = arith.constant 0 : i32
    return %c0_i32, %c0_i32_0 : i32, i32
  }
  func.func @transform_5(%arg0: i32) -> (i32, i32, i32) {
    %c0_i32 = arith.constant 0 : i32
    %c0_i32_0 = arith.constant 0 : i32
    %c0_i32_1 = arith.constant 0 : i32
    return %arg0, %c0_i32, %c0_i32_0 : i32, i32, i32
  }
}

</mosaic_0001>

<llo_original>
// kernel: tpu_custom_call.1
$region0: #{tpu_custom_call.1}
  #allocation0 [shape = 'u32[]', space=smem, size = 0x4, offset = 0x4, fixed_abs, tag = 'smem constant byte address 0x4 - core index']
  #allocation1 [shape = 'u32[72,128]{1,0:T(1,128)}', space=vmem, size = 0x9000, scoped, tag = 'internal scratch']
  %s0 = inlined_call_operand.hbm [shape: f32[8,128], index: 0, kind: input, shape index: {}]
  %s1 = inlined_call_operand.hbm [shape: f32[16,128], index: 1, kind: input, shape index: {}]
  %s2 = inlined_call_operand.hbm [shape: f32[16,128], index: 2, kind: output, shape index: {}]
  %s3 = sld [smem:[#allocation0]]
  $region49: #{tpu_custom_call.1} parent=0
    _
  %s5 = ssub.s32 1, %s3
  %s6 = scalar_select 0, %s5, %s3
  $region1: #{tpu_custom_call.1} parent=0
    #allocation2 [shape = 'u8[4096]{0}', space=vmem, size = 0x1000, scoped, tag = 'input window, operand 0, single buffered']
    #allocation3 [shape = 's32[2]{0}', space=sflag, size = 0x8, scoped, tag = 'scoped memory for tpu_custom_call.1']
    #allocation4 [shape = 's32[2]{0}', space=sflag, size = 0x8, scoped, tag = 'scoped memory for tpu_custom_call.1']
    #allocation5 [shape = 'u8[8192]{0}', space=vmem, size = 0x2000, scoped, tag = 'input window, operand 1']
    #allocation6 [shape = 's32[2]{0}', space=sflag, size = 0x8, scoped, tag = 'scoped memory for tpu_custom_call.1']
    #allocation7 [shape = 'u8[8192]{0}', space=vmem, size = 0x2000, scoped, tag = 'output window, operand 0']
    %7 = vsyncpa [#allocation3], 0
    %8 = vsyncpa [#allocation6], 0
    %s9 = scalar_lea.sflag [#allocation6], 1
    %10 = vsyncpa %s9, 0
    %11 = vsyncpa [#allocation4], 0
    %s12 = scalar_lea.sflag [#allocation4], 1
    %13 = vsyncpa %s12, 0
    loop: start=0, step=1, limit=4
    $region2: #{tpu_custom_call.1} parent=1 // loop_pre_header
      _
    $region3: #{tpu_custom_call.1} parent=1 // loop_header
      %s15 = sphi 0, %s19
      %p16 = scmp.ge.s32.totalorder %s15, 4
      %s23 = sphi 0, %s23
      %s25 = sphi 0, %s23
      %s26 = sphi 0, %s25
      %s40 = sphi 0, %s26
      %s46 = sphi 0, %s48
      %s49 = sphi 0, %s46
      %s50 = sphi 0, %s49
      %s66 = sphi 0, %s50
      %s72 = sphi 0, %s74
      %s75 = sphi 0, %s72
      %s76 = sphi 0, %s75
      %s92 = sphi 0, %s76
    $region4: #{tpu_custom_call.1} parent=1 // loop_header_branch
      %18 = sbr.rel (%p16) target = $region8
    $region5: #{tpu_custom_call.1} parent=1 // loop_body
      %s20 = ssub.s32 %s15, 1
      %s21 = ssub.s32 %s15, 2
      %s22 = sadd.s32 %s15, 1
      %s24 = sadd.s32 %s23, 1
      %p27 = scmp.eq.s32.totalorder %s15, 1
      %p28 = scmp.ne.s32.totalorder %s23, %s25
      %p29 = scmp.eq.s32.totalorder %s15, 0
      %p30 = por %p28, %p29
      %p31 = scmp.ne.s32.totalorder %s23, %s25
      %p32 = scmp.eq.s32.totalorder %s20, 1
      %p33 = por %p31, %p32
      %p34 = scmp.ne.s32.totalorder %s25, %s26
      %p35 = scmp.eq.s32.totalorder %s20, 0
      %p36 = por %p34, %p35
      %p37 = scmp.ne.s32.totalorder %s25, %s26
      %p38 = scmp.eq.s32.totalorder %s21, 1
      %p39 = por %p37, %p38
      %p41 = scmp.ne.s32.totalorder %s26, %s40
      %p42 = scmp.eq.s32.totalorder %s21, 0
      %p43 = por %p41, %p42
      %s44 = ssub.s32 %s15, %s22
      %p45 = scmp.eq.s32.totalorder %s44, 0
      %s47 = sadd.s32 %s46, 1
      %s48 = scalar_select %p45, %s46, %s47
      %p51 = pneg %p45
      %p52 = scmp.eq.s32.totalorder %s15, 1
      %p53 = por %p51, %p52
      %p54 = scmp.ne.s32.totalorder %s46, %s49
      %p55 = scmp.eq.s32.totalorder %s15, 0
      %p56 = por %p54, %p55
      %p57 = scmp.ne.s32.totalorder %s46, %s49
      %p58 = scmp.eq.s32.totalorder %s20, 1
      %p59 = por %p57, %p58
      %p60 = scmp.ne.s32.totalorder %s49, %s50
      %p61 = scmp.eq.s32.totalorder %s20, 0
      %p62 = por %p60, %p61
      %p63 = scmp.ne.s32.totalorder %s49, %s50
      %p64 = scmp.eq.s32.totalorder %s21, 1
      %p65 = por %p63, %p64
      %p67 = scmp.ne.s32.totalorder %s50, %s66
      %p68 = scmp.eq.s32.totalorder %s21, 0
      %p69 = por %p67, %p68
      %s70 = ssub.s32 %s15, %s22
      %p71 = scmp.eq.s32.totalorder %s70, 0
      %s73 = sadd.s32 %s72, 1
      %s74 = scalar_select %p71, %s72, %s73
      %p77 = pneg %p71
      %p78 = scmp.eq.s32.totalorder %s15, 1
      %p79 = por %p77, %p78
      %p80 = scmp.ne.s32.totalorder %s72, %s75
      %p81 = scmp.eq.s32.totalorder %s15, 0
      %p82 = por %p80, %p81
      %p83 = scmp.ne.s32.totalorder %s72, %s75
      %p84 = scmp.eq.s32.totalorder %s20, 1
      %p85 = por %p83, %p84
      %p86 = scmp.ne.s32.totalorder %s75, %s76
      %p87 = scmp.eq.s32.totalorder %s20, 0
      %p88 = por %p86, %p87
      %p89 = scmp.ne.s32.totalorder %s75, %s76
      %p90 = scmp.eq.s32.totalorder %s21, 1
      %p91 = por %p89, %p90
      %p93 = scmp.ne.s32.totalorder %s76, %s92
      %p94 = scmp.eq.s32.totalorder %s21, 0
      %p95 = por %p93, %p94
      %p96 = scmp.le.s32.totalorder 1, %s15
      %p97 = scmp.lt.s32.totalorder %s15, 3
      %p98 = pnand %p96, %p97
      %p99 = pneg %p98
      // Predicated region
      $region9: #{tpu_custom_call.1} parent=5 // pred_check
        _
      $region10: #{tpu_custom_call.1} parent=5 // pred_check_branch
        %101 = sbr.rel (%p98) target = $region12
      $region11: #{tpu_custom_call.1} parent=5 // pred_region
        %s102 = ssub.s32 %s15, 1
        // Predicated region
        $region13: #{tpu_custom_call.1} parent=11 // pred_check
          %p103 = pneg %p36
        $region14: #{tpu_custom_call.1} parent=11 // pred_check_branch
          %105 = sbr.rel (%p103) target = $region16
        $region15: #{tpu_custom_call.1} parent=11 // pred_region
          %107 = vsyncadd [#allocation3], 0
          %s109 = sshll.u32 %s0, 4
          %s110 = int_to_ptr.hbm [resolvable:$true] %s109
          %s111 = sshll.u32 [#allocation2], 4
          %s112 = int_to_ptr.vmem [resolvable:$true] %s111
          %114 = dma.hbm_to_vmem [thread:$0]  %s110, 128, %s112, [#allocation3]
        $region16: #{tpu_custom_call.1} parent=11 // pred_fallthru
          _
      $region12: #{tpu_custom_call.1} parent=5 // pred_fallthru
        _
      %p115 = scmp.lt.s32.totalorder %s15, 2
      // Predicated region
      $region17: #{tpu_custom_call.1} parent=5 // pred_check
        %p116 = pneg %p115
      $region18: #{tpu_custom_call.1} parent=5 // pred_check_branch
        %118 = sbr.rel (%p116) target = $region20
      $region19: #{tpu_custom_call.1} parent=5 // pred_region
        // Predicated region
        $region21: #{tpu_custom_call.1} parent=19 // pred_check
          %p119 = pneg %p56
        $region22: #{tpu_custom_call.1} parent=19 // pred_check_branch
          %121 = sbr.rel (%p119) target = $region24
        $region23: #{tpu_custom_call.1} parent=19 // pred_region
          %s122 = sand.u32 %s46, 1
          %s123 = scalar_lea.sflag [#allocation6], %s122
          %s124 = sand.u32 %s46, 1
          %s125 = smul.addr %s124, 8
          %s126 = scalar_lea.vmem [#allocation5], %s125
          %128 = vsyncadd %s123, 0
          %s129 = smul.addr %s15, 8
          %s130 = scalar_lea.hbm %s1, %s129
          %s132 = sshll.u32 %s130, 4
          %s133 = int_to_ptr.hbm [resolvable:$true] %s132
          %s134 = sshll.u32 %s126, 4
          %s135 = int_to_ptr.vmem [resolvable:$true] %s134
          %137 = dma.hbm_to_vmem [thread:$0]  %s133, 128, %s135, %s123
        $region24: #{tpu_custom_call.1} parent=19 // pred_fallthru
          _
      $region20: #{tpu_custom_call.1} parent=5 // pred_fallthru
        _
      %p138 = scmp.le.s32.totalorder 1, %s15
      %p139 = scmp.lt.s32.totalorder %s15, 3
      %p140 = pnand %p138, %p139
      %p141 = pneg %p140
      // Predicated region
      $region25: #{tpu_custom_call.1} parent=5 // pred_check
        _
      $region26: #{tpu_custom_call.1} parent=5 // pred_check_branch
        %143 = sbr.rel (%p140) target = $region28
      $region27: #{tpu_custom_call.1} parent=5 // pred_region
        %s144 = ssub.s32 %s15, 1
        // Predicated region
        $region29: #{tpu_custom_call.1} parent=27 // pred_check
          %p145 = pneg %p36
        $region30: #{tpu_custom_call.1} parent=27 // pred_check_branch
          %147 = sbr.rel (%p145) target = $region32
        $region31: #{tpu_custom_call.1} parent=27 // pred_region
          %149 = dma.done [#allocation3], 128
        $region32: #{tpu_custom_call.1} parent=27 // pred_fallthru
          _
        %s150 = sand.u32 %s49, 1
        %s151 = scalar_lea.sflag [#allocation6], %s150
        %s152 = sand.u32 %s49, 1
        %s153 = smul.addr %s152, 8
        %s154 = scalar_lea.vmem [#allocation5], %s153
        // Predicated region
        $region33: #{tpu_custom_call.1} parent=27 // pred_check
          %p155 = pneg %p62
        $region34: #{tpu_custom_call.1} parent=27 // pred_check_branch
          %157 = sbr.rel (%p155) target = $region36
        $region35: #{tpu_custom_call.1} parent=27 // pred_region
          %159 = dma.done %s151, 128
        $region36: #{tpu_custom_call.1} parent=27 // pred_fallthru
          _
        %p160 = pneg %p36
        %p161 = pneg %p33
        %s162 = sand.u32 %s49, 1
        %s163 = scalar_lea.sflag [#allocation6], %s162
        %s164 = sand.u32 %s49, 1
        %s165 = smul.addr %s164, 8
        %s166 = scalar_lea.vmem [#allocation5], %s165
        %p167 = pneg %p62
        %p168 = pneg %p59
        %p169 = pneg %p88
        %p170 = pneg %p85
        %s171 = sand.u32 %s75, 1
        %s172 = scalar_lea.sflag [#allocation4], %s171
        %s173 = sand.u32 %s75, 1
        %s174 = smul.addr %s173, 8
        %s175 = scalar_lea.vmem [#allocation7], %s174
        %v176 = vld [vmem:[%s154] sm:$0xff]
        %v177 = vld [vmem:[#allocation2] sm:$0xff]
        %v178 = vadd.f32 %v176, %v177
        %179 = vst [vmem:[%s175] sm:$0xff] %v178
        %s180 = sand.u32 %s75, 1
        %s181 = scalar_lea.sflag [#allocation4], %s180
        %s182 = sand.u32 %s75, 1
        %s183 = smul.addr %s182, 8
        %s184 = scalar_lea.vmem [#allocation7], %s183
        // Predicated region
        $region37: #{tpu_custom_call.1} parent=27 // pred_check
          %p185 = pneg %p85
        $region38: #{tpu_custom_call.1} parent=27 // pred_check_branch
          %187 = sbr.rel (%p185) target = $region40
        $region39: #{tpu_custom_call.1} parent=27 // pred_region
          %189 = vsyncadd %s181, 0
          %s190 = smul.addr %s20, 8
          %s191 = scalar_lea.hbm %s2, %s190
          %s193 = sshll.u32 %s184, 4
          %s194 = int_to_ptr.vmem [resolvable:$true] %s193
          %s195 = sshll.u32 %s191, 4
          %s196 = int_to_ptr.hbm [resolvable:$true] %s195
          %198 = dma.vmem_to_hbm [thread:$0]  %s194, 128, %s196, %s181
        $region40: #{tpu_custom_call.1} parent=27 // pred_fallthru
          _
      $region28: #{tpu_custom_call.1} parent=5 // pred_fallthru
        _
      %p199 = scmp.le.s32.totalorder 2, %s15
      // Predicated region
      $region41: #{tpu_custom_call.1} parent=5 // pred_check
        %p200 = pneg %p199
      $region42: #{tpu_custom_call.1} parent=5 // pred_check_branch
        %202 = sbr.rel (%p200) target = $region44
      $region43: #{tpu_custom_call.1} parent=5 // pred_region
        %s203 = ssub.s32 %s15, 2
        // Predicated region
        $region45: #{tpu_custom_call.1} parent=43 // pred_check
          %p204 = pneg %p91
        $region46: #{tpu_custom_call.1} parent=43 // pred_check_branch
          %206 = sbr.rel (%p204) target = $region48
        $region47: #{tpu_custom_call.1} parent=43 // pred_region
          %s207 = sand.u32 %s76, 1
          %s208 = scalar_lea.sflag [#allocation4], %s207
          %s209 = sand.u32 %s76, 1
          %s210 = smul.addr %s209, 8
          %s211 = scalar_lea.vmem [#allocation7], %s210
          %213 = dma.done %s208, 128
        $region48: #{tpu_custom_call.1} parent=43 // pred_fallthru
          _
      $region44: #{tpu_custom_call.1} parent=5 // pred_fallthru
        _
    $region6: #{tpu_custom_call.1} parent=1 // loop_footer
      %s19 = sadd.s32 1, %s15
    $region7: #{tpu_custom_call.1} parent=1 // loop_footer_branch
      %14 = sbr.rel target = $region3
    $region8: #{tpu_custom_call.1} parent=1 // loop_exit
      _
    %214 = vsyncpa [#allocation3], 1
    %s215 = scalar_lea.sflag [#allocation3], 1
    %216 = vsyncpa %s215, 1
    %217 = vsyncpa [#allocation6], 1
    %s218 = scalar_lea.sflag [#allocation6], 1
    %219 = vsyncpa %s218, 1
    %220 = vsyncpa [#allocation4], 1
    %s221 = scalar_lea.sflag [#allocation4], 1
    %222 = vsyncpa %s221, 1

// kernel: tpu_custom_call.1
$region0: #{tpu_custom_call.1}
  #allocation0 [shape = 'u32[]', space=smem, size = 0x4, offset = 0x4, fixed_abs, tag = 'smem constant byte address 0x4 - core index']
  #allocation1 [shape = 'u32[72,128]{1,0:T(1,128)}', space=vmem, size = 0x9000, scoped, tag = 'internal scratch']
  #allocation2 [shape = 'f32[2,18,18,4]{3,2,1,0:T(8,128)}', space=vmem, size = 0x6c000, scoped, tag = 'scratch operand']
  #allocation3 [shape = 'f32[256,8]{1,0:T(8,128)}', space=vmem, size = 0x20000, scoped, tag = 'scratch operand']
  %s0 = inlined_call_operand.vmem [shape: f32[2,18,18,4], index: 0, kind: input, shape index: {}]
  %s1 = inlined_call_operand.vmem [shape: f32[36,4], index: 1, kind: input, shape index: {}]
  %s2 = inlined_call_operand.vmem [shape: f32[1,4], index: 2, kind: input, shape index: {}]
  %s3 = inlined_call_operand.vmem [shape: f32[36,8], index: 3, kind: input, shape index: {}]
  %s4 = inlined_call_operand.vmem [shape: f32[1,8], index: 4, kind: input, shape index: {}]
  %s5 = inlined_call_operand.vmem [shape: f32[2,64,8], index: 5, kind: output, shape index: {}]
  %s6 = sld [smem:[#allocation0]]
  $region30: #{tpu_custom_call.1} parent=0
    _
  %s8 = ssub.s32 1, %s6
  %s9 = scalar_select 0, %s8, %s6
  // Predicated region
  $region2: #{tpu_custom_call.1} parent=0 // pred_check
    _
  $region3: #{tpu_custom_call.1} parent=0 // pred_check_branch
    %11 = sbr.rel (0) target = $region5
  $region4: #{tpu_custom_call.1} parent=0 // pred_region
    _
  $region5: #{tpu_custom_call.1} parent=0 // pred_fallthru
    _
  // Predicated region
  $region6: #{tpu_custom_call.1} parent=0 // pred_check
    _
  $region7: #{tpu_custom_call.1} parent=0 // pred_check_branch
    %13 = sbr.rel (0) target = $region9
  $region8: #{tpu_custom_call.1} parent=0 // pred_region
    _
  $region9: #{tpu_custom_call.1} parent=0 // pred_fallthru
    _
  // Predicated region
  $region10: #{tpu_custom_call.1} parent=0 // pred_check
    _
  $region11: #{tpu_custom_call.1} parent=0 // pred_check_branch
    %15 = sbr.rel (0) target = $region13
  $region12: #{tpu_custom_call.1} parent=0 // pred_region
    _
  $region13: #{tpu_custom_call.1} parent=0 // pred_fallthru
    _
  // Predicated region
  $region14: #{tpu_custom_call.1} parent=0 // pred_check
    _
  $region15: #{tpu_custom_call.1} parent=0 // pred_check_branch
    %17 = sbr.rel (0) target = $region17
  $region16: #{tpu_custom_call.1} parent=0 // pred_region
    _
  $region17: #{tpu_custom_call.1} parent=0 // pred_fallthru
    _
  // Predicated region
  $region18: #{tpu_custom_call.1} parent=0 // pred_check
    _
  $region19: #{tpu_custom_call.1} parent=0 // pred_check_branch
    %19 = sbr.rel (0) target = $region21
  $region20: #{tpu_custom_call.1} parent=0 // pred_region
    _
  $region21: #{tpu_custom_call.1} parent=0 // pred_fallthru
    _
  %v20 = vld [vmem:[%s0] sm:$0xff]
  %v21 = vld [vmem:[%s0 + $0x8] sm:$0xff]
  %v22 = vld [vmem:[%s0 + $0x18] sm:$0xff]
  %v23 = vld [vmem:[%s0 + $0x20] sm:$0xff]
  %v24 = vld [vmem:[%s0 + $0x30] sm:$0xff]
  %v25 = vld [vmem:[%s0 + $0x38] sm:$0xff]
  %v26 = vld [vmem:[%s0 + $0x48] sm:$0xff]
  %v27 = vld [vmem:[%s0 + $0x50] sm:$0xff]
  %v28 = vld [vmem:[%s0 + $0x60] sm:$0xff]
  %v29 = vld [vmem:[%s0 + $0x68] sm:$0xff]
  %v30 = vld [vmem:[%s0 + $0x78] sm:$0xff]
  %v31 = vld [vmem:[%s0 + $0x80] sm:$0xff]
  %v32 = vld [vmem:[%s0 + $0x90] sm:$0xff]
  %v33 = vld [vmem:[%s0 + $0x98] sm:$0xff]
  %v34 = vld [vmem:[%s0 + $0xa8] sm:$0xff]
  %v35 = vld [vmem:[%s0 + $0xb0] sm:$0xff]
  %v36 = vld [vmem:[%s0 + $0xc0] sm:$0xff]
  %v37 = vld [vmem:[%s0 + $0xc8] sm:$0xff]
  %v38 = vld [vmem:[%s0 + $0xd8] sm:$0xff]
  %v39 = vld [vmem:[%s0 + $0xe0] sm:$0xff]
  %v40 = vld [vmem:[%s0 + $0xf0] sm:$0xff]
  %v41 = vld [vmem:[%s0 + $0xf8] sm:$0xff]
  %v42 = vld [vmem:[%s0 + $0x108] sm:$0xff]
  %v43 = vld [vmem:[%s0 + $0x110] sm:$0xff]
  %v44 = vld [vmem:[%s0 + $0x120] sm:$0xff]
  %v45 = vld [vmem:[%s0 + $0x128] sm:$0xff]
  %v46 = vld [vmem:[%s0 + $0x138] sm:$0xff]
  %v47 = vld [vmem:[%s0 + $0x140] sm:$0xff]
  %v48 = vld [vmem:[%s0 + $0x150] sm:$0xff]
  %v49 = vld [vmem:[%s0 + $0x158] sm:$0xff]
  %v50 = vld [vmem:[%s0 + $0x168] sm:$0xff]
  %v51 = vld [vmem:[%s0 + $0x170] sm:$0xff]
  %v52 = vld [vmem:[%s0 + $0x1b0] sm:$0xff]
  %v53 = vld [vmem:[%s0 + $0x1b8] sm:$0xff]
  %v54 = vld [vmem:[%s0 + $0x1c8] sm:$0xff]
  %v55 = vld [vmem:[%s0 + $0x1d0] sm:$0xff]
  %v56 = vld [vmem:[%s0 + $0x1e0] sm:$0xff]
  %v57 = vld [vmem:[%s0 + $0x1e8] sm:$0xff]
  %v58 = vld [vmem:[%s0 + $0x1f8] sm:$0xff]
  %v59 = vld [vmem:[%s0 + $0x200] sm:$0xff]
  %v60 = vld [vmem:[%s0 + $0x210] sm:$0xff]
  %v61 = vld [vmem:[%s0 + $0x218] sm:$0xff]
  %v62 = vld [vmem:[%s0 + $0x228] sm:$0xff]
  %v63 = vld [vmem:[%s0 + $0x230] sm:$0xff]
  %v64 = vld [vmem:[%s0 + $0x240] sm:$0xff]
  %v65 = vld [vmem:[%s0 + $0x248] sm:$0xff]
  %v66 = vld [vmem:[%s0 + $0x258] sm:$0xff]
  %v67 = vld [vmem:[%s0 + $0x260] sm:$0xff]
  %v68 = vld [vmem:[%s0 + $0x270] sm:$0xff]
  %v69 = vld [vmem:[%s0 + $0x278] sm:$0xff]
  %v70 = vld [vmem:[%s0 + $0x288] sm:$0xff]
  %v71 = vld [vmem:[%s0 + $0x290] sm:$0xff]
  %v72 = vld [vmem:[%s0 + $0x2a0] sm:$0xff]
  %v73 = vld [vmem:[%s0 + $0x2a8] sm:$0xff]
  %v74 = vld [vmem:[%s0 + $0x2b8] sm:$0xff]
  %v75 = vld [vmem:[%s0 + $0x2c0] sm:$0xff]
  %v76 = vld [vmem:[%s0 + $0x2d0] sm:$0xff]
  %v77 = vld [vmem:[%s0 + $0x2d8] sm:$0xff]
  %v78 = vld [vmem:[%s0 + $0x2e8] sm:$0xff]
  %v79 = vld [vmem:[%s0 + $0x2f0] sm:$0xff]
  %v80 = vld [vmem:[%s0 + $0x300] sm:$0xff]
  %v81 = vld [vmem:[%s0 + $0x308] sm:$0xff]
  %v82 = vld [vmem:[%s0 + $0x318] sm:$0xff]
  %v83 = vld [vmem:[%s0 + $0x320] sm:$0xff]
  %v84 = vld [vmem:[%s0 + $0x1] sm:$0xff]
  %v85 = vld [vmem:[%s0 + $0x9] sm:$0xff]
  %v86 = vld [vmem:[%s0 + $0x19] sm:$0xff]
  %v87 = vld [vmem:[%s0 + $0x21] sm:$0xff]
  %v88 = vld [vmem:[%s0 + $0x31] sm:$0xff]
  %v89 = vld [vmem:[%s0 + $0x39] sm:$0xff]
  %v90 = vld [vmem:[%s0 + $0x49] sm:$0xff]
  %v91 = vld [vmem:[%s0 + $0x51] sm:$0xff]
  %v92 = vld [vmem:[%s0 + $0x61] sm:$0xff]
  %v93 = vld [vmem:[%s0 + $0x69] sm:$0xff]
  %v94 = vld [vmem:[%s0 + $0x79] sm:$0xff]
  %v95 = vld [vmem:[%s0 + $0x81] sm:$0xff]
  %v96 = vld [vmem:[%s0 + $0x91] sm:$0xff]
  %v97 = vld [vmem:[%s0 + $0x99] sm:$0xff]
  %v98 = vld [vmem:[%s0 + $0xa9] sm:$0xff]
  %v99 = vld [vmem:[%s0 + $0xb1] sm:$0xff]
  %v100 = vld [vmem:[%s0 + $0xc1] sm:$0xff]
  %v101 = vld [vmem:[%s0 + $0xc9] sm:$0xff]
  %v102 = vld [vmem:[%s0 + $0xd9] sm:$0xff]
  %v103 = vld [vmem:[%s0 + $0xe1] sm:$0xff]
  %v104 = vld [vmem:[%s0 + $0xf1] sm:$0xff]
  %v105 = vld [vmem:[%s0 + $0xf9] sm:$0xff]
  %v106 = vld [vmem:[%s0 + $0x109] sm:$0xff]
  %v107 = vld [vmem:[%s0 + $0x111] sm:$0xff]
  %v108 = vld [vmem:[%s0 + $0x121] sm:$0xff]
  %v109 = vld [vmem:[%s0 + $0x129] sm:$0xff]
  %v110 = vld [vmem:[%s0 + $0x139] sm:$0xff]
  %v111 = vld [vmem:[%s0 + $0x141] sm:$0xff]
  %v112 = vld [vmem:[%s0 + $0x151] sm:$0xff]
  %v113 = vld [vmem:[%s0 + $0x159] sm:$0xff]
  %v114 = vld [vmem:[%s0 + $0x169] sm:$0xff]
  %v115 = vld [vmem:[%s0 + $0x171] sm:$0xff]
  %v116 = vld [vmem:[%s0 + $0x1b1] sm:$0xff]
  %v117 = vld [vmem:[%s0 + $0x1b9] sm:$0xff]
  %v118 = vld [vmem:[%s0 + $0x1c9] sm:$0xff]
  %v119 = vld [vmem:[%s0 + $0x1d1] sm:$0xff]
  %v120 = vld [vmem:[%s0 + $0x1e1] sm:$0xff]
  %v121 = vld [vmem:[%s0 + $0x1e9] sm:$0xff]
  %v122 = vld [vmem:[%s0 + $0x1f9] sm:$0xff]
  %v123 = vld [vmem:[%s0 + $0x201] sm:$0xff]
  %v124 = vld [vmem:[%s0 + $0x211] sm:$0xff]
  %v125 = vld [vmem:[%s0 + $0x219] sm:$0xff]
  %v126 = vld [vmem:[%s0 + $0x229] sm:$0xff]
  %v127 = vld [vmem:[%s0 + $0x231] sm:$0xff]
  %v128 = vld [vmem:[%s0 + $0x241] sm:$0xff]
  %v129 = vld [vmem:[%s0 + $0x249] sm:$0xff]
  %v130 = vld [vmem:[%s0 + $0x259] sm:$0xff]
  %v131 = vld [vmem:[%s0 + $0x261] sm:$0xff]
  %v132 = vld [vmem:[%s0 + $0x271] sm:$0xff]
  %v133 = vld [vmem:[%s0 + $0x279] sm:$0xff]
  %v134 = vld [vmem:[%s0 + $0x289] sm:$0xff]
  %v135 = vld [vmem:[%s0 + $0x291] sm:$0xff]
  %v136 = vld [vmem:[%s0 + $0x2a1] sm:$0xff]
  %v137 = vld [vmem:[%s0 + $0x2a9] sm:$0xff]
  %v138 = vld [vmem:[%s0 + $0x2b9] sm:$0xff]
  %v139 = vld [vmem:[%s0 + $0x2c1] sm:$0xff]
  %v140 = vld [vmem:[%s0 + $0x2d1] sm:$0xff]
  %v141 = vld [vmem:[%s0 + $0x2d9] sm:$0xff]
  %v142 = vld [vmem:[%s0 + $0x2e9] sm:$0xff]
  %v143 = vld [vmem:[%s0 + $0x2f1] sm:$0xff]
  %v144 = vld [vmem:[%s0 + $0x301] sm:$0xff]
  %v145 = vld [vmem:[%s0 + $0x309] sm:$0xff]
  %v146 = vld [vmem:[%s0 + $0x319] sm:$0xff]
  %v147 = vld [vmem:[%s0 + $0x321] sm:$0xff]
  %v148 = vld [vmem:[%s0 + $0x2] sm:$0xff]
  %v149 = vld [vmem:[%s0 + $0xa] sm:$0xff]
  %v150 = vld [vmem:[%s0 + $0x1a] sm:$0xff]
  %v151 = vld [vmem:[%s0 + $0x22] sm:$0xff]
  %v152 = vld [vmem:[%s0 + $0x32] sm:$0xff]
  %v153 = vld [vmem:[%s0 + $0x3a] sm:$0xff]
  %v154 = vld [vmem:[%s0 + $0x4a] sm:$0xff]
  %v155 = vld [vmem:[%s0 + $0x52] sm:$0xff]
  %v156 = vld [vmem:[%s0 + $0x62] sm:$0xff]
  %v157 = vld [vmem:[%s0 + $0x6a] sm:$0xff]
  %v158 = vld [vmem:[%s0 + $0x7a] sm:$0xff]
  %v159 = vld [vmem:[%s0 + $0x82] sm:$0xff]
  %v160 = vld [vmem:[%s0 + $0x92] sm:$0xff]
  %v161 = vld [vmem:[%s0 + $0x9a] sm:$0xff]
  %v162 = vld [vmem:[%s0 + $0xaa] sm:$0xff]
  %v163 = vld [vmem:[%s0 + $0xb2] sm:$0xff]
  %v164 = vld [vmem:[%s0 + $0xc2] sm:$0xff]
  %v165 = vld [vmem:[%s0 + $0xca] sm:$0xff]
  %v166 = vld [vmem:[%s0 + $0xda] sm:$0xff]
  %v167 = vld [vmem:[%s0 + $0xe2] sm:$0xff]
  %v168 = vld [vmem:[%s0 + $0xf2] sm:$0xff]
  %v169 = vld [vmem:[%s0 + $0xfa] sm:$0xff]
  %v170 = vld [vmem:[%s0 + $0x10a] sm:$0xff]
  %v171 = vld [vmem:[%s0 + $0x112] sm:$0xff]
  %v172 = vld [vmem:[%s0 + $0x122] sm:$0xff]
  %v173 = vld [vmem:[%s0 + $0x12a] sm:$0xff]
  %v174 = vld [vmem:[%s0 + $0x13a] sm:$0xff]
  %v175 = vld [vmem:[%s0 + $0x142] sm:$0xff]
  %v176 = vld [vmem:[%s0 + $0x152] sm:$0xff]
  %v177 = vld [vmem:[%s0 + $0x15a] sm:$0xff]
  %v178 = vld [vmem:[%s0 + $0x16a] sm:$0xff]
  %v179 = vld [vmem:[%s0 + $0x172] sm:$0xff]
  %v180 = vld [vmem:[%s0 + $0x1b2] sm:$0xff]
  %v181 = vld [vmem:[%s0 + $0x1ba] sm:$0xff]
  %v182 = vld [vmem:[%s0 + $0x1ca] sm:$0xff]
  %v183 = vld [vmem:[%s0 + $0x1d2] sm:$0xff]
  %v184 = vld [vmem:[%s0 + $0x1e2] sm:$0xff]
  %v185 = vld [vmem:[%s0 + $0x1ea] sm:$0xff]
  %v186 = vld [vmem:[%s0 + $0x1fa] sm:$0xff]
  %v187 = vld [vmem:[%s0 + $0x202] sm:$0xff]
  %v188 = vld [vmem:[%s0 + $0x212] sm:$0xff]
  %v189 = vld [vmem:[%s0 + $0x21a] sm:$0xff]
  %v190 = vld [vmem:[%s0 + $0x22a] sm:$0xff]
  %v191 = vld [vmem:[%s0 + $0x232] sm:$0xff]
  %v192 = vld [vmem:[%s0 + $0x242] sm:$0xff]
  %v193 = vld [vmem:[%s0 + $0x24a] sm:$0xff]
  %v194 = vld [vmem:[%s0 + $0x25a] sm:$0xff]
  %v195 = vld [vmem:[%s0 + $0x262] sm:$0xff]
  %v196 = vld [vmem:[%s0 + $0x272] sm:$0xff]
  %v197 = vld [vmem:[%s0 + $0x27a] sm:$0xff]
  %v198 = vld [vmem:[%s0 + $0x28a] sm:$0xff]
  %v199 = vld [vmem:[%s0 + $0x292] sm:$0xff]
  %v200 = vld [vmem:[%s0 + $0x2a2] sm:$0xff]
  %v201 = vld [vmem:[%s0 + $0x2aa] sm:$0xff]
  %v202 = vld [vmem:[%s0 + $0x2ba] sm:$0xff]
  %v203 = vld [vmem:[%s0 + $0x2c2] sm:$0xff]
  %v204 = vld [vmem:[%s0 + $0x2d2] sm:$0xff]
  %v205 = vld [vmem:[%s0 + $0x2da] sm:$0xff]
  %v206 = vld [vmem:[%s0 + $0x2ea] sm:$0xff]
  %v207 = vld [vmem:[%s0 + $0x2f2] sm:$0xff]
  %v208 = vld [vmem:[%s0 + $0x302] sm:$0xff]
  %v209 = vld [vmem:[%s0 + $0x30a] sm:$0xff]
  %v210 = vld [vmem:[%s0 + $0x31a] sm:$0xff]
  %v211 = vld [vmem:[%s0 + $0x322] sm:$0xff]
  %s212 = scalar_lea.vmem %s0, 24
  %v213 = vld [vmem:[%s212] sm:$0xff]
  %v214 = vld [vmem:[%s212 + $0x8] sm:$0xff]
  %v215 = vld [vmem:[%s212 + $0x18] sm:$0xff]
  %v216 = vld [vmem:[%s212 + $0x20] sm:$0xff]
  %v217 = vld [vmem:[%s212 + $0x30] sm:$0xff]
  %v218 = vld [vmem:[%s212 + $0x38] sm:$0xff]
  %v219 = vld [vmem:[%s212 + $0x48] sm:$0xff]
  %v220 = vld [vmem:[%s212 + $0x50] sm:$0xff]
  %v221 = vld [vmem:[%s212 + $0x60] sm:$0xff]
  %v222 = vld [vmem:[%s212 + $0x68] sm:$0xff]
  %v223 = vld [vmem:[%s212 + $0x78] sm:$0xff]
  %v224 = vld [vmem:[%s212 + $0x80] sm:$0xff]
  %v225 = vld [vmem:[%s212 + $0x90] sm:$0xff]
  %v226 = vld [vmem:[%s212 + $0x98] sm:$0xff]
  %v227 = vld [vmem:[%s212 + $0xa8] sm:$0xff]
  %v228 = vld [vmem:[%s212 + $0xb0] sm:$0xff]
  %v229 = vld [vmem:[%s212 + $0xc0] sm:$0xff]
  %v230 = vld [vmem:[%s212 + $0xc8] sm:$0xff]
  %v231 = vld [vmem:[%s212 + $0xd8] sm:$0xff]
  %v232 = vld [vmem:[%s212 + $0xe0] sm:$0xff]
  %v233 = vld [vmem:[%s212 + $0xf0] sm:$0xff]
  %v234 = vld [vmem:[%s212 + $0xf8] sm:$0xff]
  %v235 = vld [vmem:[%s212 + $0x108] sm:$0xff]
  %v236 = vld [vmem:[%s212 + $0x110] sm:$0xff]
  %v237 = vld [vmem:[%s212 + $0x120] sm:$0xff]
  %v238 = vld [vmem:[%s212 + $0x128] sm:$0xff]
  %v239 = vld [vmem:[%s212 + $0x138] sm:$0xff]
  %v240 = vld [vmem:[%s212 + $0x140] sm:$0xff]
  %v241 = vld [vmem:[%s212 + $0x150] sm:$0xff]
  %v242 = vld [vmem:[%s212 + $0x158] sm:$0xff]
  %v243 = vld [vmem:[%s212 + $0x168] sm:$0xff]
  %v244 = vld [vmem:[%s212 + $0x170] sm:$0xff]
  %v245 = vld [vmem:[%s212 + $0x1b0] sm:$0xff]
  %v246 = vld [vmem:[%s212 + $0x1b8] sm:$0xff]
  %v247 = vld [vmem:[%s212 + $0x1c8] sm:$0xff]
  %v248 = vld [vmem:[%s212 + $0x1d0] sm:$0xff]
  %v249 = vld [vmem:[%s212 + $0x1e0] sm:$0xff]
  %v250 = vld [vmem:[%s212 + $0x1e8] sm:$0xff]
  %v251 = vld [vmem:[%s212 + $0x1f8] sm:$0xff]
  %v252 = vld [vmem:[%s212 + $0x200] sm:$0xff]
  %v253 = vld [vmem:[%s212 + $0x210] sm:$0xff]
  %v254 = vld [vmem:[%s212 + $0x218] sm:$0xff]
  %v255 = vld [vmem:[%s212 + $0x228] sm:$0xff]
  %v256 = vld [vmem:[%s212 + $0x230] sm:$0xff]
  %v257 = vld [vmem:[%s212 + $0x240] sm:$0xff]
  %v258 = vld [vmem:[%s212 + $0x248] sm:$0xff]
  %v259 = vld [vmem:[%s212 + $0x258] sm:$0xff]
  %v260 = vld [vmem:[%s212 + $0x260] sm:$0xff]
  %v261 = vld [vmem:[%s212 + $0x270] sm:$0xff]
  %v262 = vld [vmem:[%s212 + $0x278] sm:$0xff]
  %v263 = vld [vmem:[%s212 + $0x288] sm:$0xff]
  %v264 = vld [vmem:[%s212 + $0x290] sm:$0xff]
  %v265 = vld [vmem:[%s212 + $0x2a0] sm:$0xff]
  %v266 = vld [vmem:[%s212 + $0x2a8] sm:$0xff]
  %v267 = vld [vmem:[%s212 + $0x2b8] sm:$0xff]
  %v268 = vld [vmem:[%s212 + $0x2c0] sm:$0xff]
  %v269 = vld [vmem:[%s212 + $0x2d0] sm:$0xff]
  %v270 = vld [vmem:[%s212 + $0x2d8] sm:$0xff]
  %v271 = vld [vmem:[%s212 + $0x2e8] sm:$0xff]
  %v272 = vld [vmem:[%s212 + $0x2f0] sm:$0xff]
  %v273 = vld [vmem:[%s212 + $0x300] sm:$0xff]
  %v274 = vld [vmem:[%s212 + $0x308] sm:$0xff]
  %v275 = vld [vmem:[%s212 + $0x318] sm:$0xff]
  %v276 = vld [vmem:[%s212 + $0x320] sm:$0xff]
  %v277 = vld [vmem:[%s212 + $0x1] sm:$0xff]
  %v278 = vld [vmem:[%s212 + $0x9] sm:$0xff]
  %v279 = vld [vmem:[%s212 + $0x19] sm:$0xff]
  %v280 = vld [vmem:[%s212 + $0x21] sm:$0xff]
  %v281 = vld [vmem:[%s212 + $0x31] sm:$0xff]
  %v282 = vld [vmem:[%s212 + $0x39] sm:$0xff]
  %v283 = vld [vmem:[%s212 + $0x49] sm:$0xff]
  %v284 = vld [vmem:[%s212 + $0x51] sm:$0xff]
  %v285 = vld [vmem:[%s212 + $0x61] sm:$0xff]
  %v286 = vld [vmem:[%s212 + $0x69] sm:$0xff]
  %v287 = vld [vmem:[%s212 + $0x79] sm:$0xff]
  %v288 = vld [vmem:[%s212 + $0x81] sm:$0xff]
  %v289 = vld [vmem:[%s212 + $0x91] sm:$0xff]
  %v290 = vld [vmem:[%s212 + $0x99] sm:$0xff]
  %v291 = vld [vmem:[%s212 + $0xa9] sm:$0xff]
  %v292 = vld [vmem:[%s212 + $0xb1] sm:$0xff]
  %v293 = vld [vmem:[%s212 + $0xc1] sm:$0xff]
  %v294 = vld [vmem:[%s212 + $0xc9] sm:$0xff]
  %v295 = vld [vmem:[%s212 + $0xd9] sm:$0xff]
  %v296 = vld [vmem:[%s212 + $0xe1] sm:$0xff]
  %v297 = vld [vmem:[%s212 + $0xf1] sm:$0xff]
  %v298 = vld [vmem:[%s212 + $0xf9] sm:$0xff]
  %v299 = vld [vmem:[%s212 + $0x109] sm:$0xff]
  %v300 = vld [vmem:[%s212 + $0x111] sm:$0xff]
  %v301 = vld [vmem:[%s212 + $0x121] sm:$0xff]
  %v302 = vld [vmem:[%s212 + $0x129] sm:$0xff]
  %v303 = vld [vmem:[%s212 + $0x139] sm:$0xff]
  %v304 = vld [vmem:[%s212 + $0x141] sm:$0xff]
  %v305 = vld [vmem:[%s212 + $0x151] sm:$0xff]
  %v306 = vld [vmem:[%s212 + $0x159] sm:$0xff]
  %v307 = vld [vmem:[%s212 + $0x169] sm:$0xff]
  %v308 = vld [vmem:[%s212 + $0x171] sm:$0xff]
  %v309 = vld [vmem:[%s212 + $0x1b1] sm:$0xff]
  %v310 = vld [vmem:[%s212 + $0x1b9] sm:$0xff]
  %v311 = vld [vmem:[%s212 + $0x1c9] sm:$0xff]
  %v312 = vld [vmem:[%s212 + $0x1d1] sm:$0xff]
  %v313 = vld [vmem:[%s212 + $0x1e1] sm:$0xff]
  %v314 = vld [vmem:[%s212 + $0x1e9] sm:$0xff]
  %v315 = vld [vmem:[%s212 + $0x1f9] sm:$0xff]
  %v316 = vld [vmem:[%s212 + $0x201] sm:$0xff]
  %v317 = vld [vmem:[%s212 + $0x211] sm:$0xff]
  %v318 = vld [vmem:[%s212 + $0x219] sm:$0xff]
  %v319 = vld [vmem:[%s212 + $0x229] sm:$0xff]
  %v320 = vld [vmem:[%s212 + $0x231] sm:$0xff]
  %v321 = vld [vmem:[%s212 + $0x241] sm:$0xff]
  %v322 = vld [vmem:[%s212 + $0x249] sm:$0xff]
  %v323 = vld [vmem:[%s212 + $0x259] sm:$0xff]
  %v324 = vld [vmem:[%s212 + $0x261] sm:$0xff]
  %v325 = vld [vmem:[%s212 + $0x271] sm:$0xff]
  %v326 = vld [vmem:[%s212 + $0x279] sm:$0xff]
  %v327 = vld [vmem:[%s212 + $0x289] sm:$0xff]
  %v328 = vld [vmem:[%s212 + $0x291] sm:$0xff]
  %v329 = vld [vmem:[%s212 + $0x2a1] sm:$0xff]
  %v330 = vld [vmem:[%s212 + $0x2a9] sm:$0xff]
  %v331 = vld [vmem:[%s212 + $0x2b9] sm:$0xff]
  %v332 = vld [vmem:[%s212 + $0x2c1] sm:$0xff]
  %v333 = vld [vmem:[%s212 + $0x2d1] sm:$0xff]
  %v334 = vld [vmem:[%s212 + $0x2d9] sm:$0xff]
  %v335 = vld [vmem:[%s212 + $0x2e9] sm:$0xff]
  %v336 = vld [vmem:[%s212 + $0x2f1] sm:$0xff]
  %v337 = vld [vmem:[%s212 + $0x301] sm:$0xff]
  %v338 = vld [vmem:[%s212 + $0x309] sm:$0xff]
  %v339 = vld [vmem:[%s212 + $0x319] sm:$0xff]
  %v340 = vld [vmem:[%s212 + $0x321] sm:$0xff]
  %v341 = vld [vmem:[%s212 + $0x2] sm:$0xff]
  %v342 = vld [vmem:[%s212 + $0xa] sm:$0xff]
  %v343 = vld [vmem:[%s212 + $0x1a] sm:$0xff]
  %v344 = vld [vmem:[%s212 + $0x22] sm:$0xff]
  %v345 = vld [vmem:[%s212 + $0x32] sm:$0xff]
  %v346 = vld [vmem:[%s212 + $0x3a] sm:$0xff]
  %v347 = vld [vmem:[%s212 + $0x4a] sm:$0xff]
  %v348 = vld [vmem:[%s212 + $0x52] sm:$0xff]
  %v349 = vld [vmem:[%s212 + $0x62] sm:$0xff]
  %v350 = vld [vmem:[%s212 + $0x6a] sm:$0xff]
  %v351 = vld [vmem:[%s212 + $0x7a] sm:$0xff]
  %v352 = vld [vmem:[%s212 + $0x82] sm:$0xff]
  %v353 = vld [vmem:[%s212 + $0x92] sm:$0xff]
  %v354 = vld [vmem:[%s212 + $0x9a] sm:$0xff]
  %v355 = vld [vmem:[%s212 + $0xaa] sm:$0xff]
  %v356 = vld [vmem:[%s212 + $0xb2] sm:$0xff]
  %v357 = vld [vmem:[%s212 + $0xc2] sm:$0xff]
  %v358 = vld [vmem:[%s212 + $0xca] sm:$0xff]
  %v359 = vld [vmem:[%s212 + $0xda] sm:$0xff]
  %v360 = vld [vmem:[%s212 + $0xe2] sm:$0xff]
  %v361 = vld [vmem:[%s212 + $0xf2] sm:$0xff]
  %v362 = vld [vmem:[%s212 + $0xfa] sm:$0xff]
  %v363 = vld [vmem:[%s212 + $0x10a] sm:$0xff]
  %v364 = vld [vmem:[%s212 + $0x112] sm:$0xff]
  %v365 = vld [vmem:[%s212 + $0x122] sm:$0xff]
  %v366 = vld [vmem:[%s212 + $0x12a] sm:$0xff]
  %v367 = vld [vmem:[%s212 + $0x13a] sm:$0xff]
  %v368 = vld [vmem:[%s212 + $0x142] sm:$0xff]
  %v369 = vld [vmem:[%s212 + $0x152] sm:$0xff]
  %v370 = vld [vmem:[%s212 + $0x15a] sm:$0xff]
  %v371 = vld [vmem:[%s212 + $0x16a] sm:$0xff]
  %v372 = vld [vmem:[%s212 + $0x172] sm:$0xff]
  %v373 = vld [vmem:[%s212 + $0x1b2] sm:$0xff]
  %v374 = vld [vmem:[%s212 + $0x1ba] sm:$0xff]
  %v375 = vld [vmem:[%s212 + $0x1ca] sm:$0xff]
  %v376 = vld [vmem:[%s212 + $0x1d2] sm:$0xff]
  %v377 = vld [vmem:[%s212 + $0x1e2] sm:$0xff]
  %v378 = vld [vmem:[%s212 + $0x1ea] sm:$0xff]
  %v379 = vld [vmem:[%s212 + $0x1fa] sm:$0xff]
  %v380 = vld [vmem:[%s212 + $0x202] sm:$0xff]
  %v381 = vld [vmem:[%s212 + $0x212] sm:$0xff]
  %v382 = vld [vmem:[%s212 + $0x21a] sm:$0xff]
  %v383 = vld [vmem:[%s212 + $0x22a] sm:$0xff]
  %v384 = vld [vmem:[%s212 + $0x232] sm:$0xff]
  %v385 = vld [vmem:[%s212 + $0x242] sm:$0xff]
  %v386 = vld [vmem:[%s212 + $0x24a] sm:$0xff]
  %v387 = vld [vmem:[%s212 + $0x25a] sm:$0xff]
  %v388 = vld [vmem:[%s212 + $0x262] sm:$0xff]
  %v389 = vld [vmem:[%s212 + $0x272] sm:$0xff]
  %v390 = vld [vmem:[%s212 + $0x27a] sm:$0xff]
  %v391 = vld [vmem:[%s212 + $0x28a] sm:$0xff]
  %v392 = vld [vmem:[%s212 + $0x292] sm:$0xff]
  %v393 = vld [vmem:[%s212 + $0x2a2] sm:$0xff]
  %v394 = vld [vmem:[%s212 + $0x2aa] sm:$0xff]
  %v395 = vld [vmem:[%s212 + $0x2ba] sm:$0xff]
  %v396 = vld [vmem:[%s212 + $0x2c2] sm:$0xff]
  %v397 = vld [vmem:[%s212 + $0x2d2] sm:$0xff]
  %v398 = vld [vmem:[%s212 + $0x2da] sm:$0xff]
  %v399 = vld [vmem:[%s212 + $0x2ea] sm:$0xff]
  %v400 = vld [vmem:[%s212 + $0x2f2] sm:$0xff]
  %v401 = vld [vmem:[%s212 + $0x302] sm:$0xff]
  %v402 = vld [vmem:[%s212 + $0x30a] sm:$0xff]
  %v403 = vld [vmem:[%s212 + $0x31a] sm:$0xff]
  %v404 = vld [vmem:[%s212 + $0x322] sm:$0xff]
  %s405 = scalar_lea.vmem %s0, 48
  %v406 = vld [vmem:[%s405] sm:$0xff]
  %v407 = vld [vmem:[%s405 + $0x8] sm:$0xff]
  %v408 = vld [vmem:[%s405 + $0x18] sm:$0xff]
  %v409 = vld [vmem:[%s405 + $0x20] sm:$0xff]
  %v410 = vld [vmem:[%s405 + $0x30] sm:$0xff]
  %v411 = vld [vmem:[%s405 + $0x38] sm:$0xff]
  %v412 = vld [vmem:[%s405 + $0x48] sm:$0xff]
  %v413 = vld [vmem:[%s405 + $0x50] sm:$0xff]
  %v414 = vld [vmem:[%s405 + $0x60] sm:$0xff]
  %v415 = vld [vmem:[%s405 + $0x68] sm:$0xff]
  %v416 = vld [vmem:[%s405 + $0x78] sm:$0xff]
  %v417 = vld [vmem:[%s405 + $0x80] sm:$0xff]
  %v418 = vld [vmem:[%s405 + $0x90] sm:$0xff]
  %v419 = vld [vmem:[%s405 + $0x98] sm:$0xff]
  %v420 = vld [vmem:[%s405 + $0xa8] sm:$0xff]
  %v421 = vld [vmem:[%s405 + $0xb0] sm:$0xff]
  %v422 = vld [vmem:[%s405 + $0xc0] sm:$0xff]
  %v423 = vld [vmem:[%s405 + $0xc8] sm:$0xff]
  %v424 = vld [vmem:[%s405 + $0xd8] sm:$0xff]
  %v425 = vld [vmem:[%s405 + $0xe0] sm:$0xff]
  %v426 = vld [vmem:[%s405 + $0xf0] sm:$0xff]
  %v427 = vld [vmem:[%s405 + $0xf8] sm:$0xff]
  %v428 = vld [vmem:[%s405 + $0x108] sm:$0xff]
  %v429 = vld [vmem:[%s405 + $0x110] sm:$0xff]
  %v430 = vld [vmem:[%s405 + $0x120] sm:$0xff]
  %v431 = vld [vmem:[%s405 + $0x128] sm:$0xff]
  %v432 = vld [vmem:[%s405 + $0x138] sm:$0xff]
  %v433 = vld [vmem:[%s405 + $0x140] sm:$0xff]
  %v434 = vld [vmem:[%s405 + $0x150] sm:$0xff]
  %v435 = vld [vmem:[%s405 + $0x158] sm:$0xff]
  %v436 = vld [vmem:[%s405 + $0x168] sm:$0xff]
  %v437 = vld [vmem:[%s405 + $0x170] sm:$0xff]
  %v438 = vld [vmem:[%s405 + $0x1b0] sm:$0xff]
  %v439 = vld [vmem:[%s405 + $0x1b8] sm:$0xff]
  %v440 = vld [vmem:[%s405 + $0x1c8] sm:$0xff]
  %v441 = vld [vmem:[%s405 + $0x1d0] sm:$0xff]
  %v442 = vld [vmem:[%s405 + $0x1e0] sm:$0xff]
  %v443 = vld [vmem:[%s405 + $0x1e8] sm:$0xff]
  %v444 = vld [vmem:[%s405 + $0x1f8] sm:$0xff]
  %v445 = vld [vmem:[%s405 + $0x200] sm:$0xff]
  %v446 = vld [vmem:[%s405 + $0x210] sm:$0xff]
  %v447 = vld [vmem:[%s405 + $0x218] sm:$0xff]
  %v448 = vld [vmem:[%s405 + $0x228] sm:$0xff]
  %v449 = vld [vmem:[%s405 + $0x230] sm:$0xff]
  %v450 = vld [vmem:[%s405 + $0x240] sm:$0xff]
  %v451 = vld [vmem:[%s405 + $0x248] sm:$0xff]
  %v452 = vld [vmem:[%s405 + $0x258] sm:$0xff]
  %v453 = vld [vmem:[%s405 + $0x260] sm:$0xff]
  %v454 = vld [vmem:[%s405 + $0x270] sm:$0xff]
  %v455 = vld [vmem:[%s405 + $0x278] sm:$0xff]
  %v456 = vld [vmem:[%s405 + $0x288] sm:$0xff]
  %v457 = vld [vmem:[%s405 + $0x290] sm:$0xff]
  %v458 = vld [vmem:[%s405 + $0x2a0] sm:$0xff]
  %v459 = vld [vmem:[%s405 + $0x2a8] sm:$0xff]
  %v460 = vld [vmem:[%s405 + $0x2b8] sm:$0xff]
  %v461 = vld [vmem:[%s405 + $0x2c0] sm:$0xff]
  %v462 = vld [vmem:[%s405 + $0x2d0] sm:$0xff]
  %v463 = vld [vmem:[%s405 + $0x2d8] sm:$0xff]
  %v464 = vld [vmem:[%s405 + $0x2e8] sm:$0xff]
  %v465 = vld [vmem:[%s405 + $0x2f0] sm:$0xff]
  %v466 = vld [vmem:[%s405 + $0x300] sm:$0xff]
  %v467 = vld [vmem:[%s405 + $0x308] sm:$0xff]
  %v468 = vld [vmem:[%s405 + $0x318] sm:$0xff]
  %v469 = vld [vmem:[%s405 + $0x320] sm:$0xff]
  %v470 = vld [vmem:[%s405 + $0x1] sm:$0xff]
  %v471 = vld [vmem:[%s405 + $0x9] sm:$0xff]
  %v472 = vld [vmem:[%s405 + $0x19] sm:$0xff]
  %v473 = vld [vmem:[%s405 + $0x21] sm:$0xff]
  %v474 = vld [vmem:[%s405 + $0x31] sm:$0xff]
  %v475 = vld [vmem:[%s405 + $0x39] sm:$0xff]
  %v476 = vld [vmem:[%s405 + $0x49] sm:$0xff]
  %v477 = vld [vmem:[%s405 + $0x51] sm:$0xff]
  %v478 = vld [vmem:[%s405 + $0x61] sm:$0xff]
  %v479 = vld [vmem:[%s405 + $0x69] sm:$0xff]
  %v480 = vld [vmem:[%s405 + $0x79] sm:$0xff]
  %v481 = vld [vmem:[%s405 + $0x81] sm:$0xff]
  %v482 = vld [vmem:[%s405 + $0x91] sm:$0xff]
  %v483 = vld [vmem:[%s405 + $0x99] sm:$0xff]
  %v484 = vld [vmem:[%s405 + $0xa9] sm:$0xff]
  %v485 = vld [vmem:[%s405 + $0xb1] sm:$0xff]
  %v486 = vld [vmem:[%s405 + $0xc1] sm:$0xff]
  %v487 = vld [vmem:[%s405 + $0xc9] sm:$0xff]
  %v488 = vld [vmem:[%s405 + $0xd9] sm:$0xff]
  %v489 = vld [vmem:[%s405 + $0xe1] sm:$0xff]
  %v490 = vld [vmem:[%s405 + $0xf1] sm:$0xff]
  %v491 = vld [vmem:[%s405 + $0xf9] sm:$0xff]
  %v492 = vld [vmem:[%s405 + $0x109] sm:$0xff]
  %v493 = vld [vmem:[%s405 + $0x111] sm:$0xff]
  %v494 = vld [vmem:[%s405 + $0x121] sm:$0xff]
  %v495 = vld [vmem:[%s405 + $0x129] sm:$0xff]
  %v496 = vld [vmem:[%s405 + $0x139] sm:$0xff]
  %v497 = vld [vmem:[%s405 + $0x141] sm:$0xff]
  %v498 = vld [vmem:[%s405 + $0x151] sm:$0xff]
  %v499 = vld [vmem:[%s405 + $0x159] sm:$0xff]
  %v500 = vld [vmem:[%s405 + $0x169] sm:$0xff]
  %v501 = vld [vmem:[%s405 + $0x171] sm:$0xff]
  %v502 = vld [vmem:[%s405 + $0x1b1] sm:$0xff]
  %v503 = vld [vmem:[%s405 + $0x1b9] sm:$0xff]
  %v504 = vld [vmem:[%s405 + $0x1c9] sm:$0xff]
  %v505 = vld [vmem:[%s405 + $0x1d1] sm:$0xff]
  %v506 = vld [vmem:[%s405 + $0x1e1] sm:$0xff]
  %v507 = vld [vmem:[%s405 + $0x1e9] sm:$0xff]
  %v508 = vld [vmem:[%s405 + $0x1f9] sm:$0xff]
  %v509 = vld [vmem:[%s405 + $0x201] sm:$0xff]
  %v510 = vld [vmem:[%s405 + $0x211] sm:$0xff]
  %v511 = vld [vmem:[%s405 + $0x219] sm:$0xff]
  %v512 = vld [vmem:[%s405 + $0x229] sm:$0xff]
  %v513 = vld [vmem:[%s405 + $0x231] sm:$0xff]
  %v514 = vld [vmem:[%s405 + $0x241] sm:$0xff]
  %v515 = vld [vmem:[%s405 + $0x249] sm:$0xff]
  %v516 = vld [vmem:[%s405 + $0x259] sm:$0xff]
  %v517 = vld [vmem:[%s405 + $0x261] sm:$0xff]
  %v518 = vld [vmem:[%s405 + $0x271] sm:$0xff]
  %v519 = vld [vmem:[%s405 + $0x279] sm:$0xff]
  %v520 = vld [vmem:[%s405 + $0x289] sm:$0xff]
  %v521 = vld [vmem:[%s405 + $0x291] sm:$0xff]
  %v522 = vld [vmem:[%s405 + $0x2a1] sm:$0xff]
  %v523 = vld [vmem:[%s405 + $0x2a9] sm:$0xff]
  %v524 = vld [vmem:[%s405 + $0x2b9] sm:$0xff]
  %v525 = vld [vmem:[%s405 + $0x2c1] sm:$0xff]
  %v526 = vld [vmem:[%s405 + $0x2d1] sm:$0xff]
  %v527 = vld [vmem:[%s405 + $0x2d9] sm:$0xff]
  %v528 = vld [vmem:[%s405 + $0x2e9] sm:$0xff]
  %v529 = vld [vmem:[%s405 + $0x2f1] sm:$0xff]
  %v530 = vld [vmem:[%s405 + $0x301] sm:$0xff]
  %v531 = vld [vmem:[%s405 + $0x309] sm:$0xff]
  %v532 = vld [vmem:[%s405 + $0x319] sm:$0xff]
  %v533 = vld [vmem:[%s405 + $0x321] sm:$0xff]
  %v534 = vld [vmem:[%s405 + $0x2] sm:$0xff]
  %v535 = vld [vmem:[%s405 + $0xa] sm:$0xff]
  %v536 = vld [vmem:[%s405 + $0x1a] sm:$0xff]
  %v537 = vld [vmem:[%s405 + $0x22] sm:$0xff]
  %v538 = vld [vmem:[%s405 + $0x32] sm:$0xff]
  %v539 = vld [vmem:[%s405 + $0x3a] sm:$0xff]
  %v540 = vld [vmem:[%s405 + $0x4a] sm:$0xff]
  %v541 = vld [vmem:[%s405 + $0x52] sm:$0xff]
  %v542 = vld [vmem:[%s405 + $0x62] sm:$0xff]
  %v543 = vld [vmem:[%s405 + $0x6a] sm:$0xff]
  %v544 = vld [vmem:[%s405 + $0x7a] sm:$0xff]
  %v545 = vld [vmem:[%s405 + $0x82] sm:$0xff]
  %v546 = vld [vmem:[%s405 + $0x92] sm:$0xff]
  %v547 = vld [vmem:[%s405 + $0x9a] sm:$0xff]
  %v548 = vld [vmem:[%s405 + $0xaa] sm:$0xff]
  %v549 = vld [vmem:[%s405 + $0xb2] sm:$0xff]
  %v550 = vld [vmem:[%s405 + $0xc2] sm:$0xff]
  %v551 = vld [vmem:[%s405 + $0xca] sm:$0xff]
  %v552 = vld [vmem:[%s405 + $0xda] sm:$0xff]
  %v553 = vld [vmem:[%s405 + $0xe2] sm:$0xff]
  %v554 = vld [vmem:[%s405 + $0xf2] sm:$0xff]
  %v555 = vld [vmem:[%s405 + $0xfa] sm:$0xff]
  %v556 = vld [vmem:[%s405 + $0x10a] sm:$0xff]
  %v557 = vld [vmem:[%s405 + $0x112] sm:$0xff]
  %v558 = vld [vmem:[%s405 + $0x122] sm:$0xff]
  %v559 = vld [vmem:[%s405 + $0x12a] sm:$0xff]
  %v560 = vld [vmem:[%s405 + $0x13a] sm:$0xff]
  %v561 = vld [vmem:[%s405 + $0x142] sm:$0xff]
  %v562 = vld [vmem:[%s405 + $0x152] sm:$0xff]
  %v563 = vld [vmem:[%s405 + $0x15a] sm:$0xff]
  %v564 = vld [vmem:[%s405 + $0x16a] sm:$0xff]
  %v565 = vld [vmem:[%s405 + $0x172] sm:$0xff]
  %v566 = vld [vmem:[%s405 + $0x1b2] sm:$0xff]
  %v567 = vld [vmem:[%s405 + $0x1ba] sm:$0xff]
  %v568 = vld [vmem:[%s405 + $0x1ca] sm:$0xff]
  %v569 = vld [vmem:[%s405 + $0x1d2] sm:$0xff]
  %v570 = vld [vmem:[%s405 + $0x1e2] sm:$0xff]
  %v571 = vld [vmem:[%s405 + $0x1ea] sm:$0xff]
  %v572 = vld [vmem:[%s405 + $0x1fa] sm:$0xff]
  %v573 = vld [vmem:[%s405 + $0x202] sm:$0xff]
  %v574 = vld [vmem:[%s405 + $0x212] sm:$0xff]
  %v575 = vld [vmem:[%s405 + $0x21a] sm:$0xff]
  %v576 = vld [vmem:[%s405 + $0x22a] sm:$0xff]
  %v577 = vld [vmem:[%s405 + $0x232] sm:$0xff]
  %v578 = vld [vmem:[%s405 + $0x242] sm:$0xff]
  %v579 = vld [vmem:[%s405 + $0x24a] sm:$0xff]
  %v580 = vld [vmem:[%s405 + $0x25a] sm:$0xff]
  %v581 = vld [vmem:[%s405 + $0x262] sm:$0xff]
  %v582 = vld [vmem:[%s405 + $0x272] sm:$0xff]
  %v583 = vld [vmem:[%s405 + $0x27a] sm:$0xff]
  %v584 = vld [vmem:[%s405 + $0x28a] sm:$0xff]
  %v585 = vld [vmem:[%s405 + $0x292] sm:$0xff]
  %v586 = vld [vmem:[%s405 + $0x2a2] sm:$0xff]
  %v587 = vld [vmem:[%s405 + $0x2aa] sm:$0xff]
  %v588 = vld [vmem:[%s405 + $0x2ba] sm:$0xff]
  %v589 = vld [vmem:[%s405 + $0x2c2] sm:$0xff]
  %v590 = vld [vmem:[%s405 + $0x2d2] sm:$0xff]
  %v591 = vld [vmem:[%s405 + $0x2da] sm:$0xff]
  %v592 = vld [vmem:[%s405 + $0x2ea] sm:$0xff]
  %v593 = vld [vmem:[%s405 + $0x2f2] sm:$0xff]
  %v594 = vld [vmem:[%s405 + $0x302] sm:$0xff]
  %v595 = vld [vmem:[%s405 + $0x30a] sm:$0xff]
  %v596 = vld [vmem:[%s405 + $0x31a] sm:$0xff]
  %v597 = vld [vmem:[%s405 + $0x322] sm:$0xff]
  %662 = vrot.lane.b32.xlu0 %v84, 4
  %v663 = vpop.permute.xlu0 %662
  %664 = vrot.lane.b32.xlu0 %v85, 4
  %v665 = vpop.permute.xlu0 %664
  %666 = vrot.lane.b32.xlu0 %v86, 4
  %v667 = vpop.permute.xlu0 %666
  %668 = vrot.lane.b32.xlu0 %v87, 4
  %v669 = vpop.permute.xlu0 %668
  %670 = vrot.lane.b32.xlu0 %v88, 4
  %v671 = vpop.permute.xlu0 %670
  %672 = vrot.lane.b32.xlu0 %v89, 4
  %v673 = vpop.permute.xlu0 %672
  %674 = vrot.lane.b32.xlu0 %v90, 4
  %v675 = vpop.permute.xlu0 %674
  %676 = vrot.lane.b32.xlu0 %v91, 4
  %v677 = vpop.permute.xlu0 %676
  %678 = vrot.lane.b32.xlu0 %v92, 4
  %v679 = vpop.permute.xlu0 %678
  %680 = vrot.lane.b32.xlu0 %v93, 4
  %v681 = vpop.permute.xlu0 %680
  %682 = vrot.lane.b32.xlu0 %v94, 4
  %v683 = vpop.permute.xlu0 %682
  %684 = vrot.lane.b32.xlu0 %v95, 4
  %v685 = vpop.permute.xlu0 %684
  %686 = vrot.lane.b32.xlu0 %v96, 4
  %v687 = vpop.permute.xlu0 %686
  %688 = vrot.lane.b32.xlu0 %v97, 4
  %v689 = vpop.permute.xlu0 %688
  %690 = vrot.lane.b32.xlu0 %v98, 4
  %v691 = vpop.permute.xlu0 %690
  %692 = vrot.lane.b32.xlu0 %v99, 4
  %v693 = vpop.permute.xlu0 %692
  %694 = vrot.lane.b32.xlu0 %v100, 4
  %v695 = vpop.permute.xlu0 %694
  %696 = vrot.lane.b32.xlu0 %v101, 4
  %v697 = vpop.permute.xlu0 %696
  %698 = vrot.lane.b32.xlu0 %v102, 4
  %v699 = vpop.permute.xlu0 %698
  %700 = vrot.lane.b32.xlu0 %v103, 4
  %v701 = vpop.permute.xlu0 %700
  %702 = vrot.lane.b32.xlu0 %v104, 4
  %v703 = vpop.permute.xlu0 %702
  %704 = vrot.lane.b32.xlu0 %v105, 4
  %v705 = vpop.permute.xlu0 %704
  %706 = vrot.lane.b32.xlu0 %v106, 4
  %v707 = vpop.permute.xlu0 %706
  %708 = vrot.lane.b32.xlu0 %v107, 4
  %v709 = vpop.permute.xlu0 %708
  %710 = vrot.lane.b32.xlu0 %v108, 4
  %v711 = vpop.permute.xlu0 %710
  %712 = vrot.lane.b32.xlu0 %v109, 4
  %v713 = vpop.permute.xlu0 %712
  %714 = vrot.lane.b32.xlu0 %v110, 4
  %v715 = vpop.permute.xlu0 %714
  %716 = vrot.lane.b32.xlu0 %v111, 4
  %v717 = vpop.permute.xlu0 %716
  %718 = vrot.lane.b32.xlu0 %v112, 4
  %v719 = vpop.permute.xlu0 %718
  %720 = vrot.lane.b32.xlu0 %v113, 4
  %v721 = vpop.permute.xlu0 %720
  %722 = vrot.lane.b32.xlu0 %v114, 4
  %v723 = vpop.permute.xlu0 %722
  %724 = vrot.lane.b32.xlu0 %v115, 4
  %v725 = vpop.permute.xlu0 %724
  %726 = vrot.lane.b32.xlu0 %v116, 4
  %v727 = vpop.permute.xlu0 %726
  %728 = vrot.lane.b32.xlu0 %v117, 4
  %v729 = vpop.permute.xlu0 %728
  %730 = vrot.lane.b32.xlu0 %v118, 4
  %v731 = vpop.permute.xlu0 %730
  %732 = vrot.lane.b32.xlu0 %v119, 4
  %v733 = vpop.permute.xlu0 %732
  %734 = vrot.lane.b32.xlu0 %v120, 4
  %v735 = vpop.permute.xlu0 %734
  %736 = vrot.lane.b32.xlu0 %v121, 4
  %v737 = vpop.permute.xlu0 %736
  %738 = vrot.lane.b32.xlu0 %v122, 4
  %v739 = vpop.permute.xlu0 %738
  %740 = vrot.lane.b32.xlu0 %v123, 4
  %v741 = vpop.permute.xlu0 %740
  %742 = vrot.lane.b32.xlu0 %v124, 4
  %v743 = vpop.permute.xlu0 %742
  %744 = vrot.lane.b32.xlu0 %v125, 4
  %v745 = vpop.permute.xlu0 %744
  %746 = vrot.lane.b32.xlu0 %v126, 4
  %v747 = vpop.permute.xlu0 %746
  %748 = vrot.lane.b32.xlu0 %v127, 4
  %v749 = vpop.permute.xlu0 %748
  %750 = vrot.lane.b32.xlu0 %v128, 4
  %v751 = vpop.permute.xlu0 %750
  %752 = vrot.lane.b32.xlu0 %v129, 4
  %v753 = vpop.permute.xlu0 %752
  %754 = vrot.lane.b32.xlu0 %v130, 4
  %v755 = vpop.permute.xlu0 %754
  %756 = vrot.lane.b32.xlu0 %v131, 4
  %v757 = vpop.permute.xlu0 %756
  %758 = vrot.lane.b32.xlu0 %v132, 4
  %v759 = vpop.permute.xlu0 %758
  %760 = vrot.lane.b32.xlu0 %v133, 4
  %v761 = vpop.permute.xlu0 %760
  %762 = vrot.lane.b32.xlu0 %v134, 4
  %v763 = vpop.permute.xlu0 %762
  %764 = vrot.lane.b32.xlu0 %v135, 4
  %v765 = vpop.permute.xlu0 %764
  %766 = vrot.lane.b32.xlu0 %v136, 4
  %v767 = vpop.permute.xlu0 %766
  %768 = vrot.lane.b32.xlu0 %v137, 4
  %v769 = vpop.permute.xlu0 %768
  %770 = vrot.lane.b32.xlu0 %v138, 4
  %v771 = vpop.permute.xlu0 %770
  %772 = vrot.lane.b32.xlu0 %v139, 4
  %v773 = vpop.permute.xlu0 %772
  %774 = vrot.lane.b32.xlu0 %v140, 4
  %v775 = vpop.permute.xlu0 %774
  %776 = vrot.lane.b32.xlu0 %v141, 4
  %v777 = vpop.permute.xlu0 %776
  %778 = vrot.lane.b32.xlu0 %v142, 4
  %v779 = vpop.permute.xlu0 %778
  %780 = vrot.lane.b32.xlu0 %v143, 4
  %v781 = vpop.permute.xlu0 %780
  %782 = vrot.lane.b32.xlu0 %v144, 4
  %v783 = vpop.permute.xlu0 %782
  %784 = vrot.lane.b32.xlu0 %v145, 4
  %v785 = vpop.permute.xlu0 %784
  %786 = vrot.lane.b32.xlu0 %v146, 4
  %v787 = vpop.permute.xlu0 %786
  %788 = vrot.lane.b32.xlu0 %v147, 4
  %v789 = vpop.permute.xlu0 %788
  %918 = vrot.lane.b32.xlu0 %v148, 8
  %v919 = vpop.permute.xlu0 %918
  %920 = vrot.lane.b32.xlu0 %v149, 8
  %v921 = vpop.permute.xlu0 %920
  %922 = vrot.lane.b32.xlu0 %v150, 8
  %v923 = vpop.permute.xlu0 %922
  %924 = vrot.lane.b32.xlu0 %v151, 8
  %v925 = vpop.permute.xlu0 %924
  %926 = vrot.lane.b32.xlu0 %v152, 8
  %v927 = vpop.permute.xlu0 %926
  %928 = vrot.lane.b32.xlu0 %v153, 8
  %v929 = vpop.permute.xlu0 %928
  %930 = vrot.lane.b32.xlu0 %v154, 8
  %v931 = vpop.permute.xlu0 %930
  %932 = vrot.lane.b32.xlu0 %v155, 8
  %v933 = vpop.permute.xlu0 %932
  %934 = vrot.lane.b32.xlu0 %v156, 8
  %v935 = vpop.permute.xlu0 %934
  %936 = vrot.lane.b32.xlu0 %v157, 8
  %v937 = vpop.permute.xlu0 %936
  %938 = vrot.lane.b32.xlu0 %v158, 8
  %v939 = vpop.permute.xlu0 %938
  %940 = vrot.lane.b32.xlu0 %v159, 8
  %v941 = vpop.permute.xlu0 %940
  %942 = vrot.lane.b32.xlu0 %v160, 8
  %v943 = vpop.permute.xlu0 %942
  %944 = vrot.lane.b32.xlu0 %v161, 8
  %v945 = vpop.permute.xlu0 %944
  %946 = vrot.lane.b32.xlu0 %v162, 8
  %v947 = vpop.permute.xlu0 %946
  %948 = vrot.lane.b32.xlu0 %v163, 8
  %v949 = vpop.permute.xlu0 %948
  %950 = vrot.lane.b32.xlu0 %v164, 8
  %v951 = vpop.permute.xlu0 %950
  %952 = vrot.lane.b32.xlu0 %v165, 8
  %v953 = vpop.permute.xlu0 %952
  %954 = vrot.lane.b32.xlu0 %v166, 8
  %v955 = vpop.permute.xlu0 %954
  %956 = vrot.lane.b32.xlu0 %v167, 8
  %v957 = vpop.permute.xlu0 %956
  %958 = vrot.lane.b32.xlu0 %v168, 8
  %v959 = vpop.permute.xlu0 %958
  %960 = vrot.lane.b32.xlu0 %v169, 8
  %v961 = vpop.permute.xlu0 %960
  %962 = vrot.lane.b32.xlu0 %v170, 8
  %v963 = vpop.permute.xlu0 %962
  %964 = vrot.lane.b32.xlu0 %v171, 8
  %v965 = vpop.permute.xlu0 %964
  %966 = vrot.lane.b32.xlu0 %v172, 8
  %v967 = vpop.permute.xlu0 %966
  %968 = vrot.lane.b32.xlu0 %v173, 8
  %v969 = vpop.permute.xlu0 %968
  %970 = vrot.lane.b32.xlu0 %v174, 8
  %v971 = vpop.permute.xlu0 %970
  %972 = vrot.lane.b32.xlu0 %v175, 8
  %v973 = vpop.permute.xlu0 %972
  %974 = vrot.lane.b32.xlu0 %v176, 8
  %v975 = vpop.permute.xlu0 %974
  %976 = vrot.lane.b32.xlu0 %v177, 8
  %v977 = vpop.permute.xlu0 %976
  %978 = vrot.lane.b32.xlu0 %v178, 8
  %v979 = vpop.permute.xlu0 %978
  %980 = vrot.lane.b32.xlu0 %v179, 8
  %v981 = vpop.permute.xlu0 %980
  %982 = vrot.lane.b32.xlu0 %v180, 8
  %v983 = vpop.permute.xlu0 %982
  %984 = vrot.lane.b32.xlu0 %v181, 8
  %v985 = vpop.permute.xlu0 %984
  %986 = vrot.lane.b32.xlu0 %v182, 8
  %v987 = vpop.permute.xlu0 %986
  %988 = vrot.lane.b32.xlu0 %v183, 8
  %v989 = vpop.permute.xlu0 %988
  %990 = vrot.lane.b32.xlu0 %v184, 8
  %v991 = vpop.permute.xlu0 %990
  %992 = vrot.lane.b32.xlu0 %v185, 8
  %v993 = vpop.permute.xlu0 %992
  %994 = vrot.lane.b32.xlu0 %v186, 8
  %v995 = vpop.permute.xlu0 %994
  %996 = vrot.lane.b32.xlu0 %v187, 8
  %v997 = vpop.permute.xlu0 %996
  %998 = vrot.lane.b32.xlu0 %v188, 8
  %v999 = vpop.permute.xlu0 %998
  %1000 = vrot.lane.b32.xlu0 %v189, 8
  %v1001 = vpop.permute.xlu0 %1000
  %1002 = vrot.lane.b32.xlu0 %v190, 8
  %v1003 = vpop.permute.xlu0 %1002
  %1004 = vrot.lane.b32.xlu0 %v191, 8
  %v1005 = vpop.permute.xlu0 %1004
  %1006 = vrot.lane.b32.xlu0 %v192, 8
  %v1007 = vpop.permute.xlu0 %1006
  %1008 = vrot.lane.b32.xlu0 %v193, 8
  %v1009 = vpop.permute.xlu0 %1008
  %1010 = vrot.lane.b32.xlu0 %v194, 8
  %v1011 = vpop.permute.xlu0 %1010
  %1012 = vrot.lane.b32.xlu0 %v195, 8
  %v1013 = vpop.permute.xlu0 %1012
  %1014 = vrot.lane.b32.xlu0 %v196, 8
  %v1015 = vpop.permute.xlu0 %1014
  %1016 = vrot.lane.b32.xlu0 %v197, 8
  %v1017 = vpop.permute.xlu0 %1016
  %1018 = vrot.lane.b32.xlu0 %v198, 8
  %v1019 = vpop.permute.xlu0 %1018
  %1020 = vrot.lane.b32.xlu0 %v199, 8
  %v1021 = vpop.permute.xlu0 %1020
  %1022 = vrot.lane.b32.xlu0 %v200, 8
  %v1023 = vpop.permute.xlu0 %1022
  %1024 = vrot.lane.b32.xlu0 %v201, 8
  %v1025 = vpop.permute.xlu0 %1024
  %1026 = vrot.lane.b32.xlu0 %v202, 8
  %v1027 = vpop.permute.xlu0 %1026
  %1028 = vrot.lane.b32.xlu0 %v203, 8
  %v1029 = vpop.permute.xlu0 %1028
  %1030 = vrot.lane.b32.xlu0 %v204, 8
  %v1031 = vpop.permute.xlu0 %1030
  %1032 = vrot.lane.b32.xlu0 %v205, 8
  %v1033 = vpop.permute.xlu0 %1032
  %1034 = vrot.lane.b32.xlu0 %v206, 8
  %v1035 = vpop.permute.xlu0 %1034
  %1036 = vrot.lane.b32.xlu0 %v207, 8
  %v1037 = vpop.permute.xlu0 %1036
  %1038 = vrot.lane.b32.xlu0 %v208, 8
  %v1039 = vpop.permute.xlu0 %1038
  %1040 = vrot.lane.b32.xlu0 %v209, 8
  %v1041 = vpop.permute.xlu0 %1040
  %1042 = vrot.lane.b32.xlu0 %v210, 8
  %v1043 = vpop.permute.xlu0 %1042
  %1044 = vrot.lane.b32.xlu0 %v211, 8
  %v1045 = vpop.permute.xlu0 %1044
  %1174 = vrot.lane.b32.xlu0 %v213, 12
  %v1175 = vpop.permute.xlu0 %1174
  %1176 = vrot.lane.b32.xlu0 %v214, 12
  %v1177 = vpop.permute.xlu0 %1176
  %1178 = vrot.lane.b32.xlu0 %v215, 12
  %v1179 = vpop.permute.xlu0 %1178
  %1180 = vrot.lane.b32.xlu0 %v216, 12
  %v1181 = vpop.permute.xlu0 %1180
  %1182 = vrot.lane.b32.xlu0 %v217, 12
  %v1183 = vpop.permute.xlu0 %1182
  %1184 = vrot.lane.b32.xlu0 %v218, 12
  %v1185 = vpop.permute.xlu0 %1184
  %1186 = vrot.lane.b32.xlu0 %v219, 12
  %v1187 = vpop.permute.xlu0 %1186
  %1188 = vrot.lane.b32.xlu0 %v220, 12
  %v1189 = vpop.permute.xlu0 %1188
  %1190 = vrot.lane.b32.xlu0 %v221, 12
  %v1191 = vpop.permute.xlu0 %1190
  %1192 = vrot.lane.b32.xlu0 %v222, 12
  %v1193 = vpop.permute.xlu0 %1192
  %1194 = vrot.lane.b32.xlu0 %v223, 12
  %v1195 = vpop.permute.xlu0 %1194
  %1196 = vrot.lane.b32.xlu0 %v224, 12
  %v1197 = vpop.permute.xlu0 %1196
  %1198 = vrot.lane.b32.xlu0 %v225, 12
  %v1199 = vpop.permute.xlu0 %1198
  %1200 = vrot.lane.b32.xlu0 %v226, 12
  %v1201 = vpop.permute.xlu0 %1200
  %1202 = vrot.lane.b32.xlu0 %v227, 12
  %v1203 = vpop.permute.xlu0 %1202
  %1204 = vrot.lane.b32.xlu0 %v228, 12
  %v1205 = vpop.permute.xlu0 %1204
  %1206 = vrot.lane.b32.xlu0 %v229, 12
  %v1207 = vpop.permute.xlu0 %1206
  %1208 = vrot.lane.b32.xlu0 %v230, 12
  %v1209 = vpop.permute.xlu0 %1208
  %1210 = vrot.lane.b32.xlu0 %v231, 12
  %v1211 = vpop.permute.xlu0 %1210
  %1212 = vrot.lane.b32.xlu0 %v232, 12
  %v1213 = vpop.permute.xlu0 %1212
  %1214 = vrot.lane.b32.xlu0 %v233, 12
  %v1215 = vpop.permute.xlu0 %1214
  %1216 = vrot.lane.b32.xlu0 %v234, 12
  %v1217 = vpop.permute.xlu0 %1216
  %1218 = vrot.lane.b32.xlu0 %v235, 12
  %v1219 = vpop.permute.xlu0 %1218
  %1220 = vrot.lane.b32.xlu0 %v236, 12
  %v1221 = vpop.permute.xlu0 %1220
  %1222 = vrot.lane.b32.xlu0 %v237, 12
  %v1223 = vpop.permute.xlu0 %1222
  %1224 = vrot.lane.b32.xlu0 %v238, 12
  %v1225 = vpop.permute.xlu0 %1224
  %1226 = vrot.lane.b32.xlu0 %v239, 12
  %v1227 = vpop.permute.xlu0 %1226
  %1228 = vrot.lane.b32.xlu0 %v240, 12
  %v1229 = vpop.permute.xlu0 %1228
  %1230 = vrot.lane.b32.xlu0 %v241, 12
  %v1231 = vpop.permute.xlu0 %1230
  %1232 = vrot.lane.b32.xlu0 %v242, 12
  %v1233 = vpop.permute.xlu0 %1232
  %1234 = vrot.lane.b32.xlu0 %v243, 12
  %v1235 = vpop.permute.xlu0 %1234
  %1236 = vrot.lane.b32.xlu0 %v244, 12
  %v1237 = vpop.permute.xlu0 %1236
  %1238 = vrot.lane.b32.xlu0 %v245, 12
  %v1239 = vpop.permute.xlu0 %1238
  %1240 = vrot.lane.b32.xlu0 %v246, 12
  %v1241 = vpop.permute.xlu0 %1240
  %1242 = vrot.lane.b32.xlu0 %v247, 12
  %v1243 = vpop.permute.xlu0 %1242
  %1244 = vrot.lane.b32.xlu0 %v248, 12
  %v1245 = vpop.permute.xlu0 %1244
  %1246 = vrot.lane.b32.xlu0 %v249, 12
  %v1247 = vpop.permute.xlu0 %1246
  %1248 = vrot.lane.b32.xlu0 %v250, 12
  %v1249 = vpop.permute.xlu0 %1248
  %1250 = vrot.lane.b32.xlu0 %v251, 12
  %v1251 = vpop.permute.xlu0 %1250
  %1252 = vrot.lane.b32.xlu0 %v252, 12
  %v1253 = vpop.permute.xlu0 %1252
  %1254 = vrot.lane.b32.xlu0 %v253, 12
  %v1255 = vpop.permute.xlu0 %1254
  %1256 = vrot.lane.b32.xlu0 %v254, 12
  %v1257 = vpop.permute.xlu0 %1256
  %1258 = vrot.lane.b32.xlu0 %v255, 12
  %v1259 = vpop.permute.xlu0 %1258
  %1260 = vrot.lane.b32.xlu0 %v256, 12
  %v1261 = vpop.permute.xlu0 %1260
  %1262 = vrot.lane.b32.xlu0 %v257, 12
  %v1263 = vpop.permute.xlu0 %1262
  %1264 = vrot.lane.b32.xlu0 %v258, 12
  %v1265 = vpop.permute.xlu0 %1264
  %1266 = vrot.lane.b32.xlu0 %v259, 12
  %v1267 = vpop.permute.xlu0 %1266
  %1268 = vrot.lane.b32.xlu0 %v260, 12
  %v1269 = vpop.permute.xlu0 %1268
  %1270 = vrot.lane.b32.xlu0 %v261, 12
  %v1271 = vpop.permute.xlu0 %1270
  %1272 = vrot.lane.b32.xlu0 %v262, 12
  %v1273 = vpop.permute.xlu0 %1272
  %1274 = vrot.lane.b32.xlu0 %v263, 12
  %v1275 = vpop.permute.xlu0 %1274
  %1276 = vrot.lane.b32.xlu0 %v264, 12
  %v1277 = vpop.permute.xlu0 %1276
  %1278 = vrot.lane.b32.xlu0 %v265, 12
  %v1279 = vpop.permute.xlu0 %1278
  %1280 = vrot.lane.b32.xlu0 %v266, 12
  %v1281 = vpop.permute.xlu0 %1280
  %1282 = vrot.lane.b32.xlu0 %v267, 12
  %v1283 = vpop.permute.xlu0 %1282
  %1284 = vrot.lane.b32.xlu0 %v268, 12
  %v1285 = vpop.permute.xlu0 %1284
  %1286 = vrot.lane.b32.xlu0 %v269, 12
  %v1287 = vpop.permute.xlu0 %1286
  %1288 = vrot.lane.b32.xlu0 %v270, 12
  %v1289 = vpop.permute.xlu0 %1288
  %1290 = vrot.lane.b32.xlu0 %v271, 12
  %v1291 = vpop.permute.xlu0 %1290
  %1292 = vrot.lane.b32.xlu0 %v272, 12
  %v1293 = vpop.permute.xlu0 %1292
  %1294 = vrot.lane.b32.xlu0 %v273, 12
  %v1295 = vpop.permute.xlu0 %1294
  %1296 = vrot.lane.b32.xlu0 %v274, 12
  %v1297 = vpop.permute.xlu0 %1296
  %1298 = vrot.lane.b32.xlu0 %v275, 12
  %v1299 = vpop.permute.xlu0 %1298
  %1300 = vrot.lane.b32.xlu0 %v276, 12
  %v1301 = vpop.permute.xlu0 %1300
  %1430 = vrot.lane.b32.xlu0 %v277, 16
  %v1431 = vpop.permute.xlu0 %1430
  %1432 = vrot.lane.b32.xlu0 %v278, 16
  %v1433 = vpop.permute.xlu0 %1432
  %1434 = vrot.lane.b32.xlu0 %v279, 16
  %v1435 = vpop.permute.xlu0 %1434
  %1436 = vrot.lane.b32.xlu0 %v280, 16
  %v1437 = vpop.permute.xlu0 %1436
  %1438 = vrot.lane.b32.xlu0 %v281, 16
  %v1439 = vpop.permute.xlu0 %1438
  %1440 = vrot.lane.b32.xlu0 %v282, 16
  %v1441 = vpop.permute.xlu0 %1440
  %1442 = vrot.lane.b32.xlu0 %v283, 16
  %v1443 = vpop.permute.xlu0 %1442
  %1444 = vrot.lane.b32.xlu0 %v284, 16
  %v1445 = vpop.permute.xlu0 %1444
  %1446 = vrot.lane.b32.xlu0 %v285, 16
  %v1447 = vpop.permute.xlu0 %1446
  %1448 = vrot.lane.b32.xlu0 %v286, 16
  %v1449 = vpop.permute.xlu0 %1448
  %1450 = vrot.lane.b32.xlu0 %v287, 16
  %v1451 = vpop.permute.xlu0 %1450
  %1452 = vrot.lane.b32.xlu0 %v288, 16
  %v1453 = vpop.permute.xlu0 %1452
  %1454 = vrot.lane.b32.xlu0 %v289, 16
  %v1455 = vpop.permute.xlu0 %1454
  %1456 = vrot.lane.b32.xlu0 %v290, 16
  %v1457 = vpop.permute.xlu0 %1456
  %1458 = vrot.lane.b32.xlu0 %v291, 16
  %v1459 = vpop.permute.xlu0 %1458
  %1460 = vrot.lane.b32.xlu0 %v292, 16
  %v1461 = vpop.permute.xlu0 %1460
  %1462 = vrot.lane.b32.xlu0 %v293, 16
  %v1463 = vpop.permute.xlu0 %1462
  %1464 = vrot.lane.b32.xlu0 %v294, 16
  %v1465 = vpop.permute.xlu0 %1464
  %1466 = vrot.lane.b32.xlu0 %v295, 16
  %v1467 = vpop.permute.xlu0 %1466
  %1468 = vrot.lane.b32.xlu0 %v296, 16
  %v1469 = vpop.permute.xlu0 %1468
  %1470 = vrot.lane.b32.xlu0 %v297, 16
  %v1471 = vpop.permute.xlu0 %1470
  %1472 = vrot.lane.b32.xlu0 %v298, 16
  %v1473 = vpop.permute.xlu0 %1472
  %1474 = vrot.lane.b32.xlu0 %v299, 16
  %v1475 = vpop.permute.xlu0 %1474
  %1476 = vrot.lane.b32.xlu0 %v300, 16
  %v1477 = vpop.permute.xlu0 %1476
  %1478 = vrot.lane.b32.xlu0 %v301, 16
  %v1479 = vpop.permute.xlu0 %1478
  %1480 = vrot.lane.b32.xlu0 %v302, 16
  %v1481 = vpop.permute.xlu0 %1480
  %1482 = vrot.lane.b32.xlu0 %v303, 16
  %v1483 = vpop.permute.xlu0 %1482
  %1484 = vrot.lane.b32.xlu0 %v304, 16
  %v1485 = vpop.permute.xlu0 %1484
  %1486 = vrot.lane.b32.xlu0 %v305, 16
  %v1487 = vpop.permute.xlu0 %1486
  %1488 = vrot.lane.b32.xlu0 %v306, 16
  %v1489 = vpop.permute.xlu0 %1488
  %1490 = vrot.lane.b32.xlu0 %v307, 16
  %v1491 = vpop.permute.xlu0 %1490
  %1492 = vrot.lane.b32.xlu0 %v308, 16
  %v1493 = vpop.permute.xlu0 %1492
  %1494 = vrot.lane.b32.xlu0 %v309, 16
  %v1495 = vpop.permute.xlu0 %1494
  %1496 = vrot.lane.b32.xlu0 %v310, 16
  %v1497 = vpop.permute.xlu0 %1496
  %1498 = vrot.lane.b32.xlu0 %v311, 16
  %v1499 = vpop.permute.xlu0 %1498
  %1500 = vrot.lane.b32.xlu0 %v312, 16
  %v1501 = vpop.permute.xlu0 %1500
  %1502 = vrot.lane.b32.xlu0 %v313, 16
  %v1503 = vpop.permute.xlu0 %1502
  %1504 = vrot.lane.b32.xlu0 %v314, 16
  %v1505 = vpop.permute.xlu0 %1504
  %1506 = vrot.lane.b32.xlu0 %v315, 16
  %v1507 = vpop.permute.xlu0 %1506
  %1508 = vrot.lane.b32.xlu0 %v316, 16
  %v1509 = vpop.permute.xlu0 %1508
  %1510 = vrot.lane.b32.xlu0 %v317, 16
  %v1511 = vpop.permute.xlu0 %1510
  %1512 = vrot.lane.b32.xlu0 %v318, 16
  %v1513 = vpop.permute.xlu0 %1512
  %1514 = vrot.lane.b32.xlu0 %v319, 16
  %v1515 = vpop.permute.xlu0 %1514
  %1516 = vrot.lane.b32.xlu0 %v320, 16
  %v1517 = vpop.permute.xlu0 %1516
  %1518 = vrot.lane.b32.xlu0 %v321, 16
  %v1519 = vpop.permute.xlu0 %1518
  %1520 = vrot.lane.b32.xlu0 %v322, 16
  %v1521 = vpop.permute.xlu0 %1520
  %1522 = vrot.lane.b32.xlu0 %v323, 16
  %v1523 = vpop.permute.xlu0 %1522
  %1524 = vrot.lane.b32.xlu0 %v324, 16
  %v1525 = vpop.permute.xlu0 %1524
  %1526 = vrot.lane.b32.xlu0 %v325, 16
  %v1527 = vpop.permute.xlu0 %1526
  %1528 = vrot.lane.b32.xlu0 %v326, 16
  %v1529 = vpop.permute.xlu0 %1528
  %1530 = vrot.lane.b32.xlu0 %v327, 16
  %v1531 = vpop.permute.xlu0 %1530
  %1532 = vrot.lane.b32.xlu0 %v328, 16
  %v1533 = vpop.permute.xlu0 %1532
  %1534 = vrot.lane.b32.xlu0 %v329, 16
  %v1535 = vpop.permute.xlu0 %1534
  %1536 = vrot.lane.b32.xlu0 %v330, 16
  %v1537 = vpop.permute.xlu0 %1536
  %1538 = vrot.lane.b32.xlu0 %v331, 16
  %v1539 = vpop.permute.xlu0 %1538
  %1540 = vrot.lane.b32.xlu0 %v332, 16
  %v1541 = vpop.permute.xlu0 %1540
  %1542 = vrot.lane.b32.xlu0 %v333, 16
  %v1543 = vpop.permute.xlu0 %1542
  %1544 = vrot.lane.b32.xlu0 %v334, 16
  %v1545 = vpop.permute.xlu0 %1544
  %1546 = vrot.lane.b32.xlu0 %v335, 16
  %v1547 = vpop.permute.xlu0 %1546
  %1548 = vrot.lane.b32.xlu0 %v336, 16
  %v1549 = vpop.permute.xlu0 %1548
  %1550 = vrot.lane.b32.xlu0 %v337, 16
  %v1551 = vpop.permute.xlu0 %1550
  %1552 = vrot.lane.b32.xlu0 %v338, 16
  %v1553 = vpop.permute.xlu0 %1552
  %1554 = vrot.lane.b32.xlu0 %v339, 16
  %v1555 = vpop.permute.xlu0 %1554
  %1556 = vrot.lane.b32.xlu0 %v340, 16
  %v1557 = vpop.permute.xlu0 %1556
  %1686 = vrot.lane.b32.xlu0 %v341, 20
  %v1687 = vpop.permute.xlu0 %1686
  %1688 = vrot.lane.b32.xlu0 %v342, 20
  %v1689 = vpop.permute.xlu0 %1688
  %1690 = vrot.lane.b32.xlu0 %v343, 20
  %v1691 = vpop.permute.xlu0 %1690
  %1692 = vrot.lane.b32.xlu0 %v344, 20
  %v1693 = vpop.permute.xlu0 %1692
  %1694 = vrot.lane.b32.xlu0 %v345, 20
  %v1695 = vpop.permute.xlu0 %1694
  %1696 = vrot.lane.b32.xlu0 %v346, 20
  %v1697 = vpop.permute.xlu0 %1696
  %1698 = vrot.lane.b32.xlu0 %v347, 20
  %v1699 = vpop.permute.xlu0 %1698
  %1700 = vrot.lane.b32.xlu0 %v348, 20
  %v1701 = vpop.permute.xlu0 %1700
  %1702 = vrot.lane.b32.xlu0 %v349, 20
  %v1703 = vpop.permute.xlu0 %1702
  %1704 = vrot.lane.b32.xlu0 %v350, 20
  %v1705 = vpop.permute.xlu0 %1704
  %1706 = vrot.lane.b32.xlu0 %v351, 20
  %v1707 = vpop.permute.xlu0 %1706
  %1708 = vrot.lane.b32.xlu0 %v352, 20
  %v1709 = vpop.permute.xlu0 %1708
  %1710 = vrot.lane.b32.xlu0 %v353, 20
  %v1711 = vpop.permute.xlu0 %1710
  %1712 = vrot.lane.b32.xlu0 %v354, 20
  %v1713 = vpop.permute.xlu0 %1712
  %1714 = vrot.lane.b32.xlu0 %v355, 20
  %v1715 = vpop.permute.xlu0 %1714
  %1716 = vrot.lane.b32.xlu0 %v356, 20
  %v1717 = vpop.permute.xlu0 %1716
  %1718 = vrot.lane.b32.xlu0 %v357, 20
  %v1719 = vpop.permute.xlu0 %1718
  %1720 = vrot.lane.b32.xlu0 %v358, 20
  %v1721 = vpop.permute.xlu0 %1720
  %1722 = vrot.lane.b32.xlu0 %v359, 20
  %v1723 = vpop.permute.xlu0 %1722
  %1724 = vrot.lane.b32.xlu0 %v360, 20
  %v1725 = vpop.permute.xlu0 %1724
  %1726 = vrot.lane.b32.xlu0 %v361, 20
  %v1727 = vpop.permute.xlu0 %1726
  %1728 = vrot.lane.b32.xlu0 %v362, 20
  %v1729 = vpop.permute.xlu0 %1728
  %1730 = vrot.lane.b32.xlu0 %v363, 20
  %v1731 = vpop.permute.xlu0 %1730
  %1732 = vrot.lane.b32.xlu0 %v364, 20
  %v1733 = vpop.permute.xlu0 %1732
  %1734 = vrot.lane.b32.xlu0 %v365, 20
  %v1735 = vpop.permute.xlu0 %1734
  %1736 = vrot.lane.b32.xlu0 %v366, 20
  %v1737 = vpop.permute.xlu0 %1736
  %1738 = vrot.lane.b32.xlu0 %v367, 20
  %v1739 = vpop.permute.xlu0 %1738
  %1740 = vrot.lane.b32.xlu0 %v368, 20
  %v1741 = vpop.permute.xlu0 %1740
  %1742 = vrot.lane.b32.xlu0 %v369, 20
  %v1743 = vpop.permute.xlu0 %1742
  %1744 = vrot.lane.b32.xlu0 %v370, 20
  %v1745 = vpop.permute.xlu0 %1744
  %1746 = vrot.lane.b32.xlu0 %v371, 20
  %v1747 = vpop.permute.xlu0 %1746
  %1748 = vrot.lane.b32.xlu0 %v372, 20
  %v1749 = vpop.permute.xlu0 %1748
  %1750 = vrot.lane.b32.xlu0 %v373, 20
  %v1751 = vpop.permute.xlu0 %1750
  %1752 = vrot.lane.b32.xlu0 %v374, 20
  %v1753 = vpop.permute.xlu0 %1752
  %1754 = vrot.lane.b32.xlu0 %v375, 20
  %v1755 = vpop.permute.xlu0 %1754
  %1756 = vrot.lane.b32.xlu0 %v376, 20
  %v1757 = vpop.permute.xlu0 %1756
  %1758 = vrot.lane.b32.xlu0 %v377, 20
  %v1759 = vpop.permute.xlu0 %1758
  %1760 = vrot.lane.b32.xlu0 %v378, 20
  %v1761 = vpop.permute.xlu0 %1760
  %1762 = vrot.lane.b32.xlu0 %v379, 20
  %v1763 = vpop.permute.xlu0 %1762
  %1764 = vrot.lane.b32.xlu0 %v380, 20
  %v1765 = vpop.permute.xlu0 %1764
  %1766 = vrot.lane.b32.xlu0 %v381, 20
  %v1767 = vpop.permute.xlu0 %1766
  %1768 = vrot.lane.b32.xlu0 %v382, 20
  %v1769 = vpop.permute.xlu0 %1768
  %1770 = vrot.lane.b32.xlu0 %v383, 20
  %v1771 = vpop.permute.xlu0 %1770
  %1772 = vrot.lane.b32.xlu0 %v384, 20
  %v1773 = vpop.permute.xlu0 %1772
  %1774 = vrot.lane.b32.xlu0 %v385, 20
  %v1775 = vpop.permute.xlu0 %1774
  %1776 = vrot.lane.b32.xlu0 %v386, 20
  %v1777 = vpop.permute.xlu0 %1776
  %1778 = vrot.lane.b32.xlu0 %v387, 20
  %v1779 = vpop.permute.xlu0 %1778
  %1780 = vrot.lane.b32.xlu0 %v388, 20
  %v1781 = vpop.permute.xlu0 %1780
  %1782 = vrot.lane.b32.xlu0 %v389, 20
  %v1783 = vpop.permute.xlu0 %1782
  %1784 = vrot.lane.b32.xlu0 %v390, 20
  %v1785 = vpop.permute.xlu0 %1784
  %1786 = vrot.lane.b32.xlu0 %v391, 20
  %v1787 = vpop.permute.xlu0 %1786
  %1788 = vrot.lane.b32.xlu0 %v392, 20
  %v1789 = vpop.permute.xlu0 %1788
  %1790 = vrot.lane.b32.xlu0 %v393, 20
  %v1791 = vpop.permute.xlu0 %1790
  %1792 = vrot.lane.b32.xlu0 %v394, 20
  %v1793 = vpop.permute.xlu0 %1792
  %1794 = vrot.lane.b32.xlu0 %v395, 20
  %v1795 = vpop.permute.xlu0 %1794
  %1796 = vrot.lane.b32.xlu0 %v396, 20
  %v1797 = vpop.permute.xlu0 %1796
  %1798 = vrot.lane.b32.xlu0 %v397, 20
  %v1799 = vpop.permute.xlu0 %1798
  %1800 = vrot.lane.b32.xlu0 %v398, 20
  %v1801 = vpop.permute.xlu0 %1800
  %1802 = vrot.lane.b32.xlu0 %v399, 20
  %v1803 = vpop.permute.xlu0 %1802
  %1804 = vrot.lane.b32.xlu0 %v400, 20
  %v1805 = vpop.permute.xlu0 %1804
  %1806 = vrot.lane.b32.xlu0 %v401, 20
  %v1807 = vpop.permute.xlu0 %1806
  %1808 = vrot.lane.b32.xlu0 %v402, 20
  %v1809 = vpop.permute.xlu0 %1808
  %1810 = vrot.lane.b32.xlu0 %v403, 20
  %v1811 = vpop.permute.xlu0 %1810
  %1812 = vrot.lane.b32.xlu0 %v404, 20
  %v1813 = vpop.permute.xlu0 %1812
  %1942 = vrot.lane.b32.xlu0 %v406, 24
  %v1943 = vpop.permute.xlu0 %1942
  %1944 = vrot.lane.b32.xlu0 %v407, 24
  %v1945 = vpop.permute.xlu0 %1944
  %1946 = vrot.lane.b32.xlu0 %v408, 24
  %v1947 = vpop.permute.xlu0 %1946
  %1948 = vrot.lane.b32.xlu0 %v409, 24
  %v1949 = vpop.permute.xlu0 %1948
  %1950 = vrot.lane.b32.xlu0 %v410, 24
  %v1951 = vpop.permute.xlu0 %1950
  %1952 = vrot.lane.b32.xlu0 %v411, 24
  %v1953 = vpop.permute.xlu0 %1952
  %1954 = vrot.lane.b32.xlu0 %v412, 24
  %v1955 = vpop.permute.xlu0 %1954
  %1956 = vrot.lane.b32.xlu0 %v413, 24
  %v1957 = vpop.permute.xlu0 %1956
  %1958 = vrot.lane.b32.xlu0 %v414, 24
  %v1959 = vpop.permute.xlu0 %1958
  %1960 = vrot.lane.b32.xlu0 %v415, 24
  %v1961 = vpop.permute.xlu0 %1960
  %1962 = vrot.lane.b32.xlu0 %v416, 24
  %v1963 = vpop.permute.xlu0 %1962
  %1964 = vrot.lane.b32.xlu0 %v417, 24
  %v1965 = vpop.permute.xlu0 %1964
  %1966 = vrot.lane.b32.xlu0 %v418, 24
  %v1967 = vpop.permute.xlu0 %1966
  %1968 = vrot.lane.b32.xlu0 %v419, 24
  %v1969 = vpop.permute.xlu0 %1968
  %1970 = vrot.lane.b32.xlu0 %v420, 24
  %v1971 = vpop.permute.xlu0 %1970
  %1972 = vrot.lane.b32.xlu0 %v421, 24
  %v1973 = vpop.permute.xlu0 %1972
  %1974 = vrot.lane.b32.xlu0 %v422, 24
  %v1975 = vpop.permute.xlu0 %1974
  %1976 = vrot.lane.b32.xlu0 %v423, 24
  %v1977 = vpop.permute.xlu0 %1976
  %1978 = vrot.lane.b32.xlu0 %v424, 24
  %v1979 = vpop.permute.xlu0 %1978
  %1980 = vrot.lane.b32.xlu0 %v425, 24
  %v1981 = vpop.permute.xlu0 %1980
  %1982 = vrot.lane.b32.xlu0 %v426, 24
  %v1983 = vpop.permute.xlu0 %1982
  %1984 = vrot.lane.b32.xlu0 %v427, 24
  %v1985 = vpop.permute.xlu0 %1984
  %1986 = vrot.lane.b32.xlu0 %v428, 24
  %v1987 = vpop.permute.xlu0 %1986
  %1988 = vrot.lane.b32.xlu0 %v429, 24
  %v1989 = vpop.permute.xlu0 %1988
  %1990 = vrot.lane.b32.xlu0 %v430, 24
  %v1991 = vpop.permute.xlu0 %1990
  %1992 = vrot.lane.b32.xlu0 %v431, 24
  %v1993 = vpop.permute.xlu0 %1992
  %1994 = vrot.lane.b32.xlu0 %v432, 24
  %v1995 = vpop.permute.xlu0 %1994
  %1996 = vrot.lane.b32.xlu0 %v433, 24
  %v1997 = vpop.permute.xlu0 %1996
  %1998 = vrot.lane.b32.xlu0 %v434, 24
  %v1999 = vpop.permute.xlu0 %1998
  %2000 = vrot.lane.b32.xlu0 %v435, 24
  %v2001 = vpop.permute.xlu0 %2000
  %2002 = vrot.lane.b32.xlu0 %v436, 24
  %v2003 = vpop.permute.xlu0 %2002
  %2004 = vrot.lane.b32.xlu0 %v437, 24
  %v2005 = vpop.permute.xlu0 %2004
  %2006 = vrot.lane.b32.xlu0 %v438, 24
  %v2007 = vpop.permute.xlu0 %2006
  %2008 = vrot.lane.b32.xlu0 %v439, 24
  %v2009 = vpop.permute.xlu0 %2008
  %2010 = vrot.lane.b32.xlu0 %v440, 24
  %v2011 = vpop.permute.xlu0 %2010
  %2012 = vrot.lane.b32.xlu0 %v441, 24
  %v2013 = vpop.permute.xlu0 %2012
  %2014 = vrot.lane.b32.xlu0 %v442, 24
  %v2015 = vpop.permute.xlu0 %2014
  %2016 = vrot.lane.b32.xlu0 %v443, 24
  %v2017 = vpop.permute.xlu0 %2016
  %2018 = vrot.lane.b32.xlu0 %v444, 24
  %v2019 = vpop.permute.xlu0 %2018
  %2020 = vrot.lane.b32.xlu0 %v445, 24
  %v2021 = vpop.permute.xlu0 %2020
  %2022 = vrot.lane.b32.xlu0 %v446, 24
  %v2023 = vpop.permute.xlu0 %2022
  %2024 = vrot.lane.b32.xlu0 %v447, 24
  %v2025 = vpop.permute.xlu0 %2024
  %2026 = vrot.lane.b32.xlu0 %v448, 24
  %v2027 = vpop.permute.xlu0 %2026
  %2028 = vrot.lane.b32.xlu0 %v449, 24
  %v2029 = vpop.permute.xlu0 %2028
  %2030 = vrot.lane.b32.xlu0 %v450, 24
  %v2031 = vpop.permute.xlu0 %2030
  %2032 = vrot.lane.b32.xlu0 %v451, 24
  %v2033 = vpop.permute.xlu0 %2032
  %2034 = vrot.lane.b32.xlu0 %v452, 24
  %v2035 = vpop.permute.xlu0 %2034
  %2036 = vrot.lane.b32.xlu0 %v453, 24
  %v2037 = vpop.permute.xlu0 %2036
  %2038 = vrot.lane.b32.xlu0 %v454, 24
  %v2039 = vpop.permute.xlu0 %2038
  %2040 = vrot.lane.b32.xlu0 %v455, 24
  %v2041 = vpop.permute.xlu0 %2040
  %2042 = vrot.lane.b32.xlu0 %v456, 24
  %v2043 = vpop.permute.xlu0 %2042
  %2044 = vrot.lane.b32.xlu0 %v457, 24
  %v2045 = vpop.permute.xlu0 %2044
  %2046 = vrot.lane.b32.xlu0 %v458, 24
  %v2047 = vpop.permute.xlu0 %2046
  %2048 = vrot.lane.b32.xlu0 %v459, 24
  %v2049 = vpop.permute.xlu0 %2048
  %2050 = vrot.lane.b32.xlu0 %v460, 24
  %v2051 = vpop.permute.xlu0 %2050
  %2052 = vrot.lane.b32.xlu0 %v461, 24
  %v2053 = vpop.permute.xlu0 %2052
  %2054 = vrot.lane.b32.xlu0 %v462, 24
  %v2055 = vpop.permute.xlu0 %2054
  %2056 = vrot.lane.b32.xlu0 %v463, 24
  %v2057 = vpop.permute.xlu0 %2056
  %2058 = vrot.lane.b32.xlu0 %v464, 24
  %v2059 = vpop.permute.xlu0 %2058
  %2060 = vrot.lane.b32.xlu0 %v465, 24
  %v2061 = vpop.permute.xlu0 %2060
  %2062 = vrot.lane.b32.xlu0 %v466, 24
  %v2063 = vpop.permute.xlu0 %2062
  %2064 = vrot.lane.b32.xlu0 %v467, 24
  %v2065 = vpop.permute.xlu0 %2064
  %2066 = vrot.lane.b32.xlu0 %v468, 24
  %v2067 = vpop.permute.xlu0 %2066
  %2068 = vrot.lane.b32.xlu0 %v469, 24
  %v2069 = vpop.permute.xlu0 %2068
  %2198 = vrot.lane.b32.xlu0 %v470, 28
  %v2199 = vpop.permute.xlu0 %2198
  %2200 = vrot.lane.b32.xlu0 %v471, 28
  %v2201 = vpop.permute.xlu0 %2200
  %2202 = vrot.lane.b32.xlu0 %v472, 28
  %v2203 = vpop.permute.xlu0 %2202
  %2204 = vrot.lane.b32.xlu0 %v473, 28
  %v2205 = vpop.permute.xlu0 %2204
  %2206 = vrot.lane.b32.xlu0 %v474, 28
  %v2207 = vpop.permute.xlu0 %2206
  %2208 = vrot.lane.b32.xlu0 %v475, 28
  %v2209 = vpop.permute.xlu0 %2208
  %2210 = vrot.lane.b32.xlu0 %v476, 28
  %v2211 = vpop.permute.xlu0 %2210
  %2212 = vrot.lane.b32.xlu0 %v477, 28
  %v2213 = vpop.permute.xlu0 %2212
  %2214 = vrot.lane.b32.xlu0 %v478, 28
  %v2215 = vpop.permute.xlu0 %2214
  %2216 = vrot.lane.b32.xlu0 %v479, 28
  %v2217 = vpop.permute.xlu0 %2216
  %2218 = vrot.lane.b32.xlu0 %v480, 28
  %v2219 = vpop.permute.xlu0 %2218
  %2220 = vrot.lane.b32.xlu0 %v481, 28
  %v2221 = vpop.permute.xlu0 %2220
  %2222 = vrot.lane.b32.xlu0 %v482, 28
  %v2223 = vpop.permute.xlu0 %2222
  %2224 = vrot.lane.b32.xlu0 %v483, 28
  %v2225 = vpop.permute.xlu0 %2224
  %2226 = vrot.lane.b32.xlu0 %v484, 28
  %v2227 = vpop.permute.xlu0 %2226
  %2228 = vrot.lane.b32.xlu0 %v485, 28
  %v2229 = vpop.permute.xlu0 %2228
  %2230 = vrot.lane.b32.xlu0 %v486, 28
  %v2231 = vpop.permute.xlu0 %2230
  %2232 = vrot.lane.b32.xlu0 %v487, 28
  %v2233 = vpop.permute.xlu0 %2232
  %2234 = vrot.lane.b32.xlu0 %v488, 28
  %v2235 = vpop.permute.xlu0 %2234
  %2236 = vrot.lane.b32.xlu0 %v489, 28
  %v2237 = vpop.permute.xlu0 %2236
  %2238 = vrot.lane.b32.xlu0 %v490, 28
  %v2239 = vpop.permute.xlu0 %2238
  %2240 = vrot.lane.b32.xlu0 %v491, 28
  %v2241 = vpop.permute.xlu0 %2240
  %2242 = vrot.lane.b32.xlu0 %v492, 28
  %v2243 = vpop.permute.xlu0 %2242
  %2244 = vrot.lane.b32.xlu0 %v493, 28
  %v2245 = vpop.permute.xlu0 %2244
  %2246 = vrot.lane.b32.xlu0 %v494, 28
  %v2247 = vpop.permute.xlu0 %2246
  %2248 = vrot.lane.b32.xlu0 %v495, 28
  %v2249 = vpop.permute.xlu0 %2248
  %2250 = vrot.lane.b32.xlu0 %v496, 28
  %v2251 = vpop.permute.xlu0 %2250
  %2252 = vrot.lane.b32.xlu0 %v497, 28
  %v2253 = vpop.permute.xlu0 %2252
  %2254 = vrot.lane.b32.xlu0 %v498, 28
  %v2255 = vpop.permute.xlu0 %2254
  %2256 = vrot.lane.b32.xlu0 %v499, 28
  %v2257 = vpop.permute.xlu0 %2256
  %2258 = vrot.lane.b32.xlu0 %v500, 28
  %v2259 = vpop.permute.xlu0 %2258
  %2260 = vrot.lane.b32.xlu0 %v501, 28
  %v2261 = vpop.permute.xlu0 %2260
  %2262 = vrot.lane.b32.xlu0 %v502, 28
  %v2263 = vpop.permute.xlu0 %2262
  %2264 = vrot.lane.b32.xlu0 %v503, 28
  %v2265 = vpop.permute.xlu0 %2264
  %2266 = vrot.lane.b32.xlu0 %v504, 28
  %v2267 = vpop.permute.xlu0 %2266
  %2268 = vrot.lane.b32.xlu0 %v505, 28
  %v2269 = vpop.permute.xlu0 %2268
  %2270 = vrot.lane.b32.xlu0 %v506, 28
  %v2271 = vpop.permute.xlu0 %2270
  %2272 = vrot.lane.b32.xlu0 %v507, 28
  %v2273 = vpop.permute.xlu0 %2272
  %2274 = vrot.lane.b32.xlu0 %v508, 28
  %v2275 = vpop.permute.xlu0 %2274
  %2276 = vrot.lane.b32.xlu0 %v509, 28
  %v2277 = vpop.permute.xlu0 %2276
  %2278 = vrot.lane.b32.xlu0 %v510, 28
  %v2279 = vpop.permute.xlu0 %2278
  %2280 = vrot.lane.b32.xlu0 %v511, 28
  %v2281 = vpop.permute.xlu0 %2280
  %2282 = vrot.lane.b32.xlu0 %v512, 28
  %v2283 = vpop.permute.xlu0 %2282
  %2284 = vrot.lane.b32.xlu0 %v513, 28
  %v2285 = vpop.permute.xlu0 %2284
  %2286 = vrot.lane.b32.xlu0 %v514, 28
  %v2287 = vpop.permute.xlu0 %2286
  %2288 = vrot.lane.b32.xlu0 %v515, 28
  %v2289 = vpop.permute.xlu0 %2288
  %2290 = vrot.lane.b32.xlu0 %v516, 28
  %v2291 = vpop.permute.xlu0 %2290
  %2292 = vrot.lane.b32.xlu0 %v517, 28
  %v2293 = vpop.permute.xlu0 %2292
  %2294 = vrot.lane.b32.xlu0 %v518, 28
  %v2295 = vpop.permute.xlu0 %2294
  %2296 = vrot.lane.b32.xlu0 %v519, 28
  %v2297 = vpop.permute.xlu0 %2296
  %2298 = vrot.lane.b32.xlu0 %v520, 28
  %v2299 = vpop.permute.xlu0 %2298
  %2300 = vrot.lane.b32.xlu0 %v521, 28
  %v2301 = vpop.permute.xlu0 %2300
  %2302 = vrot.lane.b32.xlu0 %v522, 28
  %v2303 = vpop.permute.xlu0 %2302
  %2304 = vrot.lane.b32.xlu0 %v523, 28
  %v2305 = vpop.permute.xlu0 %2304
  %2306 = vrot.lane.b32.xlu0 %v524, 28
  %v2307 = vpop.permute.xlu0 %2306
  %2308 = vrot.lane.b32.xlu0 %v525, 28
  %v2309 = vpop.permute.xlu0 %2308
  %2310 = vrot.lane.b32.xlu0 %v526, 28
  %v2311 = vpop.permute.xlu0 %2310
  %2312 = vrot.lane.b32.xlu0 %v527, 28
  %v2313 = vpop.permute.xlu0 %2312
  %2314 = vrot.lane.b32.xlu0 %v528, 28
  %v2315 = vpop.permute.xlu0 %2314
  %2316 = vrot.lane.b32.xlu0 %v529, 28
  %v2317 = vpop.permute.xlu0 %2316
  %2318 = vrot.lane.b32.xlu0 %v530, 28
  %v2319 = vpop.permute.xlu0 %2318
  %2320 = vrot.lane.b32.xlu0 %v531, 28
  %v2321 = vpop.permute.xlu0 %2320
  %2322 = vrot.lane.b32.xlu0 %v532, 28
  %v2323 = vpop.permute.xlu0 %2322
  %2324 = vrot.lane.b32.xlu0 %v533, 28
  %v2325 = vpop.permute.xlu0 %2324
  %2454 = vrot.lane.b32.xlu0 %v534, 32
  %v2455 = vpop.permute.xlu0 %2454
  %2456 = vrot.lane.b32.xlu0 %v535, 32
  %v2457 = vpop.permute.xlu0 %2456
  %2458 = vrot.lane.b32.xlu0 %v536, 32
  %v2459 = vpop.permute.xlu0 %2458
  %2460 = vrot.lane.b32.xlu0 %v537, 32
  %v2461 = vpop.permute.xlu0 %2460
  %2462 = vrot.lane.b32.xlu0 %v538, 32
  %v2463 = vpop.permute.xlu0 %2462
  %2464 = vrot.lane.b32.xlu0 %v539, 32
  %v2465 = vpop.permute.xlu0 %2464
  %2466 = vrot.lane.b32.xlu0 %v540, 32
  %v2467 = vpop.permute.xlu0 %2466
  %2468 = vrot.lane.b32.xlu0 %v541, 32
  %v2469 = vpop.permute.xlu0 %2468
  %2470 = vrot.lane.b32.xlu0 %v542, 32
  %v2471 = vpop.permute.xlu0 %2470
  %2472 = vrot.lane.b32.xlu0 %v543, 32
  %v2473 = vpop.permute.xlu0 %2472
  %2474 = vrot.lane.b32.xlu0 %v544, 32
  %v2475 = vpop.permute.xlu0 %2474
  %2476 = vrot.lane.b32.xlu0 %v545, 32
  %v2477 = vpop.permute.xlu0 %2476
  %2478 = vrot.lane.b32.xlu0 %v546, 32
  %v2479 = vpop.permute.xlu0 %2478
  %2480 = vrot.lane.b32.xlu0 %v547, 32
  %v2481 = vpop.permute.xlu0 %2480
  %2482 = vrot.lane.b32.xlu0 %v548, 32
  %v2483 = vpop.permute.xlu0 %2482
  %2484 = vrot.lane.b32.xlu0 %v549, 32
  %v2485 = vpop.permute.xlu0 %2484
  %2486 = vrot.lane.b32.xlu0 %v550, 32
  %v2487 = vpop.permute.xlu0 %2486
  %2488 = vrot.lane.b32.xlu0 %v551, 32
  %v2489 = vpop.permute.xlu0 %2488
  %2490 = vrot.lane.b32.xlu0 %v552, 32
  %v2491 = vpop.permute.xlu0 %2490
  %2492 = vrot.lane.b32.xlu0 %v553, 32
  %v2493 = vpop.permute.xlu0 %2492
  %2494 = vrot.lane.b32.xlu0 %v554, 32
  %v2495 = vpop.permute.xlu0 %2494
  %2496 = vrot.lane.b32.xlu0 %v555, 32
  %v2497 = vpop.permute.xlu0 %2496
  %2498 = vrot.lane.b32.xlu0 %v556, 32
  %v2499 = vpop.permute.xlu0 %2498
  %2500 = vrot.lane.b32.xlu0 %v557, 32
  %v2501 = vpop.permute.xlu0 %2500
  %2502 = vrot.lane.b32.xlu0 %v558, 32
  %v2503 = vpop.permute.xlu0 %2502
  %2504 = vrot.lane.b32.xlu0 %v559, 32
  %v2505 = vpop.permute.xlu0 %2504
  %2506 = vrot.lane.b32.xlu0 %v560, 32
  %v2507 = vpop.permute.xlu0 %2506
  %2508 = vrot.lane.b32.xlu0 %v561, 32
  %v2509 = vpop.permute.xlu0 %2508
  %2510 = vrot.lane.b32.xlu0 %v562, 32
  %v2511 = vpop.permute.xlu0 %2510
  %2512 = vrot.lane.b32.xlu0 %v563, 32
  %v2513 = vpop.permute.xlu0 %2512
  %2514 = vrot.lane.b32.xlu0 %v564, 32
  %v2515 = vpop.permute.xlu0 %2514
  %2516 = vrot.lane.b32.xlu0 %v565, 32
  %v2517 = vpop.permute.xlu0 %2516
  %2518 = vrot.lane.b32.xlu0 %v566, 32
  %v2519 = vpop.permute.xlu0 %2518
  %2520 = vrot.lane.b32.xlu0 %v567, 32
  %v2521 = vpop.permute.xlu0 %2520
  %2522 = vrot.lane.b32.xlu0 %v568, 32
  %v2523 = vpop.permute.xlu0 %2522
  %2524 = vrot.lane.b32.xlu0 %v569, 32
  %v2525 = vpop.permute.xlu0 %2524
  %2526 = vrot.lane.b32.xlu0 %v570, 32
  %v2527 = vpop.permute.xlu0 %2526
  %2528 = vrot.lane.b32.xlu0 %v571, 32
  %v2529 = vpop.permute.xlu0 %2528
  %2530 = vrot.lane.b32.xlu0 %v572, 32
  %v2531 = vpop.permute.xlu0 %2530
  %2532 = vrot.lane.b32.xlu0 %v573, 32
  %v2533 = vpop.permute.xlu0 %2532
  %2534 = vrot.lane.b32.xlu0 %v574, 32
  %v2535 = vpop.permute.xlu0 %2534
  %2536 = vrot.lane.b32.xlu0 %v575, 32
  %v2537 = vpop.permute.xlu0 %2536
  %2538 = vrot.lane.b32.xlu0 %v576, 32
  %v2539 = vpop.permute.xlu0 %2538
  %2540 = vrot.lane.b32.xlu0 %v577, 32
  %v2541 = vpop.permute.xlu0 %2540
  %2542 = vrot.lane.b32.xlu0 %v578, 32
  %v2543 = vpop.permute.xlu0 %2542
  %2544 = vrot.lane.b32.xlu0 %v579, 32
  %v2545 = vpop.permute.xlu0 %2544
  %2546 = vrot.lane.b32.xlu0 %v580, 32
  %v2547 = vpop.permute.xlu0 %2546
  %2548 = vrot.lane.b32.xlu0 %v581, 32
  %v2549 = vpop.permute.xlu0 %2548
  %2550 = vrot.lane.b32.xlu0 %v582, 32
  %v2551 = vpop.permute.xlu0 %2550
  %2552 = vrot.lane.b32.xlu0 %v583, 32
  %v2553 = vpop.permute.xlu0 %2552
  %2554 = vrot.lane.b32.xlu0 %v584, 32
  %v2555 = vpop.permute.xlu0 %2554
  %2556 = vrot.lane.b32.xlu0 %v585, 32
  %v2557 = vpop.permute.xlu0 %2556
  %2558 = vrot.lane.b32.xlu0 %v586, 32
  %v2559 = vpop.permute.xlu0 %2558
  %2560 = vrot.lane.b32.xlu0 %v587, 32
  %v2561 = vpop.permute.xlu0 %2560
  %2562 = vrot.lane.b32.xlu0 %v588, 32
  %v2563 = vpop.permute.xlu0 %2562
  %2564 = vrot.lane.b32.xlu0 %v589, 32
  %v2565 = vpop.permute.xlu0 %2564
  %2566 = vrot.lane.b32.xlu0 %v590, 32
  %v2567 = vpop.permute.xlu0 %2566
  %2568 = vrot.lane.b32.xlu0 %v591, 32
  %v2569 = vpop.permute.xlu0 %2568
  %2570 = vrot.lane.b32.xlu0 %v592, 32
  %v2571 = vpop.permute.xlu0 %2570
  %2572 = vrot.lane.b32.xlu0 %v593, 32
  %v2573 = vpop.permute.xlu0 %2572
  %2574 = vrot.lane.b32.xlu0 %v594, 32
  %v2575 = vpop.permute.xlu0 %2574
  %2576 = vrot.lane.b32.xlu0 %v595, 32
  %v2577 = vpop.permute.xlu0 %2576
  %2578 = vrot.lane.b32.xlu0 %v596, 32
  %v2579 = vpop.permute.xlu0 %2578
  %2580 = vrot.lane.b32.xlu0 %v597, 32
  %v2581 = vpop.permute.xlu0 %2580
  %vm2646 = vcmask 31744
  %v2647 = vsel %vm2646, %v20, %v663
  %v2648 = vsel %vm2646, %v21, %v665
  %v2649 = vsel %vm2646, %v22, %v667
  %v2650 = vsel %vm2646, %v23, %v669
  %v2651 = vsel %vm2646, %v24, %v671
  %v2652 = vsel %vm2646, %v25, %v673
  %v2653 = vsel %vm2646, %v26, %v675
  %v2654 = vsel %vm2646, %v27, %v677
  %v2655 = vsel %vm2646, %v28, %v679
  %v2656 = vsel %vm2646, %v29, %v681
  %v2657 = vsel %vm2646, %v30, %v683
  %v2658 = vsel %vm2646, %v31, %v685
  %v2659 = vsel %vm2646, %v32, %v687
  %v2660 = vsel %vm2646, %v33, %v689
  %v2661 = vsel %vm2646, %v34, %v691
  %v2662 = vsel %vm2646, %v35, %v693
  %v2663 = vsel %vm2646, %v36, %v695
  %v2664 = vsel %vm2646, %v37, %v697
  %v2665 = vsel %vm2646, %v38, %v699
  %v2666 = vsel %vm2646, %v39, %v701
  %v2667 = vsel %vm2646, %v40, %v703
  %v2668 = vsel %vm2646, %v41, %v705
  %v2669 = vsel %vm2646, %v42, %v707
  %v2670 = vsel %vm2646, %v43, %v709
  %v2671 = vsel %vm2646, %v44, %v711
  %v2672 = vsel %vm2646, %v45, %v713
  %v2673 = vsel %vm2646, %v46, %v715
  %v2674 = vsel %vm2646, %v47, %v717
  %v2675 = vsel %vm2646, %v48, %v719
  %v2676 = vsel %vm2646, %v49, %v721
  %v2677 = vsel %vm2646, %v50, %v723
  %v2678 = vsel %vm2646, %v51, %v725
  %v2679 = vsel %vm2646, %v52, %v727
  %v2680 = vsel %vm2646, %v53, %v729
  %v2681 = vsel %vm2646, %v54, %v731
  %v2682 = vsel %vm2646, %v55, %v733
  %v2683 = vsel %vm2646, %v56, %v735
  %v2684 = vsel %vm2646, %v57, %v737
  %v2685 = vsel %vm2646, %v58, %v739
  %v2686 = vsel %vm2646, %v59, %v741
  %v2687 = vsel %vm2646, %v60, %v743
  %v2688 = vsel %vm2646, %v61, %v745
  %v2689 = vsel %vm2646, %v62, %v747
  %v2690 = vsel %vm2646, %v63, %v749
  %v2691 = vsel %vm2646, %v64, %v751
  %v2692 = vsel %vm2646, %v65, %v753
  %v2693 = vsel %vm2646, %v66, %v755
  %v2694 = vsel %vm2646, %v67, %v757
  %v2695 = vsel %vm2646, %v68, %v759
  %v2696 = vsel %vm2646, %v69, %v761
  %v2697 = vsel %vm2646, %v70, %v763
  %v2698 = vsel %vm2646, %v71, %v765
  %v2699 = vsel %vm2646, %v72, %v767
  %v2700 = vsel %vm2646, %v73, %v769
  %v2701 = vsel %vm2646, %v74, %v771
  %v2702 = vsel %vm2646, %v75, %v773
  %v2703 = vsel %vm2646, %v76, %v775
  %v2704 = vsel %vm2646, %v77, %v777
  %v2705 = vsel %vm2646, %v78, %v779
  %v2706 = vsel %vm2646, %v79, %v781
  %v2707 = vsel %vm2646, %v80, %v783
  %v2708 = vsel %vm2646, %v81, %v785
  %v2709 = vsel %vm2646, %v82, %v787
  %v2710 = vsel %vm2646, %v83, %v789
  %vm2711 = vcmask 64512
  %v2712 = vsel %vm2711, %v2647, %v919
  %v2713 = vsel %vm2711, %v2648, %v921
  %v2714 = vsel %vm2711, %v2649, %v923
  %v2715 = vsel %vm2711, %v2650, %v925
  %v2716 = vsel %vm2711, %v2651, %v927
  %v2717 = vsel %vm2711, %v2652, %v929
  %v2718 = vsel %vm2711, %v2653, %v931
  %v2719 = vsel %vm2711, %v2654, %v933
  %v2720 = vsel %vm2711, %v2655, %v935
  %v2721 = vsel %vm2711, %v2656, %v937
  %v2722 = vsel %vm2711, %v2657, %v939
  %v2723 = vsel %vm2711, %v2658, %v941
  %v2724 = vsel %vm2711, %v2659, %v943
  %v2725 = vsel %vm2711, %v2660, %v945
  %v2726 = vsel %vm2711, %v2661, %v947
  %v2727 = vsel %vm2711, %v2662, %v949
  %v2728 = vsel %vm2711, %v2663, %v951
  %v2729 = vsel %vm2711, %v2664, %v953
  %v2730 = vsel %vm2711, %v2665, %v955
  %v2731 = vsel %vm2711, %v2666, %v957
  %v2732 = vsel %vm2711, %v2667, %v959
  %v2733 = vsel %vm2711, %v2668, %v961
  %v2734 = vsel %vm2711, %v2669, %v963
  %v2735 = vsel %vm2711, %v2670, %v965
  %v2736 = vsel %vm2711, %v2671, %v967
  %v2737 = vsel %vm2711, %v2672, %v969
  %v2738 = vsel %vm2711, %v2673, %v971
  %v2739 = vsel %vm2711, %v2674, %v973
  %v2740 = vsel %vm2711, %v2675, %v975
  %v2741 = vsel %vm2711, %v2676, %v977
  %v2742 = vsel %vm2711, %v2677, %v979
  %v2743 = vsel %vm2711, %v2678, %v981
  %v2744 = vsel %vm2711, %v2679, %v983
  %v2745 = vsel %vm2711, %v2680, %v985
  %v2746 = vsel %vm2711, %v2681, %v987
  %v2747 = vsel %vm2711, %v2682, %v989
  %v2748 = vsel %vm2711, %v2683, %v991
  %v2749 = vsel %vm2711, %v2684, %v993
  %v2750 = vsel %vm2711, %v2685, %v995
  %v2751 = vsel %vm2711, %v2686, %v997
  %v2752 = vsel %vm2711, %v2687, %v999
  %v2753 = vsel %vm2711, %v2688, %v1001
  %v2754 = vsel %vm2711, %v2689, %v1003
  %v2755 = vsel %vm2711, %v2690, %v1005
  %v2756 = vsel %vm2711, %v2691, %v1007
  %v2757 = vsel %vm2711, %v2692, %v1009
  %v2758 = vsel %vm2711, %v2693, %v1011
  %v2759 = vsel %vm2711, %v2694, %v1013
  %v2760 = vsel %vm2711, %v2695, %v1015
  %v2761 = vsel %vm2711, %v2696, %v1017
  %v2762 = vsel %vm2711, %v2697, %v1019
  %v2763 = vsel %vm2711, %v2698, %v1021
  %v2764 = vsel %vm2711, %v2699, %v1023
  %v2765 = vsel %vm2711, %v2700, %v1025
  %v2766 = vsel %vm2711, %v2701, %v1027
  %v2767 = vsel %vm2711, %v2702, %v1029
  %v2768 = vsel %vm2711, %v2703, %v1031
  %v2769 = vsel %vm2711, %v2704, %v1033
  %v2770 = vsel %vm2711, %v2705, %v1035
  %v2771 = vsel %vm2711, %v2706, %v1037
  %v2772 = vsel %vm2711, %v2707, %v1039
  %v2773 = vsel %vm2711, %v2708, %v1041
  %v2774 = vsel %vm2711, %v2709, %v1043
  %v2775 = vsel %vm2711, %v2710, %v1045
  %vm2776 = vcmask 97280
  %v2777 = vsel %vm2776, %v2712, %v1175
  %v2778 = vsel %vm2776, %v2713, %v1177
  %v2779 = vsel %vm2776, %v2714, %v1179
  %v2780 = vsel %vm2776, %v2715, %v1181
  %v2781 = vsel %vm2776, %v2716, %v1183
  %v2782 = vsel %vm2776, %v2717, %v1185
  %v2783 = vsel %vm2776, %v2718, %v1187
  %v2784 = vsel %vm2776, %v2719, %v1189
  %v2785 = vsel %vm2776, %v2720, %v1191
  %v2786 = vsel %vm2776, %v2721, %v1193
  %v2787 = vsel %vm2776, %v2722, %v1195
  %v2788 = vsel %vm2776, %v2723, %v1197
  %v2789 = vsel %vm2776, %v2724, %v1199
  %v2790 = vsel %vm2776, %v2725, %v1201
  %v2791 = vsel %vm2776, %v2726, %v1203
  %v2792 = vsel %vm2776, %v2727, %v1205
  %v2793 = vsel %vm2776, %v2728, %v1207
  %v2794 = vsel %vm2776, %v2729, %v1209
  %v2795 = vsel %vm2776, %v2730, %v1211
  %v2796 = vsel %vm2776, %v2731, %v1213
  %v2797 = vsel %vm2776, %v2732, %v1215
  %v2798 = vsel %vm2776, %v2733, %v1217
  %v2799 = vsel %vm2776, %v2734, %v1219
  %v2800 = vsel %vm2776, %v2735, %v1221
  %v2801 = vsel %vm2776, %v2736, %v1223
  %v2802 = vsel %vm2776, %v2737, %v1225
  %v2803 = vsel %vm2776, %v2738, %v1227
  %v2804 = vsel %vm2776, %v2739, %v1229
  %v2805 = vsel %vm2776, %v2740, %v1231
  %v2806 = vsel %vm2776, %v2741, %v1233
  %v2807 = vsel %vm2776, %v2742, %v1235
  %v2808 = vsel %vm2776, %v2743, %v1237
  %v2809 = vsel %vm2776, %v2744, %v1239
  %v2810 = vsel %vm2776, %v2745, %v1241
  %v2811 = vsel %vm2776, %v2746, %v1243
  %v2812 = vsel %vm2776, %v2747, %v1245
  %v2813 = vsel %vm2776, %v2748, %v1247
  %v2814 = vsel %vm2776, %v2749, %v1249
  %v2815 = vsel %vm2776, %v2750, %v1251
  %v2816 = vsel %vm2776, %v2751, %v1253
  %v2817 = vsel %vm2776, %v2752, %v1255
  %v2818 = vsel %vm2776, %v2753, %v1257
  %v2819 = vsel %vm2776, %v2754, %v1259
  %v2820 = vsel %vm2776, %v2755, %v1261
  %v2821 = vsel %vm2776, %v2756, %v1263
  %v2822 = vsel %vm2776, %v2757, %v1265
  %v2823 = vsel %vm2776, %v2758, %v1267
  %v2824 = vsel %vm2776, %v2759, %v1269
  %v2825 = vsel %vm2776, %v2760, %v1271
  %v2826 = vsel %vm2776, %v2761, %v1273
  %v2827 = vsel %vm2776, %v2762, %v1275
  %v2828 = vsel %vm2776, %v2763, %v1277
  %v2829 = vsel %vm2776, %v2764, %v1279
  %v2830 = vsel %vm2776, %v2765, %v1281
  %v2831 = vsel %vm2776, %v2766, %v1283
  %v2832 = vsel %vm2776, %v2767, %v1285
  %v2833 = vsel %vm2776, %v2768, %v1287
  %v2834 = vsel %vm2776, %v2769, %v1289
  %v2835 = vsel %vm2776, %v2770, %v1291
  %v2836 = vsel %vm2776, %v2771, %v1293
  %v2837 = vsel %vm2776, %v2772, %v1295
  %v2838 = vsel %vm2776, %v2773, %v1297
  %v2839 = vsel %vm2776, %v2774, %v1299
  %v2840 = vsel %vm2776, %v2775, %v1301
  %vm2841 = vcmask 130048
  %v2842 = vsel %vm2841, %v2777, %v1431
  %v2843 = vsel %vm2841, %v2778, %v1433
  %v2844 = vsel %vm2841, %v2779, %v1435
  %v2845 = vsel %vm2841, %v2780, %v1437
  %v2846 = vsel %vm2841, %v2781, %v1439
  %v2847 = vsel %vm2841, %v2782, %v1441
  %v2848 = vsel %vm2841, %v2783, %v1443
  %v2849 = vsel %vm2841, %v2784, %v1445
  %v2850 = vsel %vm2841, %v2785, %v1447
  %v2851 = vsel %vm2841, %v2786, %v1449
  %v2852 = vsel %vm2841, %v2787, %v1451
  %v2853 = vsel %vm2841, %v2788, %v1453
  %v2854 = vsel %vm2841, %v2789, %v1455
  %v2855 = vsel %vm2841, %v2790, %v1457
  %v2856 = vsel %vm2841, %v2791, %v1459
  %v2857 = vsel %vm2841, %v2792, %v1461
  %v2858 = vsel %vm2841, %v2793, %v1463
  %v2859 = vsel %vm2841, %v2794, %v1465
  %v2860 = vsel %vm2841, %v2795, %v1467
  %v2861 = vsel %vm2841, %v2796, %v1469
  %v2862 = vsel %vm2841, %v2797, %v1471
  %v2863 = vsel %vm2841, %v2798, %v1473
  %v2864 = vsel %vm2841, %v2799, %v1475
  %v2865 = vsel %vm2841, %v2800, %v1477
  %v2866 = vsel %vm2841, %v2801, %v1479
  %v2867 = vsel %vm2841, %v2802, %v1481
  %v2868 = vsel %vm2841, %v2803, %v1483
  %v2869 = vsel %vm2841, %v2804, %v1485
  %v2870 = vsel %vm2841, %v2805, %v1487
  %v2871 = vsel %vm2841, %v2806, %v1489
  %v2872 = vsel %vm2841, %v2807, %v1491
  %v2873 = vsel %vm2841, %v2808, %v1493
  %v2874 = vsel %vm2841, %v2809, %v1495
  %v2875 = vsel %vm2841, %v2810, %v1497
  %v2876 = vsel %vm2841, %v2811, %v1499
  %v2877 = vsel %vm2841, %v2812, %v1501
  %v2878 = vsel %vm2841, %v2813, %v1503
  %v2879 = vsel %vm2841, %v2814, %v1505
  %v2880 = vsel %vm2841, %v2815, %v1507
  %v2881 = vsel %vm2841, %v2816, %v1509
  %v2882 = vsel %vm2841, %v2817, %v1511
  %v2883 = vsel %vm2841, %v2818, %v1513
  %v2884 = vsel %vm2841, %v2819, %v1515
  %v2885 = vsel %vm2841, %v2820, %v1517
  %v2886 = vsel %vm2841, %v2821, %v1519
  %v2887 = vsel %vm2841, %v2822, %v1521
  %v2888 = vsel %vm2841, %v2823, %v1523
  %v2889 = vsel %vm2841, %v2824, %v1525
  %v2890 = vsel %vm2841, %v2825, %v1527
  %v2891 = vsel %vm2841, %v2826, %v1529
  %v2892 = vsel %vm2841, %v2827, %v1531
  %v2893 = vsel %vm2841, %v2828, %v1533
  %v2894 = vsel %vm2841, %v2829, %v1535
  %v2895 = vsel %vm2841, %v2830, %v1537
  %v2896 = vsel %vm2841, %v2831, %v1539
  %v2897 = vsel %vm2841, %v2832, %v1541
  %v2898 = vsel %vm2841, %v2833, %v1543
  %v2899 = vsel %vm2841, %v2834, %v1545
  %v2900 = vsel %vm2841, %v2835, %v1547
  %v2901 = vsel %vm2841, %v2836, %v1549
  %v2902 = vsel %vm2841, %v2837, %v1551
  %v2903 = vsel %vm2841, %v2838, %v1553
  %v2904 = vsel %vm2841, %v2839, %v1555
  %v2905 = vsel %vm2841, %v2840, %v1557
  %vm2906 = vcmask 162816
  %v2907 = vsel %vm2906, %v2842, %v1687
  %v2908 = vsel %vm2906, %v2843, %v1689
  %v2909 = vsel %vm2906, %v2844, %v1691
  %v2910 = vsel %vm2906, %v2845, %v1693
  %v2911 = vsel %vm2906, %v2846, %v1695
  %v2912 = vsel %vm2906, %v2847, %v1697
  %v2913 = vsel %vm2906, %v2848, %v1699
  %v2914 = vsel %vm2906, %v2849, %v1701
  %v2915 = vsel %vm2906, %v2850, %v1703
  %v2916 = vsel %vm2906, %v2851, %v1705
  %v2917 = vsel %vm2906, %v2852, %v1707
  %v2918 = vsel %vm2906, %v2853, %v1709
  %v2919 = vsel %vm2906, %v2854, %v1711
  %v2920 = vsel %vm2906, %v2855, %v1713
  %v2921 = vsel %vm2906, %v2856, %v1715
  %v2922 = vsel %vm2906, %v2857, %v1717
  %v2923 = vsel %vm2906, %v2858, %v1719
  %v2924 = vsel %vm2906, %v2859, %v1721
  %v2925 = vsel %vm2906, %v2860, %v1723
  %v2926 = vsel %vm2906, %v2861, %v1725
  %v2927 = vsel %vm2906, %v2862, %v1727
  %v2928 = vsel %vm2906, %v2863, %v1729
  %v2929 = vsel %vm2906, %v2864, %v1731
  %v2930 = vsel %vm2906, %v2865, %v1733
  %v2931 = vsel %vm2906, %v2866, %v1735
  %v2932 = vsel %vm2906, %v2867, %v1737
  %v2933 = vsel %vm2906, %v2868, %v1739
  %v2934 = vsel %vm2906, %v2869, %v1741
  %v2935 = vsel %vm2906, %v2870, %v1743
  %v2936 = vsel %vm2906, %v2871, %v1745
  %v2937 = vsel %vm2906, %v2872, %v1747
  %v2938 = vsel %vm2906, %v2873, %v1749
  %v2939 = vsel %vm2906, %v2874, %v1751
  %v2940 = vsel %vm2906, %v2875, %v1753
  %v2941 = vsel %vm2906, %v2876, %v1755
  %v2942 = vsel %vm2906, %v2877, %v1757
  %v2943 = vsel %vm2906, %v2878, %v1759
  %v2944 = vsel %vm2906, %v2879, %v1761
  %v2945 = vsel %vm2906, %v2880, %v1763
  %v2946 = vsel %vm2906, %v2881, %v1765
  %v2947 = vsel %vm2906, %v2882, %v1767
  %v2948 = vsel %vm2906, %v2883, %v1769
  %v2949 = vsel %vm2906, %v2884, %v1771
  %v2950 = vsel %vm2906, %v2885, %v1773
  %v2951 = vsel %vm2906, %v2886, %v1775
  %v2952 = vsel %vm2906, %v2887, %v1777
  %v2953 = vsel %vm2906, %v2888, %v1779
  %v2954 = vsel %vm2906, %v2889, %v1781
  %v2955 = vsel %vm2906, %v2890, %v1783
  %v2956 = vsel %vm2906, %v2891, %v1785
  %v2957 = vsel %vm2906, %v2892, %v1787
  %v2958 = vsel %vm2906, %v2893, %v1789
  %v2959 = vsel %vm2906, %v2894, %v1791
  %v2960 = vsel %vm2906, %v2895, %v1793
  %v2961 = vsel %vm2906, %v2896, %v1795
  %v2962 = vsel %vm2906, %v2897, %v1797
  %v2963 = vsel %vm2906, %v2898, %v1799
  %v2964 = vsel %vm2906, %v2899, %v1801
  %v2965 = vsel %vm2906, %v2900, %v1803
  %v2966 = vsel %vm2906, %v2901, %v1805
  %v2967 = vsel %vm2906, %v2902, %v1807
  %v2968 = vsel %vm2906, %v2903, %v1809
  %v2969 = vsel %vm2906, %v2904, %v1811
  %v2970 = vsel %vm2906, %v2905, %v1813
  %vm2971 = vcmask 195584
  %v2972 = vsel %vm2971, %v2907, %v1943
  %v2973 = vsel %vm2971, %v2908, %v1945
  %v2974 = vsel %vm2971, %v2909, %v1947
  %v2975 = vsel %vm2971, %v2910, %v1949
  %v2976 = vsel %vm2971, %v2911, %v1951
  %v2977 = vsel %vm2971, %v2912, %v1953
  %v2978 = vsel %vm2971, %v2913, %v1955
  %v2979 = vsel %vm2971, %v2914, %v1957
  %v2980 = vsel %vm2971, %v2915, %v1959
  %v2981 = vsel %vm2971, %v2916, %v1961
  %v2982 = vsel %vm2971, %v2917, %v1963
  %v2983 = vsel %vm2971, %v2918, %v1965
  %v2984 = vsel %vm2971, %v2919, %v1967
  %v2985 = vsel %vm2971, %v2920, %v1969
  %v2986 = vsel %vm2971, %v2921, %v1971
  %v2987 = vsel %vm2971, %v2922, %v1973
  %v2988 = vsel %vm2971, %v2923, %v1975
  %v2989 = vsel %vm2971, %v2924, %v1977
  %v2990 = vsel %vm2971, %v2925, %v1979
  %v2991 = vsel %vm2971, %v2926, %v1981
  %v2992 = vsel %vm2971, %v2927, %v1983
  %v2993 = vsel %vm2971, %v2928, %v1985
  %v2994 = vsel %vm2971, %v2929, %v1987
  %v2995 = vsel %vm2971, %v2930, %v1989
  %v2996 = vsel %vm2971, %v2931, %v1991
  %v2997 = vsel %vm2971, %v2932, %v1993
  %v2998 = vsel %vm2971, %v2933, %v1995
  %v2999 = vsel %vm2971, %v2934, %v1997
  %v3000 = vsel %vm2971, %v2935, %v1999
  %v3001 = vsel %vm2971, %v2936, %v2001
  %v3002 = vsel %vm2971, %v2937, %v2003
  %v3003 = vsel %vm2971, %v2938, %v2005
  %v3004 = vsel %vm2971, %v2939, %v2007
  %v3005 = vsel %vm2971, %v2940, %v2009
  %v3006 = vsel %vm2971, %v2941, %v2011
  %v3007 = vsel %vm2971, %v2942, %v2013
  %v3008 = vsel %vm2971, %v2943, %v2015
  %v3009 = vsel %vm2971, %v2944, %v2017
  %v3010 = vsel %vm2971, %v2945, %v2019
  %v3011 = vsel %vm2971, %v2946, %v2021
  %v3012 = vsel %vm2971, %v2947, %v2023
  %v3013 = vsel %vm2971, %v2948, %v2025
  %v3014 = vsel %vm2971, %v2949, %v2027
  %v3015 = vsel %vm2971, %v2950, %v2029
  %v3016 = vsel %vm2971, %v2951, %v2031
  %v3017 = vsel %vm2971, %v2952, %v2033
  %v3018 = vsel %vm2971, %v2953, %v2035
  %v3019 = vsel %vm2971, %v2954, %v2037
  %v3020 = vsel %vm2971, %v2955, %v2039
  %v3021 = vsel %vm2971, %v2956, %v2041
  %v3022 = vsel %vm2971, %v2957, %v2043
  %v3023 = vsel %vm2971, %v2958, %v2045
  %v3024 = vsel %vm2971, %v2959, %v2047
  %v3025 = vsel %vm2971, %v2960, %v2049
  %v3026 = vsel %vm2971, %v2961, %v2051
  %v3027 = vsel %vm2971, %v2962, %v2053
  %v3028 = vsel %vm2971, %v2963, %v2055
  %v3029 = vsel %vm2971, %v2964, %v2057
  %v3030 = vsel %vm2971, %v2965, %v2059
  %v3031 = vsel %vm2971, %v2966, %v2061
  %v3032 = vsel %vm2971, %v2967, %v2063
  %v3033 = vsel %vm2971, %v2968, %v2065
  %v3034 = vsel %vm2971, %v2969, %v2067
  %v3035 = vsel %vm2971, %v2970, %v2069
  %vm3036 = vcmask 228352
  %v3037 = vsel %vm3036, %v2972, %v2199
  %v3038 = vsel %vm3036, %v2973, %v2201
  %v3039 = vsel %vm3036, %v2974, %v2203
  %v3040 = vsel %vm3036, %v2975, %v2205
  %v3041 = vsel %vm3036, %v2976, %v2207
  %v3042 = vsel %vm3036, %v2977, %v2209
  %v3043 = vsel %vm3036, %v2978, %v2211
  %v3044 = vsel %vm3036, %v2979, %v2213
  %v3045 = vsel %vm3036, %v2980, %v2215
  %v3046 = vsel %vm3036, %v2981, %v2217
  %v3047 = vsel %vm3036, %v2982, %v2219
  %v3048 = vsel %vm3036, %v2983, %v2221
  %v3049 = vsel %vm3036, %v2984, %v2223
  %v3050 = vsel %vm3036, %v2985, %v2225
  %v3051 = vsel %vm3036, %v2986, %v2227
  %v3052 = vsel %vm3036, %v2987, %v2229
  %v3053 = vsel %vm3036, %v2988, %v2231
  %v3054 = vsel %vm3036, %v2989, %v2233
  %v3055 = vsel %vm3036, %v2990, %v2235
  %v3056 = vsel %vm3036, %v2991, %v2237
  %v3057 = vsel %vm3036, %v2992, %v2239
  %v3058 = vsel %vm3036, %v2993, %v2241
  %v3059 = vsel %vm3036, %v2994, %v2243
  %v3060 = vsel %vm3036, %v2995, %v2245
  %v3061 = vsel %vm3036, %v2996, %v2247
  %v3062 = vsel %vm3036, %v2997, %v2249
  %v3063 = vsel %vm3036, %v2998, %v2251
  %v3064 = vsel %vm3036, %v2999, %v2253
  %v3065 = vsel %vm3036, %v3000, %v2255
  %v3066 = vsel %vm3036, %v3001, %v2257
  %v3067 = vsel %vm3036, %v3002, %v2259
  %v3068 = vsel %vm3036, %v3003, %v2261
  %v3069 = vsel %vm3036, %v3004, %v2263
  %v3070 = vsel %vm3036, %v3005, %v2265
  %v3071 = vsel %vm3036, %v3006, %v2267
  %v3072 = vsel %vm3036, %v3007, %v2269
  %v3073 = vsel %vm3036, %v3008, %v2271
  %v3074 = vsel %vm3036, %v3009, %v2273
  %v3075 = vsel %vm3036, %v3010, %v2275
  %v3076 = vsel %vm3036, %v3011, %v2277
  %v3077 = vsel %vm3036, %v3012, %v2279
  %v3078 = vsel %vm3036, %v3013, %v2281
  %v3079 = vsel %vm3036, %v3014, %v2283
  %v3080 = vsel %vm3036, %v3015, %v2285
  %v3081 = vsel %vm3036, %v3016, %v2287
  %v3082 = vsel %vm3036, %v3017, %v2289
  %v3083 = vsel %vm3036, %v3018, %v2291
  %v3084 = vsel %vm3036, %v3019, %v2293
  %v3085 = vsel %vm3036, %v3020, %v2295
  %v3086 = vsel %vm3036, %v3021, %v2297
  %v3087 = vsel %vm3036, %v3022, %v2299
  %v3088 = vsel %vm3036, %v3023, %v2301
  %v3089 = vsel %vm3036, %v3024, %v2303
  %v3090 = vsel %vm3036, %v3025, %v2305
  %v3091 = vsel %vm3036, %v3026, %v2307
  %v3092 = vsel %vm3036, %v3027, %v2309
  %v3093 = vsel %vm3036, %v3028, %v2311
  %v3094 = vsel %vm3036, %v3029, %v2313
  %v3095 = vsel %vm3036, %v3030, %v2315
  %v3096 = vsel %vm3036, %v3031, %v2317
  %v3097 = vsel %vm3036, %v3032, %v2319
  %v3098 = vsel %vm3036, %v3033, %v2321
  %v3099 = vsel %vm3036, %v3034, %v2323
  %v3100 = vsel %vm3036, %v3035, %v2325
  %vm3101 = vcmask 261120
  %v3102 = vsel %vm3101, %v3037, %v2455
  %v3103 = vsel %vm3101, %v3038, %v2457
  %v3104 = vsel %vm3101, %v3039, %v2459
  %v3105 = vsel %vm3101, %v3040, %v2461
  %v3106 = vsel %vm3101, %v3041, %v2463
  %v3107 = vsel %vm3101, %v3042, %v2465
  %v3108 = vsel %vm3101, %v3043, %v2467
  %v3109 = vsel %vm3101, %v3044, %v2469
  %v3110 = vsel %vm3101, %v3045, %v2471
  %v3111 = vsel %vm3101, %v3046, %v2473
  %v3112 = vsel %vm3101, %v3047, %v2475
  %v3113 = vsel %vm3101, %v3048, %v2477
  %v3114 = vsel %vm3101, %v3049, %v2479
  %v3115 = vsel %vm3101, %v3050, %v2481
  %v3116 = vsel %vm3101, %v3051, %v2483
  %v3117 = vsel %vm3101, %v3052, %v2485
  %v3118 = vsel %vm3101, %v3053, %v2487
  %v3119 = vsel %vm3101, %v3054, %v2489
  %v3120 = vsel %vm3101, %v3055, %v2491
  %v3121 = vsel %vm3101, %v3056, %v2493
  %v3122 = vsel %vm3101, %v3057, %v2495
  %v3123 = vsel %vm3101, %v3058, %v2497
  %v3124 = vsel %vm3101, %v3059, %v2499
  %v3125 = vsel %vm3101, %v3060, %v2501
  %v3126 = vsel %vm3101, %v3061, %v2503
  %v3127 = vsel %vm3101, %v3062, %v2505
  %v3128 = vsel %vm3101, %v3063, %v2507
  %v3129 = vsel %vm3101, %v3064, %v2509
  %v3130 = vsel %vm3101, %v3065, %v2511
  %v3131 = vsel %vm3101, %v3066, %v2513
  %v3132 = vsel %vm3101, %v3067, %v2515
  %v3133 = vsel %vm3101, %v3068, %v2517
  %v3134 = vsel %vm3101, %v3069, %v2519
  %v3135 = vsel %vm3101, %v3070, %v2521
  %v3136 = vsel %vm3101, %v3071, %v2523
  %v3137 = vsel %vm3101, %v3072, %v2525
  %v3138 = vsel %vm3101, %v3073, %v2527
  %v3139 = vsel %vm3101, %v3074, %v2529
  %v3140 = vsel %vm3101, %v3075, %v2531
  %v3141 = vsel %vm3101, %v3076, %v2533
  %v3142 = vsel %vm3101, %v3077, %v2535
  %v3143 = vsel %vm3101, %v3078, %v2537
  %v3144 = vsel %vm3101, %v3079, %v2539
  %v3145 = vsel %vm3101, %v3080, %v2541
  %v3146 = vsel %vm3101, %v3081, %v2543
  %v3147 = vsel %vm3101, %v3082, %v2545
  %v3148 = vsel %vm3101, %v3083, %v2547
  %v3149 = vsel %vm3101, %v3084, %v2549
  %v3150 = vsel %vm3101, %v3085, %v2551
  %v3151 = vsel %vm3101, %v3086, %v2553
  %v3152 = vsel %vm3101, %v3087, %v2555
  %v3153 = vsel %vm3101, %v3088, %v2557
  %v3154 = vsel %vm3101, %v3089, %v2559
  %v3155 = vsel %vm3101, %v3090, %v2561
  %v3156 = vsel %vm3101, %v3091, %v2563
  %v3157 = vsel %vm3101, %v3092, %v2565
  %v3158 = vsel %vm3101, %v3093, %v2567
  %v3159 = vsel %vm3101, %v3094, %v2569
  %v3160 = vsel %vm3101, %v3095, %v2571
  %v3161 = vsel %vm3101, %v3096, %v2573
  %v3162 = vsel %vm3101, %v3097, %v2575
  %v3163 = vsel %vm3101, %v3098, %v2577
  %v3164 = vsel %vm3101, %v3099, %v2579
  %v3165 = vsel %vm3101, %v3100, %v2581
  %v3166 = vld [vmem:[%s1] sm:$0xff]
  %v3167 = vld [vmem:[%s1 + $0x8] sm:$0xff]
  %v3168 = vld [vmem:[%s1 + $0x10] sm:$0xff]
  %v3169 = vld [vmem:[%s1 + $0x18] sm:$0xff]
  %v3170 = vld [vmem:[%s1 + $0x20] sm:$0xf]
  %vm3171 = vcmask 293888
  %v3173 = vsel %vm3171, %v3102, 0
  %v3176 = vsel %vm3171, %v3103, 0
  %v3179 = vsel %vm3171, %v3104, 0
  %v3182 = vsel %vm3171, %v3105, 0
  %v3185 = vsel %vm3171, %v3106, 0
  %v3188 = vsel %vm3171, %v3107, 0
  %v3191 = vsel %vm3171, %v3108, 0
  %v3194 = vsel %vm3171, %v3109, 0
  %v3197 = vsel %vm3171, %v3110, 0
  %v3200 = vsel %vm3171, %v3111, 0
  %v3203 = vsel %vm3171, %v3112, 0
  %v3206 = vsel %vm3171, %v3113, 0
  %v3209 = vsel %vm3171, %v3114, 0
  %v3212 = vsel %vm3171, %v3115, 0
  %v3215 = vsel %vm3171, %v3116, 0
  %v3218 = vsel %vm3171, %v3117, 0
  %v3221 = vsel %vm3171, %v3118, 0
  %v3224 = vsel %vm3171, %v3119, 0
  %v3227 = vsel %vm3171, %v3120, 0
  %v3230 = vsel %vm3171, %v3121, 0
  %v3233 = vsel %vm3171, %v3122, 0
  %v3236 = vsel %vm3171, %v3123, 0
  %v3239 = vsel %vm3171, %v3124, 0
  %v3242 = vsel %vm3171, %v3125, 0
  %v3245 = vsel %vm3171, %v3126, 0
  %v3248 = vsel %vm3171, %v3127, 0
  %v3251 = vsel %vm3171, %v3128, 0
  %v3254 = vsel %vm3171, %v3129, 0
  %v3257 = vsel %vm3171, %v3130, 0
  %v3260 = vsel %vm3171, %v3131, 0
  %v3263 = vsel %vm3171, %v3132, 0
  %v3266 = vsel %vm3171, %v3133, 0
  %v3269 = vsel %vm3171, %v3134, 0
  %v3272 = vsel %vm3171, %v3135, 0
  %v3275 = vsel %vm3171, %v3136, 0
  %v3278 = vsel %vm3171, %v3137, 0
  %v3281 = vsel %vm3171, %v3138, 0
  %v3284 = vsel %vm3171, %v3139, 0
  %v3287 = vsel %vm3171, %v3140, 0
  %v3290 = vsel %vm3171, %v3141, 0
  %v3293 = vsel %vm3171, %v3142, 0
  %v3296 = vsel %vm3171, %v3143, 0
  %v3299 = vsel %vm3171, %v3144, 0
  %v3302 = vsel %vm3171, %v3145, 0
  %v3305 = vsel %vm3171, %v3146, 0
  %v3308 = vsel %vm3171, %v3147, 0
  %v3311 = vsel %vm3171, %v3148, 0
  %v3314 = vsel %vm3171, %v3149, 0
  %v3317 = vsel %vm3171, %v3150, 0
  %v3320 = vsel %vm3171, %v3151, 0
  %v3323 = vsel %vm3171, %v3152, 0
  %v3326 = vsel %vm3171, %v3153, 0
  %v3329 = vsel %vm3171, %v3154, 0
  %v3332 = vsel %vm3171, %v3155, 0
  %v3335 = vsel %vm3171, %v3156, 0
  %v3338 = vsel %vm3171, %v3157, 0
  %v3341 = vsel %vm3171, %v3158, 0
  %v3344 = vsel %vm3171, %v3159, 0
  %v3347 = vsel %vm3171, %v3160, 0
  %v3350 = vsel %vm3171, %v3161, 0
  %v3353 = vsel %vm3171, %v3162, 0
  %v3356 = vsel %vm3171, %v3163, 0
  %v3359 = vsel %vm3171, %v3164, 0
  %v3362 = vsel %vm3171, %v3165, 0
  %vm3364 = vcmask 1043456
  %v3366 = vsel %vm3364, %v3170, 0
  %3368 = vmatpush.msra.mxu0 0.0
  %3369 = vmatpush.msra.mxu0 0.0
  %3370 = vmatpush.msra.mxu0 0.0
  %3371 = vmatpush.msra.mxu0 0.0
  %3372 = vmatpush.msra.mxu0 0.0
  %3373 = vmatpush.msra.mxu0 0.0
  %3374 = vmatpush.msra.mxu0 0.0
  %3375 = vmatpush.msra.mxu0 0.0
  %3376 = vmatpush.msra.mxu0 0.0
  %3377 = vmatpush.msra.mxu0 0.0
  %3378 = vmatpush.msra.mxu0 0.0
  %3379 = vmatpush.msra.mxu0 %v3366
  %3380 = vmatpush.msra.mxu0 %v3169
  %3381 = vmatpush.msra.mxu0 %v3168
  %3382 = vmatpush.msra.mxu0 %v3167
  %3383 = vmatpush.msra.mxu0 %v3166
  %3384 = vmatmul.f32.gmra.mxu0 %v3173
  %v3385 = vpop.f32.mrf.mxu0
  %v3386 = vadd.f32 0.0, %v3385
  %3387 = vmatmul.f32.gmra.mxu0 %v3176
  %v3388 = vpop.f32.mrf.mxu0
  %v3389 = vadd.f32 0.0, %v3388
  %3390 = vmatmul.f32.gmra.mxu0 %v3179
  %v3391 = vpop.f32.mrf.mxu0
  %v3392 = vadd.f32 0.0, %v3391
  %3393 = vmatmul.f32.gmra.mxu0 %v3182
  %v3394 = vpop.f32.mrf.mxu0
  %v3395 = vadd.f32 0.0, %v3394
  %3396 = vmatmul.f32.gmra.mxu0 %v3185
  %v3397 = vpop.f32.mrf.mxu0
  %v3398 = vadd.f32 0.0, %v3397
  %3399 = vmatmul.f32.gmra.mxu0 %v3188
  %v3400 = vpop.f32.mrf.mxu0
  %v3401 = vadd.f32 0.0, %v3400
  %3402 = vmatmul.f32.gmra.mxu0 %v3191
  %v3403 = vpop.f32.mrf.mxu0
  %v3404 = vadd.f32 0.0, %v3403
  %3405 = vmatmul.f32.gmra.mxu0 %v3194
  %v3406 = vpop.f32.mrf.mxu0
  %v3407 = vadd.f32 0.0, %v3406
  %3408 = vmatmul.f32.gmra.mxu0 %v3197
  %v3409 = vpop.f32.mrf.mxu0
  %v3410 = vadd.f32 0.0, %v3409
  %3411 = vmatmul.f32.gmra.mxu0 %v3200
  %v3412 = vpop.f32.mrf.mxu0
  %v3413 = vadd.f32 0.0, %v3412
  %3414 = vmatmul.f32.gmra.mxu0 %v3203
  %v3415 = vpop.f32.mrf.mxu0
  %v3416 = vadd.f32 0.0, %v3415
  %3417 = vmatmul.f32.gmra.mxu0 %v3206
  %v3418 = vpop.f32.mrf.mxu0
  %v3419 = vadd.f32 0.0, %v3418
  %3420 = vmatmul.f32.gmra.mxu0 %v3209
  %v3421 = vpop.f32.mrf.mxu0
  %v3422 = vadd.f32 0.0, %v3421
  %3423 = vmatmul.f32.gmra.mxu0 %v3212
  %v3424 = vpop.f32.mrf.mxu0
  %v3425 = vadd.f32 0.0, %v3424
  %3426 = vmatmul.f32.gmra.mxu0 %v3215
  %v3427 = vpop.f32.mrf.mxu0
  %v3428 = vadd.f32 0.0, %v3427
  %3429 = vmatmul.f32.gmra.mxu0 %v3218
  %v3430 = vpop.f32.mrf.mxu0
  %v3431 = vadd.f32 0.0, %v3430
  %3432 = vmatmul.f32.gmra.mxu0 %v3221
  %v3433 = vpop.f32.mrf.mxu0
  %v3434 = vadd.f32 0.0, %v3433
  %3435 = vmatmul.f32.gmra.mxu0 %v3224
  %v3436 = vpop.f32.mrf.mxu0
  %v3437 = vadd.f32 0.0, %v3436
  %3438 = vmatmul.f32.gmra.mxu0 %v3227
  %v3439 = vpop.f32.mrf.mxu0
  %v3440 = vadd.f32 0.0, %v3439
  %3441 = vmatmul.f32.gmra.mxu0 %v3230
  %v3442 = vpop.f32.mrf.mxu0
  %v3443 = vadd.f32 0.0, %v3442
  %3444 = vmatmul.f32.gmra.mxu0 %v3233
  %v3445 = vpop.f32.mrf.mxu0
  %v3446 = vadd.f32 0.0, %v3445
  %3447 = vmatmul.f32.gmra.mxu0 %v3236
  %v3448 = vpop.f32.mrf.mxu0
  %v3449 = vadd.f32 0.0, %v3448
  %3450 = vmatmul.f32.gmra.mxu0 %v3239
  %v3451 = vpop.f32.mrf.mxu0
  %v3452 = vadd.f32 0.0, %v3451
  %3453 = vmatmul.f32.gmra.mxu0 %v3242
  %v3454 = vpop.f32.mrf.mxu0
  %v3455 = vadd.f32 0.0, %v3454
  %3456 = vmatmul.f32.gmra.mxu0 %v3245
  %v3457 = vpop.f32.mrf.mxu0
  %v3458 = vadd.f32 0.0, %v3457
  %3459 = vmatmul.f32.gmra.mxu0 %v3248
  %v3460 = vpop.f32.mrf.mxu0
  %v3461 = vadd.f32 0.0, %v3460
  %3462 = vmatmul.f32.gmra.mxu0 %v3251
  %v3463 = vpop.f32.mrf.mxu0
  %v3464 = vadd.f32 0.0, %v3463
  %3465 = vmatmul.f32.gmra.mxu0 %v3254
  %v3466 = vpop.f32.mrf.mxu0
  %v3467 = vadd.f32 0.0, %v3466
  %3468 = vmatmul.f32.gmra.mxu0 %v3257
  %v3469 = vpop.f32.mrf.mxu0
  %v3470 = vadd.f32 0.0, %v3469
  %3471 = vmatmul.f32.gmra.mxu0 %v3260
  %v3472 = vpop.f32.mrf.mxu0
  %v3473 = vadd.f32 0.0, %v3472
  %3474 = vmatmul.f32.gmra.mxu0 %v3263
  %v3475 = vpop.f32.mrf.mxu0
  %v3476 = vadd.f32 0.0, %v3475
  %3477 = vmatmul.f32.gmra.mxu0 %v3266
  %v3478 = vpop.f32.mrf.mxu0
  %v3479 = vadd.f32 0.0, %v3478
  %3480 = vmatmul.f32.gmra.mxu0 %v3269
  %v3481 = vpop.f32.mrf.mxu0
  %v3482 = vadd.f32 0.0, %v3481
  %3483 = vmatmul.f32.gmra.mxu0 %v3272
  %v3484 = vpop.f32.mrf.mxu0
  %v3485 = vadd.f32 0.0, %v3484
  %3486 = vmatmul.f32.gmra.mxu0 %v3275
  %v3487 = vpop.f32.mrf.mxu0
  %v3488 = vadd.f32 0.0, %v3487
  %3489 = vmatmul.f32.gmra.mxu0 %v3278
  %v3490 = vpop.f32.mrf.mxu0
  %v3491 = vadd.f32 0.0, %v3490
  %3492 = vmatmul.f32.gmra.mxu0 %v3281
  %v3493 = vpop.f32.mrf.mxu0
  %v3494 = vadd.f32 0.0, %v3493
  %3495 = vmatmul.f32.gmra.mxu0 %v3284
  %v3496 = vpop.f32.mrf.mxu0
  %v3497 = vadd.f32 0.0, %v3496
  %3498 = vmatmul.f32.gmra.mxu0 %v3287
  %v3499 = vpop.f32.mrf.mxu0
  %v3500 = vadd.f32 0.0, %v3499
  %3501 = vmatmul.f32.gmra.mxu0 %v3290
  %v3502 = vpop.f32.mrf.mxu0
  %v3503 = vadd.f32 0.0, %v3502
  %3504 = vmatmul.f32.gmra.mxu0 %v3293
  %v3505 = vpop.f32.mrf.mxu0
  %v3506 = vadd.f32 0.0, %v3505
  %3507 = vmatmul.f32.gmra.mxu0 %v3296
  %v3508 = vpop.f32.mrf.mxu0
  %v3509 = vadd.f32 0.0, %v3508
  %3510 = vmatmul.f32.gmra.mxu0 %v3299
  %v3511 = vpop.f32.mrf.mxu0
  %v3512 = vadd.f32 0.0, %v3511
  %3513 = vmatmul.f32.gmra.mxu0 %v3302
  %v3514 = vpop.f32.mrf.mxu0
  %v3515 = vadd.f32 0.0, %v3514
  %3516 = vmatmul.f32.gmra.mxu0 %v3305
  %v3517 = vpop.f32.mrf.mxu0
  %v3518 = vadd.f32 0.0, %v3517
  %3519 = vmatmul.f32.gmra.mxu0 %v3308
  %v3520 = vpop.f32.mrf.mxu0
  %v3521 = vadd.f32 0.0, %v3520
  %3522 = vmatmul.f32.gmra.mxu0 %v3311
  %v3523 = vpop.f32.mrf.mxu0
  %v3524 = vadd.f32 0.0, %v3523
  %3525 = vmatmul.f32.gmra.mxu0 %v3314
  %v3526 = vpop.f32.mrf.mxu0
  %v3527 = vadd.f32 0.0, %v3526
  %3528 = vmatmul.f32.gmra.mxu0 %v3317
  %v3529 = vpop.f32.mrf.mxu0
  %v3530 = vadd.f32 0.0, %v3529
  %3531 = vmatmul.f32.gmra.mxu0 %v3320
  %v3532 = vpop.f32.mrf.mxu0
  %v3533 = vadd.f32 0.0, %v3532
  %3534 = vmatmul.f32.gmra.mxu0 %v3323
  %v3535 = vpop.f32.mrf.mxu0
  %v3536 = vadd.f32 0.0, %v3535
  %3537 = vmatmul.f32.gmra.mxu0 %v3326
  %v3538 = vpop.f32.mrf.mxu0
  %v3539 = vadd.f32 0.0, %v3538
  %3540 = vmatmul.f32.gmra.mxu0 %v3329
  %v3541 = vpop.f32.mrf.mxu0
  %v3542 = vadd.f32 0.0, %v3541
  %3543 = vmatmul.f32.gmra.mxu0 %v3332
  %v3544 = vpop.f32.mrf.mxu0
  %v3545 = vadd.f32 0.0, %v3544
  %3546 = vmatmul.f32.gmra.mxu0 %v3335
  %v3547 = vpop.f32.mrf.mxu0
  %v3548 = vadd.f32 0.0, %v3547
  %3549 = vmatmul.f32.gmra.mxu0 %v3338
  %v3550 = vpop.f32.mrf.mxu0
  %v3551 = vadd.f32 0.0, %v3550
  %3552 = vmatmul.f32.gmra.mxu0 %v3341
  %v3553 = vpop.f32.mrf.mxu0
  %v3554 = vadd.f32 0.0, %v3553
  %3555 = vmatmul.f32.gmra.mxu0 %v3344
  %v3556 = vpop.f32.mrf.mxu0
  %v3557 = vadd.f32 0.0, %v3556
  %3558 = vmatmul.f32.gmra.mxu0 %v3347
  %v3559 = vpop.f32.mrf.mxu0
  %v3560 = vadd.f32 0.0, %v3559
  %3561 = vmatmul.f32.gmra.mxu0 %v3350
  %v3562 = vpop.f32.mrf.mxu0
  %v3563 = vadd.f32 0.0, %v3562
  %3564 = vmatmul.f32.gmra.mxu0 %v3353
  %v3565 = vpop.f32.mrf.mxu0
  %v3566 = vadd.f32 0.0, %v3565
  %3567 = vmatmul.f32.gmra.mxu0 %v3356
  %v3568 = vpop.f32.mrf.mxu0
  %v3569 = vadd.f32 0.0, %v3568
  %3570 = vmatmul.f32.gmra.mxu0 %v3359
  %v3571 = vpop.f32.mrf.mxu0
  %v3572 = vadd.f32 0.0, %v3571
  %3573 = vmatmul.f32.gmra.mxu0 %v3362
  %v3574 = vpop.f32.mrf.mxu0
  %v3575 = vadd.f32 0.0, %v3574
  %3576 = vdwg.mxu0
  %v3577 = vmul.f32 %v3386, 0.23112509
  %v3578 = vmul.f32 %v3389, 0.23112509
  %v3579 = vmul.f32 %v3392, 0.23112509
  %v3580 = vmul.f32 %v3395, 0.23112509
  %v3581 = vmul.f32 %v3398, 0.23112509
  %v3582 = vmul.f32 %v3401, 0.23112509
  %v3583 = vmul.f32 %v3404, 0.23112509
  %v3584 = vmul.f32 %v3407, 0.23112509
  %v3585 = vmul.f32 %v3410, 0.23112509
  %v3586 = vmul.f32 %v3413, 0.23112509
  %v3587 = vmul.f32 %v3416, 0.23112509
  %v3588 = vmul.f32 %v3419, 0.23112509
  %v3589 = vmul.f32 %v3422, 0.23112509
  %v3590 = vmul.f32 %v3425, 0.23112509
  %v3591 = vmul.f32 %v3428, 0.23112509
  %v3592 = vmul.f32 %v3431, 0.23112509
  %v3593 = vmul.f32 %v3434, 0.23112509
  %v3594 = vmul.f32 %v3437, 0.23112509
  %v3595 = vmul.f32 %v3440, 0.23112509
  %v3596 = vmul.f32 %v3443, 0.23112509
  %v3597 = vmul.f32 %v3446, 0.23112509
  %v3598 = vmul.f32 %v3449, 0.23112509
  %v3599 = vmul.f32 %v3452, 0.23112509
  %v3600 = vmul.f32 %v3455, 0.23112509
  %v3601 = vmul.f32 %v3458, 0.23112509
  %v3602 = vmul.f32 %v3461, 0.23112509
  %v3603 = vmul.f32 %v3464, 0.23112509
  %v3604 = vmul.f32 %v3467, 0.23112509
  %v3605 = vmul.f32 %v3470, 0.23112509
  %v3606 = vmul.f32 %v3473, 0.23112509
  %v3607 = vmul.f32 %v3476, 0.23112509
  %v3608 = vmul.f32 %v3479, 0.23112509
  %v3609 = vmul.f32 %v3482, 0.23112509
  %v3610 = vmul.f32 %v3485, 0.23112509
  %v3611 = vmul.f32 %v3488, 0.23112509
  %v3612 = vmul.f32 %v3491, 0.23112509
  %v3613 = vmul.f32 %v3494, 0.23112509
  %v3614 = vmul.f32 %v3497, 0.23112509
  %v3615 = vmul.f32 %v3500, 0.23112509
  %v3616 = vmul.f32 %v3503, 0.23112509
  %v3617 = vmul.f32 %v3506, 0.23112509
  %v3618 = vmul.f32 %v3509, 0.23112509
  %v3619 = vmul.f32 %v3512, 0.23112509
  %v3620 = vmul.f32 %v3515, 0.23112509
  %v3621 = vmul.f32 %v3518, 0.23112509
  %v3622 = vmul.f32 %v3521, 0.23112509
  %v3623 = vmul.f32 %v3524, 0.23112509
  %v3624 = vmul.f32 %v3527, 0.23112509
  %v3625 = vmul.f32 %v3530, 0.23112509
  %v3626 = vmul.f32 %v3533, 0.23112509
  %v3627 = vmul.f32 %v3536, 0.23112509
  %v3628 = vmul.f32 %v3539, 0.23112509
  %v3629 = vmul.f32 %v3542, 0.23112509
  %v3630 = vmul.f32 %v3545, 0.23112509
  %v3631 = vmul.f32 %v3548, 0.23112509
  %v3632 = vmul.f32 %v3551, 0.23112509
  %v3633 = vmul.f32 %v3554, 0.23112509
  %v3634 = vmul.f32 %v3557, 0.23112509
  %v3635 = vmul.f32 %v3560, 0.23112509
  %v3636 = vmul.f32 %v3563, 0.23112509
  %v3637 = vmul.f32 %v3566, 0.23112509
  %v3638 = vmul.f32 %v3569, 0.23112509
  %v3639 = vmul.f32 %v3572, 0.23112509
  %v3640 = vmul.f32 %v3575, 0.23112509
  %v3641 = vld [vmem:[%s2] sm:$0x1]
  %v3643 = vperm.slane %v3641, 0
  %v3645 = vadd.f32 %v3577, %v3643
  %v3646 = vadd.f32 %v3578, %v3643
  %v3647 = vadd.f32 %v3579, %v3643
  %v3648 = vadd.f32 %v3580, %v3643
  %v3649 = vadd.f32 %v3581, %v3643
  %v3650 = vadd.f32 %v3582, %v3643
  %v3651 = vadd.f32 %v3583, %v3643
  %v3652 = vadd.f32 %v3584, %v3643
  %v3653 = vadd.f32 %v3585, %v3643
  %v3654 = vadd.f32 %v3586, %v3643
  %v3655 = vadd.f32 %v3587, %v3643
  %v3656 = vadd.f32 %v3588, %v3643
  %v3657 = vadd.f32 %v3589, %v3643
  %v3658 = vadd.f32 %v3590, %v3643
  %v3659 = vadd.f32 %v3591, %v3643
  %v3660 = vadd.f32 %v3592, %v3643
  %v3661 = vadd.f32 %v3593, %v3643
  %v3662 = vadd.f32 %v3594, %v3643
  %v3663 = vadd.f32 %v3595, %v3643
  %v3664 = vadd.f32 %v3596, %v3643
  %v3665 = vadd.f32 %v3597, %v3643
  %v3666 = vadd.f32 %v3598, %v3643
  %v3667 = vadd.f32 %v3599, %v3643
  %v3668 = vadd.f32 %v3600, %v3643
  %v3669 = vadd.f32 %v3601, %v3643
  %v3670 = vadd.f32 %v3602, %v3643
  %v3671 = vadd.f32 %v3603, %v3643
  %v3672 = vadd.f32 %v3604, %v3643
  %v3673 = vadd.f32 %v3605, %v3643
  %v3674 = vadd.f32 %v3606, %v3643
  %v3675 = vadd.f32 %v3607, %v3643
  %v3676 = vadd.f32 %v3608, %v3643
  %v3677 = vadd.f32 %v3609, %v3643
  %v3678 = vadd.f32 %v3610, %v3643
  %v3679 = vadd.f32 %v3611, %v3643
  %v3680 = vadd.f32 %v3612, %v3643
  %v3681 = vadd.f32 %v3613, %v3643
  %v3682 = vadd.f32 %v3614, %v3643
  %v3683 = vadd.f32 %v3615, %v3643
  %v3684 = vadd.f32 %v3616, %v3643
  %v3685 = vadd.f32 %v3617, %v3643
  %v3686 = vadd.f32 %v3618, %v3643
  %v3687 = vadd.f32 %v3619, %v3643
  %v3688 = vadd.f32 %v3620, %v3643
  %v3689 = vadd.f32 %v3621, %v3643
  %v3690 = vadd.f32 %v3622, %v3643
  %v3691 = vadd.f32 %v3623, %v3643
  %v3692 = vadd.f32 %v3624, %v3643
  %v3693 = vadd.f32 %v3625, %v3643
  %v3694 = vadd.f32 %v3626, %v3643
  %v3695 = vadd.f32 %v3627, %v3643
  %v3696 = vadd.f32 %v3628, %v3643
  %v3697 = vadd.f32 %v3629, %v3643
  %v3698 = vadd.f32 %v3630, %v3643
  %v3699 = vadd.f32 %v3631, %v3643
  %v3700 = vadd.f32 %v3632, %v3643
  %v3701 = vadd.f32 %v3633, %v3643
  %v3702 = vadd.f32 %v3634, %v3643
  %v3703 = vadd.f32 %v3635, %v3643
  %v3704 = vadd.f32 %v3636, %v3643
  %v3705 = vadd.f32 %v3637, %v3643
  %v3706 = vadd.f32 %v3638, %v3643
  %v3707 = vadd.f32 %v3639, %v3643
  %v3708 = vadd.f32 %v3640, %v3643
  %vm3709 = vcmp.ge.f32.partialorder %v3645, 0.0
  %vm3710 = vcmp.ge.f32.partialorder %v3646, 0.0
  %vm3711 = vcmp.ge.f32.partialorder %v3647, 0.0
  %vm3712 = vcmp.ge.f32.partialorder %v3648, 0.0
  %vm3713 = vcmp.ge.f32.partialorder %v3649, 0.0
  %vm3714 = vcmp.ge.f32.partialorder %v3650, 0.0
  %vm3715 = vcmp.ge.f32.partialorder %v3651, 0.0
  %vm3716 = vcmp.ge.f32.partialorder %v3652, 0.0
  %vm3717 = vcmp.ge.f32.partialorder %v3653, 0.0
  %vm3718 = vcmp.ge.f32.partialorder %v3654, 0.0
  %vm3719 = vcmp.ge.f32.partialorder %v3655, 0.0
  %vm3720 = vcmp.ge.f32.partialorder %v3656, 0.0
  %vm3721 = vcmp.ge.f32.partialorder %v3657, 0.0
  %vm3722 = vcmp.ge.f32.partialorder %v3658, 0.0
  %vm3723 = vcmp.ge.f32.partialorder %v3659, 0.0
  %vm3724 = vcmp.ge.f32.partialorder %v3660, 0.0
  %vm3725 = vcmp.ge.f32.partialorder %v3661, 0.0
  %vm3726 = vcmp.ge.f32.partialorder %v3662, 0.0
  %vm3727 = vcmp.ge.f32.partialorder %v3663, 0.0
  %vm3728 = vcmp.ge.f32.partialorder %v3664, 0.0
  %vm3729 = vcmp.ge.f32.partialorder %v3665, 0.0
  %vm3730 = vcmp.ge.f32.partialorder %v3666, 0.0
  %vm3731 = vcmp.ge.f32.partialorder %v3667, 0.0
  %vm3732 = vcmp.ge.f32.partialorder %v3668, 0.0
  %vm3733 = vcmp.ge.f32.partialorder %v3669, 0.0
  %vm3734 = vcmp.ge.f32.partialorder %v3670, 0.0
  %vm3735 = vcmp.ge.f32.partialorder %v3671, 0.0
  %vm3736 = vcmp.ge.f32.partialorder %v3672, 0.0
  %vm3737 = vcmp.ge.f32.partialorder %v3673, 0.0
  %vm3738 = vcmp.ge.f32.partialorder %v3674, 0.0
  %vm3739 = vcmp.ge.f32.partialorder %v3675, 0.0
  %vm3740 = vcmp.ge.f32.partialorder %v3676, 0.0
  %vm3741 = vcmp.ge.f32.partialorder %v3677, 0.0
  %vm3742 = vcmp.ge.f32.partialorder %v3678, 0.0
  %vm3743 = vcmp.ge.f32.partialorder %v3679, 0.0
  %vm3744 = vcmp.ge.f32.partialorder %v3680, 0.0
  %vm3745 = vcmp.ge.f32.partialorder %v3681, 0.0
  %vm3746 = vcmp.ge.f32.partialorder %v3682, 0.0
  %vm3747 = vcmp.ge.f32.partialorder %v3683, 0.0
  %vm3748 = vcmp.ge.f32.partialorder %v3684, 0.0
  %vm3749 = vcmp.ge.f32.partialorder %v3685, 0.0
  %vm3750 = vcmp.ge.f32.partialorder %v3686, 0.0
  %vm3751 = vcmp.ge.f32.partialorder %v3687, 0.0
  %vm3752 = vcmp.ge.f32.partialorder %v3688, 0.0
  %vm3753 = vcmp.ge.f32.partialorder %v3689, 0.0
  %vm3754 = vcmp.ge.f32.partialorder %v3690, 0.0
  %vm3755 = vcmp.ge.f32.partialorder %v3691, 0.0
  %vm3756 = vcmp.ge.f32.partialorder %v3692, 0.0
  %vm3757 = vcmp.ge.f32.partialorder %v3693, 0.0
  %vm3758 = vcmp.ge.f32.partialorder %v3694, 0.0
  %vm3759 = vcmp.ge.f32.partialorder %v3695, 0.0
  %vm3760 = vcmp.ge.f32.partialorder %v3696, 0.0
  %vm3761 = vcmp.ge.f32.partialorder %v3697, 0.0
  %vm3762 = vcmp.ge.f32.partialorder %v3698, 0.0
  %vm3763 = vcmp.ge.f32.partialorder %v3699, 0.0
  %vm3764 = vcmp.ge.f32.partialorder %v3700, 0.0
  %vm3765 = vcmp.ge.f32.partialorder %v3701, 0.0
  %vm3766 = vcmp.ge.f32.partialorder %v3702, 0.0
  %vm3767 = vcmp.ge.f32.partialorder %v3703, 0.0
  %vm3768 = vcmp.ge.f32.partialorder %v3704, 0.0
  %vm3769 = vcmp.ge.f32.partialorder %v3705, 0.0
  %vm3770 = vcmp.ge.f32.partialorder %v3706, 0.0
  %vm3771 = vcmp.ge.f32.partialorder %v3707, 0.0
  %vm3772 = vcmp.ge.f32.partialorder %v3708, 0.0
  %v3773 = vmul.f32 %v3645, 0.2
  %v3774 = vmul.f32 %v3646, 0.2
  %v3775 = vmul.f32 %v3647, 0.2
  %v3776 = vmul.f32 %v3648, 0.2
  %v3777 = vmul.f32 %v3649, 0.2
  %v3778 = vmul.f32 %v3650, 0.2
  %v3779 = vmul.f32 %v3651, 0.2
  %v3780 = vmul.f32 %v3652, 0.2
  %v3781 = vmul.f32 %v3653, 0.2
  %v3782 = vmul.f32 %v3654, 0.2
  %v3783 = vmul.f32 %v3655, 0.2
  %v3784 = vmul.f32 %v3656, 0.2
  %v3785 = vmul.f32 %v3657, 0.2
  %v3786 = vmul.f32 %v3658, 0.2
  %v3787 = vmul.f32 %v3659, 0.2
  %v3788 = vmul.f32 %v3660, 0.2
  %v3789 = vmul.f32 %v3661, 0.2
  %v3790 = vmul.f32 %v3662, 0.2
  %v3791 = vmul.f32 %v3663, 0.2
  %v3792 = vmul.f32 %v3664, 0.2
  %v3793 = vmul.f32 %v3665, 0.2
  %v3794 = vmul.f32 %v3666, 0.2
  %v3795 = vmul.f32 %v3667, 0.2
  %v3796 = vmul.f32 %v3668, 0.2
  %v3797 = vmul.f32 %v3669, 0.2
  %v3798 = vmul.f32 %v3670, 0.2
  %v3799 = vmul.f32 %v3671, 0.2
  %v3800 = vmul.f32 %v3672, 0.2
  %v3801 = vmul.f32 %v3673, 0.2
  %v3802 = vmul.f32 %v3674, 0.2
  %v3803 = vmul.f32 %v3675, 0.2
  %v3804 = vmul.f32 %v3676, 0.2
  %v3805 = vmul.f32 %v3677, 0.2
  %v3806 = vmul.f32 %v3678, 0.2
  %v3807 = vmul.f32 %v3679, 0.2
  %v3808 = vmul.f32 %v3680, 0.2
  %v3809 = vmul.f32 %v3681, 0.2
  %v3810 = vmul.f32 %v3682, 0.2
  %v3811 = vmul.f32 %v3683, 0.2
  %v3812 = vmul.f32 %v3684, 0.2
  %v3813 = vmul.f32 %v3685, 0.2
  %v3814 = vmul.f32 %v3686, 0.2
  %v3815 = vmul.f32 %v3687, 0.2
  %v3816 = vmul.f32 %v3688, 0.2
  %v3817 = vmul.f32 %v3689, 0.2
  %v3818 = vmul.f32 %v3690, 0.2
  %v3819 = vmul.f32 %v3691, 0.2
  %v3820 = vmul.f32 %v3692, 0.2
  %v3821 = vmul.f32 %v3693, 0.2
  %v3822 = vmul.f32 %v3694, 0.2
  %v3823 = vmul.f32 %v3695, 0.2
  %v3824 = vmul.f32 %v3696, 0.2
  %v3825 = vmul.f32 %v3697, 0.2
  %v3826 = vmul.f32 %v3698, 0.2
  %v3827 = vmul.f32 %v3699, 0.2
  %v3828 = vmul.f32 %v3700, 0.2
  %v3829 = vmul.f32 %v3701, 0.2
  %v3830 = vmul.f32 %v3702, 0.2
  %v3831 = vmul.f32 %v3703, 0.2
  %v3832 = vmul.f32 %v3704, 0.2
  %v3833 = vmul.f32 %v3705, 0.2
  %v3834 = vmul.f32 %v3706, 0.2
  %v3835 = vmul.f32 %v3707, 0.2
  %v3836 = vmul.f32 %v3708, 0.2
  %v3837 = vsel %vm3709, %v3645, %v3773
  %v3838 = vsel %vm3710, %v3646, %v3774
  %v3839 = vsel %vm3711, %v3647, %v3775
  %v3840 = vsel %vm3712, %v3648, %v3776
  %v3841 = vsel %vm3713, %v3649, %v3777
  %v3842 = vsel %vm3714, %v3650, %v3778
  %v3843 = vsel %vm3715, %v3651, %v3779
  %v3844 = vsel %vm3716, %v3652, %v3780
  %v3845 = vsel %vm3717, %v3653, %v3781
  %v3846 = vsel %vm3718, %v3654, %v3782
  %v3847 = vsel %vm3719, %v3655, %v3783
  %v3848 = vsel %vm3720, %v3656, %v3784
  %v3849 = vsel %vm3721, %v3657, %v3785
  %v3850 = vsel %vm3722, %v3658, %v3786
  %v3851 = vsel %vm3723, %v3659, %v3787
  %v3852 = vsel %vm3724, %v3660, %v3788
  %v3853 = vsel %vm3725, %v3661, %v3789
  %v3854 = vsel %vm3726, %v3662, %v3790
  %v3855 = vsel %vm3727, %v3663, %v3791
  %v3856 = vsel %vm3728, %v3664, %v3792
  %v3857 = vsel %vm3729, %v3665, %v3793
  %v3858 = vsel %vm3730, %v3666, %v3794
  %v3859 = vsel %vm3731, %v3667, %v3795
  %v3860 = vsel %vm3732, %v3668, %v3796
  %v3861 = vsel %vm3733, %v3669, %v3797
  %v3862 = vsel %vm3734, %v3670, %v3798
  %v3863 = vsel %vm3735, %v3671, %v3799
  %v3864 = vsel %vm3736, %v3672, %v3800
  %v3865 = vsel %vm3737, %v3673, %v3801
  %v3866 = vsel %vm3738, %v3674, %v3802
  %v3867 = vsel %vm3739, %v3675, %v3803
  %v3868 = vsel %vm3740, %v3676, %v3804
  %v3869 = vsel %vm3741, %v3677, %v3805
  %v3870 = vsel %vm3742, %v3678, %v3806
  %v3871 = vsel %vm3743, %v3679, %v3807
  %v3872 = vsel %vm3744, %v3680, %v3808
  %v3873 = vsel %vm3745, %v3681, %v3809
  %v3874 = vsel %vm3746, %v3682, %v3810
  %v3875 = vsel %vm3747, %v3683, %v3811
  %v3876 = vsel %vm3748, %v3684, %v3812
  %v3877 = vsel %vm3749, %v3685, %v3813
  %v3878 = vsel %vm3750, %v3686, %v3814
  %v3879 = vsel %vm3751, %v3687, %v3815
  %v3880 = vsel %vm3752, %v3688, %v3816
  %v3881 = vsel %vm3753, %v3689, %v3817
  %v3882 = vsel %vm3754, %v3690, %v3818
  %v3883 = vsel %vm3755, %v3691, %v3819
  %v3884 = vsel %vm3756, %v3692, %v3820
  %v3885 = vsel %vm3757, %v3693, %v3821
  %v3886 = vsel %vm3758, %v3694, %v3822
  %v3887 = vsel %vm3759, %v3695, %v3823
  %v3888 = vsel %vm3760, %v3696, %v3824
  %v3889 = vsel %vm3761, %v3697, %v3825
  %v3890 = vsel %vm3762, %v3698, %v3826
  %v3891 = vsel %vm3763, %v3699, %v3827
  %v3892 = vsel %vm3764, %v3700, %v3828
  %v3893 = vsel %vm3765, %v3701, %v3829
  %v3894 = vsel %vm3766, %v3702, %v3830
  %v3895 = vsel %vm3767, %v3703, %v3831
  %v3896 = vsel %vm3768, %v3704, %v3832
  %v3897 = vsel %vm3769, %v3705, %v3833
  %v3898 = vsel %vm3770, %v3706, %v3834
  %v3899 = vsel %vm3771, %v3707, %v3835
  %v3900 = vsel %vm3772, %v3708, %v3836
  %vm3965 = vcmask 1040384
  %v3966 = vrot.slane %v3837, 7
  %v3967 = vrot.slane %v3838, 7
  %v3968 = vsel %vm3965, %v3966, %v3967
  %v3969 = vrot.slane %v3839, 7
  %v3970 = vrot.slane %v3840, 7
  %v3971 = vsel %vm3965, %v3969, %v3970
  %v3972 = vrot.slane %v3841, 7
  %v3973 = vrot.slane %v3842, 7
  %v3974 = vsel %vm3965, %v3972, %v3973
  %v3975 = vrot.slane %v3843, 7
  %v3976 = vrot.slane %v3844, 7
  %v3977 = vsel %vm3965, %v3975, %v3976
  %v3978 = vrot.slane %v3845, 7
  %v3979 = vrot.slane %v3846, 7
  %v3980 = vsel %vm3965, %v3978, %v3979
  %v3981 = vrot.slane %v3847, 7
  %v3982 = vrot.slane %v3848, 7
  %v3983 = vsel %vm3965, %v3981, %v3982
  %v3984 = vrot.slane %v3849, 7
  %v3985 = vrot.slane %v3850, 7
  %v3986 = vsel %vm3965, %v3984, %v3985
  %v3987 = vrot.slane %v3851, 7
  %v3988 = vrot.slane %v3852, 7
  %v3989 = vsel %vm3965, %v3987, %v3988
  %v3990 = vrot.slane %v3853, 7
  %v3991 = vrot.slane %v3854, 7
  %v3992 = vsel %vm3965, %v3990, %v3991
  %v3993 = vrot.slane %v3855, 7
  %v3994 = vrot.slane %v3856, 7
  %v3995 = vsel %vm3965, %v3993, %v3994
  %v3996 = vrot.slane %v3857, 7
  %v3997 = vrot.slane %v3858, 7
  %v3998 = vsel %vm3965, %v3996, %v3997
  %v3999 = vrot.slane %v3859, 7
  %v4000 = vrot.slane %v3860, 7
  %v4001 = vsel %vm3965, %v3999, %v4000
  %v4002 = vrot.slane %v3861, 7
  %v4003 = vrot.slane %v3862, 7
  %v4004 = vsel %vm3965, %v4002, %v4003
  %v4005 = vrot.slane %v3863, 7
  %v4006 = vrot.slane %v3864, 7
  %v4007 = vsel %vm3965, %v4005, %v4006
  %v4008 = vrot.slane %v3865, 7
  %v4009 = vrot.slane %v3866, 7
  %v4010 = vsel %vm3965, %v4008, %v4009
  %v4011 = vrot.slane %v3867, 7
  %v4012 = vrot.slane %v3868, 7
  %v4013 = vsel %vm3965, %v4011, %v4012
  %v4014 = vrot.slane %v3869, 7
  %v4015 = vrot.slane %v3870, 7
  %v4016 = vsel %vm3965, %v4014, %v4015
  %v4017 = vrot.slane %v3871, 7
  %v4018 = vrot.slane %v3872, 7
  %v4019 = vsel %vm3965, %v4017, %v4018
  %v4020 = vrot.slane %v3873, 7
  %v4021 = vrot.slane %v3874, 7
  %v4022 = vsel %vm3965, %v4020, %v4021
  %v4023 = vrot.slane %v3875, 7
  %v4024 = vrot.slane %v3876, 7
  %v4025 = vsel %vm3965, %v4023, %v4024
  %v4026 = vrot.slane %v3877, 7
  %v4027 = vrot.slane %v3878, 7
  %v4028 = vsel %vm3965, %v4026, %v4027
  %v4029 = vrot.slane %v3879, 7
  %v4030 = vrot.slane %v3880, 7
  %v4031 = vsel %vm3965, %v4029, %v4030
  %v4032 = vrot.slane %v3881, 7
  %v4033 = vrot.slane %v3882, 7
  %v4034 = vsel %vm3965, %v4032, %v4033
  %v4035 = vrot.slane %v3883, 7
  %v4036 = vrot.slane %v3884, 7
  %v4037 = vsel %vm3965, %v4035, %v4036
  %v4038 = vrot.slane %v3885, 7
  %v4039 = vrot.slane %v3886, 7
  %v4040 = vsel %vm3965, %v4038, %v4039
  %v4041 = vrot.slane %v3887, 7
  %v4042 = vrot.slane %v3888, 7
  %v4043 = vsel %vm3965, %v4041, %v4042
  %v4044 = vrot.slane %v3889, 7
  %v4045 = vrot.slane %v3890, 7
  %v4046 = vsel %vm3965, %v4044, %v4045
  %v4047 = vrot.slane %v3891, 7
  %v4048 = vrot.slane %v3892, 7
  %v4049 = vsel %vm3965, %v4047, %v4048
  %v4050 = vrot.slane %v3893, 7
  %v4051 = vrot.slane %v3894, 7
  %v4052 = vsel %vm3965, %v4050, %v4051
  %v4053 = vrot.slane %v3895, 7
  %v4054 = vrot.slane %v3896, 7
  %v4055 = vsel %vm3965, %v4053, %v4054
  %v4056 = vrot.slane %v3897, 7
  %v4057 = vrot.slane %v3898, 7
  %v4058 = vsel %vm3965, %v4056, %v4057
  %v4059 = vrot.slane %v3899, 7
  %v4060 = vrot.slane %v3900, 7
  %v4061 = vsel %vm3965, %v4059, %v4060
  %v4158 = vsel %vm3965, 0.0, %v3966
  %v4159 = vsel %vm3965, 0.0, %v3969
  %v4160 = vsel %vm3965, 0.0, %v3972
  %v4161 = vsel %vm3965, 0.0, %v3975
  %v4162 = vsel %vm3965, 0.0, %v3978
  %v4163 = vsel %vm3965, 0.0, %v3981
  %v4164 = vsel %vm3965, 0.0, %v3984
  %v4165 = vsel %vm3965, 0.0, %v3987
  %v4166 = vsel %vm3965, 0.0, %v3990
  %v4167 = vsel %vm3965, 0.0, %v3993
  %v4168 = vsel %vm3965, 0.0, %v3996
  %v4169 = vsel %vm3965, 0.0, %v3999
  %v4170 = vsel %vm3965, 0.0, %v4002
  %v4171 = vsel %vm3965, 0.0, %v4005
  %v4172 = vsel %vm3965, 0.0, %v4008
  %v4173 = vsel %vm3965, 0.0, %v4011
  %v4174 = vsel %vm3965, 0.0, %v4014
  %v4175 = vsel %vm3965, 0.0, %v4017
  %v4176 = vsel %vm3965, 0.0, %v4020
  %v4177 = vsel %vm3965, 0.0, %v4023
  %v4178 = vsel %vm3965, 0.0, %v4026
  %v4179 = vsel %vm3965, 0.0, %v4029
  %v4180 = vsel %vm3965, 0.0, %v4032
  %v4181 = vsel %vm3965, 0.0, %v4035
  %v4182 = vsel %vm3965, 0.0, %v4038
  %v4183 = vsel %vm3965, 0.0, %v4041
  %v4184 = vsel %vm3965, 0.0, %v4044
  %v4185 = vsel %vm3965, 0.0, %v4047
  %v4186 = vsel %vm3965, 0.0, %v4050
  %v4187 = vsel %vm3965, 0.0, %v4053
  %v4188 = vsel %vm3965, 0.0, %v4056
  %v4189 = vsel %vm3965, 0.0, %v4059
  %v4190 = vsel %vm3965, %v3967, 0.0
  %v4191 = vsel %vm3965, %v3970, 0.0
  %v4192 = vsel %vm3965, %v3973, 0.0
  %v4193 = vsel %vm3965, %v3976, 0.0
  %v4194 = vsel %vm3965, %v3979, 0.0
  %v4195 = vsel %vm3965, %v3982, 0.0
  %v4196 = vsel %vm3965, %v3985, 0.0
  %v4197 = vsel %vm3965, %v3988, 0.0
  %v4198 = vsel %vm3965, %v3991, 0.0
  %v4199 = vsel %vm3965, %v3994, 0.0
  %v4200 = vsel %vm3965, %v3997, 0.0
  %v4201 = vsel %vm3965, %v4000, 0.0
  %v4202 = vsel %vm3965, %v4003, 0.0
  %v4203 = vsel %vm3965, %v4006, 0.0
  %v4204 = vsel %vm3965, %v4009, 0.0
  %v4205 = vsel %vm3965, %v4012, 0.0
  %v4206 = vsel %vm3965, %v4015, 0.0
  %v4207 = vsel %vm3965, %v4018, 0.0
  %v4208 = vsel %vm3965, %v4021, 0.0
  %v4209 = vsel %vm3965, %v4024, 0.0
  %v4210 = vsel %vm3965, %v4027, 0.0
  %v4211 = vsel %vm3965, %v4030, 0.0
  %v4212 = vsel %vm3965, %v4033, 0.0
  %v4213 = vsel %vm3965, %v4036, 0.0
  %v4214 = vsel %vm3965, %v4039, 0.0
  %v4215 = vsel %vm3965, %v4042, 0.0
  %v4216 = vsel %vm3965, %v4045, 0.0
  %v4217 = vsel %vm3965, %v4048, 0.0
  %v4218 = vsel %vm3965, %v4051, 0.0
  %v4219 = vsel %vm3965, %v4054, 0.0
  %v4220 = vsel %vm3965, %v4057, 0.0
  %v4221 = vsel %vm3965, %v4060, 0.0
  %4222 = vst.msk [vmem:[#allocation2] sm:$0xff] %vm2646, 0.0
  %4223 = vst.msk [vmem:[#allocation2 + $0x8] sm:$0xff] %vm2646, 0.0
  %vm4224 = vcmask 25600
  %4225 = vst.msk [vmem:[#allocation2 + $0x10] sm:$0x3] %vm4224, 0.0
  %4226 = vst.msk [vmem:[#allocation2 + $0x1b0] sm:$0xff] %vm2646, 0.0
  %4227 = vst.msk [vmem:[#allocation2 + $0x1b8] sm:$0xff] %vm2646, 0.0
  %4228 = vst.msk [vmem:[#allocation2 + $0x1c0] sm:$0x3] %vm4224, 0.0
  %s4229 = scalar_lea.vmem [#allocation2], 408
  %4230 = vst.msk [vmem:[%s4229] sm:$0xff] %vm2646, 0.0
  %4231 = vst.msk [vmem:[%s4229 + $0x8] sm:$0xff] %vm2646, 0.0
  %4232 = vst.msk [vmem:[%s4229 + $0x10] sm:$0x3] %vm4224, 0.0
  %4233 = vst.msk [vmem:[%s4229 + $0x1b0] sm:$0xff] %vm2646, 0.0
  %4234 = vst.msk [vmem:[%s4229 + $0x1b8] sm:$0xff] %vm2646, 0.0
  %4235 = vst.msk [vmem:[%s4229 + $0x1c0] sm:$0x3] %vm4224, 0.0
  %s4236 = scalar_lea.vmem [#allocation2], 24
  %4237 = vst.msk [vmem:[%s4236] sm:$0xff] %vm2646, %v4158
  %4238 = vst.msk [vmem:[%s4236 + $0x8] sm:$0xff] %vm2646, %v3968
  %4239 = vst.msk [vmem:[%s4236 + $0x10] sm:$0x3] %vm4224, %v4190
  %4240 = vst.msk [vmem:[%s4236 + $0x18] sm:$0xff] %vm2646, %v4159
  %4241 = vst.msk [vmem:[%s4236 + $0x20] sm:$0xff] %vm2646, %v3971
  %4242 = vst.msk [vmem:[%s4236 + $0x28] sm:$0x3] %vm4224, %v4191
  %4243 = vst.msk [vmem:[%s4236 + $0x30] sm:$0xff] %vm2646, %v4160
  %4244 = vst.msk [vmem:[%s4236 + $0x38] sm:$0xff] %vm2646, %v3974
  %4245 = vst.msk [vmem:[%s4236 + $0x40] sm:$0x3] %vm4224, %v4192
  %4246 = vst.msk [vmem:[%s4236 + $0x48] sm:$0xff] %vm2646, %v4161
  %4247 = vst.msk [vmem:[%s4236 + $0x50] sm:$0xff] %vm2646, %v3977
  %4248 = vst.msk [vmem:[%s4236 + $0x58] sm:$0x3] %vm4224, %v4193
  %4249 = vst.msk [vmem:[%s4236 + $0x60] sm:$0xff] %vm2646, %v4162
  %4250 = vst.msk [vmem:[%s4236 + $0x68] sm:$0xff] %vm2646, %v3980
  %4251 = vst.msk [vmem:[%s4236 + $0x70] sm:$0x3] %vm4224, %v4194
  %4252 = vst.msk [vmem:[%s4236 + $0x78] sm:$0xff] %vm2646, %v4163
  %4253 = vst.msk [vmem:[%s4236 + $0x80] sm:$0xff] %vm2646, %v3983
  %4254 = vst.msk [vmem:[%s4236 + $0x88] sm:$0x3] %vm4224, %v4195
  %4255 = vst.msk [vmem:[%s4236 + $0x90] sm:$0xff] %vm2646, %v4164
  %4256 = vst.msk [vmem:[%s4236 + $0x98] sm:$0xff] %vm2646, %v3986
  %4257 = vst.msk [vmem:[%s4236 + $0xa0] sm:$0x3] %vm4224, %v4196
  %4258 = vst.msk [vmem:[%s4236 + $0xa8] sm:$0xff] %vm2646, %v4165
  %4259 = vst.msk [vmem:[%s4236 + $0xb0] sm:$0xff] %vm2646, %v3989
  %4260 = vst.msk [vmem:[%s4236 + $0xb8] sm:$0x3] %vm4224, %v4197
  %4261 = vst.msk [vmem:[%s4236 + $0xc0] sm:$0xff] %vm2646, %v4166
  %4262 = vst.msk [vmem:[%s4236 + $0xc8] sm:$0xff] %vm2646, %v3992
  %4263 = vst.msk [vmem:[%s4236 + $0xd0] sm:$0x3] %vm4224, %v4198
  %4264 = vst.msk [vmem:[%s4236 + $0xd8] sm:$0xff] %vm2646, %v4167
  %4265 = vst.msk [vmem:[%s4236 + $0xe0] sm:$0xff] %vm2646, %v3995
  %4266 = vst.msk [vmem:[%s4236 + $0xe8] sm:$0x3] %vm4224, %v4199
  %4267 = vst.msk [vmem:[%s4236 + $0xf0] sm:$0xff] %vm2646, %v4168
  %4268 = vst.msk [vmem:[%s4236 + $0xf8] sm:$0xff] %vm2646, %v3998
  %4269 = vst.msk [vmem:[%s4236 + $0x100] sm:$0x3] %vm4224, %v4200
  %4270 = vst.msk [vmem:[%s4236 + $0x108] sm:$0xff] %vm2646, %v4169
  %4271 = vst.msk [vmem:[%s4236 + $0x110] sm:$0xff] %vm2646, %v4001
  %4272 = vst.msk [vmem:[%s4236 + $0x118] sm:$0x3] %vm4224, %v4201
  %4273 = vst.msk [vmem:[%s4236 + $0x120] sm:$0xff] %vm2646, %v4170
  %4274 = vst.msk [vmem:[%s4236 + $0x128] sm:$0xff] %vm2646, %v4004
  %4275 = vst.msk [vmem:[%s4236 + $0x130] sm:$0x3] %vm4224, %v4202
  %4276 = vst.msk [vmem:[%s4236 + $0x138] sm:$0xff] %vm2646, %v4171
  %4277 = vst.msk [vmem:[%s4236 + $0x140] sm:$0xff] %vm2646, %v4007
  %4278 = vst.msk [vmem:[%s4236 + $0x148] sm:$0x3] %vm4224, %v4203
  %4279 = vst.msk [vmem:[%s4236 + $0x150] sm:$0xff] %vm2646, %v4172
  %4280 = vst.msk [vmem:[%s4236 + $0x158] sm:$0xff] %vm2646, %v4010
  %4281 = vst.msk [vmem:[%s4236 + $0x160] sm:$0x3] %vm4224, %v4204
  %4282 = vst.msk [vmem:[%s4236 + $0x168] sm:$0xff] %vm2646, %v4173
  %4283 = vst.msk [vmem:[%s4236 + $0x170] sm:$0xff] %vm2646, %v4013
  %4284 = vst.msk [vmem:[%s4236 + $0x178] sm:$0x3] %vm4224, %v4205
  %4285 = vst.msk [vmem:[%s4236 + $0x1b0] sm:$0xff] %vm2646, %v4174
  %4286 = vst.msk [vmem:[%s4236 + $0x1b8] sm:$0xff] %vm2646, %v4016
  %4287 = vst.msk [vmem:[%s4236 + $0x1c0] sm:$0x3] %vm4224, %v4206
  %4288 = vst.msk [vmem:[%s4236 + $0x1c8] sm:$0xff] %vm2646, %v4175
  %4289 = vst.msk [vmem:[%s4236 + $0x1d0] sm:$0xff] %vm2646, %v4019
  %4290 = vst.msk [vmem:[%s4236 + $0x1d8] sm:$0x3] %vm4224, %v4207
  %4291 = vst.msk [vmem:[%s4236 + $0x1e0] sm:$0xff] %vm2646, %v4176
  %4292 = vst.msk [vmem:[%s4236 + $0x1e8] sm:$0xff] %vm2646, %v4022
  %4293 = vst.msk [vmem:[%s4236 + $0x1f0] sm:$0x3] %vm4224, %v4208
  %4294 = vst.msk [vmem:[%s4236 + $0x1f8] sm:$0xff] %vm2646, %v4177
  %4295 = vst.msk [vmem:[%s4236 + $0x200] sm:$0xff] %vm2646, %v4025
  %4296 = vst.msk [vmem:[%s4236 + $0x208] sm:$0x3] %vm4224, %v4209
  %4297 = vst.msk [vmem:[%s4236 + $0x210] sm:$0xff] %vm2646, %v4178
  %4298 = vst.msk [vmem:[%s4236 + $0x218] sm:$0xff] %vm2646, %v4028
  %4299 = vst.msk [vmem:[%s4236 + $0x220] sm:$0x3] %vm4224, %v4210
  %4300 = vst.msk [vmem:[%s4236 + $0x228] sm:$0xff] %vm2646, %v4179
  %4301 = vst.msk [vmem:[%s4236 + $0x230] sm:$0xff] %vm2646, %v4031
  %4302 = vst.msk [vmem:[%s4236 + $0x238] sm:$0x3] %vm4224, %v4211
  %4303 = vst.msk [vmem:[%s4236 + $0x240] sm:$0xff] %vm2646, %v4180
  %4304 = vst.msk [vmem:[%s4236 + $0x248] sm:$0xff] %vm2646, %v4034
  %4305 = vst.msk [vmem:[%s4236 + $0x250] sm:$0x3] %vm4224, %v4212
  %4306 = vst.msk [vmem:[%s4236 + $0x258] sm:$0xff] %vm2646, %v4181
  %4307 = vst.msk [vmem:[%s4236 + $0x260] sm:$0xff] %vm2646, %v4037
  %4308 = vst.msk [vmem:[%s4236 + $0x268] sm:$0x3] %vm4224, %v4213
  %4309 = vst.msk [vmem:[%s4236 + $0x270] sm:$0xff] %vm2646, %v4182
  %4310 = vst.msk [vmem:[%s4236 + $0x278] sm:$0xff] %vm2646, %v4040
  %4311 = vst.msk [vmem:[%s4236 + $0x280] sm:$0x3] %vm4224, %v4214
  %4312 = vst.msk [vmem:[%s4236 + $0x288] sm:$0xff] %vm2646, %v4183
  %4313 = vst.msk [vmem:[%s4236 + $0x290] sm:$0xff] %vm2646, %v4043
  %4314 = vst.msk [vmem:[%s4236 + $0x298] sm:$0x3] %vm4224, %v4215
  %4315 = vst.msk [vmem:[%s4236 + $0x2a0] sm:$0xff] %vm2646, %v4184
  %4316 = vst.msk [vmem:[%s4236 + $0x2a8] sm:$0xff] %vm2646, %v4046
  %4317 = vst.msk [vmem:[%s4236 + $0x2b0] sm:$0x3] %vm4224, %v4216
  %4318 = vst.msk [vmem:[%s4236 + $0x2b8] sm:$0xff] %vm2646, %v4185
  %4319 = vst.msk [vmem:[%s4236 + $0x2c0] sm:$0xff] %vm2646, %v4049
  %4320 = vst.msk [vmem:[%s4236 + $0x2c8] sm:$0x3] %vm4224, %v4217
  %4321 = vst.msk [vmem:[%s4236 + $0x2d0] sm:$0xff] %vm2646, %v4186
  %4322 = vst.msk [vmem:[%s4236 + $0x2d8] sm:$0xff] %vm2646, %v4052
  %4323 = vst.msk [vmem:[%s4236 + $0x2e0] sm:$0x3] %vm4224, %v4218
  %4324 = vst.msk [vmem:[%s4236 + $0x2e8] sm:$0xff] %vm2646, %v4187
  %4325 = vst.msk [vmem:[%s4236 + $0x2f0] sm:$0xff] %vm2646, %v4055
  %4326 = vst.msk [vmem:[%s4236 + $0x2f8] sm:$0x3] %vm4224, %v4219
  %4327 = vst.msk [vmem:[%s4236 + $0x300] sm:$0xff] %vm2646, %v4188
  %4328 = vst.msk [vmem:[%s4236 + $0x308] sm:$0xff] %vm2646, %v4058
  %4329 = vst.msk [vmem:[%s4236 + $0x310] sm:$0x3] %vm4224, %v4220
  %4330 = vst.msk [vmem:[%s4236 + $0x318] sm:$0xff] %vm2646, %v4189
  %4331 = vst.msk [vmem:[%s4236 + $0x320] sm:$0xff] %vm2646, %v4061
  %4332 = vst.msk [vmem:[%s4236 + $0x328] sm:$0x3] %vm4224, %v4221
  %v4333 = vld [vmem:[#allocation2] sm:$0xff]
  %v4334 = vld [vmem:[#allocation2 + $0x8] sm:$0xff]
  %v4335 = vld [vmem:[#allocation2 + $0x18] sm:$0xff]
  %v4336 = vld [vmem:[#allocation2 + $0x20] sm:$0xff]
  %v4337 = vld [vmem:[#allocation2 + $0x30] sm:$0xff]
  %v4338 = vld [vmem:[#allocation2 + $0x38] sm:$0xff]
  %v4339 = vld [vmem:[#allocation2 + $0x48] sm:$0xff]
  %v4340 = vld [vmem:[#allocation2 + $0x50] sm:$0xff]
  %v4341 = vld [vmem:[#allocation2 + $0x60] sm:$0xff]
  %v4342 = vld [vmem:[#allocation2 + $0x68] sm:$0xff]
  %v4343 = vld [vmem:[#allocation2 + $0x78] sm:$0xff]
  %v4344 = vld [vmem:[#allocation2 + $0x80] sm:$0xff]
  %v4345 = vld [vmem:[#allocation2 + $0x90] sm:$0xff]
  %v4346 = vld [vmem:[#allocation2 + $0x98] sm:$0xff]
  %v4347 = vld [vmem:[#allocation2 + $0xa8] sm:$0xff]
  %v4348 = vld [vmem:[#allocation2 + $0xb0] sm:$0xff]
  %v4349 = vld [vmem:[#allocation2 + $0xc0] sm:$0xff]
  %v4350 = vld [vmem:[#allocation2 + $0xc8] sm:$0xff]
  %v4351 = vld [vmem:[#allocation2 + $0xd8] sm:$0xff]
  %v4352 = vld [vmem:[#allocation2 + $0xe0] sm:$0xff]
  %v4353 = vld [vmem:[#allocation2 + $0xf0] sm:$0xff]
  %v4354 = vld [vmem:[#allocation2 + $0xf8] sm:$0xff]
  %v4355 = vld [vmem:[#allocation2 + $0x108] sm:$0xff]
  %v4356 = vld [vmem:[#allocation2 + $0x110] sm:$0xff]
  %v4357 = vld [vmem:[#allocation2 + $0x120] sm:$0xff]
  %v4358 = vld [vmem:[#allocation2 + $0x128] sm:$0xff]
  %v4359 = vld [vmem:[#allocation2 + $0x138] sm:$0xff]
  %v4360 = vld [vmem:[#allocation2 + $0x140] sm:$0xff]
  %v4361 = vld [vmem:[#allocation2 + $0x150] sm:$0xff]
  %v4362 = vld [vmem:[#allocation2 + $0x158] sm:$0xff]
  %v4363 = vld [vmem:[#allocation2 + $0x168] sm:$0xff]
  %v4364 = vld [vmem:[#allocation2 + $0x170] sm:$0xff]
  %v4365 = vld [vmem:[#allocation2 + $0x1b0] sm:$0xff]
  %v4366 = vld [vmem:[#allocation2 + $0x1b8] sm:$0xff]
  %v4367 = vld [vmem:[#allocation2 + $0x1c8] sm:$0xff]
  %v4368 = vld [vmem:[#allocation2 + $0x1d0] sm:$0xff]
  %v4369 = vld [vmem:[#allocation2 + $0x1e0] sm:$0xff]
  %v4370 = vld [vmem:[#allocation2 + $0x1e8] sm:$0xff]
  %v4371 = vld [vmem:[#allocation2 + $0x1f8] sm:$0xff]
  %v4372 = vld [vmem:[#allocation2 + $0x200] sm:$0xff]
  %v4373 = vld [vmem:[#allocation2 + $0x210] sm:$0xff]
  %v4374 = vld [vmem:[#allocation2 + $0x218] sm:$0xff]
  %v4375 = vld [vmem:[#allocation2 + $0x228] sm:$0xff]
  %v4376 = vld [vmem:[#allocation2 + $0x230] sm:$0xff]
  %v4377 = vld [vmem:[#allocation2 + $0x240] sm:$0xff]
  %v4378 = vld [vmem:[#allocation2 + $0x248] sm:$0xff]
  %v4379 = vld [vmem:[#allocation2 + $0x258] sm:$0xff]
  %v4380 = vld [vmem:[#allocation2 + $0x260] sm:$0xff]
  %v4381 = vld [vmem:[#allocation2 + $0x270] sm:$0xff]
  %v4382 = vld [vmem:[#allocation2 + $0x278] sm:$0xff]
  %v4383 = vld [vmem:[#allocation2 + $0x288] sm:$0xff]
  %v4384 = vld [vmem:[#allocation2 + $0x290] sm:$0xff]
  %v4385 = vld [vmem:[#allocation2 + $0x2a0] sm:$0xff]
  %v4386 = vld [vmem:[#allocation2 + $0x2a8] sm:$0xff]
  %v4387 = vld [vmem:[#allocation2 + $0x2b8] sm:$0xff]
  %v4388 = vld [vmem:[#allocation2 + $0x2c0] sm:$0xff]
  %v4389 = vld [vmem:[#allocation2 + $0x2d0] sm:$0xff]
  %v4390 = vld [vmem:[#allocation2 + $0x2d8] sm:$0xff]
  %v4391 = vld [vmem:[#allocation2 + $0x2e8] sm:$0xff]
  %v4392 = vld [vmem:[#allocation2 + $0x2f0] sm:$0xff]
  %v4393 = vld [vmem:[#allocation2 + $0x300] sm:$0xff]
  %v4394 = vld [vmem:[#allocation2 + $0x308] sm:$0xff]
  %v4395 = vld [vmem:[#allocation2 + $0x318] sm:$0xff]
  %v4396 = vld [vmem:[#allocation2 + $0x320] sm:$0xff]
  %v4397 = vld [vmem:[#allocation2 + $0x1] sm:$0xff]
  %v4398 = vld [vmem:[#allocation2 + $0x9] sm:$0xff]
  %v4399 = vld [vmem:[#allocation2 + $0x19] sm:$0xff]
  %v4400 = vld [vmem:[#allocation2 + $0x21] sm:$0xff]
  %v4401 = vld [vmem:[#allocation2 + $0x31] sm:$0xff]
  %v4402 = vld [vmem:[#allocation2 + $0x39] sm:$0xff]
  %v4403 = vld [vmem:[#allocation2 + $0x49] sm:$0xff]
  %v4404 = vld [vmem:[#allocation2 + $0x51] sm:$0xff]
  %v4405 = vld [vmem:[#allocation2 + $0x61] sm:$0xff]
  %v4406 = vld [vmem:[#allocation2 + $0x69] sm:$0xff]
  %v4407 = vld [vmem:[#allocation2 + $0x79] sm:$0xff]
  %v4408 = vld [vmem:[#allocation2 + $0x81] sm:$0xff]
  %v4409 = vld [vmem:[#allocation2 + $0x91] sm:$0xff]
  %v4410 = vld [vmem:[#allocation2 + $0x99] sm:$0xff]
  %v4411 = vld [vmem:[#allocation2 + $0xa9] sm:$0xff]
  %v4412 = vld [vmem:[#allocation2 + $0xb1] sm:$0xff]
  %v4413 = vld [vmem:[#allocation2 + $0xc1] sm:$0xff]
  %v4414 = vld [vmem:[#allocation2 + $0xc9] sm:$0xff]
  %v4415 = vld [vmem:[#allocation2 + $0xd9] sm:$0xff]
  %v4416 = vld [vmem:[#allocation2 + $0xe1] sm:$0xff]
  %v4417 = vld [vmem:[#allocation2 + $0xf1] sm:$0xff]
  %v4418 = vld [vmem:[#allocation2 + $0xf9] sm:$0xff]
  %v4419 = vld [vmem:[#allocation2 + $0x109] sm:$0xff]
  %v4420 = vld [vmem:[#allocation2 + $0x111] sm:$0xff]
  %v4421 = vld [vmem:[#allocation2 + $0x121] sm:$0xff]
  %v4422 = vld [vmem:[#allocation2 + $0x129] sm:$0xff]
  %v4423 = vld [vmem:[#allocation2 + $0x139] sm:$0xff]
  %v4424 = vld [vmem:[#allocation2 + $0x141] sm:$0xff]
  %v4425 = vld [vmem:[#allocation2 + $0x151] sm:$0xff]
  %v4426 = vld [vmem:[#allocation2 + $0x159] sm:$0xff]
  %v4427 = vld [vmem:[#allocation2 + $0x169] sm:$0xff]
  %v4428 = vld [vmem:[#allocation2 + $0x171] sm:$0xff]
  %v4429 = vld [vmem:[#allocation2 + $0x1b1] sm:$0xff]
  %v4430 = vld [vmem:[#allocation2 + $0x1b9] sm:$0xff]
  %v4431 = vld [vmem:[#allocation2 + $0x1c9] sm:$0xff]
  %v4432 = vld [vmem:[#allocation2 + $0x1d1] sm:$0xff]
  %v4433 = vld [vmem:[#allocation2 + $0x1e1] sm:$0xff]
  %v4434 = vld [vmem:[#allocation2 + $0x1e9] sm:$0xff]
  %v4435 = vld [vmem:[#allocation2 + $0x1f9] sm:$0xff]
  %v4436 = vld [vmem:[#allocation2 + $0x201] sm:$0xff]
  %v4437 = vld [vmem:[#allocation2 + $0x211] sm:$0xff]
  %v4438 = vld [vmem:[#allocation2 + $0x219] sm:$0xff]
  %v4439 = vld [vmem:[#allocation2 + $0x229] sm:$0xff]
  %v4440 = vld [vmem:[#allocation2 + $0x231] sm:$0xff]
  %v4441 = vld [vmem:[#allocation2 + $0x241] sm:$0xff]
  %v4442 = vld [vmem:[#allocation2 + $0x249] sm:$0xff]
  %v4443 = vld [vmem:[#allocation2 + $0x259] sm:$0xff]
  %v4444 = vld [vmem:[#allocation2 + $0x261] sm:$0xff]
  %v4445 = vld [vmem:[#allocation2 + $0x271] sm:$0xff]
  %v4446 = vld [vmem:[#allocation2 + $0x279] sm:$0xff]
  %v4447 = vld [vmem:[#allocation2 + $0x289] sm:$0xff]
  %v4448 = vld [vmem:[#allocation2 + $0x291] sm:$0xff]
  %v4449 = vld [vmem:[#allocation2 + $0x2a1] sm:$0xff]
  %v4450 = vld [vmem:[#allocation2 + $0x2a9] sm:$0xff]
  %v4451 = vld [vmem:[#allocation2 + $0x2b9] sm:$0xff]
  %v4452 = vld [vmem:[#allocation2 + $0x2c1] sm:$0xff]
  %v4453 = vld [vmem:[#allocation2 + $0x2d1] sm:$0xff]
  %v4454 = vld [vmem:[#allocation2 + $0x2d9] sm:$0xff]
  %v4455 = vld [vmem:[#allocation2 + $0x2e9] sm:$0xff]
  %v4456 = vld [vmem:[#allocation2 + $0x2f1] sm:$0xff]
  %v4457 = vld [vmem:[#allocation2 + $0x301] sm:$0xff]
  %v4458 = vld [vmem:[#allocation2 + $0x309] sm:$0xff]
  %v4459 = vld [vmem:[#allocation2 + $0x319] sm:$0xff]
  %v4460 = vld [vmem:[#allocation2 + $0x321] sm:$0xff]
  %v4461 = vld [vmem:[#allocation2 + $0x2] sm:$0xff]
  %v4462 = vld [vmem:[#allocation2 + $0xa] sm:$0xff]
  %v4463 = vld [vmem:[#allocation2 + $0x1a] sm:$0xff]
  %v4464 = vld [vmem:[#allocation2 + $0x22] sm:$0xff]
  %v4465 = vld [vmem:[#allocation2 + $0x32] sm:$0xff]
  %v4466 = vld [vmem:[#allocation2 + $0x3a] sm:$0xff]
  %v4467 = vld [vmem:[#allocation2 + $0x4a] sm:$0xff]
  %v4468 = vld [vmem:[#allocation2 + $0x52] sm:$0xff]
  %v4469 = vld [vmem:[#allocation2 + $0x62] sm:$0xff]
  %v4470 = vld [vmem:[#allocation2 + $0x6a] sm:$0xff]
  %v4471 = vld [vmem:[#allocation2 + $0x7a] sm:$0xff]
  %v4472 = vld [vmem:[#allocation2 + $0x82] sm:$0xff]
  %v4473 = vld [vmem:[#allocation2 + $0x92] sm:$0xff]
  %v4474 = vld [vmem:[#allocation2 + $0x9a] sm:$0xff]
  %v4475 = vld [vmem:[#allocation2 + $0xaa] sm:$0xff]
  %v4476 = vld [vmem:[#allocation2 + $0xb2] sm:$0xff]
  %v4477 = vld [vmem:[#allocation2 + $0xc2] sm:$0xff]
  %v4478 = vld [vmem:[#allocation2 + $0xca] sm:$0xff]
  %v4479 = vld [vmem:[#allocation2 + $0xda] sm:$0xff]
  %v4480 = vld [vmem:[#allocation2 + $0xe2] sm:$0xff]
  %v4481 = vld [vmem:[#allocation2 + $0xf2] sm:$0xff]
  %v4482 = vld [vmem:[#allocation2 + $0xfa] sm:$0xff]
  %v4483 = vld [vmem:[#allocation2 + $0x10a] sm:$0xff]
  %v4484 = vld [vmem:[#allocation2 + $0x112] sm:$0xff]
  %v4485 = vld [vmem:[#allocation2 + $0x122] sm:$0xff]
  %v4486 = vld [vmem:[#allocation2 + $0x12a] sm:$0xff]
  %v4487 = vld [vmem:[#allocation2 + $0x13a] sm:$0xff]
  %v4488 = vld [vmem:[#allocation2 + $0x142] sm:$0xff]
  %v4489 = vld [vmem:[#allocation2 + $0x152] sm:$0xff]
  %v4490 = vld [vmem:[#allocation2 + $0x15a] sm:$0xff]
  %v4491 = vld [vmem:[#allocation2 + $0x16a] sm:$0xff]
  %v4492 = vld [vmem:[#allocation2 + $0x172] sm:$0xff]
  %v4493 = vld [vmem:[#allocation2 + $0x1b2] sm:$0xff]
  %v4494 = vld [vmem:[#allocation2 + $0x1ba] sm:$0xff]
  %v4495 = vld [vmem:[#allocation2 + $0x1ca] sm:$0xff]
  %v4496 = vld [vmem:[#allocation2 + $0x1d2] sm:$0xff]
  %v4497 = vld [vmem:[#allocation2 + $0x1e2] sm:$0xff]
  %v4498 = vld [vmem:[#allocation2 + $0x1ea] sm:$0xff]
  %v4499 = vld [vmem:[#allocation2 + $0x1fa] sm:$0xff]
  %v4500 = vld [vmem:[#allocation2 + $0x202] sm:$0xff]
  %v4501 = vld [vmem:[#allocation2 + $0x212] sm:$0xff]
  %v4502 = vld [vmem:[#allocation2 + $0x21a] sm:$0xff]
  %v4503 = vld [vmem:[#allocation2 + $0x22a] sm:$0xff]
  %v4504 = vld [vmem:[#allocation2 + $0x232] sm:$0xff]
  %v4505 = vld [vmem:[#allocation2 + $0x242] sm:$0xff]
  %v4506 = vld [vmem:[#allocation2 + $0x24a] sm:$0xff]
  %v4507 = vld [vmem:[#allocation2 + $0x25a] sm:$0xff]
  %v4508 = vld [vmem:[#allocation2 + $0x262] sm:$0xff]
  %v4509 = vld [vmem:[#allocation2 + $0x272] sm:$0xff]
  %v4510 = vld [vmem:[#allocation2 + $0x27a] sm:$0xff]
  %v4511 = vld [vmem:[#allocation2 + $0x28a] sm:$0xff]
  %v4512 = vld [vmem:[#allocation2 + $0x292] sm:$0xff]
  %v4513 = vld [vmem:[#allocation2 + $0x2a2] sm:$0xff]
  %v4514 = vld [vmem:[#allocation2 + $0x2aa] sm:$0xff]
  %v4515 = vld [vmem:[#allocation2 + $0x2ba] sm:$0xff]
  %v4516 = vld [vmem:[#allocation2 + $0x2c2] sm:$0xff]
  %v4517 = vld [vmem:[#allocation2 + $0x2d2] sm:$0xff]
  %v4518 = vld [vmem:[#allocation2 + $0x2da] sm:$0xff]
  %v4519 = vld [vmem:[#allocation2 + $0x2ea] sm:$0xff]
  %v4520 = vld [vmem:[#allocation2 + $0x2f2] sm:$0xff]
  %v4521 = vld [vmem:[#allocation2 + $0x302] sm:$0xff]
  %v4522 = vld [vmem:[#allocation2 + $0x30a] sm:$0xff]
  %v4523 = vld [vmem:[#allocation2 + $0x31a] sm:$0xff]
  %v4524 = vld [vmem:[#allocation2 + $0x322] sm:$0xff]
  %v4525 = vld [vmem:[%s4236] sm:$0xff]
  %v4526 = vld [vmem:[%s4236 + $0x8] sm:$0xff]
  %v4527 = vld [vmem:[%s4236 + $0x18] sm:$0xff]
  %v4528 = vld [vmem:[%s4236 + $0x20] sm:$0xff]
  %v4529 = vld [vmem:[%s4236 + $0x30] sm:$0xff]
  %v4530 = vld [vmem:[%s4236 + $0x38] sm:$0xff]
  %v4531 = vld [vmem:[%s4236 + $0x48] sm:$0xff]
  %v4532 = vld [vmem:[%s4236 + $0x50] sm:$0xff]
  %v4533 = vld [vmem:[%s4236 + $0x60] sm:$0xff]
  %v4534 = vld [vmem:[%s4236 + $0x68] sm:$0xff]
  %v4535 = vld [vmem:[%s4236 + $0x78] sm:$0xff]
  %v4536 = vld [vmem:[%s4236 + $0x80] sm:$0xff]
  %v4537 = vld [vmem:[%s4236 + $0x90] sm:$0xff]
  %v4538 = vld [vmem:[%s4236 + $0x98] sm:$0xff]
  %v4539 = vld [vmem:[%s4236 + $0xa8] sm:$0xff]
  %v4540 = vld [vmem:[%s4236 + $0xb0] sm:$0xff]
  %v4541 = vld [vmem:[%s4236 + $0xc0] sm:$0xff]
  %v4542 = vld [vmem:[%s4236 + $0xc8] sm:$0xff]
  %v4543 = vld [vmem:[%s4236 + $0xd8] sm:$0xff]
  %v4544 = vld [vmem:[%s4236 + $0xe0] sm:$0xff]
  %v4545 = vld [vmem:[%s4236 + $0xf0] sm:$0xff]
  %v4546 = vld [vmem:[%s4236 + $0xf8] sm:$0xff]
  %v4547 = vld [vmem:[%s4236 + $0x108] sm:$0xff]
  %v4548 = vld [vmem:[%s4236 + $0x110] sm:$0xff]
  %v4549 = vld [vmem:[%s4236 + $0x120] sm:$0xff]
  %v4550 = vld [vmem:[%s4236 + $0x128] sm:$0xff]
  %v4551 = vld [vmem:[%s4236 + $0x138] sm:$0xff]
  %v4552 = vld [vmem:[%s4236 + $0x140] sm:$0xff]
  %v4553 = vld [vmem:[%s4236 + $0x150] sm:$0xff]
  %v4554 = vld [vmem:[%s4236 + $0x158] sm:$0xff]
  %v4555 = vld [vmem:[%s4236 + $0x168] sm:$0xff]
  %v4556 = vld [vmem:[%s4236 + $0x170] sm:$0xff]
  %v4557 = vld [vmem:[%s4236 + $0x1b0] sm:$0xff]
  %v4558 = vld [vmem:[%s4236 + $0x1b8] sm:$0xff]
  %v4559 = vld [vmem:[%s4236 + $0x1c8] sm:$0xff]
  %v4560 = vld [vmem:[%s4236 + $0x1d0] sm:$0xff]
  %v4561 = vld [vmem:[%s4236 + $0x1e0] sm:$0xff]
  %v4562 = vld [vmem:[%s4236 + $0x1e8] sm:$0xff]
  %v4563 = vld [vmem:[%s4236 + $0x1f8] sm:$0xff]
  %v4564 = vld [vmem:[%s4236 + $0x200] sm:$0xff]
  %v4565 = vld [vmem:[%s4236 + $0x210] sm:$0xff]
  %v4566 = vld [vmem:[%s4236 + $0x218] sm:$0xff]
  %v4567 = vld [vmem:[%s4236 + $0x228] sm:$0xff]
  %v4568 = vld [vmem:[%s4236 + $0x230] sm:$0xff]
  %v4569 = vld [vmem:[%s4236 + $0x240] sm:$0xff]
  %v4570 = vld [vmem:[%s4236 + $0x248] sm:$0xff]
  %v4571 = vld [vmem:[%s4236 + $0x258] sm:$0xff]
  %v4572 = vld [vmem:[%s4236 + $0x260] sm:$0xff]
  %v4573 = vld [vmem:[%s4236 + $0x270] sm:$0xff]
  %v4574 = vld [vmem:[%s4236 + $0x278] sm:$0xff]
  %v4575 = vld [vmem:[%s4236 + $0x288] sm:$0xff]
  %v4576 = vld [vmem:[%s4236 + $0x290] sm:$0xff]
  %v4577 = vld [vmem:[%s4236 + $0x2a0] sm:$0xff]
  %v4578 = vld [vmem:[%s4236 + $0x2a8] sm:$0xff]
  %v4579 = vld [vmem:[%s4236 + $0x2b8] sm:$0xff]
  %v4580 = vld [vmem:[%s4236 + $0x2c0] sm:$0xff]
  %v4581 = vld [vmem:[%s4236 + $0x2d0] sm:$0xff]
  %v4582 = vld [vmem:[%s4236 + $0x2d8] sm:$0xff]
  %v4583 = vld [vmem:[%s4236 + $0x2e8] sm:$0xff]
  %v4584 = vld [vmem:[%s4236 + $0x2f0] sm:$0xff]
  %v4585 = vld [vmem:[%s4236 + $0x300] sm:$0xff]
  %v4586 = vld [vmem:[%s4236 + $0x308] sm:$0xff]
  %v4587 = vld [vmem:[%s4236 + $0x318] sm:$0xff]
  %v4588 = vld [vmem:[%s4236 + $0x320] sm:$0xff]
  %v4589 = vld [vmem:[%s4236 + $0x1] sm:$0xff]
  %v4590 = vld [vmem:[%s4236 + $0x9] sm:$0xff]
  %v4591 = vld [vmem:[%s4236 + $0x19] sm:$0xff]
  %v4592 = vld [vmem:[%s4236 + $0x21] sm:$0xff]
  %v4593 = vld [vmem:[%s4236 + $0x31] sm:$0xff]
  %v4594 = vld [vmem:[%s4236 + $0x39] sm:$0xff]
  %v4595 = vld [vmem:[%s4236 + $0x49] sm:$0xff]
  %v4596 = vld [vmem:[%s4236 + $0x51] sm:$0xff]
  %v4597 = vld [vmem:[%s4236 + $0x61] sm:$0xff]
  %v4598 = vld [vmem:[%s4236 + $0x69] sm:$0xff]
  %v4599 = vld [vmem:[%s4236 + $0x79] sm:$0xff]
  %v4600 = vld [vmem:[%s4236 + $0x81] sm:$0xff]
  %v4601 = vld [vmem:[%s4236 + $0x91] sm:$0xff]
  %v4602 = vld [vmem:[%s4236 + $0x99] sm:$0xff]
  %v4603 = vld [vmem:[%s4236 + $0xa9] sm:$0xff]
  %v4604 = vld [vmem:[%s4236 + $0xb1] sm:$0xff]
  %v4605 = vld [vmem:[%s4236 + $0xc1] sm:$0xff]
  %v4606 = vld [vmem:[%s4236 + $0xc9] sm:$0xff]
  %v4607 = vld [vmem:[%s4236 + $0xd9] sm:$0xff]
  %v4608 = vld [vmem:[%s4236 + $0xe1] sm:$0xff]
  %v4609 = vld [vmem:[%s4236 + $0xf1] sm:$0xff]
  %v4610 = vld [vmem:[%s4236 + $0xf9] sm:$0xff]
  %v4611 = vld [vmem:[%s4236 + $0x109] sm:$0xff]
  %v4612 = vld [vmem:[%s4236 + $0x111] sm:$0xff]
  %v4613 = vld [vmem:[%s4236 + $0x121] sm:$0xff]
  %v4614 = vld [vmem:[%s4236 + $0x129] sm:$0xff]
  %v4615 = vld [vmem:[%s4236 + $0x139] sm:$0xff]
  %v4616 = vld [vmem:[%s4236 + $0x141] sm:$0xff]
  %v4617 = vld [vmem:[%s4236 + $0x151] sm:$0xff]
  %v4618 = vld [vmem:[%s4236 + $0x159] sm:$0xff]
  %v4619 = vld [vmem:[%s4236 + $0x169] sm:$0xff]
  %v4620 = vld [vmem:[%s4236 + $0x171] sm:$0xff]
  %v4621 = vld [vmem:[%s4236 + $0x1b1] sm:$0xff]
  %v4622 = vld [vmem:[%s4236 + $0x1b9] sm:$0xff]
  %v4623 = vld [vmem:[%s4236 + $0x1c9] sm:$0xff]
  %v4624 = vld [vmem:[%s4236 + $0x1d1] sm:$0xff]
  %v4625 = vld [vmem:[%s4236 + $0x1e1] sm:$0xff]
  %v4626 = vld [vmem:[%s4236 + $0x1e9] sm:$0xff]
  %v4627 = vld [vmem:[%s4236 + $0x1f9] sm:$0xff]
  %v4628 = vld [vmem:[%s4236 + $0x201] sm:$0xff]
  %v4629 = vld [vmem:[%s4236 + $0x211] sm:$0xff]
  %v4630 = vld [vmem:[%s4236 + $0x219] sm:$0xff]
  %v4631 = vld [vmem:[%s4236 + $0x229] sm:$0xff]
  %v4632 = vld [vmem:[%s4236 + $0x231] sm:$0xff]
  %v4633 = vld [vmem:[%s4236 + $0x241] sm:$0xff]
  %v4634 = vld [vmem:[%s4236 + $0x249] sm:$0xff]
  %v4635 = vld [vmem:[%s4236 + $0x259] sm:$0xff]
  %v4636 = vld [vmem:[%s4236 + $0x261] sm:$0xff]
  %v4637 = vld [vmem:[%s4236 + $0x271] sm:$0xff]
  %v4638 = vld [vmem:[%s4236 + $0x279] sm:$0xff]
  %v4639 = vld [vmem:[%s4236 + $0x289] sm:$0xff]
  %v4640 = vld [vmem:[%s4236 + $0x291] sm:$0xff]
  %v4641 = vld [vmem:[%s4236 + $0x2a1] sm:$0xff]
  %v4642 = vld [vmem:[%s4236 + $0x2a9] sm:$0xff]
  %v4643 = vld [vmem:[%s4236 + $0x2b9] sm:$0xff]
  %v4644 = vld [vmem:[%s4236 + $0x2c1] sm:$0xff]
  %v4645 = vld [vmem:[%s4236 + $0x2d1] sm:$0xff]
  %v4646 = vld [vmem:[%s4236 + $0x2d9] sm:$0xff]
  %v4647 = vld [vmem:[%s4236 + $0x2e9] sm:$0xff]
  %v4648 = vld [vmem:[%s4236 + $0x2f1] sm:$0xff]
  %v4649 = vld [vmem:[%s4236 + $0x301] sm:$0xff]
  %v4650 = vld [vmem:[%s4236 + $0x309] sm:$0xff]
  %v4651 = vld [vmem:[%s4236 + $0x319] sm:$0xff]
  %v4652 = vld [vmem:[%s4236 + $0x321] sm:$0xff]
  %v4653 = vld [vmem:[%s4236 + $0x2] sm:$0xff]
  %v4654 = vld [vmem:[%s4236 + $0xa] sm:$0xff]
  %v4655 = vld [vmem:[%s4236 + $0x1a] sm:$0xff]
  %v4656 = vld [vmem:[%s4236 + $0x22] sm:$0xff]
  %v4657 = vld [vmem:[%s4236 + $0x32] sm:$0xff]
  %v4658 = vld [vmem:[%s4236 + $0x3a] sm:$0xff]
  %v4659 = vld [vmem:[%s4236 + $0x4a] sm:$0xff]
  %v4660 = vld [vmem:[%s4236 + $0x52] sm:$0xff]
  %v4661 = vld [vmem:[%s4236 + $0x62] sm:$0xff]
  %v4662 = vld [vmem:[%s4236 + $0x6a] sm:$0xff]
  %v4663 = vld [vmem:[%s4236 + $0x7a] sm:$0xff]
  %v4664 = vld [vmem:[%s4236 + $0x82] sm:$0xff]
  %v4665 = vld [vmem:[%s4236 + $0x92] sm:$0xff]
  %v4666 = vld [vmem:[%s4236 + $0x9a] sm:$0xff]
  %v4667 = vld [vmem:[%s4236 + $0xaa] sm:$0xff]
  %v4668 = vld [vmem:[%s4236 + $0xb2] sm:$0xff]
  %v4669 = vld [vmem:[%s4236 + $0xc2] sm:$0xff]
  %v4670 = vld [vmem:[%s4236 + $0xca] sm:$0xff]
  %v4671 = vld [vmem:[%s4236 + $0xda] sm:$0xff]
  %v4672 = vld [vmem:[%s4236 + $0xe2] sm:$0xff]
  %v4673 = vld [vmem:[%s4236 + $0xf2] sm:$0xff]
  %v4674 = vld [vmem:[%s4236 + $0xfa] sm:$0xff]
  %v4675 = vld [vmem:[%s4236 + $0x10a] sm:$0xff]
  %v4676 = vld [vmem:[%s4236 + $0x112] sm:$0xff]
  %v4677 = vld [vmem:[%s4236 + $0x122] sm:$0xff]
  %v4678 = vld [vmem:[%s4236 + $0x12a] sm:$0xff]
  %v4679 = vld [vmem:[%s4236 + $0x13a] sm:$0xff]
  %v4680 = vld [vmem:[%s4236 + $0x142] sm:$0xff]
  %v4681 = vld [vmem:[%s4236 + $0x152] sm:$0xff]
  %v4682 = vld [vmem:[%s4236 + $0x15a] sm:$0xff]
  %v4683 = vld [vmem:[%s4236 + $0x16a] sm:$0xff]
  %v4684 = vld [vmem:[%s4236 + $0x172] sm:$0xff]
  %v4685 = vld [vmem:[%s4236 + $0x1b2] sm:$0xff]
  %v4686 = vld [vmem:[%s4236 + $0x1ba] sm:$0xff]
  %v4687 = vld [vmem:[%s4236 + $0x1ca] sm:$0xff]
  %v4688 = vld [vmem:[%s4236 + $0x1d2] sm:$0xff]
  %v4689 = vld [vmem:[%s4236 + $0x1e2] sm:$0xff]
  %v4690 = vld [vmem:[%s4236 + $0x1ea] sm:$0xff]
  %v4691 = vld [vmem:[%s4236 + $0x1fa] sm:$0xff]
  %v4692 = vld [vmem:[%s4236 + $0x202] sm:$0xff]
  %v4693 = vld [vmem:[%s4236 + $0x212] sm:$0xff]
  %v4694 = vld [vmem:[%s4236 + $0x21a] sm:$0xff]
  %v4695 = vld [vmem:[%s4236 + $0x22a] sm:$0xff]
  %v4696 = vld [vmem:[%s4236 + $0x232] sm:$0xff]
  %v4697 = vld [vmem:[%s4236 + $0x242] sm:$0xff]
  %v4698 = vld [vmem:[%s4236 + $0x24a] sm:$0xff]
  %v4699 = vld [vmem:[%s4236 + $0x25a] sm:$0xff]
  %v4700 = vld [vmem:[%s4236 + $0x262] sm:$0xff]
  %v4701 = vld [vmem:[%s4236 + $0x272] sm:$0xff]
  %v4702 = vld [vmem:[%s4236 + $0x27a] sm:$0xff]
  %v4703 = vld [vmem:[%s4236 + $0x28a] sm:$0xff]
  %v4704 = vld [vmem:[%s4236 + $0x292] sm:$0xff]
  %v4705 = vld [vmem:[%s4236 + $0x2a2] sm:$0xff]
  %v4706 = vld [vmem:[%s4236 + $0x2aa] sm:$0xff]
  %v4707 = vld [vmem:[%s4236 + $0x2ba] sm:$0xff]
  %v4708 = vld [vmem:[%s4236 + $0x2c2] sm:$0xff]
  %v4709 = vld [vmem:[%s4236 + $0x2d2] sm:$0xff]
  %v4710 = vld [vmem:[%s4236 + $0x2da] sm:$0xff]
  %v4711 = vld [vmem:[%s4236 + $0x2ea] sm:$0xff]
  %v4712 = vld [vmem:[%s4236 + $0x2f2] sm:$0xff]
  %v4713 = vld [vmem:[%s4236 + $0x302] sm:$0xff]
  %v4714 = vld [vmem:[%s4236 + $0x30a] sm:$0xff]
  %v4715 = vld [vmem:[%s4236 + $0x31a] sm:$0xff]
  %v4716 = vld [vmem:[%s4236 + $0x322] sm:$0xff]
  %s4717 = scalar_lea.vmem [#allocation2], 48
  %v4718 = vld [vmem:[%s4717] sm:$0xff]
  %v4719 = vld [vmem:[%s4717 + $0x8] sm:$0xff]
  %v4720 = vld [vmem:[%s4717 + $0x18] sm:$0xff]
  %v4721 = vld [vmem:[%s4717 + $0x20] sm:$0xff]
  %v4722 = vld [vmem:[%s4717 + $0x30] sm:$0xff]
  %v4723 = vld [vmem:[%s4717 + $0x38] sm:$0xff]
  %v4724 = vld [vmem:[%s4717 + $0x48] sm:$0xff]
  %v4725 = vld [vmem:[%s4717 + $0x50] sm:$0xff]
  %v4726 = vld [vmem:[%s4717 + $0x60] sm:$0xff]
  %v4727 = vld [vmem:[%s4717 + $0x68] sm:$0xff]
  %v4728 = vld [vmem:[%s4717 + $0x78] sm:$0xff]
  %v4729 = vld [vmem:[%s4717 + $0x80] sm:$0xff]
  %v4730 = vld [vmem:[%s4717 + $0x90] sm:$0xff]
  %v4731 = vld [vmem:[%s4717 + $0x98] sm:$0xff]
  %v4732 = vld [vmem:[%s4717 + $0xa8] sm:$0xff]
  %v4733 = vld [vmem:[%s4717 + $0xb0] sm:$0xff]
  %v4734 = vld [vmem:[%s4717 + $0xc0] sm:$0xff]
  %v4735 = vld [vmem:[%s4717 + $0xc8] sm:$0xff]
  %v4736 = vld [vmem:[%s4717 + $0xd8] sm:$0xff]
  %v4737 = vld [vmem:[%s4717 + $0xe0] sm:$0xff]
  %v4738 = vld [vmem:[%s4717 + $0xf0] sm:$0xff]
  %v4739 = vld [vmem:[%s4717 + $0xf8] sm:$0xff]
  %v4740 = vld [vmem:[%s4717 + $0x108] sm:$0xff]
  %v4741 = vld [vmem:[%s4717 + $0x110] sm:$0xff]
  %v4742 = vld [vmem:[%s4717 + $0x120] sm:$0xff]
  %v4743 = vld [vmem:[%s4717 + $0x128] sm:$0xff]
  %v4744 = vld [vmem:[%s4717 + $0x138] sm:$0xff]
  %v4745 = vld [vmem:[%s4717 + $0x140] sm:$0xff]
  %v4746 = vld [vmem:[%s4717 + $0x150] sm:$0xff]
  %v4747 = vld [vmem:[%s4717 + $0x158] sm:$0xff]
  %v4748 = vld [vmem:[%s4717 + $0x168] sm:$0xff]
  %v4749 = vld [vmem:[%s4717 + $0x170] sm:$0xff]
  %v4750 = vld [vmem:[%s4717 + $0x1b0] sm:$0xff]
  %v4751 = vld [vmem:[%s4717 + $0x1b8] sm:$0xff]
  %v4752 = vld [vmem:[%s4717 + $0x1c8] sm:$0xff]
  %v4753 = vld [vmem:[%s4717 + $0x1d0] sm:$0xff]
  %v4754 = vld [vmem:[%s4717 + $0x1e0] sm:$0xff]
  %v4755 = vld [vmem:[%s4717 + $0x1e8] sm:$0xff]
  %v4756 = vld [vmem:[%s4717 + $0x1f8] sm:$0xff]
  %v4757 = vld [vmem:[%s4717 + $0x200] sm:$0xff]
  %v4758 = vld [vmem:[%s4717 + $0x210] sm:$0xff]
  %v4759 = vld [vmem:[%s4717 + $0x218] sm:$0xff]
  %v4760 = vld [vmem:[%s4717 + $0x228] sm:$0xff]
  %v4761 = vld [vmem:[%s4717 + $0x230] sm:$0xff]
  %v4762 = vld [vmem:[%s4717 + $0x240] sm:$0xff]
  %v4763 = vld [vmem:[%s4717 + $0x248] sm:$0xff]
  %v4764 = vld [vmem:[%s4717 + $0x258] sm:$0xff]
  %v4765 = vld [vmem:[%s4717 + $0x260] sm:$0xff]
  %v4766 = vld [vmem:[%s4717 + $0x270] sm:$0xff]
  %v4767 = vld [vmem:[%s4717 + $0x278] sm:$0xff]
  %v4768 = vld [vmem:[%s4717 + $0x288] sm:$0xff]
  %v4769 = vld [vmem:[%s4717 + $0x290] sm:$0xff]
  %v4770 = vld [vmem:[%s4717 + $0x2a0] sm:$0xff]
  %v4771 = vld [vmem:[%s4717 + $0x2a8] sm:$0xff]
  %v4772 = vld [vmem:[%s4717 + $0x2b8] sm:$0xff]
  %v4773 = vld [vmem:[%s4717 + $0x2c0] sm:$0xff]
  %v4774 = vld [vmem:[%s4717 + $0x2d0] sm:$0xff]
  %v4775 = vld [vmem:[%s4717 + $0x2d8] sm:$0xff]
  %v4776 = vld [vmem:[%s4717 + $0x2e8] sm:$0xff]
  %v4777 = vld [vmem:[%s4717 + $0x2f0] sm:$0xff]
  %v4778 = vld [vmem:[%s4717 + $0x300] sm:$0xff]
  %v4779 = vld [vmem:[%s4717 + $0x308] sm:$0xff]
  %v4780 = vld [vmem:[%s4717 + $0x318] sm:$0xff]
  %v4781 = vld [vmem:[%s4717 + $0x320] sm:$0xff]
  %v4782 = vld [vmem:[%s4717 + $0x1] sm:$0xff]
  %v4783 = vld [vmem:[%s4717 + $0x9] sm:$0xff]
  %v4784 = vld [vmem:[%s4717 + $0x19] sm:$0xff]
  %v4785 = vld [vmem:[%s4717 + $0x21] sm:$0xff]
  %v4786 = vld [vmem:[%s4717 + $0x31] sm:$0xff]
  %v4787 = vld [vmem:[%s4717 + $0x39] sm:$0xff]
  %v4788 = vld [vmem:[%s4717 + $0x49] sm:$0xff]
  %v4789 = vld [vmem:[%s4717 + $0x51] sm:$0xff]
  %v4790 = vld [vmem:[%s4717 + $0x61] sm:$0xff]
  %v4791 = vld [vmem:[%s4717 + $0x69] sm:$0xff]
  %v4792 = vld [vmem:[%s4717 + $0x79] sm:$0xff]
  %v4793 = vld [vmem:[%s4717 + $0x81] sm:$0xff]
  %v4794 = vld [vmem:[%s4717 + $0x91] sm:$0xff]
  %v4795 = vld [vmem:[%s4717 + $0x99] sm:$0xff]
  %v4796 = vld [vmem:[%s4717 + $0xa9] sm:$0xff]
  %v4797 = vld [vmem:[%s4717 + $0xb1] sm:$0xff]
  %v4798 = vld [vmem:[%s4717 + $0xc1] sm:$0xff]
  %v4799 = vld [vmem:[%s4717 + $0xc9] sm:$0xff]
  %v4800 = vld [vmem:[%s4717 + $0xd9] sm:$0xff]
  %v4801 = vld [vmem:[%s4717 + $0xe1] sm:$0xff]
  %v4802 = vld [vmem:[%s4717 + $0xf1] sm:$0xff]
  %v4803 = vld [vmem:[%s4717 + $0xf9] sm:$0xff]
  %v4804 = vld [vmem:[%s4717 + $0x109] sm:$0xff]
  %v4805 = vld [vmem:[%s4717 + $0x111] sm:$0xff]
  %v4806 = vld [vmem:[%s4717 + $0x121] sm:$0xff]
  %v4807 = vld [vmem:[%s4717 + $0x129] sm:$0xff]
  %v4808 = vld [vmem:[%s4717 + $0x139] sm:$0xff]
  %v4809 = vld [vmem:[%s4717 + $0x141] sm:$0xff]
  %v4810 = vld [vmem:[%s4717 + $0x151] sm:$0xff]
  %v4811 = vld [vmem:[%s4717 + $0x159] sm:$0xff]
  %v4812 = vld [vmem:[%s4717 + $0x169] sm:$0xff]
  %v4813 = vld [vmem:[%s4717 + $0x171] sm:$0xff]
  %v4814 = vld [vmem:[%s4717 + $0x1b1] sm:$0xff]
  %v4815 = vld [vmem:[%s4717 + $0x1b9] sm:$0xff]
  %v4816 = vld [vmem:[%s4717 + $0x1c9] sm:$0xff]
  %v4817 = vld [vmem:[%s4717 + $0x1d1] sm:$0xff]
  %v4818 = vld [vmem:[%s4717 + $0x1e1] sm:$0xff]
  %v4819 = vld [vmem:[%s4717 + $0x1e9] sm:$0xff]
  %v4820 = vld [vmem:[%s4717 + $0x1f9] sm:$0xff]
  %v4821 = vld [vmem:[%s4717 + $0x201] sm:$0xff]
  %v4822 = vld [vmem:[%s4717 + $0x211] sm:$0xff]
  %v4823 = vld [vmem:[%s4717 + $0x219] sm:$0xff]
  %v4824 = vld [vmem:[%s4717 + $0x229] sm:$0xff]
  %v4825 = vld [vmem:[%s4717 + $0x231] sm:$0xff]
  %v4826 = vld [vmem:[%s4717 + $0x241] sm:$0xff]
  %v4827 = vld [vmem:[%s4717 + $0x249] sm:$0xff]
  %v4828 = vld [vmem:[%s4717 + $0x259] sm:$0xff]
  %v4829 = vld [vmem:[%s4717 + $0x261] sm:$0xff]
  %v4830 = vld [vmem:[%s4717 + $0x271] sm:$0xff]
  %v4831 = vld [vmem:[%s4717 + $0x279] sm:$0xff]
  %v4832 = vld [vmem:[%s4717 + $0x289] sm:$0xff]
  %v4833 = vld [vmem:[%s4717 + $0x291] sm:$0xff]
  %v4834 = vld [vmem:[%s4717 + $0x2a1] sm:$0xff]
  %v4835 = vld [vmem:[%s4717 + $0x2a9] sm:$0xff]
  %v4836 = vld [vmem:[%s4717 + $0x2b9] sm:$0xff]
  %v4837 = vld [vmem:[%s4717 + $0x2c1] sm:$0xff]
  %v4838 = vld [vmem:[%s4717 + $0x2d1] sm:$0xff]
  %v4839 = vld [vmem:[%s4717 + $0x2d9] sm:$0xff]
  %v4840 = vld [vmem:[%s4717 + $0x2e9] sm:$0xff]
  %v4841 = vld [vmem:[%s4717 + $0x2f1] sm:$0xff]
  %v4842 = vld [vmem:[%s4717 + $0x301] sm:$0xff]
  %v4843 = vld [vmem:[%s4717 + $0x309] sm:$0xff]
  %v4844 = vld [vmem:[%s4717 + $0x319] sm:$0xff]
  %v4845 = vld [vmem:[%s4717 + $0x321] sm:$0xff]
  %v4846 = vld [vmem:[%s4717 + $0x2] sm:$0xff]
  %v4847 = vld [vmem:[%s4717 + $0xa] sm:$0xff]
  %v4848 = vld [vmem:[%s4717 + $0x1a] sm:$0xff]
  %v4849 = vld [vmem:[%s4717 + $0x22] sm:$0xff]
  %v4850 = vld [vmem:[%s4717 + $0x32] sm:$0xff]
  %v4851 = vld [vmem:[%s4717 + $0x3a] sm:$0xff]
  %v4852 = vld [vmem:[%s4717 + $0x4a] sm:$0xff]
  %v4853 = vld [vmem:[%s4717 + $0x52] sm:$0xff]
  %v4854 = vld [vmem:[%s4717 + $0x62] sm:$0xff]
  %v4855 = vld [vmem:[%s4717 + $0x6a] sm:$0xff]
  %v4856 = vld [vmem:[%s4717 + $0x7a] sm:$0xff]
  %v4857 = vld [vmem:[%s4717 + $0x82] sm:$0xff]
  %v4858 = vld [vmem:[%s4717 + $0x92] sm:$0xff]
  %v4859 = vld [vmem:[%s4717 + $0x9a] sm:$0xff]
  %v4860 = vld [vmem:[%s4717 + $0xaa] sm:$0xff]
  %v4861 = vld [vmem:[%s4717 + $0xb2] sm:$0xff]
  %v4862 = vld [vmem:[%s4717 + $0xc2] sm:$0xff]
  %v4863 = vld [vmem:[%s4717 + $0xca] sm:$0xff]
  %v4864 = vld [vmem:[%s4717 + $0xda] sm:$0xff]
  %v4865 = vld [vmem:[%s4717 + $0xe2] sm:$0xff]
  %v4866 = vld [vmem:[%s4717 + $0xf2] sm:$0xff]
  %v4867 = vld [vmem:[%s4717 + $0xfa] sm:$0xff]
  %v4868 = vld [vmem:[%s4717 + $0x10a] sm:$0xff]
  %v4869 = vld [vmem:[%s4717 + $0x112] sm:$0xff]
  %v4870 = vld [vmem:[%s4717 + $0x122] sm:$0xff]
  %v4871 = vld [vmem:[%s4717 + $0x12a] sm:$0xff]
  %v4872 = vld [vmem:[%s4717 + $0x13a] sm:$0xff]
  %v4873 = vld [vmem:[%s4717 + $0x142] sm:$0xff]
  %v4874 = vld [vmem:[%s4717 + $0x152] sm:$0xff]
  %v4875 = vld [vmem:[%s4717 + $0x15a] sm:$0xff]
  %v4876 = vld [vmem:[%s4717 + $0x16a] sm:$0xff]
  %v4877 = vld [vmem:[%s4717 + $0x172] sm:$0xff]
  %v4878 = vld [vmem:[%s4717 + $0x1b2] sm:$0xff]
  %v4879 = vld [vmem:[%s4717 + $0x1ba] sm:$0xff]
  %v4880 = vld [vmem:[%s4717 + $0x1ca] sm:$0xff]
  %v4881 = vld [vmem:[%s4717 + $0x1d2] sm:$0xff]
  %v4882 = vld [vmem:[%s4717 + $0x1e2] sm:$0xff]
  %v4883 = vld [vmem:[%s4717 + $0x1ea] sm:$0xff]
  %v4884 = vld [vmem:[%s4717 + $0x1fa] sm:$0xff]
  %v4885 = vld [vmem:[%s4717 + $0x202] sm:$0xff]
  %v4886 = vld [vmem:[%s4717 + $0x212] sm:$0xff]
  %v4887 = vld [vmem:[%s4717 + $0x21a] sm:$0xff]
  %v4888 = vld [vmem:[%s4717 + $0x22a] sm:$0xff]
  %v4889 = vld [vmem:[%s4717 + $0x232] sm:$0xff]
  %v4890 = vld [vmem:[%s4717 + $0x242] sm:$0xff]
  %v4891 = vld [vmem:[%s4717 + $0x24a] sm:$0xff]
  %v4892 = vld [vmem:[%s4717 + $0x25a] sm:$0xff]
  %v4893 = vld [vmem:[%s4717 + $0x262] sm:$0xff]
  %v4894 = vld [vmem:[%s4717 + $0x272] sm:$0xff]
  %v4895 = vld [vmem:[%s4717 + $0x27a] sm:$0xff]
  %v4896 = vld [vmem:[%s4717 + $0x28a] sm:$0xff]
  %v4897 = vld [vmem:[%s4717 + $0x292] sm:$0xff]
  %v4898 = vld [vmem:[%s4717 + $0x2a2] sm:$0xff]
  %v4899 = vld [vmem:[%s4717 + $0x2aa] sm:$0xff]
  %v4900 = vld [vmem:[%s4717 + $0x2ba] sm:$0xff]
  %v4901 = vld [vmem:[%s4717 + $0x2c2] sm:$0xff]
  %v4902 = vld [vmem:[%s4717 + $0x2d2] sm:$0xff]
  %v4903 = vld [vmem:[%s4717 + $0x2da] sm:$0xff]
  %v4904 = vld [vmem:[%s4717 + $0x2ea] sm:$0xff]
  %v4905 = vld [vmem:[%s4717 + $0x2f2] sm:$0xff]
  %v4906 = vld [vmem:[%s4717 + $0x302] sm:$0xff]
  %v4907 = vld [vmem:[%s4717 + $0x30a] sm:$0xff]
  %v4908 = vld [vmem:[%s4717 + $0x31a] sm:$0xff]
  %v4909 = vld [vmem:[%s4717 + $0x322] sm:$0xff]
  %4974 = vrot.lane.b32.xlu0 %v4397, 4
  %v4975 = vpop.permute.xlu0 %4974
  %4976 = vrot.lane.b32.xlu0 %v4398, 4
  %v4977 = vpop.permute.xlu0 %4976
  %4978 = vrot.lane.b32.xlu0 %v4399, 4
  %v4979 = vpop.permute.xlu0 %4978
  %4980 = vrot.lane.b32.xlu0 %v4400, 4
  %v4981 = vpop.permute.xlu0 %4980
  %4982 = vrot.lane.b32.xlu0 %v4401, 4
  %v4983 = vpop.permute.xlu0 %4982
  %4984 = vrot.lane.b32.xlu0 %v4402, 4
  %v4985 = vpop.permute.xlu0 %4984
  %4986 = vrot.lane.b32.xlu0 %v4403, 4
  %v4987 = vpop.permute.xlu0 %4986
  %4988 = vrot.lane.b32.xlu0 %v4404, 4
  %v4989 = vpop.permute.xlu0 %4988
  %4990 = vrot.lane.b32.xlu0 %v4405, 4
  %v4991 = vpop.permute.xlu0 %4990
  %4992 = vrot.lane.b32.xlu0 %v4406, 4
  %v4993 = vpop.permute.xlu0 %4992
  %4994 = vrot.lane.b32.xlu0 %v4407, 4
  %v4995 = vpop.permute.xlu0 %4994
  %4996 = vrot.lane.b32.xlu0 %v4408, 4
  %v4997 = vpop.permute.xlu0 %4996
  %4998 = vrot.lane.b32.xlu0 %v4409, 4
  %v4999 = vpop.permute.xlu0 %4998
  %5000 = vrot.lane.b32.xlu0 %v4410, 4
  %v5001 = vpop.permute.xlu0 %5000
  %5002 = vrot.lane.b32.xlu0 %v4411, 4
  %v5003 = vpop.permute.xlu0 %5002
  %5004 = vrot.lane.b32.xlu0 %v4412, 4
  %v5005 = vpop.permute.xlu0 %5004
  %5006 = vrot.lane.b32.xlu0 %v4413, 4
  %v5007 = vpop.permute.xlu0 %5006
  %5008 = vrot.lane.b32.xlu0 %v4414, 4
  %v5009 = vpop.permute.xlu0 %5008
  %5010 = vrot.lane.b32.xlu0 %v4415, 4
  %v5011 = vpop.permute.xlu0 %5010
  %5012 = vrot.lane.b32.xlu0 %v4416, 4
  %v5013 = vpop.permute.xlu0 %5012
  %5014 = vrot.lane.b32.xlu0 %v4417, 4
  %v5015 = vpop.permute.xlu0 %5014
  %5016 = vrot.lane.b32.xlu0 %v4418, 4
  %v5017 = vpop.permute.xlu0 %5016
  %5018 = vrot.lane.b32.xlu0 %v4419, 4
  %v5019 = vpop.permute.xlu0 %5018
  %5020 = vrot.lane.b32.xlu0 %v4420, 4
  %v5021 = vpop.permute.xlu0 %5020
  %5022 = vrot.lane.b32.xlu0 %v4421, 4
  %v5023 = vpop.permute.xlu0 %5022
  %5024 = vrot.lane.b32.xlu0 %v4422, 4
  %v5025 = vpop.permute.xlu0 %5024
  %5026 = vrot.lane.b32.xlu0 %v4423, 4
  %v5027 = vpop.permute.xlu0 %5026
  %5028 = vrot.lane.b32.xlu0 %v4424, 4
  %v5029 = vpop.permute.xlu0 %5028
  %5030 = vrot.lane.b32.xlu0 %v4425, 4
  %v5031 = vpop.permute.xlu0 %5030
  %5032 = vrot.lane.b32.xlu0 %v4426, 4
  %v5033 = vpop.permute.xlu0 %5032
  %5034 = vrot.lane.b32.xlu0 %v4427, 4
  %v5035 = vpop.permute.xlu0 %5034
  %5036 = vrot.lane.b32.xlu0 %v4428, 4
  %v5037 = vpop.permute.xlu0 %5036
  %5038 = vrot.lane.b32.xlu0 %v4429, 4
  %v5039 = vpop.permute.xlu0 %5038
  %5040 = vrot.lane.b32.xlu0 %v4430, 4
  %v5041 = vpop.permute.xlu0 %5040
  %5042 = vrot.lane.b32.xlu0 %v4431, 4
  %v5043 = vpop.permute.xlu0 %5042
  %5044 = vrot.lane.b32.xlu0 %v4432, 4
  %v5045 = vpop.permute.xlu0 %5044
  %5046 = vrot.lane.b32.xlu0 %v4433, 4
  %v5047 = vpop.permute.xlu0 %5046
  %5048 = vrot.lane.b32.xlu0 %v4434, 4
  %v5049 = vpop.permute.xlu0 %5048
  %5050 = vrot.lane.b32.xlu0 %v4435, 4
  %v5051 = vpop.permute.xlu0 %5050
  %5052 = vrot.lane.b32.xlu0 %v4436, 4
  %v5053 = vpop.permute.xlu0 %5052
  %5054 = vrot.lane.b32.xlu0 %v4437, 4
  %v5055 = vpop.permute.xlu0 %5054
  %5056 = vrot.lane.b32.xlu0 %v4438, 4
  %v5057 = vpop.permute.xlu0 %5056
  %5058 = vrot.lane.b32.xlu0 %v4439, 4
  %v5059 = vpop.permute.xlu0 %5058
  %5060 = vrot.lane.b32.xlu0 %v4440, 4
  %v5061 = vpop.permute.xlu0 %5060
  %5062 = vrot.lane.b32.xlu0 %v4441, 4
  %v5063 = vpop.permute.xlu0 %5062
  %5064 = vrot.lane.b32.xlu0 %v4442, 4
  %v5065 = vpop.permute.xlu0 %5064
  %5066 = vrot.lane.b32.xlu0 %v4443, 4
  %v5067 = vpop.permute.xlu0 %5066
  %5068 = vrot.lane.b32.xlu0 %v4444, 4
  %v5069 = vpop.permute.xlu0 %5068
  %5070 = vrot.lane.b32.xlu0 %v4445, 4
  %v5071 = vpop.permute.xlu0 %5070
  %5072 = vrot.lane.b32.xlu0 %v4446, 4
  %v5073 = vpop.permute.xlu0 %5072
  %5074 = vrot.lane.b32.xlu0 %v4447, 4
  %v5075 = vpop.permute.xlu0 %5074
  %5076 = vrot.lane.b32.xlu0 %v4448, 4
  %v5077 = vpop.permute.xlu0 %5076
  %5078 = vrot.lane.b32.xlu0 %v4449, 4
  %v5079 = vpop.permute.xlu0 %5078
  %5080 = vrot.lane.b32.xlu0 %v4450, 4
  %v5081 = vpop.permute.xlu0 %5080
  %5082 = vrot.lane.b32.xlu0 %v4451, 4
  %v5083 = vpop.permute.xlu0 %5082
  %5084 = vrot.lane.b32.xlu0 %v4452, 4
  %v5085 = vpop.permute.xlu0 %5084
  %5086 = vrot.lane.b32.xlu0 %v4453, 4
  %v5087 = vpop.permute.xlu0 %5086
  %5088 = vrot.lane.b32.xlu0 %v4454, 4
  %v5089 = vpop.permute.xlu0 %5088
  %5090 = vrot.lane.b32.xlu0 %v4455, 4
  %v5091 = vpop.permute.xlu0 %5090
  %5092 = vrot.lane.b32.xlu0 %v4456, 4
  %v5093 = vpop.permute.xlu0 %5092
  %5094 = vrot.lane.b32.xlu0 %v4457, 4
  %v5095 = vpop.permute.xlu0 %5094
  %5096 = vrot.lane.b32.xlu0 %v4458, 4
  %v5097 = vpop.permute.xlu0 %5096
  %5098 = vrot.lane.b32.xlu0 %v4459, 4
  %v5099 = vpop.permute.xlu0 %5098
  %5100 = vrot.lane.b32.xlu0 %v4460, 4
  %v5101 = vpop.permute.xlu0 %5100
  %5230 = vrot.lane.b32.xlu0 %v4461, 8
  %v5231 = vpop.permute.xlu0 %5230
  %5232 = vrot.lane.b32.xlu0 %v4462, 8
  %v5233 = vpop.permute.xlu0 %5232
  %5234 = vrot.lane.b32.xlu0 %v4463, 8
  %v5235 = vpop.permute.xlu0 %5234
  %5236 = vrot.lane.b32.xlu0 %v4464, 8
  %v5237 = vpop.permute.xlu0 %5236
  %5238 = vrot.lane.b32.xlu0 %v4465, 8
  %v5239 = vpop.permute.xlu0 %5238
  %5240 = vrot.lane.b32.xlu0 %v4466, 8
  %v5241 = vpop.permute.xlu0 %5240
  %5242 = vrot.lane.b32.xlu0 %v4467, 8
  %v5243 = vpop.permute.xlu0 %5242
  %5244 = vrot.lane.b32.xlu0 %v4468, 8
  %v5245 = vpop.permute.xlu0 %5244
  %5246 = vrot.lane.b32.xlu0 %v4469, 8
  %v5247 = vpop.permute.xlu0 %5246
  %5248 = vrot.lane.b32.xlu0 %v4470, 8
  %v5249 = vpop.permute.xlu0 %5248
  %5250 = vrot.lane.b32.xlu0 %v4471, 8
  %v5251 = vpop.permute.xlu0 %5250
  %5252 = vrot.lane.b32.xlu0 %v4472, 8
  %v5253 = vpop.permute.xlu0 %5252
  %5254 = vrot.lane.b32.xlu0 %v4473, 8
  %v5255 = vpop.permute.xlu0 %5254
  %5256 = vrot.lane.b32.xlu0 %v4474, 8
  %v5257 = vpop.permute.xlu0 %5256
  %5258 = vrot.lane.b32.xlu0 %v4475, 8
  %v5259 = vpop.permute.xlu0 %5258
  %5260 = vrot.lane.b32.xlu0 %v4476, 8
  %v5261 = vpop.permute.xlu0 %5260
  %5262 = vrot.lane.b32.xlu0 %v4477, 8
  %v5263 = vpop.permute.xlu0 %5262
  %5264 = vrot.lane.b32.xlu0 %v4478, 8
  %v5265 = vpop.permute.xlu0 %5264
  %5266 = vrot.lane.b32.xlu0 %v4479, 8
  %v5267 = vpop.permute.xlu0 %5266
  %5268 = vrot.lane.b32.xlu0 %v4480, 8
  %v5269 = vpop.permute.xlu0 %5268
  %5270 = vrot.lane.b32.xlu0 %v4481, 8
  %v5271 = vpop.permute.xlu0 %5270
  %5272 = vrot.lane.b32.xlu0 %v4482, 8
  %v5273 = vpop.permute.xlu0 %5272
  %5274 = vrot.lane.b32.xlu0 %v4483, 8
  %v5275 = vpop.permute.xlu0 %5274
  %5276 = vrot.lane.b32.xlu0 %v4484, 8
  %v5277 = vpop.permute.xlu0 %5276
  %5278 = vrot.lane.b32.xlu0 %v4485, 8
  %v5279 = vpop.permute.xlu0 %5278
  %5280 = vrot.lane.b32.xlu0 %v4486, 8
  %v5281 = vpop.permute.xlu0 %5280
  %5282 = vrot.lane.b32.xlu0 %v4487, 8
  %v5283 = vpop.permute.xlu0 %5282
  %5284 = vrot.lane.b32.xlu0 %v4488, 8
  %v5285 = vpop.permute.xlu0 %5284
  %5286 = vrot.lane.b32.xlu0 %v4489, 8
  %v5287 = vpop.permute.xlu0 %5286
  %5288 = vrot.lane.b32.xlu0 %v4490, 8
  %v5289 = vpop.permute.xlu0 %5288
  %5290 = vrot.lane.b32.xlu0 %v4491, 8
  %v5291 = vpop.permute.xlu0 %5290
  %5292 = vrot.lane.b32.xlu0 %v4492, 8
  %v5293 = vpop.permute.xlu0 %5292
  %5294 = vrot.lane.b32.xlu0 %v4493, 8
  %v5295 = vpop.permute.xlu0 %5294
  %5296 = vrot.lane.b32.xlu0 %v4494, 8
  %v5297 = vpop.permute.xlu0 %5296
  %5298 = vrot.lane.b32.xlu0 %v4495, 8
  %v5299 = vpop.permute.xlu0 %5298
  %5300 = vrot.lane.b32.xlu0 %v4496, 8
  %v5301 = vpop.permute.xlu0 %5300
  %5302 = vrot.lane.b32.xlu0 %v4497, 8
  %v5303 = vpop.permute.xlu0 %5302
  %5304 = vrot.lane.b32.xlu0 %v4498, 8
  %v5305 = vpop.permute.xlu0 %5304
  %5306 = vrot.lane.b32.xlu0 %v4499, 8
  %v5307 = vpop.permute.xlu0 %5306
  %5308 = vrot.lane.b32.xlu0 %v4500, 8
  %v5309 = vpop.permute.xlu0 %5308
  %5310 = vrot.lane.b32.xlu0 %v4501, 8
  %v5311 = vpop.permute.xlu0 %5310
  %5312 = vrot.lane.b32.xlu0 %v4502, 8
  %v5313 = vpop.permute.xlu0 %5312
  %5314 = vrot.lane.b32.xlu0 %v4503, 8
  %v5315 = vpop.permute.xlu0 %5314
  %5316 = vrot.lane.b32.xlu0 %v4504, 8
  %v5317 = vpop.permute.xlu0 %5316
  %5318 = vrot.lane.b32.xlu0 %v4505, 8
  %v5319 = vpop.permute.xlu0 %5318
  %5320 = vrot.lane.b32.xlu0 %v4506, 8
  %v5321 = vpop.permute.xlu0 %5320
  %5322 = vrot.lane.b32.xlu0 %v4507, 8
  %v5323 = vpop.permute.xlu0 %5322
  %5324 = vrot.lane.b32.xlu0 %v4508, 8
  %v5325 = vpop.permute.xlu0 %5324
  %5326 = vrot.lane.b32.xlu0 %v4509, 8
  %v5327 = vpop.permute.xlu0 %5326
  %5328 = vrot.lane.b32.xlu0 %v4510, 8
  %v5329 = vpop.permute.xlu0 %5328
  %5330 = vrot.lane.b32.xlu0 %v4511, 8
  %v5331 = vpop.permute.xlu0 %5330
  %5332 = vrot.lane.b32.xlu0 %v4512, 8
  %v5333 = vpop.permute.xlu0 %5332
  %5334 = vrot.lane.b32.xlu0 %v4513, 8
  %v5335 = vpop.permute.xlu0 %5334
  %5336 = vrot.lane.b32.xlu0 %v4514, 8
  %v5337 = vpop.permute.xlu0 %5336
  %5338 = vrot.lane.b32.xlu0 %v4515, 8
  %v5339 = vpop.permute.xlu0 %5338
  %5340 = vrot.lane.b32.xlu0 %v4516, 8
  %v5341 = vpop.permute.xlu0 %5340
  %5342 = vrot.lane.b32.xlu0 %v4517, 8
  %v5343 = vpop.permute.xlu0 %5342
  %5344 = vrot.lane.b32.xlu0 %v4518, 8
  %v5345 = vpop.permute.xlu0 %5344
  %5346 = vrot.lane.b32.xlu0 %v4519, 8
  %v5347 = vpop.permute.xlu0 %5346
  %5348 = vrot.lane.b32.xlu0 %v4520, 8
  %v5349 = vpop.permute.xlu0 %5348
  %5350 = vrot.lane.b32.xlu0 %v4521, 8
  %v5351 = vpop.permute.xlu0 %5350
  %5352 = vrot.lane.b32.xlu0 %v4522, 8
  %v5353 = vpop.permute.xlu0 %5352
  %5354 = vrot.lane.b32.xlu0 %v4523, 8
  %v5355 = vpop.permute.xlu0 %5354
  %5356 = vrot.lane.b32.xlu0 %v4524, 8
  %v5357 = vpop.permute.xlu0 %5356
  %5486 = vrot.lane.b32.xlu0 %v4525, 12
  %v5487 = vpop.permute.xlu0 %5486
  %5488 = vrot.lane.b32.xlu0 %v4526, 12
  %v5489 = vpop.permute.xlu0 %5488
  %5490 = vrot.lane.b32.xlu0 %v4527, 12
  %v5491 = vpop.permute.xlu0 %5490
  %5492 = vrot.lane.b32.xlu0 %v4528, 12
  %v5493 = vpop.permute.xlu0 %5492
  %5494 = vrot.lane.b32.xlu0 %v4529, 12
  %v5495 = vpop.permute.xlu0 %5494
  %5496 = vrot.lane.b32.xlu0 %v4530, 12
  %v5497 = vpop.permute.xlu0 %5496
  %5498 = vrot.lane.b32.xlu0 %v4531, 12
  %v5499 = vpop.permute.xlu0 %5498
  %5500 = vrot.lane.b32.xlu0 %v4532, 12
  %v5501 = vpop.permute.xlu0 %5500
  %5502 = vrot.lane.b32.xlu0 %v4533, 12
  %v5503 = vpop.permute.xlu0 %5502
  %5504 = vrot.lane.b32.xlu0 %v4534, 12
  %v5505 = vpop.permute.xlu0 %5504
  %5506 = vrot.lane.b32.xlu0 %v4535, 12
  %v5507 = vpop.permute.xlu0 %5506
  %5508 = vrot.lane.b32.xlu0 %v4536, 12
  %v5509 = vpop.permute.xlu0 %5508
  %5510 = vrot.lane.b32.xlu0 %v4537, 12
  %v5511 = vpop.permute.xlu0 %5510
  %5512 = vrot.lane.b32.xlu0 %v4538, 12
  %v5513 = vpop.permute.xlu0 %5512
  %5514 = vrot.lane.b32.xlu0 %v4539, 12
  %v5515 = vpop.permute.xlu0 %5514
  %5516 = vrot.lane.b32.xlu0 %v4540, 12
  %v5517 = vpop.permute.xlu0 %5516
  %5518 = vrot.lane.b32.xlu0 %v4541, 12
  %v5519 = vpop.permute.xlu0 %5518
  %5520 = vrot.lane.b32.xlu0 %v4542, 12
  %v5521 = vpop.permute.xlu0 %5520
  %5522 = vrot.lane.b32.xlu0 %v4543, 12
  %v5523 = vpop.permute.xlu0 %5522
  %5524 = vrot.lane.b32.xlu0 %v4544, 12
  %v5525 = vpop.permute.xlu0 %5524
  %5526 = vrot.lane.b32.xlu0 %v4545, 12
  %v5527 = vpop.permute.xlu0 %5526
  %5528 = vrot.lane.b32.xlu0 %v4546, 12
  %v5529 = vpop.permute.xlu0 %5528
  %5530 = vrot.lane.b32.xlu0 %v4547, 12
  %v5531 = vpop.permute.xlu0 %5530
  %5532 = vrot.lane.b32.xlu0 %v4548, 12
  %v5533 = vpop.permute.xlu0 %5532
  %5534 = vrot.lane.b32.xlu0 %v4549, 12
  %v5535 = vpop.permute.xlu0 %5534
  %5536 = vrot.lane.b32.xlu0 %v4550, 12
  %v5537 = vpop.permute.xlu0 %5536
  %5538 = vrot.lane.b32.xlu0 %v4551, 12
  %v5539 = vpop.permute.xlu0 %5538
  %5540 = vrot.lane.b32.xlu0 %v4552, 12
  %v5541 = vpop.permute.xlu0 %5540
  %5542 = vrot.lane.b32.xlu0 %v4553, 12
  %v5543 = vpop.permute.xlu0 %5542
  %5544 = vrot.lane.b32.xlu0 %v4554, 12
  %v5545 = vpop.permute.xlu0 %5544
  %5546 = vrot.lane.b32.xlu0 %v4555, 12
  %v5547 = vpop.permute.xlu0 %5546
  %5548 = vrot.lane.b32.xlu0 %v4556, 12
  %v5549 = vpop.permute.xlu0 %5548
  %5550 = vrot.lane.b32.xlu0 %v4557, 12
  %v5551 = vpop.permute.xlu0 %5550
  %5552 = vrot.lane.b32.xlu0 %v4558, 12
  %v5553 = vpop.permute.xlu0 %5552
  %5554 = vrot.lane.b32.xlu0 %v4559, 12
  %v5555 = vpop.permute.xlu0 %5554
  %5556 = vrot.lane.b32.xlu0 %v4560, 12
  %v5557 = vpop.permute.xlu0 %5556
  %5558 = vrot.lane.b32.xlu0 %v4561, 12
  %v5559 = vpop.permute.xlu0 %5558
  %5560 = vrot.lane.b32.xlu0 %v4562, 12
  %v5561 = vpop.permute.xlu0 %5560
  %5562 = vrot.lane.b32.xlu0 %v4563, 12
  %v5563 = vpop.permute.xlu0 %5562
  %5564 = vrot.lane.b32.xlu0 %v4564, 12
  %v5565 = vpop.permute.xlu0 %5564
  %5566 = vrot.lane.b32.xlu0 %v4565, 12
  %v5567 = vpop.permute.xlu0 %5566
  %5568 = vrot.lane.b32.xlu0 %v4566, 12
  %v5569 = vpop.permute.xlu0 %5568
  %5570 = vrot.lane.b32.xlu0 %v4567, 12
  %v5571 = vpop.permute.xlu0 %5570
  %5572 = vrot.lane.b32.xlu0 %v4568, 12
  %v5573 = vpop.permute.xlu0 %5572
  %5574 = vrot.lane.b32.xlu0 %v4569, 12
  %v5575 = vpop.permute.xlu0 %5574
  %5576 = vrot.lane.b32.xlu0 %v4570, 12
  %v5577 = vpop.permute.xlu0 %5576
  %5578 = vrot.lane.b32.xlu0 %v4571, 12
  %v5579 = vpop.permute.xlu0 %5578
  %5580 = vrot.lane.b32.xlu0 %v4572, 12
  %v5581 = vpop.permute.xlu0 %5580
  %5582 = vrot.lane.b32.xlu0 %v4573, 12
  %v5583 = vpop.permute.xlu0 %5582
  %5584 = vrot.lane.b32.xlu0 %v4574, 12
  %v5585 = vpop.permute.xlu0 %5584
  %5586 = vrot.lane.b32.xlu0 %v4575, 12
  %v5587 = vpop.permute.xlu0 %5586
  %5588 = vrot.lane.b32.xlu0 %v4576, 12
  %v5589 = vpop.permute.xlu0 %5588
  %5590 = vrot.lane.b32.xlu0 %v4577, 12
  %v5591 = vpop.permute.xlu0 %5590
  %5592 = vrot.lane.b32.xlu0 %v4578, 12
  %v5593 = vpop.permute.xlu0 %5592
  %5594 = vrot.lane.b32.xlu0 %v4579, 12
  %v5595 = vpop.permute.xlu0 %5594
  %5596 = vrot.lane.b32.xlu0 %v4580, 12
  %v5597 = vpop.permute.xlu0 %5596
  %5598 = vrot.lane.b32.xlu0 %v4581, 12
  %v5599 = vpop.permute.xlu0 %5598
  %5600 = vrot.lane.b32.xlu0 %v4582, 12
  %v5601 = vpop.permute.xlu0 %5600
  %5602 = vrot.lane.b32.xlu0 %v4583, 12
  %v5603 = vpop.permute.xlu0 %5602
  %5604 = vrot.lane.b32.xlu0 %v4584, 12
  %v5605 = vpop.permute.xlu0 %5604
  %5606 = vrot.lane.b32.xlu0 %v4585, 12
  %v5607 = vpop.permute.xlu0 %5606
  %5608 = vrot.lane.b32.xlu0 %v4586, 12
  %v5609 = vpop.permute.xlu0 %5608
  %5610 = vrot.lane.b32.xlu0 %v4587, 12
  %v5611 = vpop.permute.xlu0 %5610
  %5612 = vrot.lane.b32.xlu0 %v4588, 12
  %v5613 = vpop.permute.xlu0 %5612
  %5742 = vrot.lane.b32.xlu0 %v4589, 16
  %v5743 = vpop.permute.xlu0 %5742
  %5744 = vrot.lane.b32.xlu0 %v4590, 16
  %v5745 = vpop.permute.xlu0 %5744
  %5746 = vrot.lane.b32.xlu0 %v4591, 16
  %v5747 = vpop.permute.xlu0 %5746
  %5748 = vrot.lane.b32.xlu0 %v4592, 16
  %v5749 = vpop.permute.xlu0 %5748
  %5750 = vrot.lane.b32.xlu0 %v4593, 16
  %v5751 = vpop.permute.xlu0 %5750
  %5752 = vrot.lane.b32.xlu0 %v4594, 16
  %v5753 = vpop.permute.xlu0 %5752
  %5754 = vrot.lane.b32.xlu0 %v4595, 16
  %v5755 = vpop.permute.xlu0 %5754
  %5756 = vrot.lane.b32.xlu0 %v4596, 16
  %v5757 = vpop.permute.xlu0 %5756
  %5758 = vrot.lane.b32.xlu0 %v4597, 16
  %v5759 = vpop.permute.xlu0 %5758
  %5760 = vrot.lane.b32.xlu0 %v4598, 16
  %v5761 = vpop.permute.xlu0 %5760
  %5762 = vrot.lane.b32.xlu0 %v4599, 16
  %v5763 = vpop.permute.xlu0 %5762
  %5764 = vrot.lane.b32.xlu0 %v4600, 16
  %v5765 = vpop.permute.xlu0 %5764
  %5766 = vrot.lane.b32.xlu0 %v4601, 16
  %v5767 = vpop.permute.xlu0 %5766
  %5768 = vrot.lane.b32.xlu0 %v4602, 16
  %v5769 = vpop.permute.xlu0 %5768
  %5770 = vrot.lane.b32.xlu0 %v4603, 16
  %v5771 = vpop.permute.xlu0 %5770
  %5772 = vrot.lane.b32.xlu0 %v4604, 16
  %v5773 = vpop.permute.xlu0 %5772
  %5774 = vrot.lane.b32.xlu0 %v4605, 16
  %v5775 = vpop.permute.xlu0 %5774
  %5776 = vrot.lane.b32.xlu0 %v4606, 16
  %v5777 = vpop.permute.xlu0 %5776
  %5778 = vrot.lane.b32.xlu0 %v4607, 16
  %v5779 = vpop.permute.xlu0 %5778
  %5780 = vrot.lane.b32.xlu0 %v4608, 16
  %v5781 = vpop.permute.xlu0 %5780
  %5782 = vrot.lane.b32.xlu0 %v4609, 16
  %v5783 = vpop.permute.xlu0 %5782
  %5784 = vrot.lane.b32.xlu0 %v4610, 16
  %v5785 = vpop.permute.xlu0 %5784
  %5786 = vrot.lane.b32.xlu0 %v4611, 16
  %v5787 = vpop.permute.xlu0 %5786
  %5788 = vrot.lane.b32.xlu0 %v4612, 16
  %v5789 = vpop.permute.xlu0 %5788
  %5790 = vrot.lane.b32.xlu0 %v4613, 16
  %v5791 = vpop.permute.xlu0 %5790
  %5792 = vrot.lane.b32.xlu0 %v4614, 16
  %v5793 = vpop.permute.xlu0 %5792
  %5794 = vrot.lane.b32.xlu0 %v4615, 16
  %v5795 = vpop.permute.xlu0 %5794
  %5796 = vrot.lane.b32.xlu0 %v4616, 16
  %v5797 = vpop.permute.xlu0 %5796
  %5798 = vrot.lane.b32.xlu0 %v4617, 16
  %v5799 = vpop.permute.xlu0 %5798
  %5800 = vrot.lane.b32.xlu0 %v4618, 16
  %v5801 = vpop.permute.xlu0 %5800
  %5802 = vrot.lane.b32.xlu0 %v4619, 16
  %v5803 = vpop.permute.xlu0 %5802
  %5804 = vrot.lane.b32.xlu0 %v4620, 16
  %v5805 = vpop.permute.xlu0 %5804
  %5806 = vrot.lane.b32.xlu0 %v4621, 16
  %v5807 = vpop.permute.xlu0 %5806
  %5808 = vrot.lane.b32.xlu0 %v4622, 16
  %v5809 = vpop.permute.xlu0 %5808
  %5810 = vrot.lane.b32.xlu0 %v4623, 16
  %v5811 = vpop.permute.xlu0 %5810
  %5812 = vrot.lane.b32.xlu0 %v4624, 16
  %v5813 = vpop.permute.xlu0 %5812
  %5814 = vrot.lane.b32.xlu0 %v4625, 16
  %v5815 = vpop.permute.xlu0 %5814
  %5816 = vrot.lane.b32.xlu0 %v4626, 16
  %v5817 = vpop.permute.xlu0 %5816
  %5818 = vrot.lane.b32.xlu0 %v4627, 16
  %v5819 = vpop.permute.xlu0 %5818
  %5820 = vrot.lane.b32.xlu0 %v4628, 16
  %v5821 = vpop.permute.xlu0 %5820
  %5822 = vrot.lane.b32.xlu0 %v4629, 16
  %v5823 = vpop.permute.xlu0 %5822
  %5824 = vrot.lane.b32.xlu0 %v4630, 16
  %v5825 = vpop.permute.xlu0 %5824
  %5826 = vrot.lane.b32.xlu0 %v4631, 16
  %v5827 = vpop.permute.xlu0 %5826
  %5828 = vrot.lane.b32.xlu0 %v4632, 16
  %v5829 = vpop.permute.xlu0 %5828
  %5830 = vrot.lane.b32.xlu0 %v4633, 16
  %v5831 = vpop.permute.xlu0 %5830
  %5832 = vrot.lane.b32.xlu0 %v4634, 16
  %v5833 = vpop.permute.xlu0 %5832
  %5834 = vrot.lane.b32.xlu0 %v4635, 16
  %v5835 = vpop.permute.xlu0 %5834
  %5836 = vrot.lane.b32.xlu0 %v4636, 16
  %v5837 = vpop.permute.xlu0 %5836
  %5838 = vrot.lane.b32.xlu0 %v4637, 16
  %v5839 = vpop.permute.xlu0 %5838
  %5840 = vrot.lane.b32.xlu0 %v4638, 16
  %v5841 = vpop.permute.xlu0 %5840
  %5842 = vrot.lane.b32.xlu0 %v4639, 16
  %v5843 = vpop.permute.xlu0 %5842
  %5844 = vrot.lane.b32.xlu0 %v4640, 16
  %v5845 = vpop.permute.xlu0 %5844
  %5846 = vrot.lane.b32.xlu0 %v4641, 16
  %v5847 = vpop.permute.xlu0 %5846
  %5848 = vrot.lane.b32.xlu0 %v4642, 16
  %v5849 = vpop.permute.xlu0 %5848
  %5850 = vrot.lane.b32.xlu0 %v4643, 16
  %v5851 = vpop.permute.xlu0 %5850
  %5852 = vrot.lane.b32.xlu0 %v4644, 16
  %v5853 = vpop.permute.xlu0 %5852
  %5854 = vrot.lane.b32.xlu0 %v4645, 16
  %v5855 = vpop.permute.xlu0 %5854
  %5856 = vrot.lane.b32.xlu0 %v4646, 16
  %v5857 = vpop.permute.xlu0 %5856
  %5858 = vrot.lane.b32.xlu0 %v4647, 16
  %v5859 = vpop.permute.xlu0 %5858
  %5860 = vrot.lane.b32.xlu0 %v4648, 16
  %v5861 = vpop.permute.xlu0 %5860
  %5862 = vrot.lane.b32.xlu0 %v4649, 16
  %v5863 = vpop.permute.xlu0 %5862
  %5864 = vrot.lane.b32.xlu0 %v4650, 16
  %v5865 = vpop.permute.xlu0 %5864
  %5866 = vrot.lane.b32.xlu0 %v4651, 16
  %v5867 = vpop.permute.xlu0 %5866
  %5868 = vrot.lane.b32.xlu0 %v4652, 16
  %v5869 = vpop.permute.xlu0 %5868
  %5998 = vrot.lane.b32.xlu0 %v4653, 20
  %v5999 = vpop.permute.xlu0 %5998
  %6000 = vrot.lane.b32.xlu0 %v4654, 20
  %v6001 = vpop.permute.xlu0 %6000
  %6002 = vrot.lane.b32.xlu0 %v4655, 20
  %v6003 = vpop.permute.xlu0 %6002
  %6004 = vrot.lane.b32.xlu0 %v4656, 20
  %v6005 = vpop.permute.xlu0 %6004
  %6006 = vrot.lane.b32.xlu0 %v4657, 20
  %v6007 = vpop.permute.xlu0 %6006
  %6008 = vrot.lane.b32.xlu0 %v4658, 20
  %v6009 = vpop.permute.xlu0 %6008
  %6010 = vrot.lane.b32.xlu0 %v4659, 20
  %v6011 = vpop.permute.xlu0 %6010
  %6012 = vrot.lane.b32.xlu0 %v4660, 20
  %v6013 = vpop.permute.xlu0 %6012
  %6014 = vrot.lane.b32.xlu0 %v4661, 20
  %v6015 = vpop.permute.xlu0 %6014
  %6016 = vrot.lane.b32.xlu0 %v4662, 20
  %v6017 = vpop.permute.xlu0 %6016
  %6018 = vrot.lane.b32.xlu0 %v4663, 20
  %v6019 = vpop.permute.xlu0 %6018
  %6020 = vrot.lane.b32.xlu0 %v4664, 20
  %v6021 = vpop.permute.xlu0 %6020
  %6022 = vrot.lane.b32.xlu0 %v4665, 20
  %v6023 = vpop.permute.xlu0 %6022
  %6024 = vrot.lane.b32.xlu0 %v4666, 20
  %v6025 = vpop.permute.xlu0 %6024
  %6026 = vrot.lane.b32.xlu0 %v4667, 20
  %v6027 = vpop.permute.xlu0 %6026
  %6028 = vrot.lane.b32.xlu0 %v4668, 20
  %v6029 = vpop.permute.xlu0 %6028
  %6030 = vrot.lane.b32.xlu0 %v4669, 20
  %v6031 = vpop.permute.xlu0 %6030
  %6032 = vrot.lane.b32.xlu0 %v4670, 20
  %v6033 = vpop.permute.xlu0 %6032
  %6034 = vrot.lane.b32.xlu0 %v4671, 20
  %v6035 = vpop.permute.xlu0 %6034
  %6036 = vrot.lane.b32.xlu0 %v4672, 20
  %v6037 = vpop.permute.xlu0 %6036
  %6038 = vrot.lane.b32.xlu0 %v4673, 20
  %v6039 = vpop.permute.xlu0 %6038
  %6040 = vrot.lane.b32.xlu0 %v4674, 20
  %v6041 = vpop.permute.xlu0 %6040
  %6042 = vrot.lane.b32.xlu0 %v4675, 20
  %v6043 = vpop.permute.xlu0 %6042
  %6044 = vrot.lane.b32.xlu0 %v4676, 20
  %v6045 = vpop.permute.xlu0 %6044
  %6046 = vrot.lane.b32.xlu0 %v4677, 20
  %v6047 = vpop.permute.xlu0 %6046
  %6048 = vrot.lane.b32.xlu0 %v4678, 20
  %v6049 = vpop.permute.xlu0 %6048
  %6050 = vrot.lane.b32.xlu0 %v4679, 20
  %v6051 = vpop.permute.xlu0 %6050
  %6052 = vrot.lane.b32.xlu0 %v4680, 20
  %v6053 = vpop.permute.xlu0 %6052
  %6054 = vrot.lane.b32.xlu0 %v4681, 20
  %v6055 = vpop.permute.xlu0 %6054
  %6056 = vrot.lane.b32.xlu0 %v4682, 20
  %v6057 = vpop.permute.xlu0 %6056
  %6058 = vrot.lane.b32.xlu0 %v4683, 20
  %v6059 = vpop.permute.xlu0 %6058
  %6060 = vrot.lane.b32.xlu0 %v4684, 20
  %v6061 = vpop.permute.xlu0 %6060
  %6062 = vrot.lane.b32.xlu0 %v4685, 20
  %v6063 = vpop.permute.xlu0 %6062
  %6064 = vrot.lane.b32.xlu0 %v4686, 20
  %v6065 = vpop.permute.xlu0 %6064
  %6066 = vrot.lane.b32.xlu0 %v4687, 20
  %v6067 = vpop.permute.xlu0 %6066
  %6068 = vrot.lane.b32.xlu0 %v4688, 20
  %v6069 = vpop.permute.xlu0 %6068
  %6070 = vrot.lane.b32.xlu0 %v4689, 20
  %v6071 = vpop.permute.xlu0 %6070
  %6072 = vrot.lane.b32.xlu0 %v4690, 20
  %v6073 = vpop.permute.xlu0 %6072
  %6074 = vrot.lane.b32.xlu0 %v4691, 20
  %v6075 = vpop.permute.xlu0 %6074
  %6076 = vrot.lane.b32.xlu0 %v4692, 20
  %v6077 = vpop.permute.xlu0 %6076
  %6078 = vrot.lane.b32.xlu0 %v4693, 20
  %v6079 = vpop.permute.xlu0 %6078
  %6080 = vrot.lane.b32.xlu0 %v4694, 20
  %v6081 = vpop.permute.xlu0 %6080
  %6082 = vrot.lane.b32.xlu0 %v4695, 20
  %v6083 = vpop.permute.xlu0 %6082
  %6084 = vrot.lane.b32.xlu0 %v4696, 20
  %v6085 = vpop.permute.xlu0 %6084
  %6086 = vrot.lane.b32.xlu0 %v4697, 20
  %v6087 = vpop.permute.xlu0 %6086
  %6088 = vrot.lane.b32.xlu0 %v4698, 20
  %v6089 = vpop.permute.xlu0 %6088
  %6090 = vrot.lane.b32.xlu0 %v4699, 20
  %v6091 = vpop.permute.xlu0 %6090
  %6092 = vrot.lane.b32.xlu0 %v4700, 20
  %v6093 = vpop.permute.xlu0 %6092
  %6094 = vrot.lane.b32.xlu0 %v4701, 20
  %v6095 = vpop.permute.xlu0 %6094
  %6096 = vrot.lane.b32.xlu0 %v4702, 20
  %v6097 = vpop.permute.xlu0 %6096
  %6098 = vrot.lane.b32.xlu0 %v4703, 20
  %v6099 = vpop.permute.xlu0 %6098
  %6100 = vrot.lane.b32.xlu0 %v4704, 20
  %v6101 = vpop.permute.xlu0 %6100
  %6102 = vrot.lane.b32.xlu0 %v4705, 20
  %v6103 = vpop.permute.xlu0 %6102
  %6104 = vrot.lane.b32.xlu0 %v4706, 20
  %v6105 = vpop.permute.xlu0 %6104
  %6106 = vrot.lane.b32.xlu0 %v4707, 20
  %v6107 = vpop.permute.xlu0 %6106
  %6108 = vrot.lane.b32.xlu0 %v4708, 20
  %v6109 = vpop.permute.xlu0 %6108
  %6110 = vrot.lane.b32.xlu0 %v4709, 20
  %v6111 = vpop.permute.xlu0 %6110
  %6112 = vrot.lane.b32.xlu0 %v4710, 20
  %v6113 = vpop.permute.xlu0 %6112
  %6114 = vrot.lane.b32.xlu0 %v4711, 20
  %v6115 = vpop.permute.xlu0 %6114
  %6116 = vrot.lane.b32.xlu0 %v4712, 20
  %v6117 = vpop.permute.xlu0 %6116
  %6118 = vrot.lane.b32.xlu0 %v4713, 20
  %v6119 = vpop.permute.xlu0 %6118
  %6120 = vrot.lane.b32.xlu0 %v4714, 20
  %v6121 = vpop.permute.xlu0 %6120
  %6122 = vrot.lane.b32.xlu0 %v4715, 20
  %v6123 = vpop.permute.xlu0 %6122
  %6124 = vrot.lane.b32.xlu0 %v4716, 20
  %v6125 = vpop.permute.xlu0 %6124
  %6254 = vrot.lane.b32.xlu0 %v4718, 24
  %v6255 = vpop.permute.xlu0 %6254
  %6256 = vrot.lane.b32.xlu0 %v4719, 24
  %v6257 = vpop.permute.xlu0 %6256
  %6258 = vrot.lane.b32.xlu0 %v4720, 24
  %v6259 = vpop.permute.xlu0 %6258
  %6260 = vrot.lane.b32.xlu0 %v4721, 24
  %v6261 = vpop.permute.xlu0 %6260
  %6262 = vrot.lane.b32.xlu0 %v4722, 24
  %v6263 = vpop.permute.xlu0 %6262
  %6264 = vrot.lane.b32.xlu0 %v4723, 24
  %v6265 = vpop.permute.xlu0 %6264
  %6266 = vrot.lane.b32.xlu0 %v4724, 24
  %v6267 = vpop.permute.xlu0 %6266
  %6268 = vrot.lane.b32.xlu0 %v4725, 24
  %v6269 = vpop.permute.xlu0 %6268
  %6270 = vrot.lane.b32.xlu0 %v4726, 24
  %v6271 = vpop.permute.xlu0 %6270
  %6272 = vrot.lane.b32.xlu0 %v4727, 24
  %v6273 = vpop.permute.xlu0 %6272
  %6274 = vrot.lane.b32.xlu0 %v4728, 24
  %v6275 = vpop.permute.xlu0 %6274
  %6276 = vrot.lane.b32.xlu0 %v4729, 24
  %v6277 = vpop.permute.xlu0 %6276
  %6278 = vrot.lane.b32.xlu0 %v4730, 24
  %v6279 = vpop.permute.xlu0 %6278
  %6280 = vrot.lane.b32.xlu0 %v4731, 24
  %v6281 = vpop.permute.xlu0 %6280
  %6282 = vrot.lane.b32.xlu0 %v4732, 24
  %v6283 = vpop.permute.xlu0 %6282
  %6284 = vrot.lane.b32.xlu0 %v4733, 24
  %v6285 = vpop.permute.xlu0 %6284
  %6286 = vrot.lane.b32.xlu0 %v4734, 24
  %v6287 = vpop.permute.xlu0 %6286
  %6288 = vrot.lane.b32.xlu0 %v4735, 24
  %v6289 = vpop.permute.xlu0 %6288
  %6290 = vrot.lane.b32.xlu0 %v4736, 24
  %v6291 = vpop.permute.xlu0 %6290
  %6292 = vrot.lane.b32.xlu0 %v4737, 24
  %v6293 = vpop.permute.xlu0 %6292
  %6294 = vrot.lane.b32.xlu0 %v4738, 24
  %v6295 = vpop.permute.xlu0 %6294
  %6296 = vrot.lane.b32.xlu0 %v4739, 24
  %v6297 = vpop.permute.xlu0 %6296
  %6298 = vrot.lane.b32.xlu0 %v4740, 24
  %v6299 = vpop.permute.xlu0 %6298
  %6300 = vrot.lane.b32.xlu0 %v4741, 24
  %v6301 = vpop.permute.xlu0 %6300
  %6302 = vrot.lane.b32.xlu0 %v4742, 24
  %v6303 = vpop.permute.xlu0 %6302
  %6304 = vrot.lane.b32.xlu0 %v4743, 24
  %v6305 = vpop.permute.xlu0 %6304
  %6306 = vrot.lane.b32.xlu0 %v4744, 24
  %v6307 = vpop.permute.xlu0 %6306
  %6308 = vrot.lane.b32.xlu0 %v4745, 24
  %v6309 = vpop.permute.xlu0 %6308
  %6310 = vrot.lane.b32.xlu0 %v4746, 24
  %v6311 = vpop.permute.xlu0 %6310
  %6312 = vrot.lane.b32.xlu0 %v4747, 24
  %v6313 = vpop.permute.xlu0 %6312
  %6314 = vrot.lane.b32.xlu0 %v4748, 24
  %v6315 = vpop.permute.xlu0 %6314
  %6316 = vrot.lane.b32.xlu0 %v4749, 24
  %v6317 = vpop.permute.xlu0 %6316
  %6318 = vrot.lane.b32.xlu0 %v4750, 24
  %v6319 = vpop.permute.xlu0 %6318
  %6320 = vrot.lane.b32.xlu0 %v4751, 24
  %v6321 = vpop.permute.xlu0 %6320
  %6322 = vrot.lane.b32.xlu0 %v4752, 24
  %v6323 = vpop.permute.xlu0 %6322
  %6324 = vrot.lane.b32.xlu0 %v4753, 24
  %v6325 = vpop.permute.xlu0 %6324
  %6326 = vrot.lane.b32.xlu0 %v4754, 24
  %v6327 = vpop.permute.xlu0 %6326
  %6328 = vrot.lane.b32.xlu0 %v4755, 24
  %v6329 = vpop.permute.xlu0 %6328
  %6330 = vrot.lane.b32.xlu0 %v4756, 24
  %v6331 = vpop.permute.xlu0 %6330
  %6332 = vrot.lane.b32.xlu0 %v4757, 24
  %v6333 = vpop.permute.xlu0 %6332
  %6334 = vrot.lane.b32.xlu0 %v4758, 24
  %v6335 = vpop.permute.xlu0 %6334
  %6336 = vrot.lane.b32.xlu0 %v4759, 24
  %v6337 = vpop.permute.xlu0 %6336
  %6338 = vrot.lane.b32.xlu0 %v4760, 24
  %v6339 = vpop.permute.xlu0 %6338
  %6340 = vrot.lane.b32.xlu0 %v4761, 24
  %v6341 = vpop.permute.xlu0 %6340
  %6342 = vrot.lane.b32.xlu0 %v4762, 24
  %v6343 = vpop.permute.xlu0 %6342
  %6344 = vrot.lane.b32.xlu0 %v4763, 24
  %v6345 = vpop.permute.xlu0 %6344
  %6346 = vrot.lane.b32.xlu0 %v4764, 24
  %v6347 = vpop.permute.xlu0 %6346
  %6348 = vrot.lane.b32.xlu0 %v4765, 24
  %v6349 = vpop.permute.xlu0 %6348
  %6350 = vrot.lane.b32.xlu0 %v4766, 24
  %v6351 = vpop.permute.xlu0 %6350
  %6352 = vrot.lane.b32.xlu0 %v4767, 24
  %v6353 = vpop.permute.xlu0 %6352
  %6354 = vrot.lane.b32.xlu0 %v4768, 24
  %v6355 = vpop.permute.xlu0 %6354
  %6356 = vrot.lane.b32.xlu0 %v4769, 24
  %v6357 = vpop.permute.xlu0 %6356
  %6358 = vrot.lane.b32.xlu0 %v4770, 24
  %v6359 = vpop.permute.xlu0 %6358
  %6360 = vrot.lane.b32.xlu0 %v4771, 24
  %v6361 = vpop.permute.xlu0 %6360
  %6362 = vrot.lane.b32.xlu0 %v4772, 24
  %v6363 = vpop.permute.xlu0 %6362
  %6364 = vrot.lane.b32.xlu0 %v4773, 24
  %v6365 = vpop.permute.xlu0 %6364
  %6366 = vrot.lane.b32.xlu0 %v4774, 24
  %v6367 = vpop.permute.xlu0 %6366
  %6368 = vrot.lane.b32.xlu0 %v4775, 24
  %v6369 = vpop.permute.xlu0 %6368
  %6370 = vrot.lane.b32.xlu0 %v4776, 24
  %v6371 = vpop.permute.xlu0 %6370
  %6372 = vrot.lane.b32.xlu0 %v4777, 24
  %v6373 = vpop.permute.xlu0 %6372
  %6374 = vrot.lane.b32.xlu0 %v4778, 24
  %v6375 = vpop.permute.xlu0 %6374
  %6376 = vrot.lane.b32.xlu0 %v4779, 24
  %v6377 = vpop.permute.xlu0 %6376
  %6378 = vrot.lane.b32.xlu0 %v4780, 24
  %v6379 = vpop.permute.xlu0 %6378
  %6380 = vrot.lane.b32.xlu0 %v4781, 24
  %v6381 = vpop.permute.xlu0 %6380
  %6510 = vrot.lane.b32.xlu0 %v4782, 28
  %v6511 = vpop.permute.xlu0 %6510
  %6512 = vrot.lane.b32.xlu0 %v4783, 28
  %v6513 = vpop.permute.xlu0 %6512
  %6514 = vrot.lane.b32.xlu0 %v4784, 28
  %v6515 = vpop.permute.xlu0 %6514
  %6516 = vrot.lane.b32.xlu0 %v4785, 28
  %v6517 = vpop.permute.xlu0 %6516
  %6518 = vrot.lane.b32.xlu0 %v4786, 28
  %v6519 = vpop.permute.xlu0 %6518
  %6520 = vrot.lane.b32.xlu0 %v4787, 28
  %v6521 = vpop.permute.xlu0 %6520
  %6522 = vrot.lane.b32.xlu0 %v4788, 28
  %v6523 = vpop.permute.xlu0 %6522
  %6524 = vrot.lane.b32.xlu0 %v4789, 28
  %v6525 = vpop.permute.xlu0 %6524
  %6526 = vrot.lane.b32.xlu0 %v4790, 28
  %v6527 = vpop.permute.xlu0 %6526
  %6528 = vrot.lane.b32.xlu0 %v4791, 28
  %v6529 = vpop.permute.xlu0 %6528
  %6530 = vrot.lane.b32.xlu0 %v4792, 28
  %v6531 = vpop.permute.xlu0 %6530
  %6532 = vrot.lane.b32.xlu0 %v4793, 28
  %v6533 = vpop.permute.xlu0 %6532
  %6534 = vrot.lane.b32.xlu0 %v4794, 28
  %v6535 = vpop.permute.xlu0 %6534
  %6536 = vrot.lane.b32.xlu0 %v4795, 28
  %v6537 = vpop.permute.xlu0 %6536
  %6538 = vrot.lane.b32.xlu0 %v4796, 28
  %v6539 = vpop.permute.xlu0 %6538
  %6540 = vrot.lane.b32.xlu0 %v4797, 28
  %v6541 = vpop.permute.xlu0 %6540
  %6542 = vrot.lane.b32.xlu0 %v4798, 28
  %v6543 = vpop.permute.xlu0 %6542
  %6544 = vrot.lane.b32.xlu0 %v4799, 28
  %v6545 = vpop.permute.xlu0 %6544
  %6546 = vrot.lane.b32.xlu0 %v4800, 28
  %v6547 = vpop.permute.xlu0 %6546
  %6548 = vrot.lane.b32.xlu0 %v4801, 28
  %v6549 = vpop.permute.xlu0 %6548
  %6550 = vrot.lane.b32.xlu0 %v4802, 28
  %v6551 = vpop.permute.xlu0 %6550
  %6552 = vrot.lane.b32.xlu0 %v4803, 28
  %v6553 = vpop.permute.xlu0 %6552
  %6554 = vrot.lane.b32.xlu0 %v4804, 28
  %v6555 = vpop.permute.xlu0 %6554
  %6556 = vrot.lane.b32.xlu0 %v4805, 28
  %v6557 = vpop.permute.xlu0 %6556
  %6558 = vrot.lane.b32.xlu0 %v4806, 28
  %v6559 = vpop.permute.xlu0 %6558
  %6560 = vrot.lane.b32.xlu0 %v4807, 28
  %v6561 = vpop.permute.xlu0 %6560
  %6562 = vrot.lane.b32.xlu0 %v4808, 28
  %v6563 = vpop.permute.xlu0 %6562
  %6564 = vrot.lane.b32.xlu0 %v4809, 28
  %v6565 = vpop.permute.xlu0 %6564
  %6566 = vrot.lane.b32.xlu0 %v4810, 28
  %v6567 = vpop.permute.xlu0 %6566
  %6568 = vrot.lane.b32.xlu0 %v4811, 28
  %v6569 = vpop.permute.xlu0 %6568
  %6570 = vrot.lane.b32.xlu0 %v4812, 28
  %v6571 = vpop.permute.xlu0 %6570
  %6572 = vrot.lane.b32.xlu0 %v4813, 28
  %v6573 = vpop.permute.xlu0 %6572
  %6574 = vrot.lane.b32.xlu0 %v4814, 28
  %v6575 = vpop.permute.xlu0 %6574
  %6576 = vrot.lane.b32.xlu0 %v4815, 28
  %v6577 = vpop.permute.xlu0 %6576
  %6578 = vrot.lane.b32.xlu0 %v4816, 28
  %v6579 = vpop.permute.xlu0 %6578
  %6580 = vrot.lane.b32.xlu0 %v4817, 28
  %v6581 = vpop.permute.xlu0 %6580
  %6582 = vrot.lane.b32.xlu0 %v4818, 28
  %v6583 = vpop.permute.xlu0 %6582
  %6584 = vrot.lane.b32.xlu0 %v4819, 28
  %v6585 = vpop.permute.xlu0 %6584
  %6586 = vrot.lane.b32.xlu0 %v4820, 28
  %v6587 = vpop.permute.xlu0 %6586
  %6588 = vrot.lane.b32.xlu0 %v4821, 28
  %v6589 = vpop.permute.xlu0 %6588
  %6590 = vrot.lane.b32.xlu0 %v4822, 28
  %v6591 = vpop.permute.xlu0 %6590
  %6592 = vrot.lane.b32.xlu0 %v4823, 28
  %v6593 = vpop.permute.xlu0 %6592
  %6594 = vrot.lane.b32.xlu0 %v4824, 28
  %v6595 = vpop.permute.xlu0 %6594
  %6596 = vrot.lane.b32.xlu0 %v4825, 28
  %v6597 = vpop.permute.xlu0 %6596
  %6598 = vrot.lane.b32.xlu0 %v4826, 28
  %v6599 = vpop.permute.xlu0 %6598
  %6600 = vrot.lane.b32.xlu0 %v4827, 28
  %v6601 = vpop.permute.xlu0 %6600
  %6602 = vrot.lane.b32.xlu0 %v4828, 28
  %v6603 = vpop.permute.xlu0 %6602
  %6604 = vrot.lane.b32.xlu0 %v4829, 28
  %v6605 = vpop.permute.xlu0 %6604
  %6606 = vrot.lane.b32.xlu0 %v4830, 28
  %v6607 = vpop.permute.xlu0 %6606
  %6608 = vrot.lane.b32.xlu0 %v4831, 28
  %v6609 = vpop.permute.xlu0 %6608
  %6610 = vrot.lane.b32.xlu0 %v4832, 28
  %v6611 = vpop.permute.xlu0 %6610
  %6612 = vrot.lane.b32.xlu0 %v4833, 28
  %v6613 = vpop.permute.xlu0 %6612
  %6614 = vrot.lane.b32.xlu0 %v4834, 28
  %v6615 = vpop.permute.xlu0 %6614
  %6616 = vrot.lane.b32.xlu0 %v4835, 28
  %v6617 = vpop.permute.xlu0 %6616
  %6618 = vrot.lane.b32.xlu0 %v4836, 28
  %v6619 = vpop.permute.xlu0 %6618
  %6620 = vrot.lane.b32.xlu0 %v4837, 28
  %v6621 = vpop.permute.xlu0 %6620
  %6622 = vrot.lane.b32.xlu0 %v4838, 28
  %v6623 = vpop.permute.xlu0 %6622
  %6624 = vrot.lane.b32.xlu0 %v4839, 28
  %v6625 = vpop.permute.xlu0 %6624
  %6626 = vrot.lane.b32.xlu0 %v4840, 28
  %v6627 = vpop.permute.xlu0 %6626
  %6628 = vrot.lane.b32.xlu0 %v4841, 28
  %v6629 = vpop.permute.xlu0 %6628
  %6630 = vrot.lane.b32.xlu0 %v4842, 28
  %v6631 = vpop.permute.xlu0 %6630
  %6632 = vrot.lane.b32.xlu0 %v4843, 28
  %v6633 = vpop.permute.xlu0 %6632
  %6634 = vrot.lane.b32.xlu0 %v4844, 28
  %v6635 = vpop.permute.xlu0 %6634
  %6636 = vrot.lane.b32.xlu0 %v4845, 28
  %v6637 = vpop.permute.xlu0 %6636
  %6766 = vrot.lane.b32.xlu0 %v4846, 32
  %v6767 = vpop.permute.xlu0 %6766
  %6768 = vrot.lane.b32.xlu0 %v4847, 32
  %v6769 = vpop.permute.xlu0 %6768
  %6770 = vrot.lane.b32.xlu0 %v4848, 32
  %v6771 = vpop.permute.xlu0 %6770
  %6772 = vrot.lane.b32.xlu0 %v4849, 32
  %v6773 = vpop.permute.xlu0 %6772
  %6774 = vrot.lane.b32.xlu0 %v4850, 32
  %v6775 = vpop.permute.xlu0 %6774
  %6776 = vrot.lane.b32.xlu0 %v4851, 32
  %v6777 = vpop.permute.xlu0 %6776
  %6778 = vrot.lane.b32.xlu0 %v4852, 32
  %v6779 = vpop.permute.xlu0 %6778
  %6780 = vrot.lane.b32.xlu0 %v4853, 32
  %v6781 = vpop.permute.xlu0 %6780
  %6782 = vrot.lane.b32.xlu0 %v4854, 32
  %v6783 = vpop.permute.xlu0 %6782
  %6784 = vrot.lane.b32.xlu0 %v4855, 32
  %v6785 = vpop.permute.xlu0 %6784
  %6786 = vrot.lane.b32.xlu0 %v4856, 32
  %v6787 = vpop.permute.xlu0 %6786
  %6788 = vrot.lane.b32.xlu0 %v4857, 32
  %v6789 = vpop.permute.xlu0 %6788
  %6790 = vrot.lane.b32.xlu0 %v4858, 32
  %v6791 = vpop.permute.xlu0 %6790
  %6792 = vrot.lane.b32.xlu0 %v4859, 32
  %v6793 = vpop.permute.xlu0 %6792
  %6794 = vrot.lane.b32.xlu0 %v4860, 32
  %v6795 = vpop.permute.xlu0 %6794
  %6796 = vrot.lane.b32.xlu0 %v4861, 32
  %v6797 = vpop.permute.xlu0 %6796
  %6798 = vrot.lane.b32.xlu0 %v4862, 32
  %v6799 = vpop.permute.xlu0 %6798
  %6800 = vrot.lane.b32.xlu0 %v4863, 32
  %v6801 = vpop.permute.xlu0 %6800
  %6802 = vrot.lane.b32.xlu0 %v4864, 32
  %v6803 = vpop.permute.xlu0 %6802
  %6804 = vrot.lane.b32.xlu0 %v4865, 32
  %v6805 = vpop.permute.xlu0 %6804
  %6806 = vrot.lane.b32.xlu0 %v4866, 32
  %v6807 = vpop.permute.xlu0 %6806
  %6808 = vrot.lane.b32.xlu0 %v4867, 32
  %v6809 = vpop.permute.xlu0 %6808
  %6810 = vrot.lane.b32.xlu0 %v4868, 32
  %v6811 = vpop.permute.xlu0 %6810
  %6812 = vrot.lane.b32.xlu0 %v4869, 32
  %v6813 = vpop.permute.xlu0 %6812
  %6814 = vrot.lane.b32.xlu0 %v4870, 32
  %v6815 = vpop.permute.xlu0 %6814
  %6816 = vrot.lane.b32.xlu0 %v4871, 32
  %v6817 = vpop.permute.xlu0 %6816
  %6818 = vrot.lane.b32.xlu0 %v4872, 32
  %v6819 = vpop.permute.xlu0 %6818
  %6820 = vrot.lane.b32.xlu0 %v4873, 32
  %v6821 = vpop.permute.xlu0 %6820
  %6822 = vrot.lane.b32.xlu0 %v4874, 32
  %v6823 = vpop.permute.xlu0 %6822
  %6824 = vrot.lane.b32.xlu0 %v4875, 32
  %v6825 = vpop.permute.xlu0 %6824
  %6826 = vrot.lane.b32.xlu0 %v4876, 32
  %v6827 = vpop.permute.xlu0 %6826
  %6828 = vrot.lane.b32.xlu0 %v4877, 32
  %v6829 = vpop.permute.xlu0 %6828
  %6830 = vrot.lane.b32.xlu0 %v4878, 32
  %v6831 = vpop.permute.xlu0 %6830
  %6832 = vrot.lane.b32.xlu0 %v4879, 32
  %v6833 = vpop.permute.xlu0 %6832
  %6834 = vrot.lane.b32.xlu0 %v4880, 32
  %v6835 = vpop.permute.xlu0 %6834
  %6836 = vrot.lane.b32.xlu0 %v4881, 32
  %v6837 = vpop.permute.xlu0 %6836
  %6838 = vrot.lane.b32.xlu0 %v4882, 32
  %v6839 = vpop.permute.xlu0 %6838
  %6840 = vrot.lane.b32.xlu0 %v4883, 32
  %v6841 = vpop.permute.xlu0 %6840
  %6842 = vrot.lane.b32.xlu0 %v4884, 32
  %v6843 = vpop.permute.xlu0 %6842
  %6844 = vrot.lane.b32.xlu0 %v4885, 32
  %v6845 = vpop.permute.xlu0 %6844
  %6846 = vrot.lane.b32.xlu0 %v4886, 32
  %v6847 = vpop.permute.xlu0 %6846
  %6848 = vrot.lane.b32.xlu0 %v4887, 32
  %v6849 = vpop.permute.xlu0 %6848
  %6850 = vrot.lane.b32.xlu0 %v4888, 32
  %v6851 = vpop.permute.xlu0 %6850
  %6852 = vrot.lane.b32.xlu0 %v4889, 32
  %v6853 = vpop.permute.xlu0 %6852
  %6854 = vrot.lane.b32.xlu0 %v4890, 32
  %v6855 = vpop.permute.xlu0 %6854
  %6856 = vrot.lane.b32.xlu0 %v4891, 32
  %v6857 = vpop.permute.xlu0 %6856
  %6858 = vrot.lane.b32.xlu0 %v4892, 32
  %v6859 = vpop.permute.xlu0 %6858
  %6860 = vrot.lane.b32.xlu0 %v4893, 32
  %v6861 = vpop.permute.xlu0 %6860
  %6862 = vrot.lane.b32.xlu0 %v4894, 32
  %v6863 = vpop.permute.xlu0 %6862
  %6864 = vrot.lane.b32.xlu0 %v4895, 32
  %v6865 = vpop.permute.xlu0 %6864
  %6866 = vrot.lane.b32.xlu0 %v4896, 32
  %v6867 = vpop.permute.xlu0 %6866
  %6868 = vrot.lane.b32.xlu0 %v4897, 32
  %v6869 = vpop.permute.xlu0 %6868
  %6870 = vrot.lane.b32.xlu0 %v4898, 32
  %v6871 = vpop.permute.xlu0 %6870
  %6872 = vrot.lane.b32.xlu0 %v4899, 32
  %v6873 = vpop.permute.xlu0 %6872
  %6874 = vrot.lane.b32.xlu0 %v4900, 32
  %v6875 = vpop.permute.xlu0 %6874
  %6876 = vrot.lane.b32.xlu0 %v4901, 32
  %v6877 = vpop.permute.xlu0 %6876
  %6878 = vrot.lane.b32.xlu0 %v4902, 32
  %v6879 = vpop.permute.xlu0 %6878
  %6880 = vrot.lane.b32.xlu0 %v4903, 32
  %v6881 = vpop.permute.xlu0 %6880
  %6882 = vrot.lane.b32.xlu0 %v4904, 32
  %v6883 = vpop.permute.xlu0 %6882
  %6884 = vrot.lane.b32.xlu0 %v4905, 32
  %v6885 = vpop.permute.xlu0 %6884
  %6886 = vrot.lane.b32.xlu0 %v4906, 32
  %v6887 = vpop.permute.xlu0 %6886
  %6888 = vrot.lane.b32.xlu0 %v4907, 32
  %v6889 = vpop.permute.xlu0 %6888
  %6890 = vrot.lane.b32.xlu0 %v4908, 32
  %v6891 = vpop.permute.xlu0 %6890
  %6892 = vrot.lane.b32.xlu0 %v4909, 32
  %v6893 = vpop.permute.xlu0 %6892
  %v6958 = vsel %vm2646, %v4333, %v4975
  %v6959 = vsel %vm2646, %v4334, %v4977
  %v6960 = vsel %vm2646, %v4335, %v4979
  %v6961 = vsel %vm2646, %v4336, %v4981
  %v6962 = vsel %vm2646, %v4337, %v4983
  %v6963 = vsel %vm2646, %v4338, %v4985
  %v6964 = vsel %vm2646, %v4339, %v4987
  %v6965 = vsel %vm2646, %v4340, %v4989
  %v6966 = vsel %vm2646, %v4341, %v4991
  %v6967 = vsel %vm2646, %v4342, %v4993
  %v6968 = vsel %vm2646, %v4343, %v4995
  %v6969 = vsel %vm2646, %v4344, %v4997
  %v6970 = vsel %vm2646, %v4345, %v4999
  %v6971 = vsel %vm2646, %v4346, %v5001
  %v6972 = vsel %vm2646, %v4347, %v5003
  %v6973 = vsel %vm2646, %v4348, %v5005
  %v6974 = vsel %vm2646, %v4349, %v5007
  %v6975 = vsel %vm2646, %v4350, %v5009
  %v6976 = vsel %vm2646, %v4351, %v5011
  %v6977 = vsel %vm2646, %v4352, %v5013
  %v6978 = vsel %vm2646, %v4353, %v5015
  %v6979 = vsel %vm2646, %v4354, %v5017
  %v6980 = vsel %vm2646, %v4355, %v5019
  %v6981 = vsel %vm2646, %v4356, %v5021
  %v6982 = vsel %vm2646, %v4357, %v5023
  %v6983 = vsel %vm2646, %v4358, %v5025
  %v6984 = vsel %vm2646, %v4359, %v5027
  %v6985 = vsel %vm2646, %v4360, %v5029
  %v6986 = vsel %vm2646, %v4361, %v5031
  %v6987 = vsel %vm2646, %v4362, %v5033
  %v6988 = vsel %vm2646, %v4363, %v5035
  %v6989 = vsel %vm2646, %v4364, %v5037
  %v6990 = vsel %vm2646, %v4365, %v5039
  %v6991 = vsel %vm2646, %v4366, %v5041
  %v6992 = vsel %vm2646, %v4367, %v5043
  %v6993 = vsel %vm2646, %v4368, %v5045
  %v6994 = vsel %vm2646, %v4369, %v5047
  %v6995 = vsel %vm2646, %v4370, %v5049
  %v6996 = vsel %vm2646, %v4371, %v5051
  %v6997 = vsel %vm2646, %v4372, %v5053
  %v6998 = vsel %vm2646, %v4373, %v5055
  %v6999 = vsel %vm2646, %v4374, %v5057
  %v7000 = vsel %vm2646, %v4375, %v5059
  %v7001 = vsel %vm2646, %v4376, %v5061
  %v7002 = vsel %vm2646, %v4377, %v5063
  %v7003 = vsel %vm2646, %v4378, %v5065
  %v7004 = vsel %vm2646, %v4379, %v5067
  %v7005 = vsel %vm2646, %v4380, %v5069
  %v7006 = vsel %vm2646, %v4381, %v5071
  %v7007 = vsel %vm2646, %v4382, %v5073
  %v7008 = vsel %vm2646, %v4383, %v5075
  %v7009 = vsel %vm2646, %v4384, %v5077
  %v7010 = vsel %vm2646, %v4385, %v5079
  %v7011 = vsel %vm2646, %v4386, %v5081
  %v7012 = vsel %vm2646, %v4387, %v5083
  %v7013 = vsel %vm2646, %v4388, %v5085
  %v7014 = vsel %vm2646, %v4389, %v5087
  %v7015 = vsel %vm2646, %v4390, %v5089
  %v7016 = vsel %vm2646, %v4391, %v5091
  %v7017 = vsel %vm2646, %v4392, %v5093
  %v7018 = vsel %vm2646, %v4393, %v5095
  %v7019 = vsel %vm2646, %v4394, %v5097
  %v7020 = vsel %vm2646, %v4395, %v5099
  %v7021 = vsel %vm2646, %v4396, %v5101
  %v7022 = vsel %vm2711, %v6958, %v5231
  %v7023 = vsel %vm2711, %v6959, %v5233
  %v7024 = vsel %vm2711, %v6960, %v5235
  %v7025 = vsel %vm2711, %v6961, %v5237
  %v7026 = vsel %vm2711, %v6962, %v5239
  %v7027 = vsel %vm2711, %v6963, %v5241
  %v7028 = vsel %vm2711, %v6964, %v5243
  %v7029 = vsel %vm2711, %v6965, %v5245
  %v7030 = vsel %vm2711, %v6966, %v5247
  %v7031 = vsel %vm2711, %v6967, %v5249
  %v7032 = vsel %vm2711, %v6968, %v5251
  %v7033 = vsel %vm2711, %v6969, %v5253
  %v7034 = vsel %vm2711, %v6970, %v5255
  %v7035 = vsel %vm2711, %v6971, %v5257
  %v7036 = vsel %vm2711, %v6972, %v5259
  %v7037 = vsel %vm2711, %v6973, %v5261
  %v7038 = vsel %vm2711, %v6974, %v5263
  %v7039 = vsel %vm2711, %v6975, %v5265
  %v7040 = vsel %vm2711, %v6976, %v5267
  %v7041 = vsel %vm2711, %v6977, %v5269
  %v7042 = vsel %vm2711, %v6978, %v5271
  %v7043 = vsel %vm2711, %v6979, %v5273
  %v7044 = vsel %vm2711, %v6980, %v5275
  %v7045 = vsel %vm2711, %v6981, %v5277
  %v7046 = vsel %vm2711, %v6982, %v5279
  %v7047 = vsel %vm2711, %v6983, %v5281
  %v7048 = vsel %vm2711, %v6984, %v5283
  %v7049 = vsel %vm2711, %v6985, %v5285
  %v7050 = vsel %vm2711, %v6986, %v5287
  %v7051 = vsel %vm2711, %v6987, %v5289
  %v7052 = vsel %vm2711, %v6988, %v5291
  %v7053 = vsel %vm2711, %v6989, %v5293
  %v7054 = vsel %vm2711, %v6990, %v5295
  %v7055 = vsel %vm2711, %v6991, %v5297
  %v7056 = vsel %vm2711, %v6992, %v5299
  %v7057 = vsel %vm2711, %v6993, %v5301
  %v7058 = vsel %vm2711, %v6994, %v5303
  %v7059 = vsel %vm2711, %v6995, %v5305
  %v7060 = vsel %vm2711, %v6996, %v5307
  %v7061 = vsel %vm2711, %v6997, %v5309
  %v7062 = vsel %vm2711, %v6998, %v5311
  %v7063 = vsel %vm2711, %v6999, %v5313
  %v7064 = vsel %vm2711, %v7000, %v5315
  %v7065 = vsel %vm2711, %v7001, %v5317
  %v7066 = vsel %vm2711, %v7002, %v5319
  %v7067 = vsel %vm2711, %v7003, %v5321
  %v7068 = vsel %vm2711, %v7004, %v5323
  %v7069 = vsel %vm2711, %v7005, %v5325
  %v7070 = vsel %vm2711, %v7006, %v5327
  %v7071 = vsel %vm2711, %v7007, %v5329
  %v7072 = vsel %vm2711, %v7008, %v5331
  %v7073 = vsel %vm2711, %v7009, %v5333
  %v7074 = vsel %vm2711, %v7010, %v5335
  %v7075 = vsel %vm2711, %v7011, %v5337
  %v7076 = vsel %vm2711, %v7012, %v5339
  %v7077 = vsel %vm2711, %v7013, %v5341
  %v7078 = vsel %vm2711, %v7014, %v5343
  %v7079 = vsel %vm2711, %v7015, %v5345
  %v7080 = vsel %vm2711, %v7016, %v5347
  %v7081 = vsel %vm2711, %v7017, %v5349
  %v7082 = vsel %vm2711, %v7018, %v5351
  %v7083 = vsel %vm2711, %v7019, %v5353
  %v7084 = vsel %vm2711, %v7020, %v5355
  %v7085 = vsel %vm2711, %v7021, %v5357
  %v7086 = vsel %vm2776, %v7022, %v5487
  %v7087 = vsel %vm2776, %v7023, %v5489
  %v7088 = vsel %vm2776, %v7024, %v5491
  %v7089 = vsel %vm2776, %v7025, %v5493
  %v7090 = vsel %vm2776, %v7026, %v5495
  %v7091 = vsel %vm2776, %v7027, %v5497
  %v7092 = vsel %vm2776, %v7028, %v5499
  %v7093 = vsel %vm2776, %v7029, %v5501
  %v7094 = vsel %vm2776, %v7030, %v5503
  %v7095 = vsel %vm2776, %v7031, %v5505
  %v7096 = vsel %vm2776, %v7032, %v5507
  %v7097 = vsel %vm2776, %v7033, %v5509
  %v7098 = vsel %vm2776, %v7034, %v5511
  %v7099 = vsel %vm2776, %v7035, %v5513
  %v7100 = vsel %vm2776, %v7036, %v5515
  %v7101 = vsel %vm2776, %v7037, %v5517
  %v7102 = vsel %vm2776, %v7038, %v5519
  %v7103 = vsel %vm2776, %v7039, %v5521
  %v7104 = vsel %vm2776, %v7040, %v5523
  %v7105 = vsel %vm2776, %v7041, %v5525
  %v7106 = vsel %vm2776, %v7042, %v5527
  %v7107 = vsel %vm2776, %v7043, %v5529
  %v7108 = vsel %vm2776, %v7044, %v5531
  %v7109 = vsel %vm2776, %v7045, %v5533
  %v7110 = vsel %vm2776, %v7046, %v5535
  %v7111 = vsel %vm2776, %v7047, %v5537
  %v7112 = vsel %vm2776, %v7048, %v5539
  %v7113 = vsel %vm2776, %v7049, %v5541
  %v7114 = vsel %vm2776, %v7050, %v5543
  %v7115 = vsel %vm2776, %v7051, %v5545
  %v7116 = vsel %vm2776, %v7052, %v5547
  %v7117 = vsel %vm2776, %v7053, %v5549
  %v7118 = vsel %vm2776, %v7054, %v5551
  %v7119 = vsel %vm2776, %v7055, %v5553
  %v7120 = vsel %vm2776, %v7056, %v5555
  %v7121 = vsel %vm2776, %v7057, %v5557
  %v7122 = vsel %vm2776, %v7058, %v5559
  %v7123 = vsel %vm2776, %v7059, %v5561
  %v7124 = vsel %vm2776, %v7060, %v5563
  %v7125 = vsel %vm2776, %v7061, %v5565
  %v7126 = vsel %vm2776, %v7062, %v5567
  %v7127 = vsel %vm2776, %v7063, %v5569
  %v7128 = vsel %vm2776, %v7064, %v5571
  %v7129 = vsel %vm2776, %v7065, %v5573
  %v7130 = vsel %vm2776, %v7066, %v5575
  %v7131 = vsel %vm2776, %v7067, %v5577
  %v7132 = vsel %vm2776, %v7068, %v5579
  %v7133 = vsel %vm2776, %v7069, %v5581
  %v7134 = vsel %vm2776, %v7070, %v5583
  %v7135 = vsel %vm2776, %v7071, %v5585
  %v7136 = vsel %vm2776, %v7072, %v5587
  %v7137 = vsel %vm2776, %v7073, %v5589
  %v7138 = vsel %vm2776, %v7074, %v5591
  %v7139 = vsel %vm2776, %v7075, %v5593
  %v7140 = vsel %vm2776, %v7076, %v5595
  %v7141 = vsel %vm2776, %v7077, %v5597
  %v7142 = vsel %vm2776, %v7078, %v5599
  %v7143 = vsel %vm2776, %v7079, %v5601
  %v7144 = vsel %vm2776, %v7080, %v5603
  %v7145 = vsel %vm2776, %v7081, %v5605
  %v7146 = vsel %vm2776, %v7082, %v5607
  %v7147 = vsel %vm2776, %v7083, %v5609
  %v7148 = vsel %vm2776, %v7084, %v5611
  %v7149 = vsel %vm2776, %v7085, %v5613
  %v7150 = vsel %vm2841, %v7086, %v5743
  %v7151 = vsel %vm2841, %v7087, %v5745
  %v7152 = vsel %vm2841, %v7088, %v5747
  %v7153 = vsel %vm2841, %v7089, %v5749
  %v7154 = vsel %vm2841, %v7090, %v5751
  %v7155 = vsel %vm2841, %v7091, %v5753
  %v7156 = vsel %vm2841, %v7092, %v5755
  %v7157 = vsel %vm2841, %v7093, %v5757
  %v7158 = vsel %vm2841, %v7094, %v5759
  %v7159 = vsel %vm2841, %v7095, %v5761
  %v7160 = vsel %vm2841, %v7096, %v5763
  %v7161 = vsel %vm2841, %v7097, %v5765
  %v7162 = vsel %vm2841, %v7098, %v5767
  %v7163 = vsel %vm2841, %v7099, %v5769
  %v7164 = vsel %vm2841, %v7100, %v5771
  %v7165 = vsel %vm2841, %v7101, %v5773
  %v7166 = vsel %vm2841, %v7102, %v5775
  %v7167 = vsel %vm2841, %v7103, %v5777
  %v7168 = vsel %vm2841, %v7104, %v5779
  %v7169 = vsel %vm2841, %v7105, %v5781
  %v7170 = vsel %vm2841, %v7106, %v5783
  %v7171 = vsel %vm2841, %v7107, %v5785
  %v7172 = vsel %vm2841, %v7108, %v5787
  %v7173 = vsel %vm2841, %v7109, %v5789
  %v7174 = vsel %vm2841, %v7110, %v5791
  %v7175 = vsel %vm2841, %v7111, %v5793
  %v7176 = vsel %vm2841, %v7112, %v5795
  %v7177 = vsel %vm2841, %v7113, %v5797
  %v7178 = vsel %vm2841, %v7114, %v5799
  %v7179 = vsel %vm2841, %v7115, %v5801
  %v7180 = vsel %vm2841, %v7116, %v5803
  %v7181 = vsel %vm2841, %v7117, %v5805
  %v7182 = vsel %vm2841, %v7118, %v5807
  %v7183 = vsel %vm2841, %v7119, %v5809
  %v7184 = vsel %vm2841, %v7120, %v5811
  %v7185 = vsel %vm2841, %v7121, %v5813
  %v7186 = vsel %vm2841, %v7122, %v5815
  %v7187 = vsel %vm2841, %v7123, %v5817
  %v7188 = vsel %vm2841, %v7124, %v5819
  %v7189 = vsel %vm2841, %v7125, %v5821
  %v7190 = vsel %vm2841, %v7126, %v5823
  %v7191 = vsel %vm2841, %v7127, %v5825
  %v7192 = vsel %vm2841, %v7128, %v5827
  %v7193 = vsel %vm2841, %v7129, %v5829
  %v7194 = vsel %vm2841, %v7130, %v5831
  %v7195 = vsel %vm2841, %v7131, %v5833
  %v7196 = vsel %vm2841, %v7132, %v5835
  %v7197 = vsel %vm2841, %v7133, %v5837
  %v7198 = vsel %vm2841, %v7134, %v5839
  %v7199 = vsel %vm2841, %v7135, %v5841
  %v7200 = vsel %vm2841, %v7136, %v5843
  %v7201 = vsel %vm2841, %v7137, %v5845
  %v7202 = vsel %vm2841, %v7138, %v5847
  %v7203 = vsel %vm2841, %v7139, %v5849
  %v7204 = vsel %vm2841, %v7140, %v5851
  %v7205 = vsel %vm2841, %v7141, %v5853
  %v7206 = vsel %vm2841, %v7142, %v5855
  %v7207 = vsel %vm2841, %v7143, %v5857
  %v7208 = vsel %vm2841, %v7144, %v5859
  %v7209 = vsel %vm2841, %v7145, %v5861
  %v7210 = vsel %vm2841, %v7146, %v5863
  %v7211 = vsel %vm2841, %v7147, %v5865
  %v7212 = vsel %vm2841, %v7148, %v5867
  %v7213 = vsel %vm2841, %v7149, %v5869
  %v7214 = vsel %vm2906, %v7150, %v5999
  %v7215 = vsel %vm2906, %v7151, %v6001
  %v7216 = vsel %vm2906, %v7152, %v6003
  %v7217 = vsel %vm2906, %v7153, %v6005
  %v7218 = vsel %vm2906, %v7154, %v6007
  %v7219 = vsel %vm2906, %v7155, %v6009
  %v7220 = vsel %vm2906, %v7156, %v6011
  %v7221 = vsel %vm2906, %v7157, %v6013
  %v7222 = vsel %vm2906, %v7158, %v6015
  %v7223 = vsel %vm2906, %v7159, %v6017
  %v7224 = vsel %vm2906, %v7160, %v6019
  %v7225 = vsel %vm2906, %v7161, %v6021
  %v7226 = vsel %vm2906, %v7162, %v6023
  %v7227 = vsel %vm2906, %v7163, %v6025
  %v7228 = vsel %vm2906, %v7164, %v6027
  %v7229 = vsel %vm2906, %v7165, %v6029
  %v7230 = vsel %vm2906, %v7166, %v6031
  %v7231 = vsel %vm2906, %v7167, %v6033
  %v7232 = vsel %vm2906, %v7168, %v6035
  %v7233 = vsel %vm2906, %v7169, %v6037
  %v7234 = vsel %vm2906, %v7170, %v6039
  %v7235 = vsel %vm2906, %v7171, %v6041
  %v7236 = vsel %vm2906, %v7172, %v6043
  %v7237 = vsel %vm2906, %v7173, %v6045
  %v7238 = vsel %vm2906, %v7174, %v6047
  %v7239 = vsel %vm2906, %v7175, %v6049
  %v7240 = vsel %vm2906, %v7176, %v6051
  %v7241 = vsel %vm2906, %v7177, %v6053
  %v7242 = vsel %vm2906, %v7178, %v6055
  %v7243 = vsel %vm2906, %v7179, %v6057
  %v7244 = vsel %vm2906, %v7180, %v6059
  %v7245 = vsel %vm2906, %v7181, %v6061
  %v7246 = vsel %vm2906, %v7182, %v6063
  %v7247 = vsel %vm2906, %v7183, %v6065
  %v7248 = vsel %vm2906, %v7184, %v6067
  %v7249 = vsel %vm2906, %v7185, %v6069
  %v7250 = vsel %vm2906, %v7186, %v6071
  %v7251 = vsel %vm2906, %v7187, %v6073
  %v7252 = vsel %vm2906, %v7188, %v6075
  %v7253 = vsel %vm2906, %v7189, %v6077
  %v7254 = vsel %vm2906, %v7190, %v6079
  %v7255 = vsel %vm2906, %v7191, %v6081
  %v7256 = vsel %vm2906, %v7192, %v6083
  %v7257 = vsel %vm2906, %v7193, %v6085
  %v7258 = vsel %vm2906, %v7194, %v6087
  %v7259 = vsel %vm2906, %v7195, %v6089
  %v7260 = vsel %vm2906, %v7196, %v6091
  %v7261 = vsel %vm2906, %v7197, %v6093
  %v7262 = vsel %vm2906, %v7198, %v6095
  %v7263 = vsel %vm2906, %v7199, %v6097
  %v7264 = vsel %vm2906, %v7200, %v6099
  %v7265 = vsel %vm2906, %v7201, %v6101
  %v7266 = vsel %vm2906, %v7202, %v6103
  %v7267 = vsel %vm2906, %v7203, %v6105
  %v7268 = vsel %vm2906, %v7204, %v6107
  %v7269 = vsel %vm2906, %v7205, %v6109
  %v7270 = vsel %vm2906, %v7206, %v6111
  %v7271 = vsel %vm2906, %v7207, %v6113
  %v7272 = vsel %vm2906, %v7208, %v6115
  %v7273 = vsel %vm2906, %v7209, %v6117
  %v7274 = vsel %vm2906, %v7210, %v6119
  %v7275 = vsel %vm2906, %v7211, %v6121
  %v7276 = vsel %vm2906, %v7212, %v6123
  %v7277 = vsel %vm2906, %v7213, %v6125
  %v7278 = vsel %vm2971, %v7214, %v6255
  %v7279 = vsel %vm2971, %v7215, %v6257
  %v7280 = vsel %vm2971, %v7216, %v6259
  %v7281 = vsel %vm2971, %v7217, %v6261
  %v7282 = vsel %vm2971, %v7218, %v6263
  %v7283 = vsel %vm2971, %v7219, %v6265
  %v7284 = vsel %vm2971, %v7220, %v6267
  %v7285 = vsel %vm2971, %v7221, %v6269
  %v7286 = vsel %vm2971, %v7222, %v6271
  %v7287 = vsel %vm2971, %v7223, %v6273
  %v7288 = vsel %vm2971, %v7224, %v6275
  %v7289 = vsel %vm2971, %v7225, %v6277
  %v7290 = vsel %vm2971, %v7226, %v6279
  %v7291 = vsel %vm2971, %v7227, %v6281
  %v7292 = vsel %vm2971, %v7228, %v6283
  %v7293 = vsel %vm2971, %v7229, %v6285
  %v7294 = vsel %vm2971, %v7230, %v6287
  %v7295 = vsel %vm2971, %v7231, %v6289
  %v7296 = vsel %vm2971, %v7232, %v6291
  %v7297 = vsel %vm2971, %v7233, %v6293
  %v7298 = vsel %vm2971, %v7234, %v6295
  %v7299 = vsel %vm2971, %v7235, %v6297
  %v7300 = vsel %vm2971, %v7236, %v6299
  %v7301 = vsel %vm2971, %v7237, %v6301
  %v7302 = vsel %vm2971, %v7238, %v6303
  %v7303 = vsel %vm2971, %v7239, %v6305
  %v7304 = vsel %vm2971, %v7240, %v6307
  %v7305 = vsel %vm2971, %v7241, %v6309
  %v7306 = vsel %vm2971, %v7242, %v6311
  %v7307 = vsel %vm2971, %v7243, %v6313
  %v7308 = vsel %vm2971, %v7244, %v6315
  %v7309 = vsel %vm2971, %v7245, %v6317
  %v7310 = vsel %vm2971, %v7246, %v6319
  %v7311 = vsel %vm2971, %v7247, %v6321
  %v7312 = vsel %vm2971, %v7248, %v6323
  %v7313 = vsel %vm2971, %v7249, %v6325
  %v7314 = vsel %vm2971, %v7250, %v6327
  %v7315 = vsel %vm2971, %v7251, %v6329
  %v7316 = vsel %vm2971, %v7252, %v6331
  %v7317 = vsel %vm2971, %v7253, %v6333
  %v7318 = vsel %vm2971, %v7254, %v6335
  %v7319 = vsel %vm2971, %v7255, %v6337
  %v7320 = vsel %vm2971, %v7256, %v6339
  %v7321 = vsel %vm2971, %v7257, %v6341
  %v7322 = vsel %vm2971, %v7258, %v6343
  %v7323 = vsel %vm2971, %v7259, %v6345
  %v7324 = vsel %vm2971, %v7260, %v6347
  %v7325 = vsel %vm2971, %v7261, %v6349
  %v7326 = vsel %vm2971, %v7262, %v6351
  %v7327 = vsel %vm2971, %v7263, %v6353
  %v7328 = vsel %vm2971, %v7264, %v6355
  %v7329 = vsel %vm2971, %v7265, %v6357
  %v7330 = vsel %vm2971, %v7266, %v6359
  %v7331 = vsel %vm2971, %v7267, %v6361
  %v7332 = vsel %vm2971, %v7268, %v6363
  %v7333 = vsel %vm2971, %v7269, %v6365
  %v7334 = vsel %vm2971, %v7270, %v6367
  %v7335 = vsel %vm2971, %v7271, %v6369
  %v7336 = vsel %vm2971, %v7272, %v6371
  %v7337 = vsel %vm2971, %v7273, %v6373
  %v7338 = vsel %vm2971, %v7274, %v6375
  %v7339 = vsel %vm2971, %v7275, %v6377
  %v7340 = vsel %vm2971, %v7276, %v6379
  %v7341 = vsel %vm2971, %v7277, %v6381
  %v7342 = vsel %vm3036, %v7278, %v6511
  %v7343 = vsel %vm3036, %v7279, %v6513
  %v7344 = vsel %vm3036, %v7280, %v6515
  %v7345 = vsel %vm3036, %v7281, %v6517
  %v7346 = vsel %vm3036, %v7282, %v6519
  %v7347 = vsel %vm3036, %v7283, %v6521
  %v7348 = vsel %vm3036, %v7284, %v6523
  %v7349 = vsel %vm3036, %v7285, %v6525
  %v7350 = vsel %vm3036, %v7286, %v6527
  %v7351 = vsel %vm3036, %v7287, %v6529
  %v7352 = vsel %vm3036, %v7288, %v6531
  %v7353 = vsel %vm3036, %v7289, %v6533
  %v7354 = vsel %vm3036, %v7290, %v6535
  %v7355 = vsel %vm3036, %v7291, %v6537
  %v7356 = vsel %vm3036, %v7292, %v6539
  %v7357 = vsel %vm3036, %v7293, %v6541
  %v7358 = vsel %vm3036, %v7294, %v6543
  %v7359 = vsel %vm3036, %v7295, %v6545
  %v7360 = vsel %vm3036, %v7296, %v6547
  %v7361 = vsel %vm3036, %v7297, %v6549
  %v7362 = vsel %vm3036, %v7298, %v6551
  %v7363 = vsel %vm3036, %v7299, %v6553
  %v7364 = vsel %vm3036, %v7300, %v6555
  %v7365 = vsel %vm3036, %v7301, %v6557
  %v7366 = vsel %vm3036, %v7302, %v6559
  %v7367 = vsel %vm3036, %v7303, %v6561
  %v7368 = vsel %vm3036, %v7304, %v6563
  %v7369 = vsel %vm3036, %v7305, %v6565
  %v7370 = vsel %vm3036, %v7306, %v6567
  %v7371 = vsel %vm3036, %v7307, %v6569
  %v7372 = vsel %vm3036, %v7308, %v6571
  %v7373 = vsel %vm3036, %v7309, %v6573
  %v7374 = vsel %vm3036, %v7310, %v6575
  %v7375 = vsel %vm3036, %v7311, %v6577
  %v7376 = vsel %vm3036, %v7312, %v6579
  %v7377 = vsel %vm3036, %v7313, %v6581
  %v7378 = vsel %vm3036, %v7314, %v6583
  %v7379 = vsel %vm3036, %v7315, %v6585
  %v7380 = vsel %vm3036, %v7316, %v6587
  %v7381 = vsel %vm3036, %v7317, %v6589
  %v7382 = vsel %vm3036, %v7318, %v6591
  %v7383 = vsel %vm3036, %v7319, %v6593
  %v7384 = vsel %vm3036, %v7320, %v6595
  %v7385 = vsel %vm3036, %v7321, %v6597
  %v7386 = vsel %vm3036, %v7322, %v6599
  %v7387 = vsel %vm3036, %v7323, %v6601
  %v7388 = vsel %vm3036, %v7324, %v6603
  %v7389 = vsel %vm3036, %v7325, %v6605
  %v7390 = vsel %vm3036, %v7326, %v6607
  %v7391 = vsel %vm3036, %v7327, %v6609
  %v7392 = vsel %vm3036, %v7328, %v6611
  %v7393 = vsel %vm3036, %v7329, %v6613
  %v7394 = vsel %vm3036, %v7330, %v6615
  %v7395 = vsel %vm3036, %v7331, %v6617
  %v7396 = vsel %vm3036, %v7332, %v6619
  %v7397 = vsel %vm3036, %v7333, %v6621
  %v7398 = vsel %vm3036, %v7334, %v6623
  %v7399 = vsel %vm3036, %v7335, %v6625
  %v7400 = vsel %vm3036, %v7336, %v6627
  %v7401 = vsel %vm3036, %v7337, %v6629
  %v7402 = vsel %vm3036, %v7338, %v6631
  %v7403 = vsel %vm3036, %v7339, %v6633
  %v7404 = vsel %vm3036, %v7340, %v6635
  %v7405 = vsel %vm3036, %v7341, %v6637
  %v7406 = vsel %vm3101, %v7342, %v6767
  %v7407 = vsel %vm3101, %v7343, %v6769
  %v7408 = vsel %vm3101, %v7344, %v6771
  %v7409 = vsel %vm3101, %v7345, %v6773
  %v7410 = vsel %vm3101, %v7346, %v6775
  %v7411 = vsel %vm3101, %v7347, %v6777
  %v7412 = vsel %vm3101, %v7348, %v6779
  %v7413 = vsel %vm3101, %v7349, %v6781
  %v7414 = vsel %vm3101, %v7350, %v6783
  %v7415 = vsel %vm3101, %v7351, %v6785
  %v7416 = vsel %vm3101, %v7352, %v6787
  %v7417 = vsel %vm3101, %v7353, %v6789
  %v7418 = vsel %vm3101, %v7354, %v6791
  %v7419 = vsel %vm3101, %v7355, %v6793
  %v7420 = vsel %vm3101, %v7356, %v6795
  %v7421 = vsel %vm3101, %v7357, %v6797
  %v7422 = vsel %vm3101, %v7358, %v6799
  %v7423 = vsel %vm3101, %v7359, %v6801
  %v7424 = vsel %vm3101, %v7360, %v6803
  %v7425 = vsel %vm3101, %v7361, %v6805
  %v7426 = vsel %vm3101, %v7362, %v6807
  %v7427 = vsel %vm3101, %v7363, %v6809
  %v7428 = vsel %vm3101, %v7364, %v6811
  %v7429 = vsel %vm3101, %v7365, %v6813
  %v7430 = vsel %vm3101, %v7366, %v6815
  %v7431 = vsel %vm3101, %v7367, %v6817
  %v7432 = vsel %vm3101, %v7368, %v6819
  %v7433 = vsel %vm3101, %v7369, %v6821
  %v7434 = vsel %vm3101, %v7370, %v6823
  %v7435 = vsel %vm3101, %v7371, %v6825
  %v7436 = vsel %vm3101, %v7372, %v6827
  %v7437 = vsel %vm3101, %v7373, %v6829
  %v7438 = vsel %vm3101, %v7374, %v6831
  %v7439 = vsel %vm3101, %v7375, %v6833
  %v7440 = vsel %vm3101, %v7376, %v6835
  %v7441 = vsel %vm3101, %v7377, %v6837
  %v7442 = vsel %vm3101, %v7378, %v6839
  %v7443 = vsel %vm3101, %v7379, %v6841
  %v7444 = vsel %vm3101, %v7380, %v6843
  %v7445 = vsel %vm3101, %v7381, %v6845
  %v7446 = vsel %vm3101, %v7382, %v6847
  %v7447 = vsel %vm3101, %v7383, %v6849
  %v7448 = vsel %vm3101, %v7384, %v6851
  %v7449 = vsel %vm3101, %v7385, %v6853
  %v7450 = vsel %vm3101, %v7386, %v6855
  %v7451 = vsel %vm3101, %v7387, %v6857
  %v7452 = vsel %vm3101, %v7388, %v6859
  %v7453 = vsel %vm3101, %v7389, %v6861
  %v7454 = vsel %vm3101, %v7390, %v6863
  %v7455 = vsel %vm3101, %v7391, %v6865
  %v7456 = vsel %vm3101, %v7392, %v6867
  %v7457 = vsel %vm3101, %v7393, %v6869
  %v7458 = vsel %vm3101, %v7394, %v6871
  %v7459 = vsel %vm3101, %v7395, %v6873
  %v7460 = vsel %vm3101, %v7396, %v6875
  %v7461 = vsel %vm3101, %v7397, %v6877
  %v7462 = vsel %vm3101, %v7398, %v6879
  %v7463 = vsel %vm3101, %v7399, %v6881
  %v7464 = vsel %vm3101, %v7400, %v6883
  %v7465 = vsel %vm3101, %v7401, %v6885
  %v7466 = vsel %vm3101, %v7402, %v6887
  %v7467 = vsel %vm3101, %v7403, %v6889
  %v7468 = vsel %vm3101, %v7404, %v6891
  %v7469 = vsel %vm3101, %v7405, %v6893
  %v7470 = vld [vmem:[%s3] sm:$0xff]
  %v7471 = vld [vmem:[%s3 + $0x8] sm:$0xff]
  %v7472 = vld [vmem:[%s3 + $0x10] sm:$0xff]
  %v7473 = vld [vmem:[%s3 + $0x18] sm:$0xff]
  %v7474 = vld [vmem:[%s3 + $0x20] sm:$0xf]
  %v7476 = vsel %vm3171, %v7406, 0
  %v7479 = vsel %vm3171, %v7407, 0
  %v7482 = vsel %vm3171, %v7408, 0
  %v7485 = vsel %vm3171, %v7409, 0
  %v7488 = vsel %vm3171, %v7410, 0
  %v7491 = vsel %vm3171, %v7411, 0
  %v7494 = vsel %vm3171, %v7412, 0
  %v7497 = vsel %vm3171, %v7413, 0
  %v7500 = vsel %vm3171, %v7414, 0
  %v7503 = vsel %vm3171, %v7415, 0
  %v7506 = vsel %vm3171, %v7416, 0
  %v7509 = vsel %vm3171, %v7417, 0
  %v7512 = vsel %vm3171, %v7418, 0
  %v7515 = vsel %vm3171, %v7419, 0
  %v7518 = vsel %vm3171, %v7420, 0
  %v7521 = vsel %vm3171, %v7421, 0
  %v7524 = vsel %vm3171, %v7422, 0
  %v7527 = vsel %vm3171, %v7423, 0
  %v7530 = vsel %vm3171, %v7424, 0
  %v7533 = vsel %vm3171, %v7425, 0
  %v7536 = vsel %vm3171, %v7426, 0
  %v7539 = vsel %vm3171, %v7427, 0
  %v7542 = vsel %vm3171, %v7428, 0
  %v7545 = vsel %vm3171, %v7429, 0
  %v7548 = vsel %vm3171, %v7430, 0
  %v7551 = vsel %vm3171, %v7431, 0
  %v7554 = vsel %vm3171, %v7432, 0
  %v7557 = vsel %vm3171, %v7433, 0
  %v7560 = vsel %vm3171, %v7434, 0
  %v7563 = vsel %vm3171, %v7435, 0
  %v7566 = vsel %vm3171, %v7436, 0
  %v7569 = vsel %vm3171, %v7437, 0
  %v7572 = vsel %vm3171, %v7438, 0
  %v7575 = vsel %vm3171, %v7439, 0
  %v7578 = vsel %vm3171, %v7440, 0
  %v7581 = vsel %vm3171, %v7441, 0
  %v7584 = vsel %vm3171, %v7442, 0
  %v7587 = vsel %vm3171, %v7443, 0
  %v7590 = vsel %vm3171, %v7444, 0
  %v7593 = vsel %vm3171, %v7445, 0
  %v7596 = vsel %vm3171, %v7446, 0
  %v7599 = vsel %vm3171, %v7447, 0
  %v7602 = vsel %vm3171, %v7448, 0
  %v7605 = vsel %vm3171, %v7449, 0
  %v7608 = vsel %vm3171, %v7450, 0
  %v7611 = vsel %vm3171, %v7451, 0
  %v7614 = vsel %vm3171, %v7452, 0
  %v7617 = vsel %vm3171, %v7453, 0
  %v7620 = vsel %vm3171, %v7454, 0
  %v7623 = vsel %vm3171, %v7455, 0
  %v7626 = vsel %vm3171, %v7456, 0
  %v7629 = vsel %vm3171, %v7457, 0
  %v7632 = vsel %vm3171, %v7458, 0
  %v7635 = vsel %vm3171, %v7459, 0
  %v7638 = vsel %vm3171, %v7460, 0
  %v7641 = vsel %vm3171, %v7461, 0
  %v7644 = vsel %vm3171, %v7462, 0
  %v7647 = vsel %vm3171, %v7463, 0
  %v7650 = vsel %vm3171, %v7464, 0
  %v7653 = vsel %vm3171, %v7465, 0
  %v7656 = vsel %vm3171, %v7466, 0
  %v7659 = vsel %vm3171, %v7467, 0
  %v7662 = vsel %vm3171, %v7468, 0
  %v7665 = vsel %vm3171, %v7469, 0
  %v7668 = vsel %vm3364, %v7474, 0
  %7670 = vmatpush.msra.mxu0 0.0
  %7671 = vmatpush.msra.mxu0 0.0
  %7672 = vmatpush.msra.mxu0 0.0
  %7673 = vmatpush.msra.mxu0 0.0
  %7674 = vmatpush.msra.mxu0 0.0
  %7675 = vmatpush.msra.mxu0 0.0
  %7676 = vmatpush.msra.mxu0 0.0
  %7677 = vmatpush.msra.mxu0 0.0
  %7678 = vmatpush.msra.mxu0 0.0
  %7679 = vmatpush.msra.mxu0 0.0
  %7680 = vmatpush.msra.mxu0 0.0
  %7681 = vmatpush.msra.mxu0 %v7668
  %7682 = vmatpush.msra.mxu0 %v7473
  %7683 = vmatpush.msra.mxu0 %v7472
  %7684 = vmatpush.msra.mxu0 %v7471
  %7685 = vmatpush.msra.mxu0 %v7470
  %7686 = vmatmul.f32.gmra.mxu0 %v7476
  %v7687 = vpop.f32.mrf.mxu0
  %v7688 = vadd.f32 0.0, %v7687
  %7689 = vmatmul.f32.gmra.mxu0 %v7479
  %v7690 = vpop.f32.mrf.mxu0
  %v7691 = vadd.f32 0.0, %v7690
  %7692 = vmatmul.f32.gmra.mxu0 %v7482
  %v7693 = vpop.f32.mrf.mxu0
  %v7694 = vadd.f32 0.0, %v7693
  %7695 = vmatmul.f32.gmra.mxu0 %v7485
  %v7696 = vpop.f32.mrf.mxu0
  %v7697 = vadd.f32 0.0, %v7696
  %7698 = vmatmul.f32.gmra.mxu0 %v7488
  %v7699 = vpop.f32.mrf.mxu0
  %v7700 = vadd.f32 0.0, %v7699
  %7701 = vmatmul.f32.gmra.mxu0 %v7491
  %v7702 = vpop.f32.mrf.mxu0
  %v7703 = vadd.f32 0.0, %v7702
  %7704 = vmatmul.f32.gmra.mxu0 %v7494
  %v7705 = vpop.f32.mrf.mxu0
  %v7706 = vadd.f32 0.0, %v7705
  %7707 = vmatmul.f32.gmra.mxu0 %v7497
  %v7708 = vpop.f32.mrf.mxu0
  %v7709 = vadd.f32 0.0, %v7708
  %7710 = vmatmul.f32.gmra.mxu0 %v7500
  %v7711 = vpop.f32.mrf.mxu0
  %v7712 = vadd.f32 0.0, %v7711
  %7713 = vmatmul.f32.gmra.mxu0 %v7503
  %v7714 = vpop.f32.mrf.mxu0
  %v7715 = vadd.f32 0.0, %v7714
  %7716 = vmatmul.f32.gmra.mxu0 %v7506
  %v7717 = vpop.f32.mrf.mxu0
  %v7718 = vadd.f32 0.0, %v7717
  %7719 = vmatmul.f32.gmra.mxu0 %v7509
  %v7720 = vpop.f32.mrf.mxu0
  %v7721 = vadd.f32 0.0, %v7720
  %7722 = vmatmul.f32.gmra.mxu0 %v7512
  %v7723 = vpop.f32.mrf.mxu0
  %v7724 = vadd.f32 0.0, %v7723
  %7725 = vmatmul.f32.gmra.mxu0 %v7515
  %v7726 = vpop.f32.mrf.mxu0
  %v7727 = vadd.f32 0.0, %v7726
  %7728 = vmatmul.f32.gmra.mxu0 %v7518
  %v7729 = vpop.f32.mrf.mxu0
  %v7730 = vadd.f32 0.0, %v7729
  %7731 = vmatmul.f32.gmra.mxu0 %v7521
  %v7732 = vpop.f32.mrf.mxu0
  %v7733 = vadd.f32 0.0, %v7732
  %7734 = vmatmul.f32.gmra.mxu0 %v7524
  %v7735 = vpop.f32.mrf.mxu0
  %v7736 = vadd.f32 0.0, %v7735
  %7737 = vmatmul.f32.gmra.mxu0 %v7527
  %v7738 = vpop.f32.mrf.mxu0
  %v7739 = vadd.f32 0.0, %v7738
  %7740 = vmatmul.f32.gmra.mxu0 %v7530
  %v7741 = vpop.f32.mrf.mxu0
  %v7742 = vadd.f32 0.0, %v7741
  %7743 = vmatmul.f32.gmra.mxu0 %v7533
  %v7744 = vpop.f32.mrf.mxu0
  %v7745 = vadd.f32 0.0, %v7744
  %7746 = vmatmul.f32.gmra.mxu0 %v7536
  %v7747 = vpop.f32.mrf.mxu0
  %v7748 = vadd.f32 0.0, %v7747
  %7749 = vmatmul.f32.gmra.mxu0 %v7539
  %v7750 = vpop.f32.mrf.mxu0
  %v7751 = vadd.f32 0.0, %v7750
  %7752 = vmatmul.f32.gmra.mxu0 %v7542
  %v7753 = vpop.f32.mrf.mxu0
  %v7754 = vadd.f32 0.0, %v7753
  %7755 = vmatmul.f32.gmra.mxu0 %v7545
  %v7756 = vpop.f32.mrf.mxu0
  %v7757 = vadd.f32 0.0, %v7756
  %7758 = vmatmul.f32.gmra.mxu0 %v7548
  %v7759 = vpop.f32.mrf.mxu0
  %v7760 = vadd.f32 0.0, %v7759
  %7761 = vmatmul.f32.gmra.mxu0 %v7551
  %v7762 = vpop.f32.mrf.mxu0
  %v7763 = vadd.f32 0.0, %v7762
  %7764 = vmatmul.f32.gmra.mxu0 %v7554
  %v7765 = vpop.f32.mrf.mxu0
  %v7766 = vadd.f32 0.0, %v7765
  %7767 = vmatmul.f32.gmra.mxu0 %v7557
  %v7768 = vpop.f32.mrf.mxu0
  %v7769 = vadd.f32 0.0, %v7768
  %7770 = vmatmul.f32.gmra.mxu0 %v7560
  %v7771 = vpop.f32.mrf.mxu0
  %v7772 = vadd.f32 0.0, %v7771
  %7773 = vmatmul.f32.gmra.mxu0 %v7563
  %v7774 = vpop.f32.mrf.mxu0
  %v7775 = vadd.f32 0.0, %v7774
  %7776 = vmatmul.f32.gmra.mxu0 %v7566
  %v7777 = vpop.f32.mrf.mxu0
  %v7778 = vadd.f32 0.0, %v7777
  %7779 = vmatmul.f32.gmra.mxu0 %v7569
  %v7780 = vpop.f32.mrf.mxu0
  %v7781 = vadd.f32 0.0, %v7780
  %7782 = vmatmul.f32.gmra.mxu0 %v7572
  %v7783 = vpop.f32.mrf.mxu0
  %v7784 = vadd.f32 0.0, %v7783
  %7785 = vmatmul.f32.gmra.mxu0 %v7575
  %v7786 = vpop.f32.mrf.mxu0
  %v7787 = vadd.f32 0.0, %v7786
  %7788 = vmatmul.f32.gmra.mxu0 %v7578
  %v7789 = vpop.f32.mrf.mxu0
  %v7790 = vadd.f32 0.0, %v7789
  %7791 = vmatmul.f32.gmra.mxu0 %v7581
  %v7792 = vpop.f32.mrf.mxu0
  %v7793 = vadd.f32 0.0, %v7792
  %7794 = vmatmul.f32.gmra.mxu0 %v7584
  %v7795 = vpop.f32.mrf.mxu0
  %v7796 = vadd.f32 0.0, %v7795
  %7797 = vmatmul.f32.gmra.mxu0 %v7587
  %v7798 = vpop.f32.mrf.mxu0
  %v7799 = vadd.f32 0.0, %v7798
  %7800 = vmatmul.f32.gmra.mxu0 %v7590
  %v7801 = vpop.f32.mrf.mxu0
  %v7802 = vadd.f32 0.0, %v7801
  %7803 = vmatmul.f32.gmra.mxu0 %v7593
  %v7804 = vpop.f32.mrf.mxu0
  %v7805 = vadd.f32 0.0, %v7804
  %7806 = vmatmul.f32.gmra.mxu0 %v7596
  %v7807 = vpop.f32.mrf.mxu0
  %v7808 = vadd.f32 0.0, %v7807
  %7809 = vmatmul.f32.gmra.mxu0 %v7599
  %v7810 = vpop.f32.mrf.mxu0
  %v7811 = vadd.f32 0.0, %v7810
  %7812 = vmatmul.f32.gmra.mxu0 %v7602
  %v7813 = vpop.f32.mrf.mxu0
  %v7814 = vadd.f32 0.0, %v7813
  %7815 = vmatmul.f32.gmra.mxu0 %v7605
  %v7816 = vpop.f32.mrf.mxu0
  %v7817 = vadd.f32 0.0, %v7816
  %7818 = vmatmul.f32.gmra.mxu0 %v7608
  %v7819 = vpop.f32.mrf.mxu0
  %v7820 = vadd.f32 0.0, %v7819
  %7821 = vmatmul.f32.gmra.mxu0 %v7611
  %v7822 = vpop.f32.mrf.mxu0
  %v7823 = vadd.f32 0.0, %v7822
  %7824 = vmatmul.f32.gmra.mxu0 %v7614
  %v7825 = vpop.f32.mrf.mxu0
  %v7826 = vadd.f32 0.0, %v7825
  %7827 = vmatmul.f32.gmra.mxu0 %v7617
  %v7828 = vpop.f32.mrf.mxu0
  %v7829 = vadd.f32 0.0, %v7828
  %7830 = vmatmul.f32.gmra.mxu0 %v7620
  %v7831 = vpop.f32.mrf.mxu0
  %v7832 = vadd.f32 0.0, %v7831
  %7833 = vmatmul.f32.gmra.mxu0 %v7623
  %v7834 = vpop.f32.mrf.mxu0
  %v7835 = vadd.f32 0.0, %v7834
  %7836 = vmatmul.f32.gmra.mxu0 %v7626
  %v7837 = vpop.f32.mrf.mxu0
  %v7838 = vadd.f32 0.0, %v7837
  %7839 = vmatmul.f32.gmra.mxu0 %v7629
  %v7840 = vpop.f32.mrf.mxu0
  %v7841 = vadd.f32 0.0, %v7840
  %7842 = vmatmul.f32.gmra.mxu0 %v7632
  %v7843 = vpop.f32.mrf.mxu0
  %v7844 = vadd.f32 0.0, %v7843
  %7845 = vmatmul.f32.gmra.mxu0 %v7635
  %v7846 = vpop.f32.mrf.mxu0
  %v7847 = vadd.f32 0.0, %v7846
  %7848 = vmatmul.f32.gmra.mxu0 %v7638
  %v7849 = vpop.f32.mrf.mxu0
  %v7850 = vadd.f32 0.0, %v7849
  %7851 = vmatmul.f32.gmra.mxu0 %v7641
  %v7852 = vpop.f32.mrf.mxu0
  %v7853 = vadd.f32 0.0, %v7852
  %7854 = vmatmul.f32.gmra.mxu0 %v7644
  %v7855 = vpop.f32.mrf.mxu0
  %v7856 = vadd.f32 0.0, %v7855
  %7857 = vmatmul.f32.gmra.mxu0 %v7647
  %v7858 = vpop.f32.mrf.mxu0
  %v7859 = vadd.f32 0.0, %v7858
  %7860 = vmatmul.f32.gmra.mxu0 %v7650
  %v7861 = vpop.f32.mrf.mxu0
  %v7862 = vadd.f32 0.0, %v7861
  %7863 = vmatmul.f32.gmra.mxu0 %v7653
  %v7864 = vpop.f32.mrf.mxu0
  %v7865 = vadd.f32 0.0, %v7864
  %7866 = vmatmul.f32.gmra.mxu0 %v7656
  %v7867 = vpop.f32.mrf.mxu0
  %v7868 = vadd.f32 0.0, %v7867
  %7869 = vmatmul.f32.gmra.mxu0 %v7659
  %v7870 = vpop.f32.mrf.mxu0
  %v7871 = vadd.f32 0.0, %v7870
  %7872 = vmatmul.f32.gmra.mxu0 %v7662
  %v7873 = vpop.f32.mrf.mxu0
  %v7874 = vadd.f32 0.0, %v7873
  %7875 = vmatmul.f32.gmra.mxu0 %v7665
  %v7876 = vpop.f32.mrf.mxu0
  %v7877 = vadd.f32 0.0, %v7876
  %7878 = vdwg.mxu0
  %v7879 = vmul.f32 %v7688, 0.23112509
  %v7880 = vmul.f32 %v7691, 0.23112509
  %v7881 = vmul.f32 %v7694, 0.23112509
  %v7882 = vmul.f32 %v7697, 0.23112509
  %v7883 = vmul.f32 %v7700, 0.23112509
  %v7884 = vmul.f32 %v7703, 0.23112509
  %v7885 = vmul.f32 %v7706, 0.23112509
  %v7886 = vmul.f32 %v7709, 0.23112509
  %v7887 = vmul.f32 %v7712, 0.23112509
  %v7888 = vmul.f32 %v7715, 0.23112509
  %v7889 = vmul.f32 %v7718, 0.23112509
  %v7890 = vmul.f32 %v7721, 0.23112509
  %v7891 = vmul.f32 %v7724, 0.23112509
  %v7892 = vmul.f32 %v7727, 0.23112509
  %v7893 = vmul.f32 %v7730, 0.23112509
  %v7894 = vmul.f32 %v7733, 0.23112509
  %v7895 = vmul.f32 %v7736, 0.23112509
  %v7896 = vmul.f32 %v7739, 0.23112509
  %v7897 = vmul.f32 %v7742, 0.23112509
  %v7898 = vmul.f32 %v7745, 0.23112509
  %v7899 = vmul.f32 %v7748, 0.23112509
  %v7900 = vmul.f32 %v7751, 0.23112509
  %v7901 = vmul.f32 %v7754, 0.23112509
  %v7902 = vmul.f32 %v7757, 0.23112509
  %v7903 = vmul.f32 %v7760, 0.23112509
  %v7904 = vmul.f32 %v7763, 0.23112509
  %v7905 = vmul.f32 %v7766, 0.23112509
  %v7906 = vmul.f32 %v7769, 0.23112509
  %v7907 = vmul.f32 %v7772, 0.23112509
  %v7908 = vmul.f32 %v7775, 0.23112509
  %v7909 = vmul.f32 %v7778, 0.23112509
  %v7910 = vmul.f32 %v7781, 0.23112509
  %v7911 = vmul.f32 %v7784, 0.23112509
  %v7912 = vmul.f32 %v7787, 0.23112509
  %v7913 = vmul.f32 %v7790, 0.23112509
  %v7914 = vmul.f32 %v7793, 0.23112509
  %v7915 = vmul.f32 %v7796, 0.23112509
  %v7916 = vmul.f32 %v7799, 0.23112509
  %v7917 = vmul.f32 %v7802, 0.23112509
  %v7918 = vmul.f32 %v7805, 0.23112509
  %v7919 = vmul.f32 %v7808, 0.23112509
  %v7920 = vmul.f32 %v7811, 0.23112509
  %v7921 = vmul.f32 %v7814, 0.23112509
  %v7922 = vmul.f32 %v7817, 0.23112509
  %v7923 = vmul.f32 %v7820, 0.23112509
  %v7924 = vmul.f32 %v7823, 0.23112509
  %v7925 = vmul.f32 %v7826, 0.23112509
  %v7926 = vmul.f32 %v7829, 0.23112509
  %v7927 = vmul.f32 %v7832, 0.23112509
  %v7928 = vmul.f32 %v7835, 0.23112509
  %v7929 = vmul.f32 %v7838, 0.23112509
  %v7930 = vmul.f32 %v7841, 0.23112509
  %v7931 = vmul.f32 %v7844, 0.23112509
  %v7932 = vmul.f32 %v7847, 0.23112509
  %v7933 = vmul.f32 %v7850, 0.23112509
  %v7934 = vmul.f32 %v7853, 0.23112509
  %v7935 = vmul.f32 %v7856, 0.23112509
  %v7936 = vmul.f32 %v7859, 0.23112509
  %v7937 = vmul.f32 %v7862, 0.23112509
  %v7938 = vmul.f32 %v7865, 0.23112509
  %v7939 = vmul.f32 %v7868, 0.23112509
  %v7940 = vmul.f32 %v7871, 0.23112509
  %v7941 = vmul.f32 %v7874, 0.23112509
  %v7942 = vmul.f32 %v7877, 0.23112509
  %v7943 = vld [vmem:[%s4] sm:$0x1]
  %v7945 = vperm.slane %v7943, 0
  %v7947 = vadd.f32 %v7879, %v7945
  %v7948 = vadd.f32 %v7880, %v7945
  %v7949 = vadd.f32 %v7881, %v7945
  %v7950 = vadd.f32 %v7882, %v7945
  %v7951 = vadd.f32 %v7883, %v7945
  %v7952 = vadd.f32 %v7884, %v7945
  %v7953 = vadd.f32 %v7885, %v7945
  %v7954 = vadd.f32 %v7886, %v7945
  %v7955 = vadd.f32 %v7887, %v7945
  %v7956 = vadd.f32 %v7888, %v7945
  %v7957 = vadd.f32 %v7889, %v7945
  %v7958 = vadd.f32 %v7890, %v7945
  %v7959 = vadd.f32 %v7891, %v7945
  %v7960 = vadd.f32 %v7892, %v7945
  %v7961 = vadd.f32 %v7893, %v7945
  %v7962 = vadd.f32 %v7894, %v7945
  %v7963 = vadd.f32 %v7895, %v7945
  %v7964 = vadd.f32 %v7896, %v7945
  %v7965 = vadd.f32 %v7897, %v7945
  %v7966 = vadd.f32 %v7898, %v7945
  %v7967 = vadd.f32 %v7899, %v7945
  %v7968 = vadd.f32 %v7900, %v7945
  %v7969 = vadd.f32 %v7901, %v7945
  %v7970 = vadd.f32 %v7902, %v7945
  %v7971 = vadd.f32 %v7903, %v7945
  %v7972 = vadd.f32 %v7904, %v7945
  %v7973 = vadd.f32 %v7905, %v7945
  %v7974 = vadd.f32 %v7906, %v7945
  %v7975 = vadd.f32 %v7907, %v7945
  %v7976 = vadd.f32 %v7908, %v7945
  %v7977 = vadd.f32 %v7909, %v7945
  %v7978 = vadd.f32 %v7910, %v7945
  %v7979 = vadd.f32 %v7911, %v7945
  %v7980 = vadd.f32 %v7912, %v7945
  %v7981 = vadd.f32 %v7913, %v7945
  %v7982 = vadd.f32 %v7914, %v7945
  %v7983 = vadd.f32 %v7915, %v7945
  %v7984 = vadd.f32 %v7916, %v7945
  %v7985 = vadd.f32 %v7917, %v7945
  %v7986 = vadd.f32 %v7918, %v7945
  %v7987 = vadd.f32 %v7919, %v7945
  %v7988 = vadd.f32 %v7920, %v7945
  %v7989 = vadd.f32 %v7921, %v7945
  %v7990 = vadd.f32 %v7922, %v7945
  %v7991 = vadd.f32 %v7923, %v7945
  %v7992 = vadd.f32 %v7924, %v7945
  %v7993 = vadd.f32 %v7925, %v7945
  %v7994 = vadd.f32 %v7926, %v7945
  %v7995 = vadd.f32 %v7927, %v7945
  %v7996 = vadd.f32 %v7928, %v7945
  %v7997 = vadd.f32 %v7929, %v7945
  %v7998 = vadd.f32 %v7930, %v7945
  %v7999 = vadd.f32 %v7931, %v7945
  %v8000 = vadd.f32 %v7932, %v7945
  %v8001 = vadd.f32 %v7933, %v7945
  %v8002 = vadd.f32 %v7934, %v7945
  %v8003 = vadd.f32 %v7935, %v7945
  %v8004 = vadd.f32 %v7936, %v7945
  %v8005 = vadd.f32 %v7937, %v7945
  %v8006 = vadd.f32 %v7938, %v7945
  %v8007 = vadd.f32 %v7939, %v7945
  %v8008 = vadd.f32 %v7940, %v7945
  %v8009 = vadd.f32 %v7941, %v7945
  %v8010 = vadd.f32 %v7942, %v7945
  %vm8011 = vcmp.ge.f32.partialorder %v7947, 0.0
  %vm8012 = vcmp.ge.f32.partialorder %v7948, 0.0
  %vm8013 = vcmp.ge.f32.partialorder %v7949, 0.0
  %vm8014 = vcmp.ge.f32.partialorder %v7950, 0.0
  %vm8015 = vcmp.ge.f32.partialorder %v7951, 0.0
  %vm8016 = vcmp.ge.f32.partialorder %v7952, 0.0
  %vm8017 = vcmp.ge.f32.partialorder %v7953, 0.0
  %vm8018 = vcmp.ge.f32.partialorder %v7954, 0.0
  %vm8019 = vcmp.ge.f32.partialorder %v7955, 0.0
  %vm8020 = vcmp.ge.f32.partialorder %v7956, 0.0
  %vm8021 = vcmp.ge.f32.partialorder %v7957, 0.0
  %vm8022 = vcmp.ge.f32.partialorder %v7958, 0.0
  %vm8023 = vcmp.ge.f32.partialorder %v7959, 0.0
  %vm8024 = vcmp.ge.f32.partialorder %v7960, 0.0
  %vm8025 = vcmp.ge.f32.partialorder %v7961, 0.0
  %vm8026 = vcmp.ge.f32.partialorder %v7962, 0.0
  %vm8027 = vcmp.ge.f32.partialorder %v7963, 0.0
  %vm8028 = vcmp.ge.f32.partialorder %v7964, 0.0
  %vm8029 = vcmp.ge.f32.partialorder %v7965, 0.0
  %vm8030 = vcmp.ge.f32.partialorder %v7966, 0.0
  %vm8031 = vcmp.ge.f32.partialorder %v7967, 0.0
  %vm8032 = vcmp.ge.f32.partialorder %v7968, 0.0
  %vm8033 = vcmp.ge.f32.partialorder %v7969, 0.0
  %vm8034 = vcmp.ge.f32.partialorder %v7970, 0.0
  %vm8035 = vcmp.ge.f32.partialorder %v7971, 0.0
  %vm8036 = vcmp.ge.f32.partialorder %v7972, 0.0
  %vm8037 = vcmp.ge.f32.partialorder %v7973, 0.0
  %vm8038 = vcmp.ge.f32.partialorder %v7974, 0.0
  %vm8039 = vcmp.ge.f32.partialorder %v7975, 0.0
  %vm8040 = vcmp.ge.f32.partialorder %v7976, 0.0
  %vm8041 = vcmp.ge.f32.partialorder %v7977, 0.0
  %vm8042 = vcmp.ge.f32.partialorder %v7978, 0.0
  %vm8043 = vcmp.ge.f32.partialorder %v7979, 0.0
  %vm8044 = vcmp.ge.f32.partialorder %v7980, 0.0
  %vm8045 = vcmp.ge.f32.partialorder %v7981, 0.0
  %vm8046 = vcmp.ge.f32.partialorder %v7982, 0.0
  %vm8047 = vcmp.ge.f32.partialorder %v7983, 0.0
  %vm8048 = vcmp.ge.f32.partialorder %v7984, 0.0
  %vm8049 = vcmp.ge.f32.partialorder %v7985, 0.0
  %vm8050 = vcmp.ge.f32.partialorder %v7986, 0.0
  %vm8051 = vcmp.ge.f32.partialorder %v7987, 0.0
  %vm8052 = vcmp.ge.f32.partialorder %v7988, 0.0
  %vm8053 = vcmp.ge.f32.partialorder %v7989, 0.0
  %vm8054 = vcmp.ge.f32.partialorder %v7990, 0.0
  %vm8055 = vcmp.ge.f32.partialorder %v7991, 0.0
  %vm8056 = vcmp.ge.f32.partialorder %v7992, 0.0
  %vm8057 = vcmp.ge.f32.partialorder %v7993, 0.0
  %vm8058 = vcmp.ge.f32.partialorder %v7994, 0.0
  %vm8059 = vcmp.ge.f32.partialorder %v7995, 0.0
  %vm8060 = vcmp.ge.f32.partialorder %v7996, 0.0
  %vm8061 = vcmp.ge.f32.partialorder %v7997, 0.0
  %vm8062 = vcmp.ge.f32.partialorder %v7998, 0.0
  %vm8063 = vcmp.ge.f32.partialorder %v7999, 0.0
  %vm8064 = vcmp.ge.f32.partialorder %v8000, 0.0
  %vm8065 = vcmp.ge.f32.partialorder %v8001, 0.0
  %vm8066 = vcmp.ge.f32.partialorder %v8002, 0.0
  %vm8067 = vcmp.ge.f32.partialorder %v8003, 0.0
  %vm8068 = vcmp.ge.f32.partialorder %v8004, 0.0
  %vm8069 = vcmp.ge.f32.partialorder %v8005, 0.0
  %vm8070 = vcmp.ge.f32.partialorder %v8006, 0.0
  %vm8071 = vcmp.ge.f32.partialorder %v8007, 0.0
  %vm8072 = vcmp.ge.f32.partialorder %v8008, 0.0
  %vm8073 = vcmp.ge.f32.partialorder %v8009, 0.0
  %vm8074 = vcmp.ge.f32.partialorder %v8010, 0.0
  %v8075 = vmul.f32 %v7947, 0.2
  %v8076 = vmul.f32 %v7948, 0.2
  %v8077 = vmul.f32 %v7949, 0.2
  %v8078 = vmul.f32 %v7950, 0.2
  %v8079 = vmul.f32 %v7951, 0.2
  %v8080 = vmul.f32 %v7952, 0.2
  %v8081 = vmul.f32 %v7953, 0.2
  %v8082 = vmul.f32 %v7954, 0.2
  %v8083 = vmul.f32 %v7955, 0.2
  %v8084 = vmul.f32 %v7956, 0.2
  %v8085 = vmul.f32 %v7957, 0.2
  %v8086 = vmul.f32 %v7958, 0.2
  %v8087 = vmul.f32 %v7959, 0.2
  %v8088 = vmul.f32 %v7960, 0.2
  %v8089 = vmul.f32 %v7961, 0.2
  %v8090 = vmul.f32 %v7962, 0.2
  %v8091 = vmul.f32 %v7963, 0.2
  %v8092 = vmul.f32 %v7964, 0.2
  %v8093 = vmul.f32 %v7965, 0.2
  %v8094 = vmul.f32 %v7966, 0.2
  %v8095 = vmul.f32 %v7967, 0.2
  %v8096 = vmul.f32 %v7968, 0.2
  %v8097 = vmul.f32 %v7969, 0.2
  %v8098 = vmul.f32 %v7970, 0.2
  %v8099 = vmul.f32 %v7971, 0.2
  %v8100 = vmul.f32 %v7972, 0.2
  %v8101 = vmul.f32 %v7973, 0.2
  %v8102 = vmul.f32 %v7974, 0.2
  %v8103 = vmul.f32 %v7975, 0.2
  %v8104 = vmul.f32 %v7976, 0.2
  %v8105 = vmul.f32 %v7977, 0.2
  %v8106 = vmul.f32 %v7978, 0.2
  %v8107 = vmul.f32 %v7979, 0.2
  %v8108 = vmul.f32 %v7980, 0.2
  %v8109 = vmul.f32 %v7981, 0.2
  %v8110 = vmul.f32 %v7982, 0.2
  %v8111 = vmul.f32 %v7983, 0.2
  %v8112 = vmul.f32 %v7984, 0.2
  %v8113 = vmul.f32 %v7985, 0.2
  %v8114 = vmul.f32 %v7986, 0.2
  %v8115 = vmul.f32 %v7987, 0.2
  %v8116 = vmul.f32 %v7988, 0.2
  %v8117 = vmul.f32 %v7989, 0.2
  %v8118 = vmul.f32 %v7990, 0.2
  %v8119 = vmul.f32 %v7991, 0.2
  %v8120 = vmul.f32 %v7992, 0.2
  %v8121 = vmul.f32 %v7993, 0.2
  %v8122 = vmul.f32 %v7994, 0.2
  %v8123 = vmul.f32 %v7995, 0.2
  %v8124 = vmul.f32 %v7996, 0.2
  %v8125 = vmul.f32 %v7997, 0.2
  %v8126 = vmul.f32 %v7998, 0.2
  %v8127 = vmul.f32 %v7999, 0.2
  %v8128 = vmul.f32 %v8000, 0.2
  %v8129 = vmul.f32 %v8001, 0.2
  %v8130 = vmul.f32 %v8002, 0.2
  %v8131 = vmul.f32 %v8003, 0.2
  %v8132 = vmul.f32 %v8004, 0.2
  %v8133 = vmul.f32 %v8005, 0.2
  %v8134 = vmul.f32 %v8006, 0.2
  %v8135 = vmul.f32 %v8007, 0.2
  %v8136 = vmul.f32 %v8008, 0.2
  %v8137 = vmul.f32 %v8009, 0.2
  %v8138 = vmul.f32 %v8010, 0.2
  %v8139 = vsel %vm8011, %v7947, %v8075
  %v8140 = vsel %vm8012, %v7948, %v8076
  %v8141 = vsel %vm8013, %v7949, %v8077
  %v8142 = vsel %vm8014, %v7950, %v8078
  %v8143 = vsel %vm8015, %v7951, %v8079
  %v8144 = vsel %vm8016, %v7952, %v8080
  %v8145 = vsel %vm8017, %v7953, %v8081
  %v8146 = vsel %vm8018, %v7954, %v8082
  %v8147 = vsel %vm8019, %v7955, %v8083
  %v8148 = vsel %vm8020, %v7956, %v8084
  %v8149 = vsel %vm8021, %v7957, %v8085
  %v8150 = vsel %vm8022, %v7958, %v8086
  %v8151 = vsel %vm8023, %v7959, %v8087
  %v8152 = vsel %vm8024, %v7960, %v8088
  %v8153 = vsel %vm8025, %v7961, %v8089
  %v8154 = vsel %vm8026, %v7962, %v8090
  %v8155 = vsel %vm8027, %v7963, %v8091
  %v8156 = vsel %vm8028, %v7964, %v8092
  %v8157 = vsel %vm8029, %v7965, %v8093
  %v8158 = vsel %vm8030, %v7966, %v8094
  %v8159 = vsel %vm8031, %v7967, %v8095
  %v8160 = vsel %vm8032, %v7968, %v8096
  %v8161 = vsel %vm8033, %v7969, %v8097
  %v8162 = vsel %vm8034, %v7970, %v8098
  %v8163 = vsel %vm8035, %v7971, %v8099
  %v8164 = vsel %vm8036, %v7972, %v8100
  %v8165 = vsel %vm8037, %v7973, %v8101
  %v8166 = vsel %vm8038, %v7974, %v8102
  %v8167 = vsel %vm8039, %v7975, %v8103
  %v8168 = vsel %vm8040, %v7976, %v8104
  %v8169 = vsel %vm8041, %v7977, %v8105
  %v8170 = vsel %vm8042, %v7978, %v8106
  %v8171 = vsel %vm8043, %v7979, %v8107
  %v8172 = vsel %vm8044, %v7980, %v8108
  %v8173 = vsel %vm8045, %v7981, %v8109
  %v8174 = vsel %vm8046, %v7982, %v8110
  %v8175 = vsel %vm8047, %v7983, %v8111
  %v8176 = vsel %vm8048, %v7984, %v8112
  %v8177 = vsel %vm8049, %v7985, %v8113
  %v8178 = vsel %vm8050, %v7986, %v8114
  %v8179 = vsel %vm8051, %v7987, %v8115
  %v8180 = vsel %vm8052, %v7988, %v8116
  %v8181 = vsel %vm8053, %v7989, %v8117
  %v8182 = vsel %vm8054, %v7990, %v8118
  %v8183 = vsel %vm8055, %v7991, %v8119
  %v8184 = vsel %vm8056, %v7992, %v8120
  %v8185 = vsel %vm8057, %v7993, %v8121
  %v8186 = vsel %vm8058, %v7994, %v8122
  %v8187 = vsel %vm8059, %v7995, %v8123
  %v8188 = vsel %vm8060, %v7996, %v8124
  %v8189 = vsel %vm8061, %v7997, %v8125
  %v8190 = vsel %vm8062, %v7998, %v8126
  %v8191 = vsel %vm8063, %v7999, %v8127
  %v8192 = vsel %vm8064, %v8000, %v8128
  %v8193 = vsel %vm8065, %v8001, %v8129
  %v8194 = vsel %vm8066, %v8002, %v8130
  %v8195 = vsel %vm8067, %v8003, %v8131
  %v8196 = vsel %vm8068, %v8004, %v8132
  %v8197 = vsel %vm8069, %v8005, %v8133
  %v8198 = vsel %vm8070, %v8006, %v8134
  %v8199 = vsel %vm8071, %v8007, %v8135
  %v8200 = vsel %vm8072, %v8008, %v8136
  %v8201 = vsel %vm8073, %v8009, %v8137
  %v8202 = vsel %vm8074, %v8010, %v8138
  %v8203 = vadd.f32 %v8139, %v8141
  %v8204 = vadd.f32 %v8140, %v8142
  %v8205 = vadd.f32 %v8143, %v8145
  %v8206 = vadd.f32 %v8144, %v8146
  %v8207 = vadd.f32 %v8147, %v8149
  %v8208 = vadd.f32 %v8148, %v8150
  %v8209 = vadd.f32 %v8151, %v8153
  %v8210 = vadd.f32 %v8152, %v8154
  %v8211 = vadd.f32 %v8155, %v8157
  %v8212 = vadd.f32 %v8156, %v8158
  %v8213 = vadd.f32 %v8159, %v8161
  %v8214 = vadd.f32 %v8160, %v8162
  %v8215 = vadd.f32 %v8163, %v8165
  %v8216 = vadd.f32 %v8164, %v8166
  %v8217 = vadd.f32 %v8167, %v8169
  %v8218 = vadd.f32 %v8168, %v8170
  %v8219 = vadd.f32 %v8171, %v8173
  %v8220 = vadd.f32 %v8172, %v8174
  %v8221 = vadd.f32 %v8175, %v8177
  %v8222 = vadd.f32 %v8176, %v8178
  %v8223 = vadd.f32 %v8179, %v8181
  %v8224 = vadd.f32 %v8180, %v8182
  %v8225 = vadd.f32 %v8183, %v8185
  %v8226 = vadd.f32 %v8184, %v8186
  %v8227 = vadd.f32 %v8187, %v8189
  %v8228 = vadd.f32 %v8188, %v8190
  %v8229 = vadd.f32 %v8191, %v8193
  %v8230 = vadd.f32 %v8192, %v8194
  %v8231 = vadd.f32 %v8195, %v8197
  %v8232 = vadd.f32 %v8196, %v8198
  %v8233 = vadd.f32 %v8199, %v8201
  %v8234 = vadd.f32 %v8200, %v8202
  %8235 = vst.msk [vmem:[#allocation3] sm:$0xff] %vm2711, %v8203
  %8236 = vst.msk [vmem:[#allocation3 + $0x8] sm:$0xff] %vm2711, %v8204
  %8237 = vst.msk [vmem:[#allocation3 + $0x10] sm:$0xff] %vm2711, %v8205
  %8238 = vst.msk [vmem:[#allocation3 + $0x18] sm:$0xff] %vm2711, %v8206
  %8239 = vst.msk [vmem:[#allocation3 + $0x20] sm:$0xff] %vm2711, %v8207
  %8240 = vst.msk [vmem:[#allocation3 + $0x28] sm:$0xff] %vm2711, %v8208
  %8241 = vst.msk [vmem:[#allocation3 + $0x30] sm:$0xff] %vm2711, %v8209
  %8242 = vst.msk [vmem:[#allocation3 + $0x38] sm:$0xff] %vm2711, %v8210
  %8243 = vst.msk [vmem:[#allocation3 + $0x40] sm:$0xff] %vm2711, %v8211
  %8244 = vst.msk [vmem:[#allocation3 + $0x48] sm:$0xff] %vm2711, %v8212
  %8245 = vst.msk [vmem:[#allocation3 + $0x50] sm:$0xff] %vm2711, %v8213
  %8246 = vst.msk [vmem:[#allocation3 + $0x58] sm:$0xff] %vm2711, %v8214
  %8247 = vst.msk [vmem:[#allocation3 + $0x60] sm:$0xff] %vm2711, %v8215
  %8248 = vst.msk [vmem:[#allocation3 + $0x68] sm:$0xff] %vm2711, %v8216
  %8249 = vst.msk [vmem:[#allocation3 + $0x70] sm:$0xff] %vm2711, %v8217
  %8250 = vst.msk [vmem:[#allocation3 + $0x78] sm:$0xff] %vm2711, %v8218
  %8251 = vst.msk [vmem:[#allocation3 + $0x80] sm:$0xff] %vm2711, %v8219
  %8252 = vst.msk [vmem:[#allocation3 + $0x88] sm:$0xff] %vm2711, %v8220
  %8253 = vst.msk [vmem:[#allocation3 + $0x90] sm:$0xff] %vm2711, %v8221
  %8254 = vst.msk [vmem:[#allocation3 + $0x98] sm:$0xff] %vm2711, %v8222
  %8255 = vst.msk [vmem:[#allocation3 + $0xa0] sm:$0xff] %vm2711, %v8223
  %8256 = vst.msk [vmem:[#allocation3 + $0xa8] sm:$0xff] %vm2711, %v8224
  %8257 = vst.msk [vmem:[#allocation3 + $0xb0] sm:$0xff] %vm2711, %v8225
  %8258 = vst.msk [vmem:[#allocation3 + $0xb8] sm:$0xff] %vm2711, %v8226
  %8259 = vst.msk [vmem:[#allocation3 + $0xc0] sm:$0xff] %vm2711, %v8227
  %8260 = vst.msk [vmem:[#allocation3 + $0xc8] sm:$0xff] %vm2711, %v8228
  %8261 = vst.msk [vmem:[#allocation3 + $0xd0] sm:$0xff] %vm2711, %v8229
  %8262 = vst.msk [vmem:[#allocation3 + $0xd8] sm:$0xff] %vm2711, %v8230
  %8263 = vst.msk [vmem:[#allocation3 + $0xe0] sm:$0xff] %vm2711, %v8231
  %8264 = vst.msk [vmem:[#allocation3 + $0xe8] sm:$0xff] %vm2711, %v8232
  %8265 = vst.msk [vmem:[#allocation3 + $0xf0] sm:$0xff] %vm2711, %v8233
  %8266 = vst.msk [vmem:[#allocation3 + $0xf8] sm:$0xff] %vm2711, %v8234
  %v8267 = vld [vmem:[#allocation3] ss:$2 sm:$0xff]
  %s8268 = scalar_lea.vmem [#allocation3], 16
  %v8269 = vld [vmem:[%s8268] ss:$2 sm:$0xff]
  %s8270 = scalar_lea.vmem [#allocation3], 32
  %v8271 = vld [vmem:[%s8270] ss:$2 sm:$0xff]
  %s8272 = scalar_lea.vmem [#allocation3], 48
  %v8273 = vld [vmem:[%s8272] ss:$2 sm:$0xff]
  %s8274 = scalar_lea.vmem [#allocation3], 64
  %v8275 = vld [vmem:[%s8274] ss:$2 sm:$0xff]
  %s8276 = scalar_lea.vmem [#allocation3], 80
  %v8277 = vld [vmem:[%s8276] ss:$2 sm:$0xff]
  %s8278 = scalar_lea.vmem [#allocation3], 96
  %v8279 = vld [vmem:[%s8278] ss:$2 sm:$0xff]
  %s8280 = scalar_lea.vmem [#allocation3], 112
  %v8281 = vld [vmem:[%s8280] ss:$2 sm:$0xff]
  %s8282 = scalar_lea.vmem [#allocation3], 128
  %v8283 = vld [vmem:[%s8282] ss:$2 sm:$0xff]
  %s8284 = scalar_lea.vmem [#allocation3], 144
  %v8285 = vld [vmem:[%s8284] ss:$2 sm:$0xff]
  %s8286 = scalar_lea.vmem [#allocation3], 160
  %v8287 = vld [vmem:[%s8286] ss:$2 sm:$0xff]
  %s8288 = scalar_lea.vmem [#allocation3], 176
  %v8289 = vld [vmem:[%s8288] ss:$2 sm:$0xff]
  %s8290 = scalar_lea.vmem [#allocation3], 192
  %v8291 = vld [vmem:[%s8290] ss:$2 sm:$0xff]
  %s8292 = scalar_lea.vmem [#allocation3], 208
  %v8293 = vld [vmem:[%s8292] ss:$2 sm:$0xff]
  %s8294 = scalar_lea.vmem [#allocation3], 224
  %v8295 = vld [vmem:[%s8294] ss:$2 sm:$0xff]
  %s8296 = scalar_lea.vmem [#allocation3], 240
  %v8297 = vld [vmem:[%s8296] ss:$2 sm:$0xff]
  %s8298 = scalar_lea.vmem [#allocation3], 1
  %v8299 = vld [vmem:[%s8298] ss:$2 sm:$0xff]
  %s8300 = scalar_lea.vmem [#allocation3], 17
  %v8301 = vld [vmem:[%s8300] ss:$2 sm:$0xff]
  %s8302 = scalar_lea.vmem [#allocation3], 33
  %v8303 = vld [vmem:[%s8302] ss:$2 sm:$0xff]
  %s8304 = scalar_lea.vmem [#allocation3], 49
  %v8305 = vld [vmem:[%s8304] ss:$2 sm:$0xff]
  %s8306 = scalar_lea.vmem [#allocation3], 65
  %v8307 = vld [vmem:[%s8306] ss:$2 sm:$0xff]
  %s8308 = scalar_lea.vmem [#allocation3], 81
  %v8309 = vld [vmem:[%s8308] ss:$2 sm:$0xff]
  %s8310 = scalar_lea.vmem [#allocation3], 97
  %v8311 = vld [vmem:[%s8310] ss:$2 sm:$0xff]
  %s8312 = scalar_lea.vmem [#allocation3], 113
  %v8313 = vld [vmem:[%s8312] ss:$2 sm:$0xff]
  %s8314 = scalar_lea.vmem [#allocation3], 129
  %v8315 = vld [vmem:[%s8314] ss:$2 sm:$0xff]
  %s8316 = scalar_lea.vmem [#allocation3], 145
  %v8317 = vld [vmem:[%s8316] ss:$2 sm:$0xff]
  %s8318 = scalar_lea.vmem [#allocation3], 161
  %v8319 = vld [vmem:[%s8318] ss:$2 sm:$0xff]
  %s8320 = scalar_lea.vmem [#allocation3], 177
  %v8321 = vld [vmem:[%s8320] ss:$2 sm:$0xff]
  %s8322 = scalar_lea.vmem [#allocation3], 193
  %v8323 = vld [vmem:[%s8322] ss:$2 sm:$0xff]
  %s8324 = scalar_lea.vmem [#allocation3], 209
  %v8325 = vld [vmem:[%s8324] ss:$2 sm:$0xff]
  %s8326 = scalar_lea.vmem [#allocation3], 225
  %v8327 = vld [vmem:[%s8326] ss:$2 sm:$0xff]
  %s8328 = scalar_lea.vmem [#allocation3], 241
  %v8329 = vld [vmem:[%s8328] ss:$2 sm:$0xff]
  %v8330 = vadd.f32 %v8267, %v8299
  %v8331 = vadd.f32 %v8269, %v8301
  %v8332 = vadd.f32 %v8271, %v8303
  %v8333 = vadd.f32 %v8273, %v8305
  %v8334 = vadd.f32 %v8275, %v8307
  %v8335 = vadd.f32 %v8277, %v8309
  %v8336 = vadd.f32 %v8279, %v8311
  %v8337 = vadd.f32 %v8281, %v8313
  %v8338 = vadd.f32 %v8283, %v8315
  %v8339 = vadd.f32 %v8285, %v8317
  %v8340 = vadd.f32 %v8287, %v8319
  %v8341 = vadd.f32 %v8289, %v8321
  %v8342 = vadd.f32 %v8291, %v8323
  %v8343 = vadd.f32 %v8293, %v8325
  %v8344 = vadd.f32 %v8295, %v8327
  %v8345 = vadd.f32 %v8297, %v8329
  %v8346 = vmul.f32 %v8330, 0.25
  %v8347 = vmul.f32 %v8331, 0.25
  %v8348 = vmul.f32 %v8332, 0.25
  %v8349 = vmul.f32 %v8333, 0.25
  %v8350 = vmul.f32 %v8334, 0.25
  %v8351 = vmul.f32 %v8335, 0.25
  %v8352 = vmul.f32 %v8336, 0.25
  %v8353 = vmul.f32 %v8337, 0.25
  %v8354 = vmul.f32 %v8338, 0.25
  %v8355 = vmul.f32 %v8339, 0.25
  %v8356 = vmul.f32 %v8340, 0.25
  %v8357 = vmul.f32 %v8341, 0.25
  %v8358 = vmul.f32 %v8342, 0.25
  %v8359 = vmul.f32 %v8343, 0.25
  %v8360 = vmul.f32 %v8344, 0.25
  %v8361 = vmul.f32 %v8345, 0.25
  %8362 = vst.msk [vmem:[%s5] sm:$0xff] %vm2711, %v8346
  %8363 = vst.msk [vmem:[%s5 + $0x8] sm:$0xff] %vm2711, %v8347
  %8364 = vst.msk [vmem:[%s5 + $0x10] sm:$0xff] %vm2711, %v8348
  %8365 = vst.msk [vmem:[%s5 + $0x18] sm:$0xff] %vm2711, %v8349
  %8366 = vst.msk [vmem:[%s5 + $0x20] sm:$0xff] %vm2711, %v8350
  %8367 = vst.msk [vmem:[%s5 + $0x28] sm:$0xff] %vm2711, %v8351
  %8368 = vst.msk [vmem:[%s5 + $0x30] sm:$0xff] %vm2711, %v8352
  %8369 = vst.msk [vmem:[%s5 + $0x38] sm:$0xff] %vm2711, %v8353
  %8370 = vst.msk [vmem:[%s5 + $0x40] sm:$0xff] %vm2711, %v8354
  %8371 = vst.msk [vmem:[%s5 + $0x48] sm:$0xff] %vm2711, %v8355
  %8372 = vst.msk [vmem:[%s5 + $0x50] sm:$0xff] %vm2711, %v8356
  %8373 = vst.msk [vmem:[%s5 + $0x58] sm:$0xff] %vm2711, %v8357
  %8374 = vst.msk [vmem:[%s5 + $0x60] sm:$0xff] %vm2711, %v8358
  %8375 = vst.msk [vmem:[%s5 + $0x68] sm:$0xff] %vm2711, %v8359
  %8376 = vst.msk [vmem:[%s5 + $0x70] sm:$0xff] %vm2711, %v8360
  %8377 = vst.msk [vmem:[%s5 + $0x78] sm:$0xff] %vm2711, %v8361
  // Predicated region
  $region22: #{tpu_custom_call.1} parent=0 // pred_check
    _
  $region23: #{tpu_custom_call.1} parent=0 // pred_check_branch
    %8379 = sbr.rel (0) target = $region25
  $region24: #{tpu_custom_call.1} parent=0 // pred_region
    _
  $region25: #{tpu_custom_call.1} parent=0 // pred_fallthru
    _
  // Predicated region
  $region26: #{tpu_custom_call.1} parent=0 // pred_check
    _
  $region27: #{tpu_custom_call.1} parent=0 // pred_check_branch
    %8381 = sbr.rel (0) target = $region29
  $region28: #{tpu_custom_call.1} parent=0 // pred_region
    _
  $region29: #{tpu_custom_call.1} parent=0 // pred_fallthru
    _

</llo_original>
